<compile_context>
chip_gen: v7x
topology: tpu7x:2x2x1
jax: 0.10.0
libtpu: 0.0.40
codegen_flags: <defaults>
</compile_context>

<pallas_src>
import functools

import numpy as np
import jax
import jax.numpy as jnp
from jax.experimental import pallas as pl
from jax.experimental.pallas import tpu as pltpu

# Matmul operand dtype. Set to jnp.bfloat16 on v6e/v7x for 2x MXU throughput /
# halved weight+patch DMA bytes (accumulation stays f32, elementwise math stays
# f32 everywhere, which also keeps v5e's VPU/EUP happy).
_MXU_DTYPE = jnp.float32

_VMEM_LIMIT = 32 * 1024 * 1024  # explicit scoped-VMEM limit, safe on v5e/v6e/v7x
_TILE_M = 512                   # rows per matmul block (>=512 keeps HBM roofline)


# ----------------------------------------------------------------------------
# Pallas kernels
# ----------------------------------------------------------------------------
def _bmm_bias_act_kernel(a_ref, w_ref, b_ref, o_ref, *, act):
    """One (view, m-tile) step: act(A @ W + b). Blocks carry a leading view dim."""
    a = a_ref[0].astype(_MXU_DTYPE)
    w = w_ref[0].astype(_MXU_DTYPE)
    acc = jnp.dot(a, w, preferred_element_type=jnp.float32)
    acc = acc + b_ref[0]
    if act == "relu":
        acc = jnp.maximum(acc, 0.0)
    elif act == "sigmoid":
        acc = jax.nn.sigmoid(acc)           # EUP path, numerically stable
    o_ref[0] = acc.astype(o_ref.dtype)


def batched_matmul_bias_act(a, w, b, *, act):
    """act(a @ w + b) per view in one pallas_call.

    a: (V, M, K)   w: (V, K, N)   b: (V, N)   ->   (V, M, N)
    Grid = (views, M-tiles); both axes independent -> "parallel" (megacore).
    """
    V, M, K = a.shape
    N = w.shape[2]
    tm = M if M <= _TILE_M else _TILE_M     # full-M block when small (always legal)
    grid = (V, pl.cdiv(M, tm))
    kern = functools.partial(_bmm_bias_act_kernel, act=act)
    return pl.pallas_call(
        kern,
        out_shape=jax.ShapeDtypeStruct((V, M, N), jnp.float32),
        grid=grid,
        in_specs=[
            pl.BlockSpec((1, tm, K), lambda v, m: (v, m, 0)),
            pl.BlockSpec((1, K, N), lambda v, m: (v, 0, 0)),
            pl.BlockSpec((1, 1, N), lambda v, m: (v, 0, 0)),
        ],
        out_specs=pl.BlockSpec((1, tm, N), lambda v, m: (v, m, 0)),
        compiler_params=pltpu.CompilerParams(
            dimension_semantics=("parallel", "parallel"),
            vmem_limit_bytes=_VMEM_LIMIT,
        ),
    )(a, w, b.reshape(V, 1, N))


def _latent_kernel(flat_ref, wh_ref, bh_ref, eps_ref, wd_ref, bd_ref,
                   mu_ref, log_ref, z_ref, d_ref, *, n_z):
    """Fused per-view latent block:
       h   = relu(flat @ [W_mu | W_ep] + [b_mu | b_ep])
       mu, logvar = split(h)
       z   = mu + eps * exp(logvar / 2)
       d   = relu(z @ W_de + b_de)
    """
    flat = flat_ref[0].astype(_MXU_DTYPE)
    wh = wh_ref[0].astype(_MXU_DTYPE)
    h = jnp.dot(flat, wh, preferred_element_type=jnp.float32) + bh_ref[0]
    h = jnp.maximum(h, 0.0)                 # ReLU on both heads (matches Sequential)
    mu = h[:, :n_z]
    logv = h[:, n_z:]
    z = mu + eps_ref[0] * jnp.exp(0.5 * logv)
    d = jnp.dot(z.astype(_MXU_DTYPE), wd_ref[0].astype(_MXU_DTYPE),
                preferred_element_type=jnp.float32) + bd_ref[0]
    d = jnp.maximum(d, 0.0)
    mu_ref[0] = mu
    log_ref[0] = logv
    z_ref[0] = z
    d_ref[0] = d


def latent_block(flat, w_head, b_head, eps, w_de, b_de):
    """flat:(V,B,1024) w_head:(V,1024,2nz) eps:(V,B,nz) w_de:(V,nz,1024)."""
    V, B, F = flat.shape
    n_z = eps.shape[2]
    kern = functools.partial(_latent_kernel, n_z=n_z)
    out_shapes = (
        jax.ShapeDtypeStruct((V, B, n_z), jnp.float32),   # mu
        jax.ShapeDtypeStruct((V, B, n_z), jnp.float32),   # logvar
        jax.ShapeDtypeStruct((V, B, n_z), jnp.float32),   # z
        jax.ShapeDtypeStruct((V, B, F), jnp.float32),     # decoder FC output
    )
    return pl.pallas_call(
        kern,
        out_shape=out_shapes,
        grid=(V,),
        in_specs=[
            pl.BlockSpec((1, B, F), lambda v: (v, 0, 0)),
            pl.BlockSpec((1, F, 2 * n_z), lambda v: (v, 0, 0)),
            pl.BlockSpec((1, 1, 2 * n_z), lambda v: (v, 0, 0)),
            pl.BlockSpec((1, B, n_z), lambda v: (v, 0, 0)),
            pl.BlockSpec((1, n_z, F), lambda v: (v, 0, 0)),
            pl.BlockSpec((1, 1, F), lambda v: (v, 0, 0)),
        ],
        out_specs=(
            pl.BlockSpec((1, B, n_z), lambda v: (v, 0, 0)),
            pl.BlockSpec((1, B, n_z), lambda v: (v, 0, 0)),
            pl.BlockSpec((1, B, n_z), lambda v: (v, 0, 0)),
            pl.BlockSpec((1, B, F), lambda v: (v, 0, 0)),
        ),
        compiler_params=pltpu.CompilerParams(
            dimension_semantics=("parallel",),
            vmem_limit_bytes=_VMEM_LIMIT,
        ),
    )(flat, w_head, b_head.reshape(V, 1, 2 * n_z), eps, w_de, b_de.reshape(V, 1, F))


# ----------------------------------------------------------------------------
# NHWC im2col glue (plain JAX under jit; matmuls run in Pallas)
# ----------------------------------------------------------------------------
def _im2col_nhwc(x, k, stride, pad):
    """x: (N,H,W,C) -> patches (N, OH*OW, k*k*C) with column order (kh, kw, c)."""
    N, H, W, C = x.shape
    xp = jnp.pad(x, ((0, 0), (pad, pad), (pad, pad), (0, 0)))
    OH = (H + 2 * pad - k) // stride + 1
    OW = (W + 2 * pad - k) // stride + 1
    cols = []
    for kh in range(k):
        for kw in range(k):
            cols.append(xp[:, kh:kh + stride * (OH - 1) + 1:stride,
                              kw:kw + stride * (OW - 1) + 1:stride, :])
    p = jnp.stack(cols, axis=3)                      # (N, OH, OW, k*k, C)
    return p.reshape(N, OH * OW, k * k * C), OH, OW


def conv2d_all_views(x, w, b, *, act):
    """Stride-2, pad-1, 4x4 Conv2d for all views. x:(V,B,H,W,C) w:(V,16C,O)."""
    V, B, H, W, C = x.shape
    K, O = w.shape[1], w.shape[2]
    patches, OH, OW = _im2col_nhwc(x.reshape(V * B, H, W, C), 4, 2, 1)
    patches = patches.reshape(V, B * OH * OW, K)
    y = batched_matmul_bias_act(patches, w, b, act=act)          # (V, M, O)
    return y.reshape(V, B, OH, OW, O)


def conv_transpose2d_all_views(x, w_sub, b, *, act):
    """Stride-2, pad-1, 4x4 ConvTranspose2d for all views (sub-pixel form).

    x:(V,B,H,W,Cin)  w_sub:(V, 9*Cin, 4*Cout)  b:(V, Cout)  ->  (V,B,2H,2W,Cout)
    One matmul per layer over 3x3 windows of the undilated input; the 4 output
    parities come out as 4*Cout lane-dense channels and are depth-to-spaced.
    """
    V, B, H, W, C = x.shape
    O = w_sub.shape[2] // 4
    patches, _, _ = _im2col_nhwc(x.reshape(V * B, H, W, C), 3, 1, 1)   # (VB, H*W, 9C)
    patches = patches.reshape(V, B * H * W, 9 * C)
    b4 = jnp.tile(b, (1, 4))                                           # bias per parity
    y4 = batched_matmul_bias_act(patches, w_sub, b4, act=act)          # (V, BHW, 4O)
    y4 = y4.reshape(V, B, H, W, 2, 2, O)
    y = y4.transpose(0, 1, 2, 4, 3, 5, 6).reshape(V, B, 2 * H, 2 * W, O)
    return y


# ----------------------------------------------------------------------------
# Weight packing (done ONCE at init; layouts match the NHWC kernels above)
# ----------------------------------------------------------------------------
def _pack_conv(wt):
    """PyTorch Conv2d weight (O,I,k,k) -> (k*k*I, O) with row order (kh, kw, ci)."""
    O, I, k, _ = wt.shape
    return wt.transpose(2, 3, 1, 0).reshape(k * k * I, O)


def _pack_deconv_subpixel(wt):
    """PyTorch ConvTranspose2d weight (Cin,Cout,4,4) -> (9*Cin, 4*Cout).

    Rows ordered (dh, dw, ci) over a 3x3 window of the (pad-1) input; columns
    ordered (parity rc = 2*r+c, cout). Output pixel (2a+r, 2b+c) uses window row
    dh at kernel tap kh = 3 - 2*dh + r (zero outside [0,3]); same for width.
    """
    Cin, Cout, k, _ = wt.shape
    rows = []
    for dh in range(3):
        cols = []
        for dw in range(3):
            par = []
            for r in range(2):
                for c in range(2):
                    kh = 3 - 2 * dh + r
                    kw = 3 - 2 * dw + c
                    if 0 <= kh < k and 0 <= kw < k:
                        par.append(wt[:, :, kh, kw])                 # (Cin, Cout)
                    else:
                        par.append(jnp.zeros((Cin, Cout), wt.dtype))
            cols.append(jnp.stack(par, axis=1))                      # (Cin, 4, Cout)
        rows.append(jnp.stack(cols, axis=0))                         # (3, Cin, 4, Cout)
    W = jnp.stack(rows, axis=0)                                      # (3, 3, Cin, 4, Cout)
    return W.reshape(9 * Cin, 4 * Cout)


def _pack_linear_in_hwc(wt):
    """Linear weight (out, 1024) with in-index (c,h,w) -> (1024, out) rows (h,w,c)."""
    out = wt.shape[0]
    return wt.reshape(out, 64, 4, 4).transpose(2, 3, 1, 0).reshape(64 * 16, out)


def _pack_linear_out_hwc(wt):
    """Linear weight (1024, n_z) with out-index (c,h,w) -> (n_z, 1024) cols (h,w,c)."""
    nz = wt.shape[1]
    return wt.reshape(64, 4, 4, nz).transpose(3, 1, 2, 0).reshape(nz, 64 * 16)


def _pack_bias_out_hwc(bt):
    return bt.reshape(64, 4, 4).transpose(1, 2, 0).reshape(64 * 16)


def _init_single_view(key, c_in, n_z):
    """PyTorch-default-style init (uniform +/- 1/sqrt(fan_in)), then pre-pack."""
    ks = jax.random.split(key, 18)

    def u(k, shape, fan_in):
        bnd = 1.0 / np.sqrt(fan_in)
        return jax.random.uniform(k, shape, jnp.float32, -bnd, bnd)

    # torch-layout weights
    enc1_w = u(ks[0], (32, c_in, 4, 4), c_in * 16); enc1_b = u(ks[1], (32,), c_in * 16)
    enc2_w = u(ks[2], (64, 32, 4, 4), 32 * 16);     enc2_b = u(ks[3], (64,), 32 * 16)
    enc3_w = u(ks[4], (64, 64, 4, 4), 64 * 16);     enc3_b = u(ks[5], (64,), 64 * 16)
    mu_w = u(ks[6], (n_z, 1024), 1024);  mu_b = u(ks[7], (n_z,), 1024)
    ep_w = u(ks[8], (n_z, 1024), 1024);  ep_b = u(ks[9], (n_z,), 1024)
    de_w = u(ks[10], (1024, n_z), n_z);  de_b = u(ks[11], (1024,), n_z)
    dec1_w = u(ks[12], (64, 32, 4, 4), 32 * 16);   dec1_b = u(ks[13], (32,), 32 * 16)
    dec2_w = u(ks[14], (32, 32, 4, 4), 32 * 16);   dec2_b = u(ks[15], (32,), 32 * 16)
    dec3_w = u(ks[16], (32, c_in, 4, 4), 32 * 16); dec3_b = u(ks[17], (c_in,), 32 * 16)

    return {
        "enc1_w": _pack_conv(enc1_w), "enc1_b": enc1_b,
        "enc2_w": _pack_conv(enc2_w), "enc2_b": enc2_b,
        "enc3_w": _pack_conv(enc3_w), "enc3_b": enc3_b,
        # fused mu||logvar head: (1024, 2*n_z); input rows follow NHWC flatten
        "head_w": jnp.concatenate([_pack_linear_in_hwc(mu_w),
                                   _pack_linear_in_hwc(ep_w)], axis=1),
        "head_b": jnp.concatenate([mu_b, ep_b]),
        # decoder FC: (n_z, 1024) with output columns in (h, w, c) order so the
        # result reshapes straight to NHWC
        "de_w": _pack_linear_out_hwc(de_w), "de_b": _pack_bias_out_hwc(de_b),
        "dec1_w": _pack_deconv_subpixel(dec1_w), "dec1_b": dec1_b,
        "dec2_w": _pack_deconv_subpixel(dec2_w), "dec2_b": dec2_b,
        "dec3_w": _pack_deconv_subpixel(dec3_w), "dec3_b": dec3_b,
    }


def init_multi_view_params(key, view_number, c_in, n_z):
    """args.share == False: independent weights per view, stacked on axis 0."""
    per_view = [_init_single_view(jax.random.fold_in(key, v), c_in, n_z)
                for v in range(view_number)]
    return jax.tree_util.tree_map(lambda *xs: jnp.stack(xs, axis=0), *per_view)


# ----------------------------------------------------------------------------
# Forward
# ----------------------------------------------------------------------------
@jax.jit
def multi_view_forward(params, x, eps):
    """MultiViewModel.forward, all views in one jitted graph.

    x  : (V, B, C, H, W)  NCHW (PyTorch layout at the boundary)
    eps: (V, B, n_z)      reparameterization noise
    returns stacked (x_bar, z, mu, logvar) with x_bar in NCHW.
    """
    V, B, C, H, W = x.shape
    xh = x.transpose(0, 1, 3, 4, 2)                                   # -> NHWC

    # encoder (encoder(x) appears twice in PyTorch; it is deterministic -> once)
    h = conv2d_all_views(xh, params["enc1_w"], params["enc1_b"], act="relu")
    h = conv2d_all_views(h, params["enc2_w"], params["enc2_b"], act="relu")
    h = conv2d_all_views(h, params["enc3_w"], params["enc3_b"], act="relu")  # (V,B,4,4,64)
    flat = h.reshape(V, B, 4 * 4 * 64)        # NHWC flatten; head weights packed to match

    # fused latent: mu/logvar heads + reparameterize + decoder FC in one kernel
    mu, logv, z, d = latent_block(flat, params["head_w"], params["head_b"],
                                  eps, params["de_w"], params["de_b"])

    dh = d.reshape(V, B, 4, 4, 64)            # directly NHWC (de_w columns pre-permuted)
    dh = conv_transpose2d_all_views(dh, params["dec1_w"], params["dec1_b"], act="relu")
    dh = conv_transpose2d_all_views(dh, params["dec2_w"], params["dec2_b"], act="relu")
    xb = conv_transpose2d_all_views(dh, params["dec3_w"], params["dec3_b"], act="sigmoid")

    x_bar = xb.transpose(0, 1, 4, 2, 3)                               # back to NCHW
    return x_bar, z, mu, logv


def multi_view_forward_list(params, x_list, eps_list):
    """API-parity helper: returns [(x_bar, z, mu, log) for each view]."""
    x = jnp.stack(x_list)
    eps = jnp.stack(eps_list)
    x_bar, z, mu, logv = multi_view_forward(params, x, eps)
    return [(x_bar[v], z[v], mu[v], logv[v]) for v in range(len(x_list))]


# TODO(synk): the unused MultiViewModel.classifier heads (Linear + Softmax) are
# not built since forward() never calls them.

# ----------------------------------------------------------------------------
if __name__ == "__main__":
    key = jax.random.PRNGKey(0)
    # spatial must be 32: the encoder flattens to 64*4*4 as in the PyTorch model
    V, B, C, H, W = 2, 2, 3, 32, 32
    n_z = 10

    k_x, k_p, k_e = jax.random.split(key, 3)
    x = jax.random.uniform(k_x, (V, B, C, H, W), jnp.float32)
    eps = jax.random.normal(k_e, (V, B, n_z), jnp.float32)
    params = init_multi_view_params(k_p, V, C, n_z)

    x_bar, z, mu, logv = multi_view_forward(params, x, eps)
    jax.block_until_ready((x_bar, z, mu, logv))

    assert x_bar.shape == (V, B, C, H, W)
    assert z.shape == (V, B, n_z) and mu.shape == (V, B, n_z) and logv.shape == (V, B, n_z)
    assert bool(jnp.all((x_bar >= 0.0) & (x_bar <= 1.0)))       # sigmoid output range
    assert bool(jnp.all(mu >= 0.0)) and bool(jnp.all(logv >= 0.0))  # ReLU'd heads
    assert bool(jnp.all(jnp.isfinite(x_bar)))

    print("KERNEL_OK")
</pallas_src>

<mosaic_0001>
module attributes {stable_mosaic.version = 11 : i64} {
  func.func @_bmm_bias_act_kernel(%arg0: i32, %arg1: i32, %arg2: memref<1x512x48xf32, #tpu.memory_space<vmem>>, %arg3: memref<1x48x32xf32, #tpu.memory_space<vmem>>, %arg4: memref<1x1x32xf32, #tpu.memory_space<vmem>>, %arg5: memref<1x512x32xf32, #tpu.memory_space<vmem>>) attributes {dimension_semantics = [#tpu.dimension_semantics<parallel>, #tpu.dimension_semantics<parallel>], iteration_bounds = array<i64: 2, 1>, scalar_prefetch = 0 : i64, scratch_operands = 0 : i64, tpu.core_type = #tpu.core_type<tc>, window_params = [{transform_indices = @transform_0, window_bounds = array<i64: 1, 512, 48>}, {transform_indices = @transform_1, window_bounds = array<i64: 1, 48, 32>}, {transform_indices = @transform_2, window_bounds = array<i64: 1, 1, 32>}, {transform_indices = @transform_3, window_bounds = array<i64: 1, 512, 32>}]} {
    %c0 = arith.constant 0 : index
    %c0_0 = arith.constant 0 : index
    %c0_1 = arith.constant 0 : index
    %0 = vector.load %arg2[%c0, %c0_0, %c0_1] : memref<1x512x48xf32, #tpu.memory_space<vmem>>, vector<1x512x48xf32>
    %1 = vector.shape_cast %0 : vector<1x512x48xf32> to vector<512x48xf32>
    %c0_2 = arith.constant 0 : index
    %c0_3 = arith.constant 0 : index
    %c0_4 = arith.constant 0 : index
    %2 = vector.load %arg3[%c0_2, %c0_3, %c0_4] : memref<1x48x32xf32, #tpu.memory_space<vmem>>, vector<1x48x32xf32>
    %3 = vector.shape_cast %2 : vector<1x48x32xf32> to vector<48x32xf32>
    %cst = arith.constant dense<0.000000e+00> : vector<512x32xf32>
    %4 = tpu.matmul %1, %3, %cst {dimension_numbers = #tpu.dot_dimension_numbers<[1], [0], [0], [1], [0, 0, 1, 1], [], []>} : vector<512x48xf32>, vector<48x32xf32>, vector<512x32xf32> -> vector<512x32xf32>
    %c0_5 = arith.constant 0 : index
    %c0_6 = arith.constant 0 : index
    %c0_7 = arith.constant 0 : index
    %5 = vector.load %arg4[%c0_5, %c0_6, %c0_7] : memref<1x1x32xf32, #tpu.memory_space<vmem>>, vector<1x1x32xf32>
    %6 = vector.shape_cast %5 : vector<1x1x32xf32> to vector<1x32xf32>
    %7 = vector.broadcast %6 : vector<1x32xf32> to vector<512x32xf32>
    %8 = arith.addf %4, %7 : vector<512x32xf32>
    %cst_8 = arith.constant 0.000000e+00 : f32
    %9 = vector.broadcast %cst_8 : f32 to vector<512x32xf32>
    %10 = arith.maximumf %8, %9 : vector<512x32xf32>
    %c0_9 = arith.constant 0 : index
    %c0_10 = arith.constant 0 : index
    %c0_11 = arith.constant 0 : index
    %11 = vector.load %arg5[%c0_9, %c0_10, %c0_11] : memref<1x512x32xf32, #tpu.memory_space<vmem>>, vector<1x512x32xf32>
    %12 = vector.shape_cast %11 : vector<1x512x32xf32> to vector<512x32xf32>
    %13 = vector.shape_cast %10 : vector<512x32xf32> to vector<1x512x32xf32>
    tpu.vector_store %arg5[%c0_9, %c0_10, %c0_11], %13 {strides = array<i32>} : memref<1x512x32xf32, #tpu.memory_space<vmem>>, vector<1x512x32xf32>,
    return
  }
  func.func @transform_0(%arg0: i32, %arg1: i32) -> (i32, i32, i32) {
    %c0_i32 = arith.constant 0 : i32
    %c0_i32_0 = arith.constant 0 : i32
    return %arg0, %arg1, %c0_i32 : i32, i32, i32
  }
  func.func @transform_1(%arg0: i32, %arg1: i32) -> (i32, i32, i32) {
    %c0_i32 = arith.constant 0 : i32
    %c0_i32_0 = arith.constant 0 : i32
    %c0_i32_1 = arith.constant 0 : i32
    return %arg0, %c0_i32, %c0_i32_0 : i32, i32, i32
  }
  func.func @transform_2(%arg0: i32, %arg1: i32) -> (i32, i32, i32) {
    %c0_i32 = arith.constant 0 : i32
    %c0_i32_0 = arith.constant 0 : i32
    %c0_i32_1 = arith.constant 0 : i32
    return %arg0, %c0_i32, %c0_i32_0 : i32, i32, i32
  }
  func.func @transform_3(%arg0: i32, %arg1: i32) -> (i32, i32, i32) {
    %c0_i32 = arith.constant 0 : i32
    %c0_i32_0 = arith.constant 0 : i32
    return %arg0, %arg1, %c0_i32 : i32, i32, i32
  }
}

module attributes {stable_mosaic.version = 11 : i64} {
  func.func @_bmm_bias_act_kernel(%arg0: i32, %arg1: i32, %arg2: memref<1x128x512xf32, #tpu.memory_space<vmem>>, %arg3: memref<1x512x64xf32, #tpu.memory_space<vmem>>, %arg4: memref<1x1x64xf32, #tpu.memory_space<vmem>>, %arg5: memref<1x128x64xf32, #tpu.memory_space<vmem>>) attributes {dimension_semantics = [#tpu.dimension_semantics<parallel>, #tpu.dimension_semantics<parallel>], iteration_bounds = array<i64: 2, 1>, scalar_prefetch = 0 : i64, scratch_operands = 0 : i64, tpu.core_type = #tpu.core_type<tc>, window_params = [{transform_indices = @transform_0, window_bounds = array<i64: 1, 128, 512>}, {transform_indices = @transform_1, window_bounds = array<i64: 1, 512, 64>}, {transform_indices = @transform_2, window_bounds = array<i64: 1, 1, 64>}, {transform_indices = @transform_3, window_bounds = array<i64: 1, 128, 64>}]} {
    %c0 = arith.constant 0 : index
    %c0_0 = arith.constant 0 : index
    %c0_1 = arith.constant 0 : index
    %0 = vector.load %arg2[%c0, %c0_0, %c0_1] : memref<1x128x512xf32, #tpu.memory_space<vmem>>, vector<1x128x512xf32>
    %1 = vector.shape_cast %0 : vector<1x128x512xf32> to vector<128x512xf32>
    %c0_2 = arith.constant 0 : index
    %c0_3 = arith.constant 0 : index
    %c0_4 = arith.constant 0 : index
    %2 = vector.load %arg3[%c0_2, %c0_3, %c0_4] : memref<1x512x64xf32, #tpu.memory_space<vmem>>, vector<1x512x64xf32>
    %3 = vector.shape_cast %2 : vector<1x512x64xf32> to vector<512x64xf32>
    %cst = arith.constant dense<0.000000e+00> : vector<128x64xf32>
    %4 = tpu.matmul %1, %3, %cst {dimension_numbers = #tpu.dot_dimension_numbers<[1], [0], [0], [1], [0, 0, 1, 1], [], []>} : vector<128x512xf32>, vector<512x64xf32>, vector<128x64xf32> -> vector<128x64xf32>
    %c0_5 = arith.constant 0 : index
    %c0_6 = arith.constant 0 : index
    %c0_7 = arith.constant 0 : index
    %5 = vector.load %arg4[%c0_5, %c0_6, %c0_7] : memref<1x1x64xf32, #tpu.memory_space<vmem>>, vector<1x1x64xf32>
    %6 = vector.shape_cast %5 : vector<1x1x64xf32> to vector<1x64xf32>
    %7 = vector.broadcast %6 : vector<1x64xf32> to vector<128x64xf32>
    %8 = arith.addf %4, %7 : vector<128x64xf32>
    %cst_8 = arith.constant 0.000000e+00 : f32
    %9 = vector.broadcast %cst_8 : f32 to vector<128x64xf32>
    %10 = arith.maximumf %8, %9 : vector<128x64xf32>
    %c0_9 = arith.constant 0 : index
    %c0_10 = arith.constant 0 : index
    %c0_11 = arith.constant 0 : index
    %11 = vector.load %arg5[%c0_9, %c0_10, %c0_11] : memref<1x128x64xf32, #tpu.memory_space<vmem>>, vector<1x128x64xf32>
    %12 = vector.shape_cast %11 : vector<1x128x64xf32> to vector<128x64xf32>
    %13 = vector.shape_cast %10 : vector<128x64xf32> to vector<1x128x64xf32>
    tpu.vector_store %arg5[%c0_9, %c0_10, %c0_11], %13 {strides = array<i32>} : memref<1x128x64xf32, #tpu.memory_space<vmem>>, vector<1x128x64xf32>,
    return
  }
  func.func @transform_0(%arg0: i32, %arg1: i32) -> (i32, i32, i32) {
    %c0_i32 = arith.constant 0 : i32
    %c0_i32_0 = arith.constant 0 : i32
    return %arg0, %arg1, %c0_i32 : i32, i32, i32
  }
  func.func @transform_1(%arg0: i32, %arg1: i32) -> (i32, i32, i32) {
    %c0_i32 = arith.constant 0 : i32
    %c0_i32_0 = arith.constant 0 : i32
    %c0_i32_1 = arith.constant 0 : i32
    return %arg0, %c0_i32, %c0_i32_0 : i32, i32, i32
  }
  func.func @transform_2(%arg0: i32, %arg1: i32) -> (i32, i32, i32) {
    %c0_i32 = arith.constant 0 : i32
    %c0_i32_0 = arith.constant 0 : i32
    %c0_i32_1 = arith.constant 0 : i32
    return %arg0, %c0_i32, %c0_i32_0 : i32, i32, i32
  }
  func.func @transform_3(%arg0: i32, %arg1: i32) -> (i32, i32, i32) {
    %c0_i32 = arith.constant 0 : i32
    %c0_i32_0 = arith.constant 0 : i32
    return %arg0, %arg1, %c0_i32 : i32, i32, i32
  }
}

module attributes {stable_mosaic.version = 11 : i64} {
  func.func @_bmm_bias_act_kernel(%arg0: i32, %arg1: i32, %arg2: memref<1x32x1024xf32, #tpu.memory_space<vmem>>, %arg3: memref<1x1024x64xf32, #tpu.memory_space<vmem>>, %arg4: memref<1x1x64xf32, #tpu.memory_space<vmem>>, %arg5: memref<1x32x64xf32, #tpu.memory_space<vmem>>) attributes {dimension_semantics = [#tpu.dimension_semantics<parallel>, #tpu.dimension_semantics<parallel>], iteration_bounds = array<i64: 2, 1>, scalar_prefetch = 0 : i64, scratch_operands = 0 : i64, tpu.core_type = #tpu.core_type<tc>, window_params = [{transform_indices = @transform_0, window_bounds = array<i64: 1, 32, 1024>}, {transform_indices = @transform_1, window_bounds = array<i64: 1, 1024, 64>}, {transform_indices = @transform_2, window_bounds = array<i64: 1, 1, 64>}, {transform_indices = @transform_3, window_bounds = array<i64: 1, 32, 64>}]} {
    %c0 = arith.constant 0 : index
    %c0_0 = arith.constant 0 : index
    %c0_1 = arith.constant 0 : index
    %0 = vector.load %arg2[%c0, %c0_0, %c0_1] : memref<1x32x1024xf32, #tpu.memory_space<vmem>>, vector<1x32x1024xf32>
    %1 = vector.shape_cast %0 : vector<1x32x1024xf32> to vector<32x1024xf32>
    %c0_2 = arith.constant 0 : index
    %c0_3 = arith.constant 0 : index
    %c0_4 = arith.constant 0 : index
    %2 = vector.load %arg3[%c0_2, %c0_3, %c0_4] : memref<1x1024x64xf32, #tpu.memory_space<vmem>>, vector<1x1024x64xf32>
    %3 = vector.shape_cast %2 : vector<1x1024x64xf32> to vector<1024x64xf32>
    %cst = arith.constant dense<0.000000e+00> : vector<32x64xf32>
    %4 = tpu.matmul %1, %3, %cst {dimension_numbers = #tpu.dot_dimension_numbers<[1], [0], [0], [1], [0, 0, 1, 1], [], []>} : vector<32x1024xf32>, vector<1024x64xf32>, vector<32x64xf32> -> vector<32x64xf32>
    %c0_5 = arith.constant 0 : index
    %c0_6 = arith.constant 0 : index
    %c0_7 = arith.constant 0 : index
    %5 = vector.load %arg4[%c0_5, %c0_6, %c0_7] : memref<1x1x64xf32, #tpu.memory_space<vmem>>, vector<1x1x64xf32>
    %6 = vector.shape_cast %5 : vector<1x1x64xf32> to vector<1x64xf32>
    %7 = vector.broadcast %6 : vector<1x64xf32> to vector<32x64xf32>
    %8 = arith.addf %4, %7 : vector<32x64xf32>
    %cst_8 = arith.constant 0.000000e+00 : f32
    %9 = vector.broadcast %cst_8 : f32 to vector<32x64xf32>
    %10 = arith.maximumf %8, %9 : vector<32x64xf32>
    %c0_9 = arith.constant 0 : index
    %c0_10 = arith.constant 0 : index
    %c0_11 = arith.constant 0 : index
    %11 = vector.load %arg5[%c0_9, %c0_10, %c0_11] : memref<1x32x64xf32, #tpu.memory_space<vmem>>, vector<1x32x64xf32>
    %12 = vector.shape_cast %11 : vector<1x32x64xf32> to vector<32x64xf32>
    %13 = vector.shape_cast %10 : vector<32x64xf32> to vector<1x32x64xf32>
    tpu.vector_store %arg5[%c0_9, %c0_10, %c0_11], %13 {strides = array<i32>} : memref<1x32x64xf32, #tpu.memory_space<vmem>>, vector<1x32x64xf32>,
    return
  }
  func.func @transform_0(%arg0: i32, %arg1: i32) -> (i32, i32, i32) {
    %c0_i32 = arith.constant 0 : i32
    %c0_i32_0 = arith.constant 0 : i32
    return %arg0, %arg1, %c0_i32 : i32, i32, i32
  }
  func.func @transform_1(%arg0: i32, %arg1: i32) -> (i32, i32, i32) {
    %c0_i32 = arith.constant 0 : i32
    %c0_i32_0 = arith.constant 0 : i32
    %c0_i32_1 = arith.constant 0 : i32
    return %arg0, %c0_i32, %c0_i32_0 : i32, i32, i32
  }
  func.func @transform_2(%arg0: i32, %arg1: i32) -> (i32, i32, i32) {
    %c0_i32 = arith.constant 0 : i32
    %c0_i32_0 = arith.constant 0 : i32
    %c0_i32_1 = arith.constant 0 : i32
    return %arg0, %c0_i32, %c0_i32_0 : i32, i32, i32
  }
  func.func @transform_3(%arg0: i32, %arg1: i32) -> (i32, i32, i32) {
    %c0_i32 = arith.constant 0 : i32
    %c0_i32_0 = arith.constant 0 : i32
    return %arg0, %arg1, %c0_i32 : i32, i32, i32
  }
}

module attributes {stable_mosaic.version = 11 : i64} {
  func.func @_latent_kernel(%arg0: i32, %arg1: memref<1x2x1024xf32, #tpu.memory_space<vmem>>, %arg2: memref<1x1024x20xf32, #tpu.memory_space<vmem>>, %arg3: memref<1x1x20xf32, #tpu.memory_space<vmem>>, %arg4: memref<1x2x10xf32, #tpu.memory_space<vmem>>, %arg5: memref<1x10x1024xf32, #tpu.memory_space<vmem>>, %arg6: memref<1x1x1024xf32, #tpu.memory_space<vmem>>, %arg7: memref<1x2x10xf32, #tpu.memory_space<vmem>>, %arg8: memref<1x2x10xf32, #tpu.memory_space<vmem>>, %arg9: memref<1x2x10xf32, #tpu.memory_space<vmem>>, %arg10: memref<1x2x1024xf32, #tpu.memory_space<vmem>>) attributes {dimension_semantics = [#tpu.dimension_semantics<parallel>], iteration_bounds = array<i64: 2>, scalar_prefetch = 0 : i64, scratch_operands = 0 : i64, tpu.core_type = #tpu.core_type<tc>, window_params = [{transform_indices = @transform_0, window_bounds = array<i64: 1, 2, 1024>}, {transform_indices = @transform_1, window_bounds = array<i64: 1, 1024, 20>}, {transform_indices = @transform_2, window_bounds = array<i64: 1, 1, 20>}, {transform_indices = @transform_3, window_bounds = array<i64: 1, 2, 10>}, {transform_indices = @transform_4, window_bounds = array<i64: 1, 10, 1024>}, {transform_indices = @transform_5, window_bounds = array<i64: 1, 1, 1024>}, {transform_indices = @transform_6, window_bounds = array<i64: 1, 2, 10>}, {transform_indices = @transform_7, window_bounds = array<i64: 1, 2, 10>}, {transform_indices = @transform_8, window_bounds = array<i64: 1, 2, 10>}, {transform_indices = @transform_9, window_bounds = array<i64: 1, 2, 1024>}]} {
    %c0 = arith.constant 0 : index
    %c0_0 = arith.constant 0 : index
    %c0_1 = arith.constant 0 : index
    %0 = vector.load %arg1[%c0, %c0_0, %c0_1] : memref<1x2x1024xf32, #tpu.memory_space<vmem>>, vector<1x2x1024xf32>
    %1 = vector.shape_cast %0 : vector<1x2x1024xf32> to vector<2x1024xf32>
    %c0_2 = arith.constant 0 : index
    %c0_3 = arith.constant 0 : index
    %c0_4 = arith.constant 0 : index
    %2 = vector.load %arg2[%c0_2, %c0_3, %c0_4] : memref<1x1024x20xf32, #tpu.memory_space<vmem>>, vector<1x1024x20xf32>
    %3 = vector.shape_cast %2 : vector<1x1024x20xf32> to vector<1024x20xf32>
    %cst = arith.constant dense<0.000000e+00> : vector<2x20xf32>
    %4 = tpu.matmul %1, %3, %cst {dimension_numbers = #tpu.dot_dimension_numbers<[1], [0], [0], [1], [0, 0, 1, 1], [], []>} : vector<2x1024xf32>, vector<1024x20xf32>, vector<2x20xf32> -> vector<2x20xf32>
    %c0_5 = arith.constant 0 : index
    %c0_6 = arith.constant 0 : index
    %c0_7 = arith.constant 0 : index
    %5 = vector.load %arg3[%c0_5, %c0_6, %c0_7] : memref<1x1x20xf32, #tpu.memory_space<vmem>>, vector<1x1x20xf32>
    %6 = vector.shape_cast %5 : vector<1x1x20xf32> to vector<1x20xf32>
    %7 = vector.broadcast %6 : vector<1x20xf32> to vector<2x20xf32>
    %8 = arith.addf %4, %7 : vector<2x20xf32>
    %cst_8 = arith.constant 0.000000e+00 : f32
    %9 = vector.broadcast %cst_8 : f32 to vector<2x20xf32>
    %10 = arith.maximumf %8, %9 : vector<2x20xf32>
    %11 = vector.extract_strided_slice %10 {offsets = [0, 0], sizes = [2, 10], strides = [1, 1]} : vector<2x20xf32> to vector<2x10xf32>
    %12 = vector.extract_strided_slice %10 {offsets = [0, 10], sizes = [2, 10], strides = [1, 1]} : vector<2x20xf32> to vector<2x10xf32>
    %c0_9 = arith.constant 0 : index
    %c0_10 = arith.constant 0 : index
    %c0_11 = arith.constant 0 : index
    %13 = vector.load %arg4[%c0_9, %c0_10, %c0_11] : memref<1x2x10xf32, #tpu.memory_space<vmem>>, vector<1x2x10xf32>
    %14 = vector.shape_cast %13 : vector<1x2x10xf32> to vector<2x10xf32>
    %cst_12 = arith.constant 5.000000e-01 : f32
    %15 = vector.broadcast %cst_12 : f32 to vector<2x10xf32>
    %16 = arith.mulf %15, %12 : vector<2x10xf32>
    %17 = math.exp %16 : vector<2x10xf32>
    %18 = arith.mulf %14, %17 : vector<2x10xf32>
    %19 = arith.addf %11, %18 : vector<2x10xf32>
    %c0_13 = arith.constant 0 : index
    %c0_14 = arith.constant 0 : index
    %c0_15 = arith.constant 0 : index
    %20 = vector.load %arg5[%c0_13, %c0_14, %c0_15] : memref<1x10x1024xf32, #tpu.memory_space<vmem>>, vector<1x10x1024xf32>
    %21 = vector.shape_cast %20 : vector<1x10x1024xf32> to vector<10x1024xf32>
    %cst_16 = arith.constant dense<0.000000e+00> : vector<2x1024xf32>
    %22 = tpu.matmul %19, %21, %cst_16 {dimension_numbers = #tpu.dot_dimension_numbers<[1], [0], [0], [1], [0, 0, 1, 1], [], []>} : vector<2x10xf32>, vector<10x1024xf32>, vector<2x1024xf32> -> vector<2x1024xf32>
    %c0_17 = arith.constant 0 : index
    %c0_18 = arith.constant 0 : index
    %c0_19 = arith.constant 0 : index
    %23 = vector.load %arg6[%c0_17, %c0_18, %c0_19] : memref<1x1x1024xf32, #tpu.memory_space<vmem>>, vector<1x1x1024xf32>
    %24 = vector.shape_cast %23 : vector<1x1x1024xf32> to vector<1x1024xf32>
    %25 = vector.broadcast %24 : vector<1x1024xf32> to vector<2x1024xf32>
    %26 = arith.addf %22, %25 : vector<2x1024xf32>
    %cst_20 = arith.constant 0.000000e+00 : f32
    %27 = vector.broadcast %cst_20 : f32 to vector<2x1024xf32>
    %28 = arith.maximumf %26, %27 : vector<2x1024xf32>
    %c0_21 = arith.constant 0 : index
    %c0_22 = arith.constant 0 : index
    %c0_23 = arith.constant 0 : index
    %29 = vector.load %arg7[%c0_21, %c0_22, %c0_23] : memref<1x2x10xf32, #tpu.memory_space<vmem>>, vector<1x2x10xf32>
    %30 = vector.shape_cast %29 : vector<1x2x10xf32> to vector<2x10xf32>
    %31 = vector.shape_cast %11 : vector<2x10xf32> to vector<1x2x10xf32>
    tpu.vector_store %arg7[%c0_21, %c0_22, %c0_23], %31 {strides = array<i32>} : memref<1x2x10xf32, #tpu.memory_space<vmem>>, vector<1x2x10xf32>,
    %c0_24 = arith.constant 0 : index
    %c0_25 = arith.constant 0 : index
    %c0_26 = arith.constant 0 : index
    %32 = vector.load %arg8[%c0_24, %c0_25, %c0_26] : memref<1x2x10xf32, #tpu.memory_space<vmem>>, vector<1x2x10xf32>
    %33 = vector.shape_cast %32 : vector<1x2x10xf32> to vector<2x10xf32>
    %34 = vector.shape_cast %12 : vector<2x10xf32> to vector<1x2x10xf32>
    tpu.vector_store %arg8[%c0_24, %c0_25, %c0_26], %34 {strides = array<i32>} : memref<1x2x10xf32, #tpu.memory_space<vmem>>, vector<1x2x10xf32>,
    %c0_27 = arith.constant 0 : index
    %c0_28 = arith.constant 0 : index
    %c0_29 = arith.constant 0 : index
    %35 = vector.load %arg9[%c0_27, %c0_28, %c0_29] : memref<1x2x10xf32, #tpu.memory_space<vmem>>, vector<1x2x10xf32>
    %36 = vector.shape_cast %35 : vector<1x2x10xf32> to vector<2x10xf32>
    %37 = vector.shape_cast %19 : vector<2x10xf32> to vector<1x2x10xf32>
    tpu.vector_store %arg9[%c0_27, %c0_28, %c0_29], %37 {strides = array<i32>} : memref<1x2x10xf32, #tpu.memory_space<vmem>>, vector<1x2x10xf32>,
    %c0_30 = arith.constant 0 : index
    %c0_31 = arith.constant 0 : index
    %c0_32 = arith.constant 0 : index
    %38 = vector.load %arg10[%c0_30, %c0_31, %c0_32] : memref<1x2x1024xf32, #tpu.memory_space<vmem>>, vector<1x2x1024xf32>
    %39 = vector.shape_cast %38 : vector<1x2x1024xf32> to vector<2x1024xf32>
    %40 = vector.shape_cast %28 : vector<2x1024xf32> to vector<1x2x1024xf32>
    tpu.vector_store %arg10[%c0_30, %c0_31, %c0_32], %40 {strides = array<i32>} : memref<1x2x1024xf32, #tpu.memory_space<vmem>>, vector<1x2x1024xf32>,
    return
  }
  func.func @transform_0(%arg0: i32) -> (i32, i32, i32) {
    %c0_i32 = arith.constant 0 : i32
    %c0_i32_0 = arith.constant 0 : i32
    %c0_i32_1 = arith.constant 0 : i32
    return %arg0, %c0_i32, %c0_i32_0 : i32, i32, i32
  }
  func.func @transform_1(%arg0: i32) -> (i32, i32, i32) {
    %c0_i32 = arith.constant 0 : i32
    %c0_i32_0 = arith.constant 0 : i32
    %c0_i32_1 = arith.constant 0 : i32
    return %arg0, %c0_i32, %c0_i32_0 : i32, i32, i32
  }
  func.func @transform_2(%arg0: i32) -> (i32, i32, i32) {
    %c0_i32 = arith.constant 0 : i32
    %c0_i32_0 = arith.constant 0 : i32
    %c0_i32_1 = arith.constant 0 : i32
    return %arg0, %c0_i32, %c0_i32_0 : i32, i32, i32
  }
  func.func @transform_3(%arg0: i32) -> (i32, i32, i32) {
    %c0_i32 = arith.constant 0 : i32
    %c0_i32_0 = arith.constant 0 : i32
    %c0_i32_1 = arith.constant 0 : i32
    return %arg0, %c0_i32, %c0_i32_0 : i32, i32, i32
  }
  func.func @transform_4(%arg0: i32) -> (i32, i32, i32) {
    %c0_i32 = arith.constant 0 : i32
    %c0_i32_0 = arith.constant 0 : i32
    %c0_i32_1 = arith.constant 0 : i32
    return %arg0, %c0_i32, %c0_i32_0 : i32, i32, i32
  }
  func.func @transform_5(%arg0: i32) -> (i32, i32, i32) {
    %c0_i32 = arith.constant 0 : i32
    %c0_i32_0 = arith.constant 0 : i32
    %c0_i32_1 = arith.constant 0 : i32
    return %arg0, %c0_i32, %c0_i32_0 : i32, i32, i32
  }
  func.func @transform_6(%arg0: i32) -> (i32, i32, i32) {
    %c0_i32 = arith.constant 0 : i32
    %c0_i32_0 = arith.constant 0 : i32
    %c0_i32_1 = arith.constant 0 : i32
    return %arg0, %c0_i32, %c0_i32_0 : i32, i32, i32
  }
  func.func @transform_7(%arg0: i32) -> (i32, i32, i32) {
    %c0_i32 = arith.constant 0 : i32
    %c0_i32_0 = arith.constant 0 : i32
    %c0_i32_1 = arith.constant 0 : i32
    return %arg0, %c0_i32, %c0_i32_0 : i32, i32, i32
  }
  func.func @transform_8(%arg0: i32) -> (i32, i32, i32) {
    %c0_i32 = arith.constant 0 : i32
    %c0_i32_0 = arith.constant 0 : i32
    %c0_i32_1 = arith.constant 0 : i32
    return %arg0, %c0_i32, %c0_i32_0 : i32, i32, i32
  }
  func.func @transform_9(%arg0: i32) -> (i32, i32, i32) {
    %c0_i32 = arith.constant 0 : i32
    %c0_i32_0 = arith.constant 0 : i32
    %c0_i32_1 = arith.constant 0 : i32
    return %arg0, %c0_i32, %c0_i32_0 : i32, i32, i32
  }
}

module attributes {stable_mosaic.version = 11 : i64} {
  func.func @_bmm_bias_act_kernel(%arg0: i32, %arg1: i32, %arg2: memref<1x32x576xf32, #tpu.memory_space<vmem>>, %arg3: memref<1x576x128xf32, #tpu.memory_space<vmem>>, %arg4: memref<1x1x128xf32, #tpu.memory_space<vmem>>, %arg5: memref<1x32x128xf32, #tpu.memory_space<vmem>>) attributes {dimension_semantics = [#tpu.dimension_semantics<parallel>, #tpu.dimension_semantics<parallel>], iteration_bounds = array<i64: 2, 1>, scalar_prefetch = 0 : i64, scratch_operands = 0 : i64, tpu.core_type = #tpu.core_type<tc>, window_params = [{transform_indices = @transform_0, window_bounds = array<i64: 1, 32, 576>}, {transform_indices = @transform_1, window_bounds = array<i64: 1, 576, 128>}, {transform_indices = @transform_2, window_bounds = array<i64: 1, 1, 128>}, {transform_indices = @transform_3, window_bounds = array<i64: 1, 32, 128>}]} {
    %c0 = arith.constant 0 : index
    %c0_0 = arith.constant 0 : index
    %c0_1 = arith.constant 0 : index
    %0 = vector.load %arg2[%c0, %c0_0, %c0_1] : memref<1x32x576xf32, #tpu.memory_space<vmem>>, vector<1x32x576xf32>
    %1 = vector.shape_cast %0 : vector<1x32x576xf32> to vector<32x576xf32>
    %c0_2 = arith.constant 0 : index
    %c0_3 = arith.constant 0 : index
    %c0_4 = arith.constant 0 : index
    %2 = vector.load %arg3[%c0_2, %c0_3, %c0_4] : memref<1x576x128xf32, #tpu.memory_space<vmem>>, vector<1x576x128xf32>
    %3 = vector.shape_cast %2 : vector<1x576x128xf32> to vector<576x128xf32>
    %cst = arith.constant dense<0.000000e+00> : vector<32x128xf32>
    %4 = tpu.matmul %1, %3, %cst {dimension_numbers = #tpu.dot_dimension_numbers<[1], [0], [0], [1], [0, 0, 1, 1], [], []>} : vector<32x576xf32>, vector<576x128xf32>, vector<32x128xf32> -> vector<32x128xf32>
    %c0_5 = arith.constant 0 : index
    %c0_6 = arith.constant 0 : index
    %c0_7 = arith.constant 0 : index
    %5 = vector.load %arg4[%c0_5, %c0_6, %c0_7] : memref<1x1x128xf32, #tpu.memory_space<vmem>>, vector<1x1x128xf32>
    %6 = vector.shape_cast %5 : vector<1x1x128xf32> to vector<1x128xf32>
    %7 = vector.broadcast %6 : vector<1x128xf32> to vector<32x128xf32>
    %8 = arith.addf %4, %7 : vector<32x128xf32>
    %cst_8 = arith.constant 0.000000e+00 : f32
    %9 = vector.broadcast %cst_8 : f32 to vector<32x128xf32>
    %10 = arith.maximumf %8, %9 : vector<32x128xf32>
    %c0_9 = arith.constant 0 : index
    %c0_10 = arith.constant 0 : index
    %c0_11 = arith.constant 0 : index
    %11 = vector.load %arg5[%c0_9, %c0_10, %c0_11] : memref<1x32x128xf32, #tpu.memory_space<vmem>>, vector<1x32x128xf32>
    %12 = vector.shape_cast %11 : vector<1x32x128xf32> to vector<32x128xf32>
    %13 = vector.shape_cast %10 : vector<32x128xf32> to vector<1x32x128xf32>
    tpu.vector_store %arg5[%c0_9, %c0_10, %c0_11], %13 {strides = array<i32>} : memref<1x32x128xf32, #tpu.memory_space<vmem>>, vector<1x32x128xf32>,
    return
  }
  func.func @transform_0(%arg0: i32, %arg1: i32) -> (i32, i32, i32) {
    %c0_i32 = arith.constant 0 : i32
    %c0_i32_0 = arith.constant 0 : i32
    return %arg0, %arg1, %c0_i32 : i32, i32, i32
  }
  func.func @transform_1(%arg0: i32, %arg1: i32) -> (i32, i32, i32) {
    %c0_i32 = arith.constant 0 : i32
    %c0_i32_0 = arith.constant 0 : i32
    %c0_i32_1 = arith.constant 0 : i32
    return %arg0, %c0_i32, %c0_i32_0 : i32, i32, i32
  }
  func.func @transform_2(%arg0: i32, %arg1: i32) -> (i32, i32, i32) {
    %c0_i32 = arith.constant 0 : i32
    %c0_i32_0 = arith.constant 0 : i32
    %c0_i32_1 = arith.constant 0 : i32
    return %arg0, %c0_i32, %c0_i32_0 : i32, i32, i32
  }
  func.func @transform_3(%arg0: i32, %arg1: i32) -> (i32, i32, i32) {
    %c0_i32 = arith.constant 0 : i32
    %c0_i32_0 = arith.constant 0 : i32
    return %arg0, %arg1, %c0_i32 : i32, i32, i32
  }
}

module attributes {stable_mosaic.version = 11 : i64} {
  func.func @_bmm_bias_act_kernel(%arg0: i32, %arg1: i32, %arg2: memref<1x128x288xf32, #tpu.memory_space<vmem>>, %arg3: memref<1x288x128xf32, #tpu.memory_space<vmem>>, %arg4: memref<1x1x128xf32, #tpu.memory_space<vmem>>, %arg5: memref<1x128x128xf32, #tpu.memory_space<vmem>>) attributes {dimension_semantics = [#tpu.dimension_semantics<parallel>, #tpu.dimension_semantics<parallel>], iteration_bounds = array<i64: 2, 1>, scalar_prefetch = 0 : i64, scratch_operands = 0 : i64, tpu.core_type = #tpu.core_type<tc>, window_params = [{transform_indices = @transform_0, window_bounds = array<i64: 1, 128, 288>}, {transform_indices = @transform_1, window_bounds = array<i64: 1, 288, 128>}, {transform_indices = @transform_2, window_bounds = array<i64: 1, 1, 128>}, {transform_indices = @transform_3, window_bounds = array<i64: 1, 128, 128>}]} {
    %c0 = arith.constant 0 : index
    %c0_0 = arith.constant 0 : index
    %c0_1 = arith.constant 0 : index
    %0 = vector.load %arg2[%c0, %c0_0, %c0_1] : memref<1x128x288xf32, #tpu.memory_space<vmem>>, vector<1x128x288xf32>
    %1 = vector.shape_cast %0 : vector<1x128x288xf32> to vector<128x288xf32>
    %c0_2 = arith.constant 0 : index
    %c0_3 = arith.constant 0 : index
    %c0_4 = arith.constant 0 : index
    %2 = vector.load %arg3[%c0_2, %c0_3, %c0_4] : memref<1x288x128xf32, #tpu.memory_space<vmem>>, vector<1x288x128xf32>
    %3 = vector.shape_cast %2 : vector<1x288x128xf32> to vector<288x128xf32>
    %cst = arith.constant dense<0.000000e+00> : vector<128x128xf32>
    %4 = tpu.matmul %1, %3, %cst {dimension_numbers = #tpu.dot_dimension_numbers<[1], [0], [0], [1], [0, 0, 1, 1], [], []>} : vector<128x288xf32>, vector<288x128xf32>, vector<128x128xf32> -> vector<128x128xf32>
    %c0_5 = arith.constant 0 : index
    %c0_6 = arith.constant 0 : index
    %c0_7 = arith.constant 0 : index
    %5 = vector.load %arg4[%c0_5, %c0_6, %c0_7] : memref<1x1x128xf32, #tpu.memory_space<vmem>>, vector<1x1x128xf32>
    %6 = vector.shape_cast %5 : vector<1x1x128xf32> to vector<1x128xf32>
    %7 = vector.broadcast %6 : vector<1x128xf32> to vector<128x128xf32>
    %8 = arith.addf %4, %7 : vector<128x128xf32>
    %cst_8 = arith.constant 0.000000e+00 : f32
    %9 = vector.broadcast %cst_8 : f32 to vector<128x128xf32>
    %10 = arith.maximumf %8, %9 : vector<128x128xf32>
    %c0_9 = arith.constant 0 : index
    %c0_10 = arith.constant 0 : index
    %c0_11 = arith.constant 0 : index
    %11 = vector.load %arg5[%c0_9, %c0_10, %c0_11] : memref<1x128x128xf32, #tpu.memory_space<vmem>>, vector<1x128x128xf32>
    %12 = vector.shape_cast %11 : vector<1x128x128xf32> to vector<128x128xf32>
    %13 = vector.shape_cast %10 : vector<128x128xf32> to vector<1x128x128xf32>
    tpu.vector_store %arg5[%c0_9, %c0_10, %c0_11], %13 {strides = array<i32>} : memref<1x128x128xf32, #tpu.memory_space<vmem>>, vector<1x128x128xf32>,
    return
  }
  func.func @transform_0(%arg0: i32, %arg1: i32) -> (i32, i32, i32) {
    %c0_i32 = arith.constant 0 : i32
    %c0_i32_0 = arith.constant 0 : i32
    return %arg0, %arg1, %c0_i32 : i32, i32, i32
  }
  func.func @transform_1(%arg0: i32, %arg1: i32) -> (i32, i32, i32) {
    %c0_i32 = arith.constant 0 : i32
    %c0_i32_0 = arith.constant 0 : i32
    %c0_i32_1 = arith.constant 0 : i32
    return %arg0, %c0_i32, %c0_i32_0 : i32, i32, i32
  }
  func.func @transform_2(%arg0: i32, %arg1: i32) -> (i32, i32, i32) {
    %c0_i32 = arith.constant 0 : i32
    %c0_i32_0 = arith.constant 0 : i32
    %c0_i32_1 = arith.constant 0 : i32
    return %arg0, %c0_i32, %c0_i32_0 : i32, i32, i32
  }
  func.func @transform_3(%arg0: i32, %arg1: i32) -> (i32, i32, i32) {
    %c0_i32 = arith.constant 0 : i32
    %c0_i32_0 = arith.constant 0 : i32
    return %arg0, %arg1, %c0_i32 : i32, i32, i32
  }
}

module attributes {stable_mosaic.version = 11 : i64} {
  func.func @_bmm_bias_act_kernel(%arg0: i32, %arg1: i32, %arg2: memref<1x512x288xf32, #tpu.memory_space<vmem>>, %arg3: memref<1x288x12xf32, #tpu.memory_space<vmem>>, %arg4: memref<1x1x12xf32, #tpu.memory_space<vmem>>, %arg5: memref<1x512x12xf32, #tpu.memory_space<vmem>>) attributes {dimension_semantics = [#tpu.dimension_semantics<parallel>, #tpu.dimension_semantics<parallel>], iteration_bounds = array<i64: 2, 1>, scalar_prefetch = 0 : i64, scratch_operands = 0 : i64, tpu.core_type = #tpu.core_type<tc>, window_params = [{transform_indices = @transform_0, window_bounds = array<i64: 1, 512, 288>}, {transform_indices = @transform_1, window_bounds = array<i64: 1, 288, 12>}, {transform_indices = @transform_2, window_bounds = array<i64: 1, 1, 12>}, {transform_indices = @transform_3, window_bounds = array<i64: 1, 512, 12>}]} {
    %c0 = arith.constant 0 : index
    %c0_0 = arith.constant 0 : index
    %c0_1 = arith.constant 0 : index
    %0 = vector.load %arg2[%c0, %c0_0, %c0_1] : memref<1x512x288xf32, #tpu.memory_space<vmem>>, vector<1x512x288xf32>
    %1 = vector.shape_cast %0 : vector<1x512x288xf32> to vector<512x288xf32>
    %c0_2 = arith.constant 0 : index
    %c0_3 = arith.constant 0 : index
    %c0_4 = arith.constant 0 : index
    %2 = vector.load %arg3[%c0_2, %c0_3, %c0_4] : memref<1x288x12xf32, #tpu.memory_space<vmem>>, vector<1x288x12xf32>
    %3 = vector.shape_cast %2 : vector<1x288x12xf32> to vector<288x12xf32>
    %cst = arith.constant dense<0.000000e+00> : vector<512x12xf32>
    %4 = tpu.matmul %1, %3, %cst {dimension_numbers = #tpu.dot_dimension_numbers<[1], [0], [0], [1], [0, 0, 1, 1], [], []>} : vector<512x288xf32>, vector<288x12xf32>, vector<512x12xf32> -> vector<512x12xf32>
    %c0_5 = arith.constant 0 : index
    %c0_6 = arith.constant 0 : index
    %c0_7 = arith.constant 0 : index
    %5 = vector.load %arg4[%c0_5, %c0_6, %c0_7] : memref<1x1x12xf32, #tpu.memory_space<vmem>>, vector<1x1x12xf32>
    %6 = vector.shape_cast %5 : vector<1x1x12xf32> to vector<1x12xf32>
    %7 = vector.broadcast %6 : vector<1x12xf32> to vector<512x12xf32>
    %8 = arith.addf %4, %7 : vector<512x12xf32>
    %9 = arith.negf %8 : vector<512x12xf32>
    %10 = math.exp %9 : vector<512x12xf32>
    %cst_8 = arith.constant 1.000000e+00 : f32
    %11 = vector.broadcast %cst_8 : f32 to vector<512x12xf32>
    %12 = arith.addf %11, %10 : vector<512x12xf32>
    %13 = arith.divf %11, %12 : vector<512x12xf32>
    %c0_9 = arith.constant 0 : index
    %c0_10 = arith.constant 0 : index
    %c0_11 = arith.constant 0 : index
    %14 = vector.load %arg5[%c0_9, %c0_10, %c0_11] : memref<1x512x12xf32, #tpu.memory_space<vmem>>, vector<1x512x12xf32>
    %15 = vector.shape_cast %14 : vector<1x512x12xf32> to vector<512x12xf32>
    %16 = vector.shape_cast %13 : vector<512x12xf32> to vector<1x512x12xf32>
    tpu.vector_store %arg5[%c0_9, %c0_10, %c0_11], %16 {strides = array<i32>} : memref<1x512x12xf32, #tpu.memory_space<vmem>>, vector<1x512x12xf32>,
    return
  }
  func.func @transform_0(%arg0: i32, %arg1: i32) -> (i32, i32, i32) {
    %c0_i32 = arith.constant 0 : i32
    %c0_i32_0 = arith.constant 0 : i32
    return %arg0, %arg1, %c0_i32 : i32, i32, i32
  }
  func.func @transform_1(%arg0: i32, %arg1: i32) -> (i32, i32, i32) {
    %c0_i32 = arith.constant 0 : i32
    %c0_i32_0 = arith.constant 0 : i32
    %c0_i32_1 = arith.constant 0 : i32
    return %arg0, %c0_i32, %c0_i32_0 : i32, i32, i32
  }
  func.func @transform_2(%arg0: i32, %arg1: i32) -> (i32, i32, i32) {
    %c0_i32 = arith.constant 0 : i32
    %c0_i32_0 = arith.constant 0 : i32
    %c0_i32_1 = arith.constant 0 : i32
    return %arg0, %c0_i32, %c0_i32_0 : i32, i32, i32
  }
  func.func @transform_3(%arg0: i32, %arg1: i32) -> (i32, i32, i32) {
    %c0_i32 = arith.constant 0 : i32
    %c0_i32_0 = arith.constant 0 : i32
    return %arg0, %arg1, %c0_i32 : i32, i32, i32
  }
}

</mosaic_0001>

<llo_original>
// kernel: multi_view_forward.7
$region0: #{multi_view_forward.7}
  #allocation0 [shape = 'u32[]', space=smem, size = 0x4, offset = 0x4, fixed_abs, tag = 'smem constant byte address 0x4 - core index']
  #allocation1 [shape = 'u32[144,128]{1,0:T(1,128)}', space=vmem, size = 0x12000, scoped, tag = 'internal scratch']
  %s0 = inlined_call_operand.vmem [shape: f32[2,512,48], index: 0, kind: input, shape index: {}]
  %s1 = inlined_call_operand.vmem [shape: f32[2,48,32], index: 1, kind: input, shape index: {}]
  %s2 = inlined_call_operand.vmem [shape: f32[2,1,32], index: 2, kind: input, shape index: {}]
  %s3 = inlined_call_operand.vmem [shape: f32[2,512,32], index: 3, kind: output, shape index: {}]
  %s4 = sld [smem:[#allocation0]]
  $region45: #{multi_view_forward.7} parent=0
    _
  %s6 = ssub.s32 1, %s4
  %s7 = scalar_select 0, %s6, %s4
  loop: start=0, step=1, limit=4
  $region2: #{multi_view_forward.7} parent=0 // loop_pre_header
    _
  $region3: #{multi_view_forward.7} parent=0 // loop_header
    %s9 = sphi 0, %s13
    %p10 = scmp.ge.s32.totalorder %s9, 4
    %s16 = sphi 0, %s28
    %s17 = sphi 0, %s24
    %s18 = sphi 0, %s16
    %s19 = sphi 0, %s17
    %s20 = sphi 0, %s18
    %s21 = sphi 0, %s19
    %s33 = sphi 0, %s35
    %s36 = sphi 0, %s33
    %s37 = sphi 0, %s36
    %s53 = sphi 0, %s37
    %s59 = sphi 0, %s61
    %s62 = sphi 0, %s59
    %s63 = sphi 0, %s62
    %s79 = sphi 0, %s63
    %s85 = sphi 0, %s87
    %s88 = sphi 0, %s85
    %s89 = sphi 0, %s88
    %s105 = sphi 0, %s89
    %s113 = sphi 0, %s115
    %s116 = sphi 0, %s113
    %s117 = sphi 0, %s116
    %s133 = sphi 0, %s117
  $region4: #{multi_view_forward.7} parent=0 // loop_header_branch
    %12 = sbr.rel (%p10) target = $region8
  $region5: #{multi_view_forward.7} parent=0 // loop_body
    %s14 = ssub.s32 %s9, 1
    %s15 = ssub.s32 %s9, 2
    %s22 = sadd.s32 1, %s17
    %p23 = scmp.ge.s32.totalorder %s22, 1
    %s24 = scalar_select %p23, 0, %s22
    %s25 = sadd.s32 1, %s16
    %s26 = scalar_select %p23, %s25, %s16
    %p27 = scmp.ge.s32.totalorder %s26, 2
    %s28 = scalar_select %p27, 0, %s26
    %s29 = ssub.s32 %s16, %s28
    %s30 = ssub.s32 %s17, %s24
    %s31 = sor.u32 %s29, %s30
    %p32 = scmp.eq.s32.totalorder %s31, 0
    %s34 = sadd.s32 %s33, 1
    %s35 = scalar_select %p32, %s33, %s34
    %p38 = pneg %p32
    %p39 = scmp.eq.s32.totalorder %s9, 1
    %p40 = por %p38, %p39
    %p41 = scmp.ne.s32.totalorder %s33, %s36
    %p42 = scmp.eq.s32.totalorder %s9, 0
    %p43 = por %p41, %p42
    %p44 = scmp.ne.s32.totalorder %s33, %s36
    %p45 = scmp.eq.s32.totalorder %s14, 1
    %p46 = por %p44, %p45
    %p47 = scmp.ne.s32.totalorder %s36, %s37
    %p48 = scmp.eq.s32.totalorder %s14, 0
    %p49 = por %p47, %p48
    %p50 = scmp.ne.s32.totalorder %s36, %s37
    %p51 = scmp.eq.s32.totalorder %s15, 1
    %p52 = por %p50, %p51
    %p54 = scmp.ne.s32.totalorder %s37, %s53
    %p55 = scmp.eq.s32.totalorder %s15, 0
    %p56 = por %p54, %p55
    %s57 = ssub.s32 %s16, %s28
    %p58 = scmp.eq.s32.totalorder %s57, 0
    %s60 = sadd.s32 %s59, 1
    %s61 = scalar_select %p58, %s59, %s60
    %p64 = pneg %p58
    %p65 = scmp.eq.s32.totalorder %s9, 1
    %p66 = por %p64, %p65
    %p67 = scmp.ne.s32.totalorder %s59, %s62
    %p68 = scmp.eq.s32.totalorder %s9, 0
    %p69 = por %p67, %p68
    %p70 = scmp.ne.s32.totalorder %s59, %s62
    %p71 = scmp.eq.s32.totalorder %s14, 1
    %p72 = por %p70, %p71
    %p73 = scmp.ne.s32.totalorder %s62, %s63
    %p74 = scmp.eq.s32.totalorder %s14, 0
    %p75 = por %p73, %p74
    %p76 = scmp.ne.s32.totalorder %s62, %s63
    %p77 = scmp.eq.s32.totalorder %s15, 1
    %p78 = por %p76, %p77
    %p80 = scmp.ne.s32.totalorder %s63, %s79
    %p81 = scmp.eq.s32.totalorder %s15, 0
    %p82 = por %p80, %p81
    %s83 = ssub.s32 %s16, %s28
    %p84 = scmp.eq.s32.totalorder %s83, 0
    %s86 = sadd.s32 %s85, 1
    %s87 = scalar_select %p84, %s85, %s86
    %p90 = pneg %p84
    %p91 = scmp.eq.s32.totalorder %s9, 1
    %p92 = por %p90, %p91
    %p93 = scmp.ne.s32.totalorder %s85, %s88
    %p94 = scmp.eq.s32.totalorder %s9, 0
    %p95 = por %p93, %p94
    %p96 = scmp.ne.s32.totalorder %s85, %s88
    %p97 = scmp.eq.s32.totalorder %s14, 1
    %p98 = por %p96, %p97
    %p99 = scmp.ne.s32.totalorder %s88, %s89
    %p100 = scmp.eq.s32.totalorder %s14, 0
    %p101 = por %p99, %p100
    %p102 = scmp.ne.s32.totalorder %s88, %s89
    %p103 = scmp.eq.s32.totalorder %s15, 1
    %p104 = por %p102, %p103
    %p106 = scmp.ne.s32.totalorder %s89, %s105
    %p107 = scmp.eq.s32.totalorder %s15, 0
    %p108 = por %p106, %p107
    %s109 = ssub.s32 %s16, %s28
    %s110 = ssub.s32 %s17, %s24
    %s111 = sor.u32 %s109, %s110
    %p112 = scmp.eq.s32.totalorder %s111, 0
    %s114 = sadd.s32 %s113, 1
    %s115 = scalar_select %p112, %s113, %s114
    %p118 = pneg %p112
    %p119 = scmp.eq.s32.totalorder %s9, 1
    %p120 = por %p118, %p119
    %p121 = scmp.ne.s32.totalorder %s113, %s116
    %p122 = scmp.eq.s32.totalorder %s9, 0
    %p123 = por %p121, %p122
    %p124 = scmp.ne.s32.totalorder %s113, %s116
    %p125 = scmp.eq.s32.totalorder %s14, 1
    %p126 = por %p124, %p125
    %p127 = scmp.ne.s32.totalorder %s116, %s117
    %p128 = scmp.eq.s32.totalorder %s14, 0
    %p129 = por %p127, %p128
    %p130 = scmp.ne.s32.totalorder %s116, %s117
    %p131 = scmp.eq.s32.totalorder %s15, 1
    %p132 = por %p130, %p131
    %p134 = scmp.ne.s32.totalorder %s117, %s133
    %p135 = scmp.eq.s32.totalorder %s15, 0
    %p136 = por %p134, %p135
    %p137 = scmp.le.s32.totalorder 1, %s9
    %p138 = scmp.lt.s32.totalorder %s9, 3
    %p139 = pnand %p137, %p138
    %p140 = pneg %p139
    // Predicated region
    $region9: #{multi_view_forward.7} parent=5 // pred_check
      _
    $region10: #{multi_view_forward.7} parent=5 // pred_check_branch
      %142 = sbr.rel (%p139) target = $region12
    $region11: #{multi_view_forward.7} parent=5 // pred_region
      %s143 = ssub.s32 %s9, 1
    $region12: #{multi_view_forward.7} parent=5 // pred_fallthru
      _
    %p144 = scmp.lt.s32.totalorder %s9, 2
    // Predicated region
    $region13: #{multi_view_forward.7} parent=5 // pred_check
      %p145 = pneg %p144
    $region14: #{multi_view_forward.7} parent=5 // pred_check_branch
      %147 = sbr.rel (%p145) target = $region16
    $region15: #{multi_view_forward.7} parent=5 // pred_region
      // Predicated region
      $region17: #{multi_view_forward.7} parent=15 // pred_check
        %p148 = pneg %p43
      $region18: #{multi_view_forward.7} parent=15 // pred_check_branch
        %150 = sbr.rel (%p148) target = $region20
      $region19: #{multi_view_forward.7} parent=15 // pred_region
        %s151 = smul.u32 64, %s17
        %p152 = scmp.lt.s32.totalorder %s16, 1
        %s153 = scalar_select %p152, %s16, 1
        %p154 = scmp.lt.s32.totalorder %s151, 63
        %s155 = scalar_select %p154, %s151, 63
        %s156 = smul.addr %s153, 64
        %s157 = sadd.s32 %s155, %s156
        %s158 = smul.addr %s157, 8
        %s159 = scalar_lea.vmem %s0, %s158
        %s160 = smul.u32 64, %s17
      $region20: #{multi_view_forward.7} parent=15 // pred_fallthru
        _
      // Predicated region
      $region21: #{multi_view_forward.7} parent=15 // pred_check
        %p161 = pneg %p69
      $region22: #{multi_view_forward.7} parent=15 // pred_check_branch
        %163 = sbr.rel (%p161) target = $region24
      $region23: #{multi_view_forward.7} parent=15 // pred_region
        %p164 = scmp.lt.s32.totalorder %s16, 1
        %s165 = scalar_select %p164, %s16, 1
        %s166 = smul.addr %s165, 6
        %s167 = smul.addr %s166, 8
        %s168 = scalar_lea.vmem %s1, %s167
      $region24: #{multi_view_forward.7} parent=15 // pred_fallthru
        _
      // Predicated region
      $region25: #{multi_view_forward.7} parent=15 // pred_check
        %p169 = pneg %p95
      $region26: #{multi_view_forward.7} parent=15 // pred_check_branch
        %171 = sbr.rel (%p169) target = $region28
      $region27: #{multi_view_forward.7} parent=15 // pred_region
        %p172 = scmp.lt.s32.totalorder %s16, 1
        %s173 = scalar_select %p172, %s16, 1
        %s174 = scalar_lea.vmem %s2, %s173
      $region28: #{multi_view_forward.7} parent=15 // pred_fallthru
        _
    $region16: #{multi_view_forward.7} parent=5 // pred_fallthru
      _
    %p175 = scmp.le.s32.totalorder 1, %s9
    %p176 = scmp.lt.s32.totalorder %s9, 3
    %p177 = pnand %p175, %p176
    %p178 = pneg %p177
    // Predicated region
    $region29: #{multi_view_forward.7} parent=5 // pred_check
      _
    $region30: #{multi_view_forward.7} parent=5 // pred_check_branch
      %180 = sbr.rel (%p177) target = $region32
    $region31: #{multi_view_forward.7} parent=5 // pred_region
      %s181 = ssub.s32 %s9, 1
      %s182 = smul.u32 64, %s19
      %p183 = scmp.lt.s32.totalorder %s18, 1
      %s184 = scalar_select %p183, %s18, 1
      %p185 = scmp.lt.s32.totalorder %s182, 63
      %s186 = scalar_select %p185, %s182, 63
      %s187 = smul.addr %s184, 64
      %s188 = sadd.s32 %s186, %s187
      %s189 = smul.addr %s188, 8
      %s190 = scalar_lea.vmem %s0, %s189
      %p191 = pneg %p49
      %p192 = pneg %p46
      %p193 = scmp.lt.s32.totalorder %s18, 1
      %s194 = scalar_select %p193, %s18, 1
      %s195 = smul.addr %s194, 6
      %s196 = smul.addr %s195, 8
      %s197 = scalar_lea.vmem %s1, %s196
      %p198 = pneg %p75
      %p199 = pneg %p72
      %p200 = scmp.lt.s32.totalorder %s18, 1
      %s201 = scalar_select %p200, %s18, 1
      %s202 = scalar_lea.vmem %s2, %s201
      %p203 = pneg %p101
      %p204 = pneg %p98
      %p205 = pneg %p129
      %p206 = pneg %p126
      %s207 = smul.u32 64, %s19
      %p208 = scmp.lt.s32.totalorder %s18, 1
      %s209 = scalar_select %p208, %s18, 1
      %p210 = scmp.lt.s32.totalorder %s207, 63
      %s211 = scalar_select %p210, %s207, 63
      %s212 = smul.addr %s209, 64
      %s213 = sadd.s32 %s211, %s212
      %s214 = smul.addr %s213, 8
      %s215 = scalar_lea.vmem %s3, %s214
      %s216 = smul.u32 64, %s19
      %p217 = scmp.lt.s32.totalorder %s18, 1
      %s218 = scalar_select %p217, %s18, 1
      %p219 = scmp.lt.s32.totalorder %s216, 63
      %s220 = scalar_select %p219, %s216, 63
      %s221 = smul.addr %s218, 64
      %s222 = sadd.s32 %s220, %s221
      %s223 = smul.addr %s222, 8
      %s224 = scalar_lea.vmem %s0, %s223
      %s225 = smul.u32 64, %s19
      %p226 = scmp.lt.s32.totalorder %s18, 1
      %s227 = scalar_select %p226, %s18, 1
      %s228 = smul.addr %s227, 6
      %s229 = smul.addr %s228, 8
      %s230 = scalar_lea.vmem %s1, %s229
      %p231 = scmp.lt.s32.totalorder %s18, 1
      %s232 = scalar_select %p231, %s18, 1
      %s233 = scalar_lea.vmem %s2, %s232
      %s234 = smul.u32 64, %s19
      %p235 = scmp.lt.s32.totalorder %s18, 1
      %s236 = scalar_select %p235, %s18, 1
      %p237 = scmp.lt.s32.totalorder %s234, 63
      %s238 = scalar_select %p237, %s234, 63
      %s239 = smul.addr %s236, 64
      %s240 = sadd.s32 %s238, %s239
      %s241 = smul.addr %s240, 8
      %s242 = scalar_lea.vmem %s3, %s241
      %s243 = smul.u32 64, %s19
      %v244 = vld [vmem:[%s224] sm:$0xff]
      %v245 = vld [vmem:[%s224 + $0x8] sm:$0xff]
      %v246 = vld [vmem:[%s224 + $0x10] sm:$0xff]
      %v247 = vld [vmem:[%s224 + $0x18] sm:$0xff]
      %v248 = vld [vmem:[%s224 + $0x20] sm:$0xff]
      %v249 = vld [vmem:[%s224 + $0x28] sm:$0xff]
      %v250 = vld [vmem:[%s224 + $0x30] sm:$0xff]
      %v251 = vld [vmem:[%s224 + $0x38] sm:$0xff]
      %v252 = vld [vmem:[%s224 + $0x40] sm:$0xff]
      %v253 = vld [vmem:[%s224 + $0x48] sm:$0xff]
      %v254 = vld [vmem:[%s224 + $0x50] sm:$0xff]
      %v255 = vld [vmem:[%s224 + $0x58] sm:$0xff]
      %v256 = vld [vmem:[%s224 + $0x60] sm:$0xff]
      %v257 = vld [vmem:[%s224 + $0x68] sm:$0xff]
      %v258 = vld [vmem:[%s224 + $0x70] sm:$0xff]
      %v259 = vld [vmem:[%s224 + $0x78] sm:$0xff]
      %v260 = vld [vmem:[%s224 + $0x80] sm:$0xff]
      %v261 = vld [vmem:[%s224 + $0x88] sm:$0xff]
      %v262 = vld [vmem:[%s224 + $0x90] sm:$0xff]
      %v263 = vld [vmem:[%s224 + $0x98] sm:$0xff]
      %v264 = vld [vmem:[%s224 + $0xa0] sm:$0xff]
      %v265 = vld [vmem:[%s224 + $0xa8] sm:$0xff]
      %v266 = vld [vmem:[%s224 + $0xb0] sm:$0xff]
      %v267 = vld [vmem:[%s224 + $0xb8] sm:$0xff]
      %v268 = vld [vmem:[%s224 + $0xc0] sm:$0xff]
      %v269 = vld [vmem:[%s224 + $0xc8] sm:$0xff]
      %v270 = vld [vmem:[%s224 + $0xd0] sm:$0xff]
      %v271 = vld [vmem:[%s224 + $0xd8] sm:$0xff]
      %v272 = vld [vmem:[%s224 + $0xe0] sm:$0xff]
      %v273 = vld [vmem:[%s224 + $0xe8] sm:$0xff]
      %v274 = vld [vmem:[%s224 + $0xf0] sm:$0xff]
      %v275 = vld [vmem:[%s224 + $0xf8] sm:$0xff]
      %v276 = vld [vmem:[%s224 + $0x100] sm:$0xff]
      %v277 = vld [vmem:[%s224 + $0x108] sm:$0xff]
      %v278 = vld [vmem:[%s224 + $0x110] sm:$0xff]
      %v279 = vld [vmem:[%s224 + $0x118] sm:$0xff]
      %v280 = vld [vmem:[%s224 + $0x120] sm:$0xff]
      %v281 = vld [vmem:[%s224 + $0x128] sm:$0xff]
      %v282 = vld [vmem:[%s224 + $0x130] sm:$0xff]
      %v283 = vld [vmem:[%s224 + $0x138] sm:$0xff]
      %v284 = vld [vmem:[%s224 + $0x140] sm:$0xff]
      %v285 = vld [vmem:[%s224 + $0x148] sm:$0xff]
      %v286 = vld [vmem:[%s224 + $0x150] sm:$0xff]
      %v287 = vld [vmem:[%s224 + $0x158] sm:$0xff]
      %v288 = vld [vmem:[%s224 + $0x160] sm:$0xff]
      %v289 = vld [vmem:[%s224 + $0x168] sm:$0xff]
      %v290 = vld [vmem:[%s224 + $0x170] sm:$0xff]
      %v291 = vld [vmem:[%s224 + $0x178] sm:$0xff]
      %v292 = vld [vmem:[%s224 + $0x180] sm:$0xff]
      %v293 = vld [vmem:[%s224 + $0x188] sm:$0xff]
      %v294 = vld [vmem:[%s224 + $0x190] sm:$0xff]
      %v295 = vld [vmem:[%s224 + $0x198] sm:$0xff]
      %v296 = vld [vmem:[%s224 + $0x1a0] sm:$0xff]
      %v297 = vld [vmem:[%s224 + $0x1a8] sm:$0xff]
      %v298 = vld [vmem:[%s224 + $0x1b0] sm:$0xff]
      %v299 = vld [vmem:[%s224 + $0x1b8] sm:$0xff]
      %v300 = vld [vmem:[%s224 + $0x1c0] sm:$0xff]
      %v301 = vld [vmem:[%s224 + $0x1c8] sm:$0xff]
      %v302 = vld [vmem:[%s224 + $0x1d0] sm:$0xff]
      %v303 = vld [vmem:[%s224 + $0x1d8] sm:$0xff]
      %v304 = vld [vmem:[%s224 + $0x1e0] sm:$0xff]
      %v305 = vld [vmem:[%s224 + $0x1e8] sm:$0xff]
      %v306 = vld [vmem:[%s224 + $0x1f0] sm:$0xff]
      %v307 = vld [vmem:[%s224 + $0x1f8] sm:$0xff]
      %v308 = vld [vmem:[%s230] sm:$0xff]
      %v309 = vld [vmem:[%s230 + $0x8] sm:$0xff]
      %v310 = vld [vmem:[%s230 + $0x10] sm:$0xff]
      %v311 = vld [vmem:[%s230 + $0x18] sm:$0xff]
      %v312 = vld [vmem:[%s230 + $0x20] sm:$0xff]
      %v313 = vld [vmem:[%s230 + $0x28] sm:$0xff]
      %v314 = vld [vmem:[%s233] sm:$0x1]
      %v316 = vlaneseq
      %v317 = vshrl.u32 %v316, 7
      %v318 = vsub.s32 0, %v317
      %v319 = vrot.slane %v314, %v318
      %vm321 = vcmask 392192
      %v323 = vsel %vm321, %v244, 0
      %v326 = vsel %vm321, %v245, 0
      %v329 = vsel %vm321, %v246, 0
      %v332 = vsel %vm321, %v247, 0
      %v335 = vsel %vm321, %v248, 0
      %v338 = vsel %vm321, %v249, 0
      %v341 = vsel %vm321, %v250, 0
      %v344 = vsel %vm321, %v251, 0
      %v347 = vsel %vm321, %v252, 0
      %v350 = vsel %vm321, %v253, 0
      %v353 = vsel %vm321, %v254, 0
      %v356 = vsel %vm321, %v255, 0
      %v359 = vsel %vm321, %v256, 0
      %v362 = vsel %vm321, %v257, 0
      %v365 = vsel %vm321, %v258, 0
      %v368 = vsel %vm321, %v259, 0
      %v371 = vsel %vm321, %v260, 0
      %v374 = vsel %vm321, %v261, 0
      %v377 = vsel %vm321, %v262, 0
      %v380 = vsel %vm321, %v263, 0
      %v383 = vsel %vm321, %v264, 0
      %v386 = vsel %vm321, %v265, 0
      %v389 = vsel %vm321, %v266, 0
      %v392 = vsel %vm321, %v267, 0
      %v395 = vsel %vm321, %v268, 0
      %v398 = vsel %vm321, %v269, 0
      %v401 = vsel %vm321, %v270, 0
      %v404 = vsel %vm321, %v271, 0
      %v407 = vsel %vm321, %v272, 0
      %v410 = vsel %vm321, %v273, 0
      %v413 = vsel %vm321, %v274, 0
      %v416 = vsel %vm321, %v275, 0
      %v419 = vsel %vm321, %v276, 0
      %v422 = vsel %vm321, %v277, 0
      %v425 = vsel %vm321, %v278, 0
      %v428 = vsel %vm321, %v279, 0
      %v431 = vsel %vm321, %v280, 0
      %v434 = vsel %vm321, %v281, 0
      %v437 = vsel %vm321, %v282, 0
      %v440 = vsel %vm321, %v283, 0
      %v443 = vsel %vm321, %v284, 0
      %v446 = vsel %vm321, %v285, 0
      %v449 = vsel %vm321, %v286, 0
      %v452 = vsel %vm321, %v287, 0
      %v455 = vsel %vm321, %v288, 0
      %v458 = vsel %vm321, %v289, 0
      %v461 = vsel %vm321, %v290, 0
      %v464 = vsel %vm321, %v291, 0
      %v467 = vsel %vm321, %v292, 0
      %v470 = vsel %vm321, %v293, 0
      %v473 = vsel %vm321, %v294, 0
      %v476 = vsel %vm321, %v295, 0
      %v479 = vsel %vm321, %v296, 0
      %v482 = vsel %vm321, %v297, 0
      %v485 = vsel %vm321, %v298, 0
      %v488 = vsel %vm321, %v299, 0
      %v491 = vsel %vm321, %v300, 0
      %v494 = vsel %vm321, %v301, 0
      %v497 = vsel %vm321, %v302, 0
      %v500 = vsel %vm321, %v303, 0
      %v503 = vsel %vm321, %v304, 0
      %v506 = vsel %vm321, %v305, 0
      %v509 = vsel %vm321, %v306, 0
      %v512 = vsel %vm321, %v307, 0
      %514 = vmatprep.subr.mxu0 0.0
      %515 = vmatpush1.msra.mxu0 %v308
      %516 = vmatprep.subr.mxu0 0.0
      %517 = vmatpush1.msra.mxu0 %v309
      %518 = vmatprep.subr.mxu0 0.0
      %519 = vmatpush1.msra.mxu0 %v310
      %520 = vmatprep.subr.mxu0 0.0
      %521 = vmatpush1.msra.mxu0 %v311
      %522 = vmatprep.subr.mxu0 0.0
      %523 = vmatpush1.msra.mxu0 %v312
      %524 = vmatprep.subr.mxu0 0.0
      %525 = vmatpush1.msra.mxu0 %v313
      %526 = vmatprep.subr.mxu0 0.0
      %527 = vmatpush1.msra.mxu0 0.0
      %528 = vmatprep.subr.mxu0 0.0
      %529 = vmatpush1.msra.mxu0 0.0
      %530 = vmatprep.subr.mxu0 0.0
      %531 = vmatpush1.msra.mxu0 0.0
      %532 = vmatprep.subr.mxu0 0.0
      %533 = vmatpush1.msra.mxu0 0.0
      %534 = vmatprep.subr.mxu0 0.0
      %535 = vmatpush1.msra.mxu0 0.0
      %536 = vmatprep.subr.mxu0 0.0
      %537 = vmatpush1.msra.mxu0 0.0
      %538 = vmatprep.subr.mxu0 0.0
      %539 = vmatpush1.msra.mxu0 0.0
      %540 = vmatprep.subr.mxu0 0.0
      %541 = vmatpush1.msra.mxu0 0.0
      %542 = vmatprep.subr.mxu0 0.0
      %543 = vmatpush1.msra.mxu0 0.0
      %544 = vmatprep.subr.mxu0 0.0
      %545 = vmatpush1.msra.mxu0 0.0
      %546 = vmatprep.subr.mxu0 0.0
      %547 = vmatpush1.msra.mxu0 0.0
      %548 = vmatprep.subr.mxu0 0.0
      %549 = vmatpush1.msra.mxu0 0.0
      %550 = vmatprep.subr.mxu0 0.0
      %551 = vmatpush1.msra.mxu0 0.0
      %552 = vmatprep.subr.mxu0 0.0
      %553 = vmatpush1.msra.mxu0 0.0
      %554 = vmatprep.subr.mxu0 0.0
      %555 = vmatpush1.msra.mxu0 0.0
      %556 = vmatprep.subr.mxu0 0.0
      %557 = vmatpush1.msra.mxu0 0.0
      %558 = vmatprep.subr.mxu0 0.0
      %559 = vmatpush1.msra.mxu0 0.0
      %560 = vmatprep.subr.mxu0 0.0
      %561 = vmatpush1.msra.mxu0 0.0
      %562 = vmatprep.subr.mxu0 0.0
      %563 = vmatpush1.msra.mxu0 0.0
      %564 = vmatprep.subr.mxu0 0.0
      %565 = vmatpush1.msra.mxu0 0.0
      %566 = vmatprep.subr.mxu0 0.0
      %567 = vmatpush1.msra.mxu0 0.0
      %568 = vmatprep.subr.mxu0 0.0
      %569 = vmatpush1.msra.mxu0 0.0
      %570 = vmatprep.subr.mxu0 0.0
      %571 = vmatpush1.msra.mxu0 0.0
      %572 = vmatprep.subr.mxu0 0.0
      %573 = vmatpush1.msra.mxu0 0.0
      %574 = vmatprep.subr.mxu0 0.0
      %575 = vmatpush1.msra.mxu0 0.0
      %576 = vmatprep.subr.mxu0 0.0
      %577 = vmatpush1.msra.mxu0 0.0
      %578 = vmatprep.mubr.f32.mxu0 0.0
      %579 = vmatmul.mubr.f32.gmra.mrb[0].mxu0 %v323
      %v580 = vpop.f32.mrb[0].mxu0
      %v581 = vadd.f32 %v319, %v580
      %v582 = vpop.f32.mrb[0].mxu0
      %583 = vmatprep.mubr.f32.mxu0 0.0
      %584 = vmatmul.mubr.f32.gmra.mrb[0].mxu0 %v326
      %v585 = vpop.f32.mrb[0].mxu0
      %v586 = vadd.f32 %v319, %v585
      %v587 = vpop.f32.mrb[0].mxu0
      %588 = vmatprep.mubr.f32.mxu0 0.0
      %589 = vmatmul.mubr.f32.gmra.mrb[0].mxu0 %v329
      %v590 = vpop.f32.mrb[0].mxu0
      %v591 = vadd.f32 %v319, %v590
      %v592 = vpop.f32.mrb[0].mxu0
      %593 = vmatprep.mubr.f32.mxu0 0.0
      %594 = vmatmul.mubr.f32.gmra.mrb[0].mxu0 %v332
      %v595 = vpop.f32.mrb[0].mxu0
      %v596 = vadd.f32 %v319, %v595
      %v597 = vpop.f32.mrb[0].mxu0
      %598 = vmatprep.mubr.f32.mxu0 0.0
      %599 = vmatmul.mubr.f32.gmra.mrb[0].mxu0 %v335
      %v600 = vpop.f32.mrb[0].mxu0
      %v601 = vadd.f32 %v319, %v600
      %v602 = vpop.f32.mrb[0].mxu0
      %603 = vmatprep.mubr.f32.mxu0 0.0
      %604 = vmatmul.mubr.f32.gmra.mrb[0].mxu0 %v338
      %v605 = vpop.f32.mrb[0].mxu0
      %v606 = vadd.f32 %v319, %v605
      %v607 = vpop.f32.mrb[0].mxu0
      %608 = vmatprep.mubr.f32.mxu0 0.0
      %609 = vmatmul.mubr.f32.gmra.mrb[0].mxu0 %v341
      %v610 = vpop.f32.mrb[0].mxu0
      %v611 = vadd.f32 %v319, %v610
      %v612 = vpop.f32.mrb[0].mxu0
      %613 = vmatprep.mubr.f32.mxu0 0.0
      %614 = vmatmul.mubr.f32.gmra.mrb[0].mxu0 %v344
      %v615 = vpop.f32.mrb[0].mxu0
      %v616 = vadd.f32 %v319, %v615
      %v617 = vpop.f32.mrb[0].mxu0
      %618 = vmatprep.mubr.f32.mxu0 0.0
      %619 = vmatmul.mubr.f32.gmra.mrb[0].mxu0 %v347
      %v620 = vpop.f32.mrb[0].mxu0
      %v621 = vadd.f32 %v319, %v620
      %v622 = vpop.f32.mrb[0].mxu0
      %623 = vmatprep.mubr.f32.mxu0 0.0
      %624 = vmatmul.mubr.f32.gmra.mrb[0].mxu0 %v350
      %v625 = vpop.f32.mrb[0].mxu0
      %v626 = vadd.f32 %v319, %v625
      %v627 = vpop.f32.mrb[0].mxu0
      %628 = vmatprep.mubr.f32.mxu0 0.0
      %629 = vmatmul.mubr.f32.gmra.mrb[0].mxu0 %v353
      %v630 = vpop.f32.mrb[0].mxu0
      %v631 = vadd.f32 %v319, %v630
      %v632 = vpop.f32.mrb[0].mxu0
      %633 = vmatprep.mubr.f32.mxu0 0.0
      %634 = vmatmul.mubr.f32.gmra.mrb[0].mxu0 %v356
      %v635 = vpop.f32.mrb[0].mxu0
      %v636 = vadd.f32 %v319, %v635
      %v637 = vpop.f32.mrb[0].mxu0
      %638 = vmatprep.mubr.f32.mxu0 0.0
      %639 = vmatmul.mubr.f32.gmra.mrb[0].mxu0 %v359
      %v640 = vpop.f32.mrb[0].mxu0
      %v641 = vadd.f32 %v319, %v640
      %v642 = vpop.f32.mrb[0].mxu0
      %643 = vmatprep.mubr.f32.mxu0 0.0
      %644 = vmatmul.mubr.f32.gmra.mrb[0].mxu0 %v362
      %v645 = vpop.f32.mrb[0].mxu0
      %v646 = vadd.f32 %v319, %v645
      %v647 = vpop.f32.mrb[0].mxu0
      %648 = vmatprep.mubr.f32.mxu0 0.0
      %649 = vmatmul.mubr.f32.gmra.mrb[0].mxu0 %v365
      %v650 = vpop.f32.mrb[0].mxu0
      %v651 = vadd.f32 %v319, %v650
      %v652 = vpop.f32.mrb[0].mxu0
      %653 = vmatprep.mubr.f32.mxu0 0.0
      %654 = vmatmul.mubr.f32.gmra.mrb[0].mxu0 %v368
      %v655 = vpop.f32.mrb[0].mxu0
      %v656 = vadd.f32 %v319, %v655
      %v657 = vpop.f32.mrb[0].mxu0
      %658 = vmatprep.mubr.f32.mxu0 0.0
      %659 = vmatmul.mubr.f32.gmra.mrb[0].mxu0 %v371
      %v660 = vpop.f32.mrb[0].mxu0
      %v661 = vadd.f32 %v319, %v660
      %v662 = vpop.f32.mrb[0].mxu0
      %663 = vmatprep.mubr.f32.mxu0 0.0
      %664 = vmatmul.mubr.f32.gmra.mrb[0].mxu0 %v374
      %v665 = vpop.f32.mrb[0].mxu0
      %v666 = vadd.f32 %v319, %v665
      %v667 = vpop.f32.mrb[0].mxu0
      %668 = vmatprep.mubr.f32.mxu0 0.0
      %669 = vmatmul.mubr.f32.gmra.mrb[0].mxu0 %v377
      %v670 = vpop.f32.mrb[0].mxu0
      %v671 = vadd.f32 %v319, %v670
      %v672 = vpop.f32.mrb[0].mxu0
      %673 = vmatprep.mubr.f32.mxu0 0.0
      %674 = vmatmul.mubr.f32.gmra.mrb[0].mxu0 %v380
      %v675 = vpop.f32.mrb[0].mxu0
      %v676 = vadd.f32 %v319, %v675
      %v677 = vpop.f32.mrb[0].mxu0
      %678 = vmatprep.mubr.f32.mxu0 0.0
      %679 = vmatmul.mubr.f32.gmra.mrb[0].mxu0 %v383
      %v680 = vpop.f32.mrb[0].mxu0
      %v681 = vadd.f32 %v319, %v680
      %v682 = vpop.f32.mrb[0].mxu0
      %683 = vmatprep.mubr.f32.mxu0 0.0
      %684 = vmatmul.mubr.f32.gmra.mrb[0].mxu0 %v386
      %v685 = vpop.f32.mrb[0].mxu0
      %v686 = vadd.f32 %v319, %v685
      %v687 = vpop.f32.mrb[0].mxu0
      %688 = vmatprep.mubr.f32.mxu0 0.0
      %689 = vmatmul.mubr.f32.gmra.mrb[0].mxu0 %v389
      %v690 = vpop.f32.mrb[0].mxu0
      %v691 = vadd.f32 %v319, %v690
      %v692 = vpop.f32.mrb[0].mxu0
      %693 = vmatprep.mubr.f32.mxu0 0.0
      %694 = vmatmul.mubr.f32.gmra.mrb[0].mxu0 %v392
      %v695 = vpop.f32.mrb[0].mxu0
      %v696 = vadd.f32 %v319, %v695
      %v697 = vpop.f32.mrb[0].mxu0
      %698 = vmatprep.mubr.f32.mxu0 0.0
      %699 = vmatmul.mubr.f32.gmra.mrb[0].mxu0 %v395
      %v700 = vpop.f32.mrb[0].mxu0
      %v701 = vadd.f32 %v319, %v700
      %v702 = vpop.f32.mrb[0].mxu0
      %703 = vmatprep.mubr.f32.mxu0 0.0
      %704 = vmatmul.mubr.f32.gmra.mrb[0].mxu0 %v398
      %v705 = vpop.f32.mrb[0].mxu0
      %v706 = vadd.f32 %v319, %v705
      %v707 = vpop.f32.mrb[0].mxu0
      %708 = vmatprep.mubr.f32.mxu0 0.0
      %709 = vmatmul.mubr.f32.gmra.mrb[0].mxu0 %v401
      %v710 = vpop.f32.mrb[0].mxu0
      %v711 = vadd.f32 %v319, %v710
      %v712 = vpop.f32.mrb[0].mxu0
      %713 = vmatprep.mubr.f32.mxu0 0.0
      %714 = vmatmul.mubr.f32.gmra.mrb[0].mxu0 %v404
      %v715 = vpop.f32.mrb[0].mxu0
      %v716 = vadd.f32 %v319, %v715
      %v717 = vpop.f32.mrb[0].mxu0
      %718 = vmatprep.mubr.f32.mxu0 0.0
      %719 = vmatmul.mubr.f32.gmra.mrb[0].mxu0 %v407
      %v720 = vpop.f32.mrb[0].mxu0
      %v721 = vadd.f32 %v319, %v720
      %v722 = vpop.f32.mrb[0].mxu0
      %723 = vmatprep.mubr.f32.mxu0 0.0
      %724 = vmatmul.mubr.f32.gmra.mrb[0].mxu0 %v410
      %v725 = vpop.f32.mrb[0].mxu0
      %v726 = vadd.f32 %v319, %v725
      %v727 = vpop.f32.mrb[0].mxu0
      %728 = vmatprep.mubr.f32.mxu0 0.0
      %729 = vmatmul.mubr.f32.gmra.mrb[0].mxu0 %v413
      %v730 = vpop.f32.mrb[0].mxu0
      %v731 = vadd.f32 %v319, %v730
      %v732 = vpop.f32.mrb[0].mxu0
      %733 = vmatprep.mubr.f32.mxu0 0.0
      %734 = vmatmul.mubr.f32.gmra.mrb[0].mxu0 %v416
      %v735 = vpop.f32.mrb[0].mxu0
      %v736 = vadd.f32 %v319, %v735
      %v737 = vpop.f32.mrb[0].mxu0
      %738 = vmatprep.mubr.f32.mxu0 0.0
      %739 = vmatmul.mubr.f32.gmra.mrb[0].mxu0 %v419
      %v740 = vpop.f32.mrb[0].mxu0
      %v741 = vadd.f32 %v319, %v740
      %v742 = vpop.f32.mrb[0].mxu0
      %743 = vmatprep.mubr.f32.mxu0 0.0
      %744 = vmatmul.mubr.f32.gmra.mrb[0].mxu0 %v422
      %v745 = vpop.f32.mrb[0].mxu0
      %v746 = vadd.f32 %v319, %v745
      %v747 = vpop.f32.mrb[0].mxu0
      %748 = vmatprep.mubr.f32.mxu0 0.0
      %749 = vmatmul.mubr.f32.gmra.mrb[0].mxu0 %v425
      %v750 = vpop.f32.mrb[0].mxu0
      %v751 = vadd.f32 %v319, %v750
      %v752 = vpop.f32.mrb[0].mxu0
      %753 = vmatprep.mubr.f32.mxu0 0.0
      %754 = vmatmul.mubr.f32.gmra.mrb[0].mxu0 %v428
      %v755 = vpop.f32.mrb[0].mxu0
      %v756 = vadd.f32 %v319, %v755
      %v757 = vpop.f32.mrb[0].mxu0
      %758 = vmatprep.mubr.f32.mxu0 0.0
      %759 = vmatmul.mubr.f32.gmra.mrb[0].mxu0 %v431
      %v760 = vpop.f32.mrb[0].mxu0
      %v761 = vadd.f32 %v319, %v760
      %v762 = vpop.f32.mrb[0].mxu0
      %763 = vmatprep.mubr.f32.mxu0 0.0
      %764 = vmatmul.mubr.f32.gmra.mrb[0].mxu0 %v434
      %v765 = vpop.f32.mrb[0].mxu0
      %v766 = vadd.f32 %v319, %v765
      %v767 = vpop.f32.mrb[0].mxu0
      %768 = vmatprep.mubr.f32.mxu0 0.0
      %769 = vmatmul.mubr.f32.gmra.mrb[0].mxu0 %v437
      %v770 = vpop.f32.mrb[0].mxu0
      %v771 = vadd.f32 %v319, %v770
      %v772 = vpop.f32.mrb[0].mxu0
      %773 = vmatprep.mubr.f32.mxu0 0.0
      %774 = vmatmul.mubr.f32.gmra.mrb[0].mxu0 %v440
      %v775 = vpop.f32.mrb[0].mxu0
      %v776 = vadd.f32 %v319, %v775
      %v777 = vpop.f32.mrb[0].mxu0
      %778 = vmatprep.mubr.f32.mxu0 0.0
      %779 = vmatmul.mubr.f32.gmra.mrb[0].mxu0 %v443
      %v780 = vpop.f32.mrb[0].mxu0
      %v781 = vadd.f32 %v319, %v780
      %v782 = vpop.f32.mrb[0].mxu0
      %783 = vmatprep.mubr.f32.mxu0 0.0
      %784 = vmatmul.mubr.f32.gmra.mrb[0].mxu0 %v446
      %v785 = vpop.f32.mrb[0].mxu0
      %v786 = vadd.f32 %v319, %v785
      %v787 = vpop.f32.mrb[0].mxu0
      %788 = vmatprep.mubr.f32.mxu0 0.0
      %789 = vmatmul.mubr.f32.gmra.mrb[0].mxu0 %v449
      %v790 = vpop.f32.mrb[0].mxu0
      %v791 = vadd.f32 %v319, %v790
      %v792 = vpop.f32.mrb[0].mxu0
      %793 = vmatprep.mubr.f32.mxu0 0.0
      %794 = vmatmul.mubr.f32.gmra.mrb[0].mxu0 %v452
      %v795 = vpop.f32.mrb[0].mxu0
      %v796 = vadd.f32 %v319, %v795
      %v797 = vpop.f32.mrb[0].mxu0
      %798 = vmatprep.mubr.f32.mxu0 0.0
      %799 = vmatmul.mubr.f32.gmra.mrb[0].mxu0 %v455
      %v800 = vpop.f32.mrb[0].mxu0
      %v801 = vadd.f32 %v319, %v800
      %v802 = vpop.f32.mrb[0].mxu0
      %803 = vmatprep.mubr.f32.mxu0 0.0
      %804 = vmatmul.mubr.f32.gmra.mrb[0].mxu0 %v458
      %v805 = vpop.f32.mrb[0].mxu0
      %v806 = vadd.f32 %v319, %v805
      %v807 = vpop.f32.mrb[0].mxu0
      %808 = vmatprep.mubr.f32.mxu0 0.0
      %809 = vmatmul.mubr.f32.gmra.mrb[0].mxu0 %v461
      %v810 = vpop.f32.mrb[0].mxu0
      %v811 = vadd.f32 %v319, %v810
      %v812 = vpop.f32.mrb[0].mxu0
      %813 = vmatprep.mubr.f32.mxu0 0.0
      %814 = vmatmul.mubr.f32.gmra.mrb[0].mxu0 %v464
      %v815 = vpop.f32.mrb[0].mxu0
      %v816 = vadd.f32 %v319, %v815
      %v817 = vpop.f32.mrb[0].mxu0
      %818 = vmatprep.mubr.f32.mxu0 0.0
      %819 = vmatmul.mubr.f32.gmra.mrb[0].mxu0 %v467
      %v820 = vpop.f32.mrb[0].mxu0
      %v821 = vadd.f32 %v319, %v820
      %v822 = vpop.f32.mrb[0].mxu0
      %823 = vmatprep.mubr.f32.mxu0 0.0
      %824 = vmatmul.mubr.f32.gmra.mrb[0].mxu0 %v470
      %v825 = vpop.f32.mrb[0].mxu0
      %v826 = vadd.f32 %v319, %v825
      %v827 = vpop.f32.mrb[0].mxu0
      %828 = vmatprep.mubr.f32.mxu0 0.0
      %829 = vmatmul.mubr.f32.gmra.mrb[0].mxu0 %v473
      %v830 = vpop.f32.mrb[0].mxu0
      %v831 = vadd.f32 %v319, %v830
      %v832 = vpop.f32.mrb[0].mxu0
      %833 = vmatprep.mubr.f32.mxu0 0.0
      %834 = vmatmul.mubr.f32.gmra.mrb[0].mxu0 %v476
      %v835 = vpop.f32.mrb[0].mxu0
      %v836 = vadd.f32 %v319, %v835
      %v837 = vpop.f32.mrb[0].mxu0
      %838 = vmatprep.mubr.f32.mxu0 0.0
      %839 = vmatmul.mubr.f32.gmra.mrb[0].mxu0 %v479
      %v840 = vpop.f32.mrb[0].mxu0
      %v841 = vadd.f32 %v319, %v840
      %v842 = vpop.f32.mrb[0].mxu0
      %843 = vmatprep.mubr.f32.mxu0 0.0
      %844 = vmatmul.mubr.f32.gmra.mrb[0].mxu0 %v482
      %v845 = vpop.f32.mrb[0].mxu0
      %v846 = vadd.f32 %v319, %v845
      %v847 = vpop.f32.mrb[0].mxu0
      %848 = vmatprep.mubr.f32.mxu0 0.0
      %849 = vmatmul.mubr.f32.gmra.mrb[0].mxu0 %v485
      %v850 = vpop.f32.mrb[0].mxu0
      %v851 = vadd.f32 %v319, %v850
      %v852 = vpop.f32.mrb[0].mxu0
      %853 = vmatprep.mubr.f32.mxu0 0.0
      %854 = vmatmul.mubr.f32.gmra.mrb[0].mxu0 %v488
      %v855 = vpop.f32.mrb[0].mxu0
      %v856 = vadd.f32 %v319, %v855
      %v857 = vpop.f32.mrb[0].mxu0
      %858 = vmatprep.mubr.f32.mxu0 0.0
      %859 = vmatmul.mubr.f32.gmra.mrb[0].mxu0 %v491
      %v860 = vpop.f32.mrb[0].mxu0
      %v861 = vadd.f32 %v319, %v860
      %v862 = vpop.f32.mrb[0].mxu0
      %863 = vmatprep.mubr.f32.mxu0 0.0
      %864 = vmatmul.mubr.f32.gmra.mrb[0].mxu0 %v494
      %v865 = vpop.f32.mrb[0].mxu0
      %v866 = vadd.f32 %v319, %v865
      %v867 = vpop.f32.mrb[0].mxu0
      %868 = vmatprep.mubr.f32.mxu0 0.0
      %869 = vmatmul.mubr.f32.gmra.mrb[0].mxu0 %v497
      %v870 = vpop.f32.mrb[0].mxu0
      %v871 = vadd.f32 %v319, %v870
      %v872 = vpop.f32.mrb[0].mxu0
      %873 = vmatprep.mubr.f32.mxu0 0.0
      %874 = vmatmul.mubr.f32.gmra.mrb[0].mxu0 %v500
      %v875 = vpop.f32.mrb[0].mxu0
      %v876 = vadd.f32 %v319, %v875
      %v877 = vpop.f32.mrb[0].mxu0
      %878 = vmatprep.mubr.f32.mxu0 0.0
      %879 = vmatmul.mubr.f32.gmra.mrb[0].mxu0 %v503
      %v880 = vpop.f32.mrb[0].mxu0
      %v881 = vadd.f32 %v319, %v880
      %v882 = vpop.f32.mrb[0].mxu0
      %883 = vmatprep.mubr.f32.mxu0 0.0
      %884 = vmatmul.mubr.f32.gmra.mrb[0].mxu0 %v506
      %v885 = vpop.f32.mrb[0].mxu0
      %v886 = vadd.f32 %v319, %v885
      %v887 = vpop.f32.mrb[0].mxu0
      %888 = vmatprep.mubr.f32.mxu0 0.0
      %889 = vmatmul.mubr.f32.gmra.mrb[0].mxu0 %v509
      %v890 = vpop.f32.mrb[0].mxu0
      %v891 = vadd.f32 %v319, %v890
      %v892 = vpop.f32.mrb[0].mxu0
      %893 = vmatprep.mubr.f32.mxu0 0.0
      %894 = vmatmul.mubr.f32.gmra.mrb[0].mxu0 %v512
      %v895 = vpop.f32.mrb[0].mxu0
      %v896 = vadd.f32 %v319, %v895
      %v897 = vpop.f32.mrb[0].mxu0
      %898 = vdwg.mxu0
      %v899 = vmax.f32 %v581, 0.0
      %v900 = vmax.f32 %v586, 0.0
      %v901 = vmax.f32 %v591, 0.0
      %v902 = vmax.f32 %v596, 0.0
      %v903 = vmax.f32 %v601, 0.0
      %v904 = vmax.f32 %v606, 0.0
      %v905 = vmax.f32 %v611, 0.0
      %v906 = vmax.f32 %v616, 0.0
      %v907 = vmax.f32 %v621, 0.0
      %v908 = vmax.f32 %v626, 0.0
      %v909 = vmax.f32 %v631, 0.0
      %v910 = vmax.f32 %v636, 0.0
      %v911 = vmax.f32 %v641, 0.0
      %v912 = vmax.f32 %v646, 0.0
      %v913 = vmax.f32 %v651, 0.0
      %v914 = vmax.f32 %v656, 0.0
      %v915 = vmax.f32 %v661, 0.0
      %v916 = vmax.f32 %v666, 0.0
      %v917 = vmax.f32 %v671, 0.0
      %v918 = vmax.f32 %v676, 0.0
      %v919 = vmax.f32 %v681, 0.0
      %v920 = vmax.f32 %v686, 0.0
      %v921 = vmax.f32 %v691, 0.0
      %v922 = vmax.f32 %v696, 0.0
      %v923 = vmax.f32 %v701, 0.0
      %v924 = vmax.f32 %v706, 0.0
      %v925 = vmax.f32 %v711, 0.0
      %v926 = vmax.f32 %v716, 0.0
      %v927 = vmax.f32 %v721, 0.0
      %v928 = vmax.f32 %v726, 0.0
      %v929 = vmax.f32 %v731, 0.0
      %v930 = vmax.f32 %v736, 0.0
      %v931 = vmax.f32 %v741, 0.0
      %v932 = vmax.f32 %v746, 0.0
      %v933 = vmax.f32 %v751, 0.0
      %v934 = vmax.f32 %v756, 0.0
      %v935 = vmax.f32 %v761, 0.0
      %v936 = vmax.f32 %v766, 0.0
      %v937 = vmax.f32 %v771, 0.0
      %v938 = vmax.f32 %v776, 0.0
      %v939 = vmax.f32 %v781, 0.0
      %v940 = vmax.f32 %v786, 0.0
      %v941 = vmax.f32 %v791, 0.0
      %v942 = vmax.f32 %v796, 0.0
      %v943 = vmax.f32 %v801, 0.0
      %v944 = vmax.f32 %v806, 0.0
      %v945 = vmax.f32 %v811, 0.0
      %v946 = vmax.f32 %v816, 0.0
      %v947 = vmax.f32 %v821, 0.0
      %v948 = vmax.f32 %v826, 0.0
      %v949 = vmax.f32 %v831, 0.0
      %v950 = vmax.f32 %v836, 0.0
      %v951 = vmax.f32 %v841, 0.0
      %v952 = vmax.f32 %v846, 0.0
      %v953 = vmax.f32 %v851, 0.0
      %v954 = vmax.f32 %v856, 0.0
      %v955 = vmax.f32 %v861, 0.0
      %v956 = vmax.f32 %v866, 0.0
      %v957 = vmax.f32 %v871, 0.0
      %v958 = vmax.f32 %v876, 0.0
      %v959 = vmax.f32 %v881, 0.0
      %v960 = vmax.f32 %v886, 0.0
      %v961 = vmax.f32 %v891, 0.0
      %v962 = vmax.f32 %v896, 0.0
      %vm963 = vcmask 261120
      %964 = vst.msk [vmem:[%s242] sm:$0xff] %vm963, %v899
      %965 = vst.msk [vmem:[%s242 + $0x8] sm:$0xff] %vm963, %v900
      %966 = vst.msk [vmem:[%s242 + $0x10] sm:$0xff] %vm963, %v901
      %967 = vst.msk [vmem:[%s242 + $0x18] sm:$0xff] %vm963, %v902
      %968 = vst.msk [vmem:[%s242 + $0x20] sm:$0xff] %vm963, %v903
      %969 = vst.msk [vmem:[%s242 + $0x28] sm:$0xff] %vm963, %v904
      %970 = vst.msk [vmem:[%s242 + $0x30] sm:$0xff] %vm963, %v905
      %971 = vst.msk [vmem:[%s242 + $0x38] sm:$0xff] %vm963, %v906
      %972 = vst.msk [vmem:[%s242 + $0x40] sm:$0xff] %vm963, %v907
      %973 = vst.msk [vmem:[%s242 + $0x48] sm:$0xff] %vm963, %v908
      %974 = vst.msk [vmem:[%s242 + $0x50] sm:$0xff] %vm963, %v909
      %975 = vst.msk [vmem:[%s242 + $0x58] sm:$0xff] %vm963, %v910
      %976 = vst.msk [vmem:[%s242 + $0x60] sm:$0xff] %vm963, %v911
      %977 = vst.msk [vmem:[%s242 + $0x68] sm:$0xff] %vm963, %v912
      %978 = vst.msk [vmem:[%s242 + $0x70] sm:$0xff] %vm963, %v913
      %979 = vst.msk [vmem:[%s242 + $0x78] sm:$0xff] %vm963, %v914
      %980 = vst.msk [vmem:[%s242 + $0x80] sm:$0xff] %vm963, %v915
      %981 = vst.msk [vmem:[%s242 + $0x88] sm:$0xff] %vm963, %v916
      %982 = vst.msk [vmem:[%s242 + $0x90] sm:$0xff] %vm963, %v917
      %983 = vst.msk [vmem:[%s242 + $0x98] sm:$0xff] %vm963, %v918
      %984 = vst.msk [vmem:[%s242 + $0xa0] sm:$0xff] %vm963, %v919
      %985 = vst.msk [vmem:[%s242 + $0xa8] sm:$0xff] %vm963, %v920
      %986 = vst.msk [vmem:[%s242 + $0xb0] sm:$0xff] %vm963, %v921
      %987 = vst.msk [vmem:[%s242 + $0xb8] sm:$0xff] %vm963, %v922
      %988 = vst.msk [vmem:[%s242 + $0xc0] sm:$0xff] %vm963, %v923
      %989 = vst.msk [vmem:[%s242 + $0xc8] sm:$0xff] %vm963, %v924
      %990 = vst.msk [vmem:[%s242 + $0xd0] sm:$0xff] %vm963, %v925
      %991 = vst.msk [vmem:[%s242 + $0xd8] sm:$0xff] %vm963, %v926
      %992 = vst.msk [vmem:[%s242 + $0xe0] sm:$0xff] %vm963, %v927
      %993 = vst.msk [vmem:[%s242 + $0xe8] sm:$0xff] %vm963, %v928
      %994 = vst.msk [vmem:[%s242 + $0xf0] sm:$0xff] %vm963, %v929
      %995 = vst.msk [vmem:[%s242 + $0xf8] sm:$0xff] %vm963, %v930
      %996 = vst.msk [vmem:[%s242 + $0x100] sm:$0xff] %vm963, %v931
      %997 = vst.msk [vmem:[%s242 + $0x108] sm:$0xff] %vm963, %v932
      %998 = vst.msk [vmem:[%s242 + $0x110] sm:$0xff] %vm963, %v933
      %999 = vst.msk [vmem:[%s242 + $0x118] sm:$0xff] %vm963, %v934
      %1000 = vst.msk [vmem:[%s242 + $0x120] sm:$0xff] %vm963, %v935
      %1001 = vst.msk [vmem:[%s242 + $0x128] sm:$0xff] %vm963, %v936
      %1002 = vst.msk [vmem:[%s242 + $0x130] sm:$0xff] %vm963, %v937
      %1003 = vst.msk [vmem:[%s242 + $0x138] sm:$0xff] %vm963, %v938
      %1004 = vst.msk [vmem:[%s242 + $0x140] sm:$0xff] %vm963, %v939
      %1005 = vst.msk [vmem:[%s242 + $0x148] sm:$0xff] %vm963, %v940
      %1006 = vst.msk [vmem:[%s242 + $0x150] sm:$0xff] %vm963, %v941
      %1007 = vst.msk [vmem:[%s242 + $0x158] sm:$0xff] %vm963, %v942
      %1008 = vst.msk [vmem:[%s242 + $0x160] sm:$0xff] %vm963, %v943
      %1009 = vst.msk [vmem:[%s242 + $0x168] sm:$0xff] %vm963, %v944
      %1010 = vst.msk [vmem:[%s242 + $0x170] sm:$0xff] %vm963, %v945
      %1011 = vst.msk [vmem:[%s242 + $0x178] sm:$0xff] %vm963, %v946
      %1012 = vst.msk [vmem:[%s242 + $0x180] sm:$0xff] %vm963, %v947
      %1013 = vst.msk [vmem:[%s242 + $0x188] sm:$0xff] %vm963, %v948
      %1014 = vst.msk [vmem:[%s242 + $0x190] sm:$0xff] %vm963, %v949
      %1015 = vst.msk [vmem:[%s242 + $0x198] sm:$0xff] %vm963, %v950
      %1016 = vst.msk [vmem:[%s242 + $0x1a0] sm:$0xff] %vm963, %v951
      %1017 = vst.msk [vmem:[%s242 + $0x1a8] sm:$0xff] %vm963, %v952
      %1018 = vst.msk [vmem:[%s242 + $0x1b0] sm:$0xff] %vm963, %v953
      %1019 = vst.msk [vmem:[%s242 + $0x1b8] sm:$0xff] %vm963, %v954
      %1020 = vst.msk [vmem:[%s242 + $0x1c0] sm:$0xff] %vm963, %v955
      %1021 = vst.msk [vmem:[%s242 + $0x1c8] sm:$0xff] %vm963, %v956
      %1022 = vst.msk [vmem:[%s242 + $0x1d0] sm:$0xff] %vm963, %v957
      %1023 = vst.msk [vmem:[%s242 + $0x1d8] sm:$0xff] %vm963, %v958
      %1024 = vst.msk [vmem:[%s242 + $0x1e0] sm:$0xff] %vm963, %v959
      %1025 = vst.msk [vmem:[%s242 + $0x1e8] sm:$0xff] %vm963, %v960
      %1026 = vst.msk [vmem:[%s242 + $0x1f0] sm:$0xff] %vm963, %v961
      %1027 = vst.msk [vmem:[%s242 + $0x1f8] sm:$0xff] %vm963, %v962
      %s1028 = smul.u32 64, %s19
      %p1029 = scmp.lt.s32.totalorder %s18, 1
      %s1030 = scalar_select %p1029, %s18, 1
      %p1031 = scmp.lt.s32.totalorder %s1028, 63
      %s1032 = scalar_select %p1031, %s1028, 63
      %s1033 = smul.addr %s1030, 64
      %s1034 = sadd.s32 %s1032, %s1033
      %s1035 = smul.addr %s1034, 8
      %s1036 = scalar_lea.vmem %s3, %s1035
      // Predicated region
      $region33: #{multi_view_forward.7} parent=31 // pred_check
        %p1037 = pneg %p126
      $region34: #{multi_view_forward.7} parent=31 // pred_check_branch
        %1039 = sbr.rel (%p1037) target = $region36
      $region35: #{multi_view_forward.7} parent=31 // pred_region
        %s1040 = smul.u32 64, %s19
      $region36: #{multi_view_forward.7} parent=31 // pred_fallthru
        _
    $region32: #{multi_view_forward.7} parent=5 // pred_fallthru
      _
    %p1041 = scmp.le.s32.totalorder 2, %s9
    // Predicated region
    $region37: #{multi_view_forward.7} parent=5 // pred_check
      %p1042 = pneg %p1041
    $region38: #{multi_view_forward.7} parent=5 // pred_check_branch
      %1044 = sbr.rel (%p1042) target = $region40
    $region39: #{multi_view_forward.7} parent=5 // pred_region
      %s1045 = ssub.s32 %s9, 2
      // Predicated region
      $region41: #{multi_view_forward.7} parent=39 // pred_check
        %p1046 = pneg %p132
      $region42: #{multi_view_forward.7} parent=39 // pred_check_branch
        %1048 = sbr.rel (%p1046) target = $region44
      $region43: #{multi_view_forward.7} parent=39 // pred_region
        %s1049 = smul.u32 64, %s21
        %p1050 = scmp.lt.s32.totalorder %s20, 1
        %s1051 = scalar_select %p1050, %s20, 1
        %p1052 = scmp.lt.s32.totalorder %s1049, 63
        %s1053 = scalar_select %p1052, %s1049, 63
        %s1054 = smul.addr %s1051, 64
        %s1055 = sadd.s32 %s1053, %s1054
        %s1056 = smul.addr %s1055, 8
        %s1057 = scalar_lea.vmem %s3, %s1056
      $region44: #{multi_view_forward.7} parent=39 // pred_fallthru
        _
    $region40: #{multi_view_forward.7} parent=5 // pred_fallthru
      _
  $region6: #{multi_view_forward.7} parent=0 // loop_footer
    %s13 = sadd.s32 1, %s9
  $region7: #{multi_view_forward.7} parent=0 // loop_footer_branch
    %8 = sbr.rel target = $region3
  $region8: #{multi_view_forward.7} parent=0 // loop_exit
    _

// kernel: multi_view_forward.8
$region0: #{multi_view_forward.8}
  #allocation0 [shape = 'u32[]', space=smem, size = 0x4, offset = 0x4, fixed_abs, tag = 'smem constant byte address 0x4 - core index']
  #allocation1 [shape = 'u32[144,128]{1,0:T(1,128)}', space=vmem, size = 0x12000, scoped, tag = 'internal scratch']
  %s0 = inlined_call_operand.vmem [shape: f32[2,128,512], index: 0, kind: input, shape index: {}]
  %s1 = inlined_call_operand.vmem [shape: f32[2,512,64], index: 1, kind: input, shape index: {}]
  %s2 = inlined_call_operand.vmem [shape: f32[2,1,64], index: 2, kind: input, shape index: {}]
  %s3 = inlined_call_operand.vmem [shape: f32[2,128,64], index: 3, kind: output, shape index: {}]
  %s4 = sld [smem:[#allocation0]]
  $region45: #{multi_view_forward.8} parent=0
    _
  %s6 = ssub.s32 1, %s4
  %s7 = scalar_select 0, %s6, %s4
  loop: start=0, step=1, limit=4
  $region2: #{multi_view_forward.8} parent=0 // loop_pre_header
    _
  $region3: #{multi_view_forward.8} parent=0 // loop_header
    %s9 = sphi 0, %s13
    %p10 = scmp.ge.s32.totalorder %s9, 4
    %s16 = sphi 0, %s28
    %s17 = sphi 0, %s24
    %s18 = sphi 0, %s16
    %s19 = sphi 0, %s17
    %s20 = sphi 0, %s18
    %s21 = sphi 0, %s19
    %s33 = sphi 0, %s35
    %s36 = sphi 0, %s33
    %s37 = sphi 0, %s36
    %s53 = sphi 0, %s37
    %s59 = sphi 0, %s61
    %s62 = sphi 0, %s59
    %s63 = sphi 0, %s62
    %s79 = sphi 0, %s63
    %s85 = sphi 0, %s87
    %s88 = sphi 0, %s85
    %s89 = sphi 0, %s88
    %s105 = sphi 0, %s89
    %s113 = sphi 0, %s115
    %s116 = sphi 0, %s113
    %s117 = sphi 0, %s116
    %s133 = sphi 0, %s117
  $region4: #{multi_view_forward.8} parent=0 // loop_header_branch
    %12 = sbr.rel (%p10) target = $region8
  $region5: #{multi_view_forward.8} parent=0 // loop_body
    %s14 = ssub.s32 %s9, 1
    %s15 = ssub.s32 %s9, 2
    %s22 = sadd.s32 1, %s17
    %p23 = scmp.ge.s32.totalorder %s22, 1
    %s24 = scalar_select %p23, 0, %s22
    %s25 = sadd.s32 1, %s16
    %s26 = scalar_select %p23, %s25, %s16
    %p27 = scmp.ge.s32.totalorder %s26, 2
    %s28 = scalar_select %p27, 0, %s26
    %s29 = ssub.s32 %s16, %s28
    %s30 = ssub.s32 %s17, %s24
    %s31 = sor.u32 %s29, %s30
    %p32 = scmp.eq.s32.totalorder %s31, 0
    %s34 = sadd.s32 %s33, 1
    %s35 = scalar_select %p32, %s33, %s34
    %p38 = pneg %p32
    %p39 = scmp.eq.s32.totalorder %s9, 1
    %p40 = por %p38, %p39
    %p41 = scmp.ne.s32.totalorder %s33, %s36
    %p42 = scmp.eq.s32.totalorder %s9, 0
    %p43 = por %p41, %p42
    %p44 = scmp.ne.s32.totalorder %s33, %s36
    %p45 = scmp.eq.s32.totalorder %s14, 1
    %p46 = por %p44, %p45
    %p47 = scmp.ne.s32.totalorder %s36, %s37
    %p48 = scmp.eq.s32.totalorder %s14, 0
    %p49 = por %p47, %p48
    %p50 = scmp.ne.s32.totalorder %s36, %s37
    %p51 = scmp.eq.s32.totalorder %s15, 1
    %p52 = por %p50, %p51
    %p54 = scmp.ne.s32.totalorder %s37, %s53
    %p55 = scmp.eq.s32.totalorder %s15, 0
    %p56 = por %p54, %p55
    %s57 = ssub.s32 %s16, %s28
    %p58 = scmp.eq.s32.totalorder %s57, 0
    %s60 = sadd.s32 %s59, 1
    %s61 = scalar_select %p58, %s59, %s60
    %p64 = pneg %p58
    %p65 = scmp.eq.s32.totalorder %s9, 1
    %p66 = por %p64, %p65
    %p67 = scmp.ne.s32.totalorder %s59, %s62
    %p68 = scmp.eq.s32.totalorder %s9, 0
    %p69 = por %p67, %p68
    %p70 = scmp.ne.s32.totalorder %s59, %s62
    %p71 = scmp.eq.s32.totalorder %s14, 1
    %p72 = por %p70, %p71
    %p73 = scmp.ne.s32.totalorder %s62, %s63
    %p74 = scmp.eq.s32.totalorder %s14, 0
    %p75 = por %p73, %p74
    %p76 = scmp.ne.s32.totalorder %s62, %s63
    %p77 = scmp.eq.s32.totalorder %s15, 1
    %p78 = por %p76, %p77
    %p80 = scmp.ne.s32.totalorder %s63, %s79
    %p81 = scmp.eq.s32.totalorder %s15, 0
    %p82 = por %p80, %p81
    %s83 = ssub.s32 %s16, %s28
    %p84 = scmp.eq.s32.totalorder %s83, 0
    %s86 = sadd.s32 %s85, 1
    %s87 = scalar_select %p84, %s85, %s86
    %p90 = pneg %p84
    %p91 = scmp.eq.s32.totalorder %s9, 1
    %p92 = por %p90, %p91
    %p93 = scmp.ne.s32.totalorder %s85, %s88
    %p94 = scmp.eq.s32.totalorder %s9, 0
    %p95 = por %p93, %p94
    %p96 = scmp.ne.s32.totalorder %s85, %s88
    %p97 = scmp.eq.s32.totalorder %s14, 1
    %p98 = por %p96, %p97
    %p99 = scmp.ne.s32.totalorder %s88, %s89
    %p100 = scmp.eq.s32.totalorder %s14, 0
    %p101 = por %p99, %p100
    %p102 = scmp.ne.s32.totalorder %s88, %s89
    %p103 = scmp.eq.s32.totalorder %s15, 1
    %p104 = por %p102, %p103
    %p106 = scmp.ne.s32.totalorder %s89, %s105
    %p107 = scmp.eq.s32.totalorder %s15, 0
    %p108 = por %p106, %p107
    %s109 = ssub.s32 %s16, %s28
    %s110 = ssub.s32 %s17, %s24
    %s111 = sor.u32 %s109, %s110
    %p112 = scmp.eq.s32.totalorder %s111, 0
    %s114 = sadd.s32 %s113, 1
    %s115 = scalar_select %p112, %s113, %s114
    %p118 = pneg %p112
    %p119 = scmp.eq.s32.totalorder %s9, 1
    %p120 = por %p118, %p119
    %p121 = scmp.ne.s32.totalorder %s113, %s116
    %p122 = scmp.eq.s32.totalorder %s9, 0
    %p123 = por %p121, %p122
    %p124 = scmp.ne.s32.totalorder %s113, %s116
    %p125 = scmp.eq.s32.totalorder %s14, 1
    %p126 = por %p124, %p125
    %p127 = scmp.ne.s32.totalorder %s116, %s117
    %p128 = scmp.eq.s32.totalorder %s14, 0
    %p129 = por %p127, %p128
    %p130 = scmp.ne.s32.totalorder %s116, %s117
    %p131 = scmp.eq.s32.totalorder %s15, 1
    %p132 = por %p130, %p131
    %p134 = scmp.ne.s32.totalorder %s117, %s133
    %p135 = scmp.eq.s32.totalorder %s15, 0
    %p136 = por %p134, %p135
    %p137 = scmp.le.s32.totalorder 1, %s9
    %p138 = scmp.lt.s32.totalorder %s9, 3
    %p139 = pnand %p137, %p138
    %p140 = pneg %p139
    // Predicated region
    $region9: #{multi_view_forward.8} parent=5 // pred_check
      _
    $region10: #{multi_view_forward.8} parent=5 // pred_check_branch
      %142 = sbr.rel (%p139) target = $region12
    $region11: #{multi_view_forward.8} parent=5 // pred_region
      %s143 = ssub.s32 %s9, 1
    $region12: #{multi_view_forward.8} parent=5 // pred_fallthru
      _
    %p144 = scmp.lt.s32.totalorder %s9, 2
    // Predicated region
    $region13: #{multi_view_forward.8} parent=5 // pred_check
      %p145 = pneg %p144
    $region14: #{multi_view_forward.8} parent=5 // pred_check_branch
      %147 = sbr.rel (%p145) target = $region16
    $region15: #{multi_view_forward.8} parent=5 // pred_region
      // Predicated region
      $region17: #{multi_view_forward.8} parent=15 // pred_check
        %p148 = pneg %p43
      $region18: #{multi_view_forward.8} parent=15 // pred_check_branch
        %150 = sbr.rel (%p148) target = $region20
      $region19: #{multi_view_forward.8} parent=15 // pred_region
        %s151 = smul.u32 16, %s17
        %p152 = scmp.lt.s32.totalorder %s16, 1
        %s153 = scalar_select %p152, %s16, 1
        %p154 = scmp.lt.s32.totalorder %s151, 15
        %s155 = scalar_select %p154, %s151, 15
        %s156 = smul.addr %s155, 4
        %s157 = smul.addr %s153, 64
        %s158 = sadd.s32 %s156, %s157
        %s159 = smul.addr %s158, 8
        %s160 = scalar_lea.vmem %s0, %s159
        %s161 = smul.u32 16, %s17
      $region20: #{multi_view_forward.8} parent=15 // pred_fallthru
        _
      // Predicated region
      $region21: #{multi_view_forward.8} parent=15 // pred_check
        %p162 = pneg %p69
      $region22: #{multi_view_forward.8} parent=15 // pred_check_branch
        %164 = sbr.rel (%p162) target = $region24
      $region23: #{multi_view_forward.8} parent=15 // pred_region
        %p165 = scmp.lt.s32.totalorder %s16, 1
        %s166 = scalar_select %p165, %s16, 1
        %s167 = smul.addr %s166, 64
        %s168 = smul.addr %s167, 8
        %s169 = scalar_lea.vmem %s1, %s168
      $region24: #{multi_view_forward.8} parent=15 // pred_fallthru
        _
      // Predicated region
      $region25: #{multi_view_forward.8} parent=15 // pred_check
        %p170 = pneg %p95
      $region26: #{multi_view_forward.8} parent=15 // pred_check_branch
        %172 = sbr.rel (%p170) target = $region28
      $region27: #{multi_view_forward.8} parent=15 // pred_region
        %p173 = scmp.lt.s32.totalorder %s16, 1
        %s174 = scalar_select %p173, %s16, 1
        %s175 = scalar_lea.vmem %s2, %s174
      $region28: #{multi_view_forward.8} parent=15 // pred_fallthru
        _
    $region16: #{multi_view_forward.8} parent=5 // pred_fallthru
      _
    %p176 = scmp.le.s32.totalorder 1, %s9
    %p177 = scmp.lt.s32.totalorder %s9, 3
    %p178 = pnand %p176, %p177
    %p179 = pneg %p178
    // Predicated region
    $region29: #{multi_view_forward.8} parent=5 // pred_check
      _
    $region30: #{multi_view_forward.8} parent=5 // pred_check_branch
      %181 = sbr.rel (%p178) target = $region32
    $region31: #{multi_view_forward.8} parent=5 // pred_region
      %s182 = ssub.s32 %s9, 1
      %s183 = smul.u32 16, %s19
      %p184 = scmp.lt.s32.totalorder %s18, 1
      %s185 = scalar_select %p184, %s18, 1
      %p186 = scmp.lt.s32.totalorder %s183, 15
      %s187 = scalar_select %p186, %s183, 15
      %s188 = smul.addr %s187, 4
      %s189 = smul.addr %s185, 64
      %s190 = sadd.s32 %s188, %s189
      %s191 = smul.addr %s190, 8
      %s192 = scalar_lea.vmem %s0, %s191
      %p193 = pneg %p49
      %p194 = pneg %p46
      %p195 = scmp.lt.s32.totalorder %s18, 1
      %s196 = scalar_select %p195, %s18, 1
      %s197 = smul.addr %s196, 64
      %s198 = smul.addr %s197, 8
      %s199 = scalar_lea.vmem %s1, %s198
      %p200 = pneg %p75
      %p201 = pneg %p72
      %p202 = scmp.lt.s32.totalorder %s18, 1
      %s203 = scalar_select %p202, %s18, 1
      %s204 = scalar_lea.vmem %s2, %s203
      %p205 = pneg %p101
      %p206 = pneg %p98
      %p207 = pneg %p129
      %p208 = pneg %p126
      %s209 = smul.u32 16, %s19
      %p210 = scmp.lt.s32.totalorder %s18, 1
      %s211 = scalar_select %p210, %s18, 1
      %p212 = scmp.lt.s32.totalorder %s209, 15
      %s213 = scalar_select %p212, %s209, 15
      %s214 = smul.addr %s211, 16
      %s215 = sadd.s32 %s213, %s214
      %s216 = smul.addr %s215, 8
      %s217 = scalar_lea.vmem %s3, %s216
      %s218 = smul.u32 16, %s19
      %p219 = scmp.lt.s32.totalorder %s18, 1
      %s220 = scalar_select %p219, %s18, 1
      %p221 = scmp.lt.s32.totalorder %s218, 15
      %s222 = scalar_select %p221, %s218, 15
      %s223 = smul.addr %s222, 4
      %s224 = smul.addr %s220, 64
      %s225 = sadd.s32 %s223, %s224
      %s226 = smul.addr %s225, 8
      %s227 = scalar_lea.vmem %s0, %s226
      %s228 = smul.u32 16, %s19
      %p229 = scmp.lt.s32.totalorder %s18, 1
      %s230 = scalar_select %p229, %s18, 1
      %s231 = smul.addr %s230, 64
      %s232 = smul.addr %s231, 8
      %s233 = scalar_lea.vmem %s1, %s232
      %p234 = scmp.lt.s32.totalorder %s18, 1
      %s235 = scalar_select %p234, %s18, 1
      %s236 = scalar_lea.vmem %s2, %s235
      %s237 = smul.u32 16, %s19
      %p238 = scmp.lt.s32.totalorder %s18, 1
      %s239 = scalar_select %p238, %s18, 1
      %p240 = scmp.lt.s32.totalorder %s237, 15
      %s241 = scalar_select %p240, %s237, 15
      %s242 = smul.addr %s239, 16
      %s243 = sadd.s32 %s241, %s242
      %s244 = smul.addr %s243, 8
      %s245 = scalar_lea.vmem %s3, %s244
      %s246 = smul.u32 16, %s19
      %v247 = vld [vmem:[%s227] sm:$0xff]
      %v248 = vld [vmem:[%s227 + $0x8] sm:$0xff]
      %v249 = vld [vmem:[%s227 + $0x10] sm:$0xff]
      %v250 = vld [vmem:[%s227 + $0x18] sm:$0xff]
      %v251 = vld [vmem:[%s227 + $0x20] sm:$0xff]
      %v252 = vld [vmem:[%s227 + $0x28] sm:$0xff]
      %v253 = vld [vmem:[%s227 + $0x30] sm:$0xff]
      %v254 = vld [vmem:[%s227 + $0x38] sm:$0xff]
      %v255 = vld [vmem:[%s227 + $0x40] sm:$0xff]
      %v256 = vld [vmem:[%s227 + $0x48] sm:$0xff]
      %v257 = vld [vmem:[%s227 + $0x50] sm:$0xff]
      %v258 = vld [vmem:[%s227 + $0x58] sm:$0xff]
      %v259 = vld [vmem:[%s227 + $0x60] sm:$0xff]
      %v260 = vld [vmem:[%s227 + $0x68] sm:$0xff]
      %v261 = vld [vmem:[%s227 + $0x70] sm:$0xff]
      %v262 = vld [vmem:[%s227 + $0x78] sm:$0xff]
      %v263 = vld [vmem:[%s227 + $0x80] sm:$0xff]
      %v264 = vld [vmem:[%s227 + $0x88] sm:$0xff]
      %v265 = vld [vmem:[%s227 + $0x90] sm:$0xff]
      %v266 = vld [vmem:[%s227 + $0x98] sm:$0xff]
      %v267 = vld [vmem:[%s227 + $0xa0] sm:$0xff]
      %v268 = vld [vmem:[%s227 + $0xa8] sm:$0xff]
      %v269 = vld [vmem:[%s227 + $0xb0] sm:$0xff]
      %v270 = vld [vmem:[%s227 + $0xb8] sm:$0xff]
      %v271 = vld [vmem:[%s227 + $0xc0] sm:$0xff]
      %v272 = vld [vmem:[%s227 + $0xc8] sm:$0xff]
      %v273 = vld [vmem:[%s227 + $0xd0] sm:$0xff]
      %v274 = vld [vmem:[%s227 + $0xd8] sm:$0xff]
      %v275 = vld [vmem:[%s227 + $0xe0] sm:$0xff]
      %v276 = vld [vmem:[%s227 + $0xe8] sm:$0xff]
      %v277 = vld [vmem:[%s227 + $0xf0] sm:$0xff]
      %v278 = vld [vmem:[%s227 + $0xf8] sm:$0xff]
      %v279 = vld [vmem:[%s227 + $0x100] sm:$0xff]
      %v280 = vld [vmem:[%s227 + $0x108] sm:$0xff]
      %v281 = vld [vmem:[%s227 + $0x110] sm:$0xff]
      %v282 = vld [vmem:[%s227 + $0x118] sm:$0xff]
      %v283 = vld [vmem:[%s227 + $0x120] sm:$0xff]
      %v284 = vld [vmem:[%s227 + $0x128] sm:$0xff]
      %v285 = vld [vmem:[%s227 + $0x130] sm:$0xff]
      %v286 = vld [vmem:[%s227 + $0x138] sm:$0xff]
      %v287 = vld [vmem:[%s227 + $0x140] sm:$0xff]
      %v288 = vld [vmem:[%s227 + $0x148] sm:$0xff]
      %v289 = vld [vmem:[%s227 + $0x150] sm:$0xff]
      %v290 = vld [vmem:[%s227 + $0x158] sm:$0xff]
      %v291 = vld [vmem:[%s227 + $0x160] sm:$0xff]
      %v292 = vld [vmem:[%s227 + $0x168] sm:$0xff]
      %v293 = vld [vmem:[%s227 + $0x170] sm:$0xff]
      %v294 = vld [vmem:[%s227 + $0x178] sm:$0xff]
      %v295 = vld [vmem:[%s227 + $0x180] sm:$0xff]
      %v296 = vld [vmem:[%s227 + $0x188] sm:$0xff]
      %v297 = vld [vmem:[%s227 + $0x190] sm:$0xff]
      %v298 = vld [vmem:[%s227 + $0x198] sm:$0xff]
      %v299 = vld [vmem:[%s227 + $0x1a0] sm:$0xff]
      %v300 = vld [vmem:[%s227 + $0x1a8] sm:$0xff]
      %v301 = vld [vmem:[%s227 + $0x1b0] sm:$0xff]
      %v302 = vld [vmem:[%s227 + $0x1b8] sm:$0xff]
      %v303 = vld [vmem:[%s227 + $0x1c0] sm:$0xff]
      %v304 = vld [vmem:[%s227 + $0x1c8] sm:$0xff]
      %v305 = vld [vmem:[%s227 + $0x1d0] sm:$0xff]
      %v306 = vld [vmem:[%s227 + $0x1d8] sm:$0xff]
      %v307 = vld [vmem:[%s227 + $0x1e0] sm:$0xff]
      %v308 = vld [vmem:[%s227 + $0x1e8] sm:$0xff]
      %v309 = vld [vmem:[%s227 + $0x1f0] sm:$0xff]
      %v310 = vld [vmem:[%s227 + $0x1f8] sm:$0xff]
      %v311 = vld [vmem:[%s233] sm:$0xff]
      %v312 = vld [vmem:[%s233 + $0x8] sm:$0xff]
      %v313 = vld [vmem:[%s233 + $0x10] sm:$0xff]
      %v314 = vld [vmem:[%s233 + $0x18] sm:$0xff]
      %v315 = vld [vmem:[%s233 + $0x20] sm:$0xff]
      %v316 = vld [vmem:[%s233 + $0x28] sm:$0xff]
      %v317 = vld [vmem:[%s233 + $0x30] sm:$0xff]
      %v318 = vld [vmem:[%s233 + $0x38] sm:$0xff]
      %v319 = vld [vmem:[%s233 + $0x40] sm:$0xff]
      %v320 = vld [vmem:[%s233 + $0x48] sm:$0xff]
      %v321 = vld [vmem:[%s233 + $0x50] sm:$0xff]
      %v322 = vld [vmem:[%s233 + $0x58] sm:$0xff]
      %v323 = vld [vmem:[%s233 + $0x60] sm:$0xff]
      %v324 = vld [vmem:[%s233 + $0x68] sm:$0xff]
      %v325 = vld [vmem:[%s233 + $0x70] sm:$0xff]
      %v326 = vld [vmem:[%s233 + $0x78] sm:$0xff]
      %v327 = vld [vmem:[%s233 + $0x80] sm:$0xff]
      %v328 = vld [vmem:[%s233 + $0x88] sm:$0xff]
      %v329 = vld [vmem:[%s233 + $0x90] sm:$0xff]
      %v330 = vld [vmem:[%s233 + $0x98] sm:$0xff]
      %v331 = vld [vmem:[%s233 + $0xa0] sm:$0xff]
      %v332 = vld [vmem:[%s233 + $0xa8] sm:$0xff]
      %v333 = vld [vmem:[%s233 + $0xb0] sm:$0xff]
      %v334 = vld [vmem:[%s233 + $0xb8] sm:$0xff]
      %v335 = vld [vmem:[%s233 + $0xc0] sm:$0xff]
      %v336 = vld [vmem:[%s233 + $0xc8] sm:$0xff]
      %v337 = vld [vmem:[%s233 + $0xd0] sm:$0xff]
      %v338 = vld [vmem:[%s233 + $0xd8] sm:$0xff]
      %v339 = vld [vmem:[%s233 + $0xe0] sm:$0xff]
      %v340 = vld [vmem:[%s233 + $0xe8] sm:$0xff]
      %v341 = vld [vmem:[%s233 + $0xf0] sm:$0xff]
      %v342 = vld [vmem:[%s233 + $0xf8] sm:$0xff]
      %v343 = vld [vmem:[%s233 + $0x100] sm:$0xff]
      %v344 = vld [vmem:[%s233 + $0x108] sm:$0xff]
      %v345 = vld [vmem:[%s233 + $0x110] sm:$0xff]
      %v346 = vld [vmem:[%s233 + $0x118] sm:$0xff]
      %v347 = vld [vmem:[%s233 + $0x120] sm:$0xff]
      %v348 = vld [vmem:[%s233 + $0x128] sm:$0xff]
      %v349 = vld [vmem:[%s233 + $0x130] sm:$0xff]
      %v350 = vld [vmem:[%s233 + $0x138] sm:$0xff]
      %v351 = vld [vmem:[%s233 + $0x140] sm:$0xff]
      %v352 = vld [vmem:[%s233 + $0x148] sm:$0xff]
      %v353 = vld [vmem:[%s233 + $0x150] sm:$0xff]
      %v354 = vld [vmem:[%s233 + $0x158] sm:$0xff]
      %v355 = vld [vmem:[%s233 + $0x160] sm:$0xff]
      %v356 = vld [vmem:[%s233 + $0x168] sm:$0xff]
      %v357 = vld [vmem:[%s233 + $0x170] sm:$0xff]
      %v358 = vld [vmem:[%s233 + $0x178] sm:$0xff]
      %v359 = vld [vmem:[%s233 + $0x180] sm:$0xff]
      %v360 = vld [vmem:[%s233 + $0x188] sm:$0xff]
      %v361 = vld [vmem:[%s233 + $0x190] sm:$0xff]
      %v362 = vld [vmem:[%s233 + $0x198] sm:$0xff]
      %v363 = vld [vmem:[%s233 + $0x1a0] sm:$0xff]
      %v364 = vld [vmem:[%s233 + $0x1a8] sm:$0xff]
      %v365 = vld [vmem:[%s233 + $0x1b0] sm:$0xff]
      %v366 = vld [vmem:[%s233 + $0x1b8] sm:$0xff]
      %v367 = vld [vmem:[%s233 + $0x1c0] sm:$0xff]
      %v368 = vld [vmem:[%s233 + $0x1c8] sm:$0xff]
      %v369 = vld [vmem:[%s233 + $0x1d0] sm:$0xff]
      %v370 = vld [vmem:[%s233 + $0x1d8] sm:$0xff]
      %v371 = vld [vmem:[%s233 + $0x1e0] sm:$0xff]
      %v372 = vld [vmem:[%s233 + $0x1e8] sm:$0xff]
      %v373 = vld [vmem:[%s233 + $0x1f0] sm:$0xff]
      %v374 = vld [vmem:[%s233 + $0x1f8] sm:$0xff]
      %v375 = vld [vmem:[%s236] sm:$0x1]
      %v377 = vlaneseq
      %v378 = vshrl.u32 %v377, 7
      %v379 = vsub.s32 0, %v378
      %v380 = vrot.slane %v375, %v379
      %382 = vmatprep.subr.mxu0 0.0
      %383 = vmatpush1.msra.mxu0 %v311
      %384 = vmatprep.subr.mxu0 0.0
      %385 = vmatpush1.msra.mxu0 %v312
      %386 = vmatprep.subr.mxu0 0.0
      %387 = vmatpush1.msra.mxu0 %v313
      %388 = vmatprep.subr.mxu0 0.0
      %389 = vmatpush1.msra.mxu0 %v314
      %390 = vmatprep.subr.mxu0 0.0
      %391 = vmatpush1.msra.mxu0 %v315
      %392 = vmatprep.subr.mxu0 0.0
      %393 = vmatpush1.msra.mxu0 %v316
      %394 = vmatprep.subr.mxu0 0.0
      %395 = vmatpush1.msra.mxu0 %v317
      %396 = vmatprep.subr.mxu0 0.0
      %397 = vmatpush1.msra.mxu0 %v318
      %398 = vmatprep.subr.mxu0 0.0
      %399 = vmatpush1.msra.mxu0 %v319
      %400 = vmatprep.subr.mxu0 0.0
      %401 = vmatpush1.msra.mxu0 %v320
      %402 = vmatprep.subr.mxu0 0.0
      %403 = vmatpush1.msra.mxu0 %v321
      %404 = vmatprep.subr.mxu0 0.0
      %405 = vmatpush1.msra.mxu0 %v322
      %406 = vmatprep.subr.mxu0 0.0
      %407 = vmatpush1.msra.mxu0 %v323
      %408 = vmatprep.subr.mxu0 0.0
      %409 = vmatpush1.msra.mxu0 %v324
      %410 = vmatprep.subr.mxu0 0.0
      %411 = vmatpush1.msra.mxu0 %v325
      %412 = vmatprep.subr.mxu0 0.0
      %413 = vmatpush1.msra.mxu0 %v326
      %414 = vmatprep.subr.mxu0 0.0
      %415 = vmatpush1.msra.mxu0 %v327
      %416 = vmatprep.subr.mxu0 0.0
      %417 = vmatpush1.msra.mxu0 %v328
      %418 = vmatprep.subr.mxu0 0.0
      %419 = vmatpush1.msra.mxu0 %v329
      %420 = vmatprep.subr.mxu0 0.0
      %421 = vmatpush1.msra.mxu0 %v330
      %422 = vmatprep.subr.mxu0 0.0
      %423 = vmatpush1.msra.mxu0 %v331
      %424 = vmatprep.subr.mxu0 0.0
      %425 = vmatpush1.msra.mxu0 %v332
      %426 = vmatprep.subr.mxu0 0.0
      %427 = vmatpush1.msra.mxu0 %v333
      %428 = vmatprep.subr.mxu0 0.0
      %429 = vmatpush1.msra.mxu0 %v334
      %430 = vmatprep.subr.mxu0 0.0
      %431 = vmatpush1.msra.mxu0 %v335
      %432 = vmatprep.subr.mxu0 0.0
      %433 = vmatpush1.msra.mxu0 %v336
      %434 = vmatprep.subr.mxu0 0.0
      %435 = vmatpush1.msra.mxu0 %v337
      %436 = vmatprep.subr.mxu0 0.0
      %437 = vmatpush1.msra.mxu0 %v338
      %438 = vmatprep.subr.mxu0 0.0
      %439 = vmatpush1.msra.mxu0 %v339
      %440 = vmatprep.subr.mxu0 0.0
      %441 = vmatpush1.msra.mxu0 %v340
      %442 = vmatprep.subr.mxu0 0.0
      %443 = vmatpush1.msra.mxu0 %v341
      %444 = vmatprep.subr.mxu0 0.0
      %445 = vmatpush1.msra.mxu0 %v342
      %446 = vmatprep.mubr.f32.mxu0 %v248
      %447 = vmatmul.mubr.f32.gmra.mrb[0].mxu0 %v247
      %v448 = vpop.f32.mrb[0].mxu0
      %v449 = vadd.f32 %v380, %v448
      %v450 = vpop.f32.mrb[0].mxu0
      %451 = vmatprep.mubr.f32.mxu0 %v252
      %452 = vmatmul.mubr.f32.gmra.mrb[0].mxu0 %v251
      %v453 = vpop.f32.mrb[0].mxu0
      %v454 = vadd.f32 %v380, %v453
      %v455 = vpop.f32.mrb[0].mxu0
      %456 = vmatprep.mubr.f32.mxu0 %v256
      %457 = vmatmul.mubr.f32.gmra.mrb[0].mxu0 %v255
      %v458 = vpop.f32.mrb[0].mxu0
      %v459 = vadd.f32 %v380, %v458
      %v460 = vpop.f32.mrb[0].mxu0
      %461 = vmatprep.mubr.f32.mxu0 %v260
      %462 = vmatmul.mubr.f32.gmra.mrb[0].mxu0 %v259
      %v463 = vpop.f32.mrb[0].mxu0
      %v464 = vadd.f32 %v380, %v463
      %v465 = vpop.f32.mrb[0].mxu0
      %466 = vmatprep.mubr.f32.mxu0 %v264
      %467 = vmatmul.mubr.f32.gmra.mrb[0].mxu0 %v263
      %v468 = vpop.f32.mrb[0].mxu0
      %v469 = vadd.f32 %v380, %v468
      %v470 = vpop.f32.mrb[0].mxu0
      %471 = vmatprep.mubr.f32.mxu0 %v268
      %472 = vmatmul.mubr.f32.gmra.mrb[0].mxu0 %v267
      %v473 = vpop.f32.mrb[0].mxu0
      %v474 = vadd.f32 %v380, %v473
      %v475 = vpop.f32.mrb[0].mxu0
      %476 = vmatprep.mubr.f32.mxu0 %v272
      %477 = vmatmul.mubr.f32.gmra.mrb[0].mxu0 %v271
      %v478 = vpop.f32.mrb[0].mxu0
      %v479 = vadd.f32 %v380, %v478
      %v480 = vpop.f32.mrb[0].mxu0
      %481 = vmatprep.mubr.f32.mxu0 %v276
      %482 = vmatmul.mubr.f32.gmra.mrb[0].mxu0 %v275
      %v483 = vpop.f32.mrb[0].mxu0
      %v484 = vadd.f32 %v380, %v483
      %v485 = vpop.f32.mrb[0].mxu0
      %486 = vmatprep.mubr.f32.mxu0 %v280
      %487 = vmatmul.mubr.f32.gmra.mrb[0].mxu0 %v279
      %v488 = vpop.f32.mrb[0].mxu0
      %v489 = vadd.f32 %v380, %v488
      %v490 = vpop.f32.mrb[0].mxu0
      %491 = vmatprep.mubr.f32.mxu0 %v284
      %492 = vmatmul.mubr.f32.gmra.mrb[0].mxu0 %v283
      %v493 = vpop.f32.mrb[0].mxu0
      %v494 = vadd.f32 %v380, %v493
      %v495 = vpop.f32.mrb[0].mxu0
      %496 = vmatprep.mubr.f32.mxu0 %v288
      %497 = vmatmul.mubr.f32.gmra.mrb[0].mxu0 %v287
      %v498 = vpop.f32.mrb[0].mxu0
      %v499 = vadd.f32 %v380, %v498
      %v500 = vpop.f32.mrb[0].mxu0
      %501 = vmatprep.mubr.f32.mxu0 %v292
      %502 = vmatmul.mubr.f32.gmra.mrb[0].mxu0 %v291
      %v503 = vpop.f32.mrb[0].mxu0
      %v504 = vadd.f32 %v380, %v503
      %v505 = vpop.f32.mrb[0].mxu0
      %506 = vmatprep.mubr.f32.mxu0 %v296
      %507 = vmatmul.mubr.f32.gmra.mrb[0].mxu0 %v295
      %v508 = vpop.f32.mrb[0].mxu0
      %v509 = vadd.f32 %v380, %v508
      %v510 = vpop.f32.mrb[0].mxu0
      %511 = vmatprep.mubr.f32.mxu0 %v300
      %512 = vmatmul.mubr.f32.gmra.mrb[0].mxu0 %v299
      %v513 = vpop.f32.mrb[0].mxu0
      %v514 = vadd.f32 %v380, %v513
      %v515 = vpop.f32.mrb[0].mxu0
      %516 = vmatprep.mubr.f32.mxu0 %v304
      %517 = vmatmul.mubr.f32.gmra.mrb[0].mxu0 %v303
      %v518 = vpop.f32.mrb[0].mxu0
      %v519 = vadd.f32 %v380, %v518
      %v520 = vpop.f32.mrb[0].mxu0
      %521 = vmatprep.mubr.f32.mxu0 %v308
      %522 = vmatmul.mubr.f32.gmra.mrb[0].mxu0 %v307
      %v523 = vpop.f32.mrb[0].mxu0
      %v524 = vadd.f32 %v380, %v523
      %v525 = vpop.f32.mrb[0].mxu0
      %526 = vdwg.mxu0
      %527 = vmatprep.subr.mxu0 0.0
      %528 = vmatpush1.msra.mxu0 %v343
      %529 = vmatprep.subr.mxu0 0.0
      %530 = vmatpush1.msra.mxu0 %v344
      %531 = vmatprep.subr.mxu0 0.0
      %532 = vmatpush1.msra.mxu0 %v345
      %533 = vmatprep.subr.mxu0 0.0
      %534 = vmatpush1.msra.mxu0 %v346
      %535 = vmatprep.subr.mxu0 0.0
      %536 = vmatpush1.msra.mxu0 %v347
      %537 = vmatprep.subr.mxu0 0.0
      %538 = vmatpush1.msra.mxu0 %v348
      %539 = vmatprep.subr.mxu0 0.0
      %540 = vmatpush1.msra.mxu0 %v349
      %541 = vmatprep.subr.mxu0 0.0
      %542 = vmatpush1.msra.mxu0 %v350
      %543 = vmatprep.subr.mxu0 0.0
      %544 = vmatpush1.msra.mxu0 %v351
      %545 = vmatprep.subr.mxu0 0.0
      %546 = vmatpush1.msra.mxu0 %v352
      %547 = vmatprep.subr.mxu0 0.0
      %548 = vmatpush1.msra.mxu0 %v353
      %549 = vmatprep.subr.mxu0 0.0
      %550 = vmatpush1.msra.mxu0 %v354
      %551 = vmatprep.subr.mxu0 0.0
      %552 = vmatpush1.msra.mxu0 %v355
      %553 = vmatprep.subr.mxu0 0.0
      %554 = vmatpush1.msra.mxu0 %v356
      %555 = vmatprep.subr.mxu0 0.0
      %556 = vmatpush1.msra.mxu0 %v357
      %557 = vmatprep.subr.mxu0 0.0
      %558 = vmatpush1.msra.mxu0 %v358
      %559 = vmatprep.subr.mxu0 0.0
      %560 = vmatpush1.msra.mxu0 %v359
      %561 = vmatprep.subr.mxu0 0.0
      %562 = vmatpush1.msra.mxu0 %v360
      %563 = vmatprep.subr.mxu0 0.0
      %564 = vmatpush1.msra.mxu0 %v361
      %565 = vmatprep.subr.mxu0 0.0
      %566 = vmatpush1.msra.mxu0 %v362
      %567 = vmatprep.subr.mxu0 0.0
      %568 = vmatpush1.msra.mxu0 %v363
      %569 = vmatprep.subr.mxu0 0.0
      %570 = vmatpush1.msra.mxu0 %v364
      %571 = vmatprep.subr.mxu0 0.0
      %572 = vmatpush1.msra.mxu0 %v365
      %573 = vmatprep.subr.mxu0 0.0
      %574 = vmatpush1.msra.mxu0 %v366
      %575 = vmatprep.subr.mxu0 0.0
      %576 = vmatpush1.msra.mxu0 %v367
      %577 = vmatprep.subr.mxu0 0.0
      %578 = vmatpush1.msra.mxu0 %v368
      %579 = vmatprep.subr.mxu0 0.0
      %580 = vmatpush1.msra.mxu0 %v369
      %581 = vmatprep.subr.mxu0 0.0
      %582 = vmatpush1.msra.mxu0 %v370
      %583 = vmatprep.subr.mxu0 0.0
      %584 = vmatpush1.msra.mxu0 %v371
      %585 = vmatprep.subr.mxu0 0.0
      %586 = vmatpush1.msra.mxu0 %v372
      %587 = vmatprep.subr.mxu0 0.0
      %588 = vmatpush1.msra.mxu0 %v373
      %589 = vmatprep.subr.mxu0 0.0
      %590 = vmatpush1.msra.mxu0 %v374
      %591 = vmatprep.mubr.f32.mxu0 %v250
      %592 = vmatmul.mubr.f32.gmra.mrb[0].mxu0 %v249
      %v593 = vpop.f32.mrb[0].mxu0
      %v594 = vadd.f32 %v449, %v593
      %v595 = vpop.f32.mrb[0].mxu0
      %596 = vmatprep.mubr.f32.mxu0 %v254
      %597 = vmatmul.mubr.f32.gmra.mrb[0].mxu0 %v253
      %v598 = vpop.f32.mrb[0].mxu0
      %v599 = vadd.f32 %v454, %v598
      %v600 = vpop.f32.mrb[0].mxu0
      %601 = vmatprep.mubr.f32.mxu0 %v258
      %602 = vmatmul.mubr.f32.gmra.mrb[0].mxu0 %v257
      %v603 = vpop.f32.mrb[0].mxu0
      %v604 = vadd.f32 %v459, %v603
      %v605 = vpop.f32.mrb[0].mxu0
      %606 = vmatprep.mubr.f32.mxu0 %v262
      %607 = vmatmul.mubr.f32.gmra.mrb[0].mxu0 %v261
      %v608 = vpop.f32.mrb[0].mxu0
      %v609 = vadd.f32 %v464, %v608
      %v610 = vpop.f32.mrb[0].mxu0
      %611 = vmatprep.mubr.f32.mxu0 %v266
      %612 = vmatmul.mubr.f32.gmra.mrb[0].mxu0 %v265
      %v613 = vpop.f32.mrb[0].mxu0
      %v614 = vadd.f32 %v469, %v613
      %v615 = vpop.f32.mrb[0].mxu0
      %616 = vmatprep.mubr.f32.mxu0 %v270
      %617 = vmatmul.mubr.f32.gmra.mrb[0].mxu0 %v269
      %v618 = vpop.f32.mrb[0].mxu0
      %v619 = vadd.f32 %v474, %v618
      %v620 = vpop.f32.mrb[0].mxu0
      %621 = vmatprep.mubr.f32.mxu0 %v274
      %622 = vmatmul.mubr.f32.gmra.mrb[0].mxu0 %v273
      %v623 = vpop.f32.mrb[0].mxu0
      %v624 = vadd.f32 %v479, %v623
      %v625 = vpop.f32.mrb[0].mxu0
      %626 = vmatprep.mubr.f32.mxu0 %v278
      %627 = vmatmul.mubr.f32.gmra.mrb[0].mxu0 %v277
      %v628 = vpop.f32.mrb[0].mxu0
      %v629 = vadd.f32 %v484, %v628
      %v630 = vpop.f32.mrb[0].mxu0
      %631 = vmatprep.mubr.f32.mxu0 %v282
      %632 = vmatmul.mubr.f32.gmra.mrb[0].mxu0 %v281
      %v633 = vpop.f32.mrb[0].mxu0
      %v634 = vadd.f32 %v489, %v633
      %v635 = vpop.f32.mrb[0].mxu0
      %636 = vmatprep.mubr.f32.mxu0 %v286
      %637 = vmatmul.mubr.f32.gmra.mrb[0].mxu0 %v285
      %v638 = vpop.f32.mrb[0].mxu0
      %v639 = vadd.f32 %v494, %v638
      %v640 = vpop.f32.mrb[0].mxu0
      %641 = vmatprep.mubr.f32.mxu0 %v290
      %642 = vmatmul.mubr.f32.gmra.mrb[0].mxu0 %v289
      %v643 = vpop.f32.mrb[0].mxu0
      %v644 = vadd.f32 %v499, %v643
      %v645 = vpop.f32.mrb[0].mxu0
      %646 = vmatprep.mubr.f32.mxu0 %v294
      %647 = vmatmul.mubr.f32.gmra.mrb[0].mxu0 %v293
      %v648 = vpop.f32.mrb[0].mxu0
      %v649 = vadd.f32 %v504, %v648
      %v650 = vpop.f32.mrb[0].mxu0
      %651 = vmatprep.mubr.f32.mxu0 %v298
      %652 = vmatmul.mubr.f32.gmra.mrb[0].mxu0 %v297
      %v653 = vpop.f32.mrb[0].mxu0
      %v654 = vadd.f32 %v509, %v653
      %v655 = vpop.f32.mrb[0].mxu0
      %656 = vmatprep.mubr.f32.mxu0 %v302
      %657 = vmatmul.mubr.f32.gmra.mrb[0].mxu0 %v301
      %v658 = vpop.f32.mrb[0].mxu0
      %v659 = vadd.f32 %v514, %v658
      %v660 = vpop.f32.mrb[0].mxu0
      %661 = vmatprep.mubr.f32.mxu0 %v306
      %662 = vmatmul.mubr.f32.gmra.mrb[0].mxu0 %v305
      %v663 = vpop.f32.mrb[0].mxu0
      %v664 = vadd.f32 %v519, %v663
      %v665 = vpop.f32.mrb[0].mxu0
      %666 = vmatprep.mubr.f32.mxu0 %v310
      %667 = vmatmul.mubr.f32.gmra.mrb[0].mxu0 %v309
      %v668 = vpop.f32.mrb[0].mxu0
      %v669 = vadd.f32 %v524, %v668
      %v670 = vpop.f32.mrb[0].mxu0
      %671 = vdwg.mxu0
      %v672 = vmax.f32 %v594, 0.0
      %v673 = vmax.f32 %v599, 0.0
      %v674 = vmax.f32 %v604, 0.0
      %v675 = vmax.f32 %v609, 0.0
      %v676 = vmax.f32 %v614, 0.0
      %v677 = vmax.f32 %v619, 0.0
      %v678 = vmax.f32 %v624, 0.0
      %v679 = vmax.f32 %v629, 0.0
      %v680 = vmax.f32 %v634, 0.0
      %v681 = vmax.f32 %v639, 0.0
      %v682 = vmax.f32 %v644, 0.0
      %v683 = vmax.f32 %v649, 0.0
      %v684 = vmax.f32 %v654, 0.0
      %v685 = vmax.f32 %v659, 0.0
      %v686 = vmax.f32 %v664, 0.0
      %v687 = vmax.f32 %v669, 0.0
      %vm688 = vcmask 523264
      %689 = vst.msk [vmem:[%s245] sm:$0xff] %vm688, %v672
      %690 = vst.msk [vmem:[%s245 + $0x8] sm:$0xff] %vm688, %v673
      %691 = vst.msk [vmem:[%s245 + $0x10] sm:$0xff] %vm688, %v674
      %692 = vst.msk [vmem:[%s245 + $0x18] sm:$0xff] %vm688, %v675
      %693 = vst.msk [vmem:[%s245 + $0x20] sm:$0xff] %vm688, %v676
      %694 = vst.msk [vmem:[%s245 + $0x28] sm:$0xff] %vm688, %v677
      %695 = vst.msk [vmem:[%s245 + $0x30] sm:$0xff] %vm688, %v678
      %696 = vst.msk [vmem:[%s245 + $0x38] sm:$0xff] %vm688, %v679
      %697 = vst.msk [vmem:[%s245 + $0x40] sm:$0xff] %vm688, %v680
      %698 = vst.msk [vmem:[%s245 + $0x48] sm:$0xff] %vm688, %v681
      %699 = vst.msk [vmem:[%s245 + $0x50] sm:$0xff] %vm688, %v682
      %700 = vst.msk [vmem:[%s245 + $0x58] sm:$0xff] %vm688, %v683
      %701 = vst.msk [vmem:[%s245 + $0x60] sm:$0xff] %vm688, %v684
      %702 = vst.msk [vmem:[%s245 + $0x68] sm:$0xff] %vm688, %v685
      %703 = vst.msk [vmem:[%s245 + $0x70] sm:$0xff] %vm688, %v686
      %704 = vst.msk [vmem:[%s245 + $0x78] sm:$0xff] %vm688, %v687
      %s705 = smul.u32 16, %s19
      %p706 = scmp.lt.s32.totalorder %s18, 1
      %s707 = scalar_select %p706, %s18, 1
      %p708 = scmp.lt.s32.totalorder %s705, 15
      %s709 = scalar_select %p708, %s705, 15
      %s710 = smul.addr %s707, 16
      %s711 = sadd.s32 %s709, %s710
      %s712 = smul.addr %s711, 8
      %s713 = scalar_lea.vmem %s3, %s712
      // Predicated region
      $region33: #{multi_view_forward.8} parent=31 // pred_check
        %p714 = pneg %p126
      $region34: #{multi_view_forward.8} parent=31 // pred_check_branch
        %716 = sbr.rel (%p714) target = $region36
      $region35: #{multi_view_forward.8} parent=31 // pred_region
        %s717 = smul.u32 16, %s19
      $region36: #{multi_view_forward.8} parent=31 // pred_fallthru
        _
    $region32: #{multi_view_forward.8} parent=5 // pred_fallthru
      _
    %p718 = scmp.le.s32.totalorder 2, %s9
    // Predicated region
    $region37: #{multi_view_forward.8} parent=5 // pred_check
      %p719 = pneg %p718
    $region38: #{multi_view_forward.8} parent=5 // pred_check_branch
      %721 = sbr.rel (%p719) target = $region40
    $region39: #{multi_view_forward.8} parent=5 // pred_region
      %s722 = ssub.s32 %s9, 2
      // Predicated region
      $region41: #{multi_view_forward.8} parent=39 // pred_check
        %p723 = pneg %p132
      $region42: #{multi_view_forward.8} parent=39 // pred_check_branch
        %725 = sbr.rel (%p723) target = $region44
      $region43: #{multi_view_forward.8} parent=39 // pred_region
        %s726 = smul.u32 16, %s21
        %p727 = scmp.lt.s32.totalorder %s20, 1
        %s728 = scalar_select %p727, %s20, 1
        %p729 = scmp.lt.s32.totalorder %s726, 15
        %s730 = scalar_select %p729, %s726, 15
        %s731 = smul.addr %s728, 16
        %s732 = sadd.s32 %s730, %s731
        %s733 = smul.addr %s732, 8
        %s734 = scalar_lea.vmem %s3, %s733
      $region44: #{multi_view_forward.8} parent=39 // pred_fallthru
        _
    $region40: #{multi_view_forward.8} parent=5 // pred_fallthru
      _
  $region6: #{multi_view_forward.8} parent=0 // loop_footer
    %s13 = sadd.s32 1, %s9
  $region7: #{multi_view_forward.8} parent=0 // loop_footer_branch
    %8 = sbr.rel target = $region3
  $region8: #{multi_view_forward.8} parent=0 // loop_exit
    _

// kernel: multi_view_forward.9
$region0: #{multi_view_forward.9}
  #allocation0 [shape = 'u32[]', space=smem, size = 0x4, offset = 0x4, fixed_abs, tag = 'smem constant byte address 0x4 - core index']
  #allocation1 [shape = 'u32[144,128]{1,0:T(1,128)}', space=vmem, size = 0x12000, scoped, tag = 'internal scratch']
  %s0 = inlined_call_operand.vmem [shape: f32[2,32,1024], index: 0, kind: input, shape index: {}]
  %s1 = inlined_call_operand.vmem [shape: f32[2,1024,64], index: 1, kind: input, shape index: {}]
  %s2 = inlined_call_operand.vmem [shape: f32[2,1,64], index: 2, kind: input, shape index: {}]
  %s3 = inlined_call_operand.vmem [shape: f32[2,32,64], index: 3, kind: output, shape index: {}]
  %s4 = sld [smem:[#allocation0]]
  $region45: #{multi_view_forward.9} parent=0
    _
  %s6 = ssub.s32 1, %s4
  %s7 = scalar_select 0, %s6, %s4
  loop: start=0, step=1, limit=4
  $region2: #{multi_view_forward.9} parent=0 // loop_pre_header
    _
  $region3: #{multi_view_forward.9} parent=0 // loop_header
    %s9 = sphi 0, %s13
    %p10 = scmp.ge.s32.totalorder %s9, 4
    %s16 = sphi 0, %s28
    %s17 = sphi 0, %s24
    %s18 = sphi 0, %s16
    %s19 = sphi 0, %s17
    %s20 = sphi 0, %s18
    %s21 = sphi 0, %s19
    %s33 = sphi 0, %s35
    %s36 = sphi 0, %s33
    %s37 = sphi 0, %s36
    %s53 = sphi 0, %s37
    %s59 = sphi 0, %s61
    %s62 = sphi 0, %s59
    %s63 = sphi 0, %s62
    %s79 = sphi 0, %s63
    %s85 = sphi 0, %s87
    %s88 = sphi 0, %s85
    %s89 = sphi 0, %s88
    %s105 = sphi 0, %s89
    %s113 = sphi 0, %s115
    %s116 = sphi 0, %s113
    %s117 = sphi 0, %s116
    %s133 = sphi 0, %s117
  $region4: #{multi_view_forward.9} parent=0 // loop_header_branch
    %12 = sbr.rel (%p10) target = $region8
  $region5: #{multi_view_forward.9} parent=0 // loop_body
    %s14 = ssub.s32 %s9, 1
    %s15 = ssub.s32 %s9, 2
    %s22 = sadd.s32 1, %s17
    %p23 = scmp.ge.s32.totalorder %s22, 1
    %s24 = scalar_select %p23, 0, %s22
    %s25 = sadd.s32 1, %s16
    %s26 = scalar_select %p23, %s25, %s16
    %p27 = scmp.ge.s32.totalorder %s26, 2
    %s28 = scalar_select %p27, 0, %s26
    %s29 = ssub.s32 %s16, %s28
    %s30 = ssub.s32 %s17, %s24
    %s31 = sor.u32 %s29, %s30
    %p32 = scmp.eq.s32.totalorder %s31, 0
    %s34 = sadd.s32 %s33, 1
    %s35 = scalar_select %p32, %s33, %s34
    %p38 = pneg %p32
    %p39 = scmp.eq.s32.totalorder %s9, 1
    %p40 = por %p38, %p39
    %p41 = scmp.ne.s32.totalorder %s33, %s36
    %p42 = scmp.eq.s32.totalorder %s9, 0
    %p43 = por %p41, %p42
    %p44 = scmp.ne.s32.totalorder %s33, %s36
    %p45 = scmp.eq.s32.totalorder %s14, 1
    %p46 = por %p44, %p45
    %p47 = scmp.ne.s32.totalorder %s36, %s37
    %p48 = scmp.eq.s32.totalorder %s14, 0
    %p49 = por %p47, %p48
    %p50 = scmp.ne.s32.totalorder %s36, %s37
    %p51 = scmp.eq.s32.totalorder %s15, 1
    %p52 = por %p50, %p51
    %p54 = scmp.ne.s32.totalorder %s37, %s53
    %p55 = scmp.eq.s32.totalorder %s15, 0
    %p56 = por %p54, %p55
    %s57 = ssub.s32 %s16, %s28
    %p58 = scmp.eq.s32.totalorder %s57, 0
    %s60 = sadd.s32 %s59, 1
    %s61 = scalar_select %p58, %s59, %s60
    %p64 = pneg %p58
    %p65 = scmp.eq.s32.totalorder %s9, 1
    %p66 = por %p64, %p65
    %p67 = scmp.ne.s32.totalorder %s59, %s62
    %p68 = scmp.eq.s32.totalorder %s9, 0
    %p69 = por %p67, %p68
    %p70 = scmp.ne.s32.totalorder %s59, %s62
    %p71 = scmp.eq.s32.totalorder %s14, 1
    %p72 = por %p70, %p71
    %p73 = scmp.ne.s32.totalorder %s62, %s63
    %p74 = scmp.eq.s32.totalorder %s14, 0
    %p75 = por %p73, %p74
    %p76 = scmp.ne.s32.totalorder %s62, %s63
    %p77 = scmp.eq.s32.totalorder %s15, 1
    %p78 = por %p76, %p77
    %p80 = scmp.ne.s32.totalorder %s63, %s79
    %p81 = scmp.eq.s32.totalorder %s15, 0
    %p82 = por %p80, %p81
    %s83 = ssub.s32 %s16, %s28
    %p84 = scmp.eq.s32.totalorder %s83, 0
    %s86 = sadd.s32 %s85, 1
    %s87 = scalar_select %p84, %s85, %s86
    %p90 = pneg %p84
    %p91 = scmp.eq.s32.totalorder %s9, 1
    %p92 = por %p90, %p91
    %p93 = scmp.ne.s32.totalorder %s85, %s88
    %p94 = scmp.eq.s32.totalorder %s9, 0
    %p95 = por %p93, %p94
    %p96 = scmp.ne.s32.totalorder %s85, %s88
    %p97 = scmp.eq.s32.totalorder %s14, 1
    %p98 = por %p96, %p97
    %p99 = scmp.ne.s32.totalorder %s88, %s89
    %p100 = scmp.eq.s32.totalorder %s14, 0
    %p101 = por %p99, %p100
    %p102 = scmp.ne.s32.totalorder %s88, %s89
    %p103 = scmp.eq.s32.totalorder %s15, 1
    %p104 = por %p102, %p103
    %p106 = scmp.ne.s32.totalorder %s89, %s105
    %p107 = scmp.eq.s32.totalorder %s15, 0
    %p108 = por %p106, %p107
    %s109 = ssub.s32 %s16, %s28
    %s110 = ssub.s32 %s17, %s24
    %s111 = sor.u32 %s109, %s110
    %p112 = scmp.eq.s32.totalorder %s111, 0
    %s114 = sadd.s32 %s113, 1
    %s115 = scalar_select %p112, %s113, %s114
    %p118 = pneg %p112
    %p119 = scmp.eq.s32.totalorder %s9, 1
    %p120 = por %p118, %p119
    %p121 = scmp.ne.s32.totalorder %s113, %s116
    %p122 = scmp.eq.s32.totalorder %s9, 0
    %p123 = por %p121, %p122
    %p124 = scmp.ne.s32.totalorder %s113, %s116
    %p125 = scmp.eq.s32.totalorder %s14, 1
    %p126 = por %p124, %p125
    %p127 = scmp.ne.s32.totalorder %s116, %s117
    %p128 = scmp.eq.s32.totalorder %s14, 0
    %p129 = por %p127, %p128
    %p130 = scmp.ne.s32.totalorder %s116, %s117
    %p131 = scmp.eq.s32.totalorder %s15, 1
    %p132 = por %p130, %p131
    %p134 = scmp.ne.s32.totalorder %s117, %s133
    %p135 = scmp.eq.s32.totalorder %s15, 0
    %p136 = por %p134, %p135
    %p137 = scmp.le.s32.totalorder 1, %s9
    %p138 = scmp.lt.s32.totalorder %s9, 3
    %p139 = pnand %p137, %p138
    %p140 = pneg %p139
    // Predicated region
    $region9: #{multi_view_forward.9} parent=5 // pred_check
      _
    $region10: #{multi_view_forward.9} parent=5 // pred_check_branch
      %142 = sbr.rel (%p139) target = $region12
    $region11: #{multi_view_forward.9} parent=5 // pred_region
      %s143 = ssub.s32 %s9, 1
    $region12: #{multi_view_forward.9} parent=5 // pred_fallthru
      _
    %p144 = scmp.lt.s32.totalorder %s9, 2
    // Predicated region
    $region13: #{multi_view_forward.9} parent=5 // pred_check
      %p145 = pneg %p144
    $region14: #{multi_view_forward.9} parent=5 // pred_check_branch
      %147 = sbr.rel (%p145) target = $region16
    $region15: #{multi_view_forward.9} parent=5 // pred_region
      // Predicated region
      $region17: #{multi_view_forward.9} parent=15 // pred_check
        %p148 = pneg %p43
      $region18: #{multi_view_forward.9} parent=15 // pred_check_branch
        %150 = sbr.rel (%p148) target = $region20
      $region19: #{multi_view_forward.9} parent=15 // pred_region
        %s151 = smul.u32 4, %s17
        %p152 = scmp.lt.s32.totalorder %s16, 1
        %s153 = scalar_select %p152, %s16, 1
        %p154 = scmp.lt.s32.totalorder %s151, 3
        %s155 = scalar_select %p154, %s151, 3
        %s156 = smul.addr %s155, 8
        %s157 = smul.addr %s153, 32
        %s158 = sadd.s32 %s156, %s157
        %s159 = smul.addr %s158, 8
        %s160 = scalar_lea.vmem %s0, %s159
        %s161 = smul.u32 4, %s17
      $region20: #{multi_view_forward.9} parent=15 // pred_fallthru
        _
      // Predicated region
      $region21: #{multi_view_forward.9} parent=15 // pred_check
        %p162 = pneg %p69
      $region22: #{multi_view_forward.9} parent=15 // pred_check_branch
        %164 = sbr.rel (%p162) target = $region24
      $region23: #{multi_view_forward.9} parent=15 // pred_region
        %p165 = scmp.lt.s32.totalorder %s16, 1
        %s166 = scalar_select %p165, %s16, 1
        %s167 = smul.addr %s166, 128
        %s168 = smul.addr %s167, 8
        %s169 = scalar_lea.vmem %s1, %s168
      $region24: #{multi_view_forward.9} parent=15 // pred_fallthru
        _
      // Predicated region
      $region25: #{multi_view_forward.9} parent=15 // pred_check
        %p170 = pneg %p95
      $region26: #{multi_view_forward.9} parent=15 // pred_check_branch
        %172 = sbr.rel (%p170) target = $region28
      $region27: #{multi_view_forward.9} parent=15 // pred_region
        %p173 = scmp.lt.s32.totalorder %s16, 1
        %s174 = scalar_select %p173, %s16, 1
        %s175 = scalar_lea.vmem %s2, %s174
      $region28: #{multi_view_forward.9} parent=15 // pred_fallthru
        _
    $region16: #{multi_view_forward.9} parent=5 // pred_fallthru
      _
    %p176 = scmp.le.s32.totalorder 1, %s9
    %p177 = scmp.lt.s32.totalorder %s9, 3
    %p178 = pnand %p176, %p177
    %p179 = pneg %p178
    // Predicated region
    $region29: #{multi_view_forward.9} parent=5 // pred_check
      _
    $region30: #{multi_view_forward.9} parent=5 // pred_check_branch
      %181 = sbr.rel (%p178) target = $region32
    $region31: #{multi_view_forward.9} parent=5 // pred_region
      %s182 = ssub.s32 %s9, 1
      %s183 = smul.u32 4, %s19
      %p184 = scmp.lt.s32.totalorder %s18, 1
      %s185 = scalar_select %p184, %s18, 1
      %p186 = scmp.lt.s32.totalorder %s183, 3
      %s187 = scalar_select %p186, %s183, 3
      %s188 = smul.addr %s187, 8
      %s189 = smul.addr %s185, 32
      %s190 = sadd.s32 %s188, %s189
      %s191 = smul.addr %s190, 8
      %s192 = scalar_lea.vmem %s0, %s191
      %p193 = pneg %p49
      %p194 = pneg %p46
      %p195 = scmp.lt.s32.totalorder %s18, 1
      %s196 = scalar_select %p195, %s18, 1
      %s197 = smul.addr %s196, 128
      %s198 = smul.addr %s197, 8
      %s199 = scalar_lea.vmem %s1, %s198
      %p200 = pneg %p75
      %p201 = pneg %p72
      %p202 = scmp.lt.s32.totalorder %s18, 1
      %s203 = scalar_select %p202, %s18, 1
      %s204 = scalar_lea.vmem %s2, %s203
      %p205 = pneg %p101
      %p206 = pneg %p98
      %p207 = pneg %p129
      %p208 = pneg %p126
      %s209 = smul.u32 4, %s19
      %p210 = scmp.lt.s32.totalorder %s18, 1
      %s211 = scalar_select %p210, %s18, 1
      %p212 = scmp.lt.s32.totalorder %s209, 3
      %s213 = scalar_select %p212, %s209, 3
      %s214 = smul.addr %s211, 4
      %s215 = sadd.s32 %s213, %s214
      %s216 = smul.addr %s215, 8
      %s217 = scalar_lea.vmem %s3, %s216
      %s218 = smul.u32 4, %s19
      %p219 = scmp.lt.s32.totalorder %s18, 1
      %s220 = scalar_select %p219, %s18, 1
      %p221 = scmp.lt.s32.totalorder %s218, 3
      %s222 = scalar_select %p221, %s218, 3
      %s223 = smul.addr %s222, 8
      %s224 = smul.addr %s220, 32
      %s225 = sadd.s32 %s223, %s224
      %s226 = smul.addr %s225, 8
      %s227 = scalar_lea.vmem %s0, %s226
      %s228 = smul.u32 4, %s19
      %p229 = scmp.lt.s32.totalorder %s18, 1
      %s230 = scalar_select %p229, %s18, 1
      %s231 = smul.addr %s230, 128
      %s232 = smul.addr %s231, 8
      %s233 = scalar_lea.vmem %s1, %s232
      %p234 = scmp.lt.s32.totalorder %s18, 1
      %s235 = scalar_select %p234, %s18, 1
      %s236 = scalar_lea.vmem %s2, %s235
      %s237 = smul.u32 4, %s19
      %p238 = scmp.lt.s32.totalorder %s18, 1
      %s239 = scalar_select %p238, %s18, 1
      %p240 = scmp.lt.s32.totalorder %s237, 3
      %s241 = scalar_select %p240, %s237, 3
      %s242 = smul.addr %s239, 4
      %s243 = sadd.s32 %s241, %s242
      %s244 = smul.addr %s243, 8
      %s245 = scalar_lea.vmem %s3, %s244
      %s246 = smul.u32 4, %s19
      %v247 = vld [vmem:[%s227] sm:$0xff]
      %v248 = vld [vmem:[%s227 + $0x8] sm:$0xff]
      %v249 = vld [vmem:[%s227 + $0x10] sm:$0xff]
      %v250 = vld [vmem:[%s227 + $0x18] sm:$0xff]
      %v251 = vld [vmem:[%s227 + $0x20] sm:$0xff]
      %v252 = vld [vmem:[%s227 + $0x28] sm:$0xff]
      %v253 = vld [vmem:[%s227 + $0x30] sm:$0xff]
      %v254 = vld [vmem:[%s227 + $0x38] sm:$0xff]
      %v255 = vld [vmem:[%s227 + $0x40] sm:$0xff]
      %v256 = vld [vmem:[%s227 + $0x48] sm:$0xff]
      %v257 = vld [vmem:[%s227 + $0x50] sm:$0xff]
      %v258 = vld [vmem:[%s227 + $0x58] sm:$0xff]
      %v259 = vld [vmem:[%s227 + $0x60] sm:$0xff]
      %v260 = vld [vmem:[%s227 + $0x68] sm:$0xff]
      %v261 = vld [vmem:[%s227 + $0x70] sm:$0xff]
      %v262 = vld [vmem:[%s227 + $0x78] sm:$0xff]
      %v263 = vld [vmem:[%s227 + $0x80] sm:$0xff]
      %v264 = vld [vmem:[%s227 + $0x88] sm:$0xff]
      %v265 = vld [vmem:[%s227 + $0x90] sm:$0xff]
      %v266 = vld [vmem:[%s227 + $0x98] sm:$0xff]
      %v267 = vld [vmem:[%s227 + $0xa0] sm:$0xff]
      %v268 = vld [vmem:[%s227 + $0xa8] sm:$0xff]
      %v269 = vld [vmem:[%s227 + $0xb0] sm:$0xff]
      %v270 = vld [vmem:[%s227 + $0xb8] sm:$0xff]
      %v271 = vld [vmem:[%s227 + $0xc0] sm:$0xff]
      %v272 = vld [vmem:[%s227 + $0xc8] sm:$0xff]
      %v273 = vld [vmem:[%s227 + $0xd0] sm:$0xff]
      %v274 = vld [vmem:[%s227 + $0xd8] sm:$0xff]
      %v275 = vld [vmem:[%s227 + $0xe0] sm:$0xff]
      %v276 = vld [vmem:[%s227 + $0xe8] sm:$0xff]
      %v277 = vld [vmem:[%s227 + $0xf0] sm:$0xff]
      %v278 = vld [vmem:[%s227 + $0xf8] sm:$0xff]
      %v279 = vld [vmem:[%s233] sm:$0xff]
      %v280 = vld [vmem:[%s233 + $0x8] sm:$0xff]
      %v281 = vld [vmem:[%s233 + $0x10] sm:$0xff]
      %v282 = vld [vmem:[%s233 + $0x18] sm:$0xff]
      %v283 = vld [vmem:[%s233 + $0x20] sm:$0xff]
      %v284 = vld [vmem:[%s233 + $0x28] sm:$0xff]
      %v285 = vld [vmem:[%s233 + $0x30] sm:$0xff]
      %v286 = vld [vmem:[%s233 + $0x38] sm:$0xff]
      %v287 = vld [vmem:[%s233 + $0x40] sm:$0xff]
      %v288 = vld [vmem:[%s233 + $0x48] sm:$0xff]
      %v289 = vld [vmem:[%s233 + $0x50] sm:$0xff]
      %v290 = vld [vmem:[%s233 + $0x58] sm:$0xff]
      %v291 = vld [vmem:[%s233 + $0x60] sm:$0xff]
      %v292 = vld [vmem:[%s233 + $0x68] sm:$0xff]
      %v293 = vld [vmem:[%s233 + $0x70] sm:$0xff]
      %v294 = vld [vmem:[%s233 + $0x78] sm:$0xff]
      %v295 = vld [vmem:[%s233 + $0x80] sm:$0xff]
      %v296 = vld [vmem:[%s233 + $0x88] sm:$0xff]
      %v297 = vld [vmem:[%s233 + $0x90] sm:$0xff]
      %v298 = vld [vmem:[%s233 + $0x98] sm:$0xff]
      %v299 = vld [vmem:[%s233 + $0xa0] sm:$0xff]
      %v300 = vld [vmem:[%s233 + $0xa8] sm:$0xff]
      %v301 = vld [vmem:[%s233 + $0xb0] sm:$0xff]
      %v302 = vld [vmem:[%s233 + $0xb8] sm:$0xff]
      %v303 = vld [vmem:[%s233 + $0xc0] sm:$0xff]
      %v304 = vld [vmem:[%s233 + $0xc8] sm:$0xff]
      %v305 = vld [vmem:[%s233 + $0xd0] sm:$0xff]
      %v306 = vld [vmem:[%s233 + $0xd8] sm:$0xff]
      %v307 = vld [vmem:[%s233 + $0xe0] sm:$0xff]
      %v308 = vld [vmem:[%s233 + $0xe8] sm:$0xff]
      %v309 = vld [vmem:[%s233 + $0xf0] sm:$0xff]
      %v310 = vld [vmem:[%s233 + $0xf8] sm:$0xff]
      %v311 = vld [vmem:[%s233 + $0x100] sm:$0xff]
      %v312 = vld [vmem:[%s233 + $0x108] sm:$0xff]
      %v313 = vld [vmem:[%s233 + $0x110] sm:$0xff]
      %v314 = vld [vmem:[%s233 + $0x118] sm:$0xff]
      %v315 = vld [vmem:[%s233 + $0x120] sm:$0xff]
      %v316 = vld [vmem:[%s233 + $0x128] sm:$0xff]
      %v317 = vld [vmem:[%s233 + $0x130] sm:$0xff]
      %v318 = vld [vmem:[%s233 + $0x138] sm:$0xff]
      %v319 = vld [vmem:[%s233 + $0x140] sm:$0xff]
      %v320 = vld [vmem:[%s233 + $0x148] sm:$0xff]
      %v321 = vld [vmem:[%s233 + $0x150] sm:$0xff]
      %v322 = vld [vmem:[%s233 + $0x158] sm:$0xff]
      %v323 = vld [vmem:[%s233 + $0x160] sm:$0xff]
      %v324 = vld [vmem:[%s233 + $0x168] sm:$0xff]
      %v325 = vld [vmem:[%s233 + $0x170] sm:$0xff]
      %v326 = vld [vmem:[%s233 + $0x178] sm:$0xff]
      %v327 = vld [vmem:[%s233 + $0x180] sm:$0xff]
      %v328 = vld [vmem:[%s233 + $0x188] sm:$0xff]
      %v329 = vld [vmem:[%s233 + $0x190] sm:$0xff]
      %v330 = vld [vmem:[%s233 + $0x198] sm:$0xff]
      %v331 = vld [vmem:[%s233 + $0x1a0] sm:$0xff]
      %v332 = vld [vmem:[%s233 + $0x1a8] sm:$0xff]
      %v333 = vld [vmem:[%s233 + $0x1b0] sm:$0xff]
      %v334 = vld [vmem:[%s233 + $0x1b8] sm:$0xff]
      %v335 = vld [vmem:[%s233 + $0x1c0] sm:$0xff]
      %v336 = vld [vmem:[%s233 + $0x1c8] sm:$0xff]
      %v337 = vld [vmem:[%s233 + $0x1d0] sm:$0xff]
      %v338 = vld [vmem:[%s233 + $0x1d8] sm:$0xff]
      %v339 = vld [vmem:[%s233 + $0x1e0] sm:$0xff]
      %v340 = vld [vmem:[%s233 + $0x1e8] sm:$0xff]
      %v341 = vld [vmem:[%s233 + $0x1f0] sm:$0xff]
      %v342 = vld [vmem:[%s233 + $0x1f8] sm:$0xff]
      %v343 = vld [vmem:[%s233 + $0x200] sm:$0xff]
      %v344 = vld [vmem:[%s233 + $0x208] sm:$0xff]
      %v345 = vld [vmem:[%s233 + $0x210] sm:$0xff]
      %v346 = vld [vmem:[%s233 + $0x218] sm:$0xff]
      %v347 = vld [vmem:[%s233 + $0x220] sm:$0xff]
      %v348 = vld [vmem:[%s233 + $0x228] sm:$0xff]
      %v349 = vld [vmem:[%s233 + $0x230] sm:$0xff]
      %v350 = vld [vmem:[%s233 + $0x238] sm:$0xff]
      %v351 = vld [vmem:[%s233 + $0x240] sm:$0xff]
      %v352 = vld [vmem:[%s233 + $0x248] sm:$0xff]
      %v353 = vld [vmem:[%s233 + $0x250] sm:$0xff]
      %v354 = vld [vmem:[%s233 + $0x258] sm:$0xff]
      %v355 = vld [vmem:[%s233 + $0x260] sm:$0xff]
      %v356 = vld [vmem:[%s233 + $0x268] sm:$0xff]
      %v357 = vld [vmem:[%s233 + $0x270] sm:$0xff]
      %v358 = vld [vmem:[%s233 + $0x278] sm:$0xff]
      %v359 = vld [vmem:[%s233 + $0x280] sm:$0xff]
      %v360 = vld [vmem:[%s233 + $0x288] sm:$0xff]
      %v361 = vld [vmem:[%s233 + $0x290] sm:$0xff]
      %v362 = vld [vmem:[%s233 + $0x298] sm:$0xff]
      %v363 = vld [vmem:[%s233 + $0x2a0] sm:$0xff]
      %v364 = vld [vmem:[%s233 + $0x2a8] sm:$0xff]
      %v365 = vld [vmem:[%s233 + $0x2b0] sm:$0xff]
      %v366 = vld [vmem:[%s233 + $0x2b8] sm:$0xff]
      %v367 = vld [vmem:[%s233 + $0x2c0] sm:$0xff]
      %v368 = vld [vmem:[%s233 + $0x2c8] sm:$0xff]
      %v369 = vld [vmem:[%s233 + $0x2d0] sm:$0xff]
      %v370 = vld [vmem:[%s233 + $0x2d8] sm:$0xff]
      %v371 = vld [vmem:[%s233 + $0x2e0] sm:$0xff]
      %v372 = vld [vmem:[%s233 + $0x2e8] sm:$0xff]
      %v373 = vld [vmem:[%s233 + $0x2f0] sm:$0xff]
      %v374 = vld [vmem:[%s233 + $0x2f8] sm:$0xff]
      %v375 = vld [vmem:[%s233 + $0x300] sm:$0xff]
      %v376 = vld [vmem:[%s233 + $0x308] sm:$0xff]
      %v377 = vld [vmem:[%s233 + $0x310] sm:$0xff]
      %v378 = vld [vmem:[%s233 + $0x318] sm:$0xff]
      %v379 = vld [vmem:[%s233 + $0x320] sm:$0xff]
      %v380 = vld [vmem:[%s233 + $0x328] sm:$0xff]
      %v381 = vld [vmem:[%s233 + $0x330] sm:$0xff]
      %v382 = vld [vmem:[%s233 + $0x338] sm:$0xff]
      %v383 = vld [vmem:[%s233 + $0x340] sm:$0xff]
      %v384 = vld [vmem:[%s233 + $0x348] sm:$0xff]
      %v385 = vld [vmem:[%s233 + $0x350] sm:$0xff]
      %v386 = vld [vmem:[%s233 + $0x358] sm:$0xff]
      %v387 = vld [vmem:[%s233 + $0x360] sm:$0xff]
      %v388 = vld [vmem:[%s233 + $0x368] sm:$0xff]
      %v389 = vld [vmem:[%s233 + $0x370] sm:$0xff]
      %v390 = vld [vmem:[%s233 + $0x378] sm:$0xff]
      %v391 = vld [vmem:[%s233 + $0x380] sm:$0xff]
      %v392 = vld [vmem:[%s233 + $0x388] sm:$0xff]
      %v393 = vld [vmem:[%s233 + $0x390] sm:$0xff]
      %v394 = vld [vmem:[%s233 + $0x398] sm:$0xff]
      %v395 = vld [vmem:[%s233 + $0x3a0] sm:$0xff]
      %v396 = vld [vmem:[%s233 + $0x3a8] sm:$0xff]
      %v397 = vld [vmem:[%s233 + $0x3b0] sm:$0xff]
      %v398 = vld [vmem:[%s233 + $0x3b8] sm:$0xff]
      %v399 = vld [vmem:[%s233 + $0x3c0] sm:$0xff]
      %v400 = vld [vmem:[%s233 + $0x3c8] sm:$0xff]
      %v401 = vld [vmem:[%s233 + $0x3d0] sm:$0xff]
      %v402 = vld [vmem:[%s233 + $0x3d8] sm:$0xff]
      %v403 = vld [vmem:[%s233 + $0x3e0] sm:$0xff]
      %v404 = vld [vmem:[%s233 + $0x3e8] sm:$0xff]
      %v405 = vld [vmem:[%s233 + $0x3f0] sm:$0xff]
      %v406 = vld [vmem:[%s233 + $0x3f8] sm:$0xff]
      %v407 = vld [vmem:[%s236] sm:$0x1]
      %v409 = vlaneseq
      %v410 = vshrl.u32 %v409, 7
      %v411 = vsub.s32 0, %v410
      %v412 = vrot.slane %v407, %v411
      %414 = vmatprep.subr.mxu0 0.0
      %415 = vmatpush1.msra.mxu0 %v279
      %416 = vmatprep.subr.mxu0 0.0
      %417 = vmatpush1.msra.mxu0 %v280
      %418 = vmatprep.subr.mxu0 0.0
      %419 = vmatpush1.msra.mxu0 %v281
      %420 = vmatprep.subr.mxu0 0.0
      %421 = vmatpush1.msra.mxu0 %v282
      %422 = vmatprep.subr.mxu0 0.0
      %423 = vmatpush1.msra.mxu0 %v283
      %424 = vmatprep.subr.mxu0 0.0
      %425 = vmatpush1.msra.mxu0 %v284
      %426 = vmatprep.subr.mxu0 0.0
      %427 = vmatpush1.msra.mxu0 %v285
      %428 = vmatprep.subr.mxu0 0.0
      %429 = vmatpush1.msra.mxu0 %v286
      %430 = vmatprep.subr.mxu0 0.0
      %431 = vmatpush1.msra.mxu0 %v287
      %432 = vmatprep.subr.mxu0 0.0
      %433 = vmatpush1.msra.mxu0 %v288
      %434 = vmatprep.subr.mxu0 0.0
      %435 = vmatpush1.msra.mxu0 %v289
      %436 = vmatprep.subr.mxu0 0.0
      %437 = vmatpush1.msra.mxu0 %v290
      %438 = vmatprep.subr.mxu0 0.0
      %439 = vmatpush1.msra.mxu0 %v291
      %440 = vmatprep.subr.mxu0 0.0
      %441 = vmatpush1.msra.mxu0 %v292
      %442 = vmatprep.subr.mxu0 0.0
      %443 = vmatpush1.msra.mxu0 %v293
      %444 = vmatprep.subr.mxu0 0.0
      %445 = vmatpush1.msra.mxu0 %v294
      %446 = vmatprep.subr.mxu0 0.0
      %447 = vmatpush1.msra.mxu0 %v295
      %448 = vmatprep.subr.mxu0 0.0
      %449 = vmatpush1.msra.mxu0 %v296
      %450 = vmatprep.subr.mxu0 0.0
      %451 = vmatpush1.msra.mxu0 %v297
      %452 = vmatprep.subr.mxu0 0.0
      %453 = vmatpush1.msra.mxu0 %v298
      %454 = vmatprep.subr.mxu0 0.0
      %455 = vmatpush1.msra.mxu0 %v299
      %456 = vmatprep.subr.mxu0 0.0
      %457 = vmatpush1.msra.mxu0 %v300
      %458 = vmatprep.subr.mxu0 0.0
      %459 = vmatpush1.msra.mxu0 %v301
      %460 = vmatprep.subr.mxu0 0.0
      %461 = vmatpush1.msra.mxu0 %v302
      %462 = vmatprep.subr.mxu0 0.0
      %463 = vmatpush1.msra.mxu0 %v303
      %464 = vmatprep.subr.mxu0 0.0
      %465 = vmatpush1.msra.mxu0 %v304
      %466 = vmatprep.subr.mxu0 0.0
      %467 = vmatpush1.msra.mxu0 %v305
      %468 = vmatprep.subr.mxu0 0.0
      %469 = vmatpush1.msra.mxu0 %v306
      %470 = vmatprep.subr.mxu0 0.0
      %471 = vmatpush1.msra.mxu0 %v307
      %472 = vmatprep.subr.mxu0 0.0
      %473 = vmatpush1.msra.mxu0 %v308
      %474 = vmatprep.subr.mxu0 0.0
      %475 = vmatpush1.msra.mxu0 %v309
      %476 = vmatprep.subr.mxu0 0.0
      %477 = vmatpush1.msra.mxu0 %v310
      %478 = vmatprep.mubr.f32.mxu0 %v248
      %479 = vmatmul.mubr.f32.gmra.mrb[0].mxu0 %v247
      %v480 = vpop.f32.mrb[0].mxu0
      %v481 = vadd.f32 %v412, %v480
      %v482 = vpop.f32.mrb[0].mxu0
      %483 = vmatprep.mubr.f32.mxu0 %v256
      %484 = vmatmul.mubr.f32.gmra.mrb[0].mxu0 %v255
      %v485 = vpop.f32.mrb[0].mxu0
      %v486 = vadd.f32 %v412, %v485
      %v487 = vpop.f32.mrb[0].mxu0
      %488 = vmatprep.mubr.f32.mxu0 %v264
      %489 = vmatmul.mubr.f32.gmra.mrb[0].mxu0 %v263
      %v490 = vpop.f32.mrb[0].mxu0
      %v491 = vadd.f32 %v412, %v490
      %v492 = vpop.f32.mrb[0].mxu0
      %493 = vmatprep.mubr.f32.mxu0 %v272
      %494 = vmatmul.mubr.f32.gmra.mrb[0].mxu0 %v271
      %v495 = vpop.f32.mrb[0].mxu0
      %v496 = vadd.f32 %v412, %v495
      %v497 = vpop.f32.mrb[0].mxu0
      %498 = vdwg.mxu0
      %499 = vmatprep.subr.mxu0 0.0
      %500 = vmatpush1.msra.mxu0 %v311
      %501 = vmatprep.subr.mxu0 0.0
      %502 = vmatpush1.msra.mxu0 %v312
      %503 = vmatprep.subr.mxu0 0.0
      %504 = vmatpush1.msra.mxu0 %v313
      %505 = vmatprep.subr.mxu0 0.0
      %506 = vmatpush1.msra.mxu0 %v314
      %507 = vmatprep.subr.mxu0 0.0
      %508 = vmatpush1.msra.mxu0 %v315
      %509 = vmatprep.subr.mxu0 0.0
      %510 = vmatpush1.msra.mxu0 %v316
      %511 = vmatprep.subr.mxu0 0.0
      %512 = vmatpush1.msra.mxu0 %v317
      %513 = vmatprep.subr.mxu0 0.0
      %514 = vmatpush1.msra.mxu0 %v318
      %515 = vmatprep.subr.mxu0 0.0
      %516 = vmatpush1.msra.mxu0 %v319
      %517 = vmatprep.subr.mxu0 0.0
      %518 = vmatpush1.msra.mxu0 %v320
      %519 = vmatprep.subr.mxu0 0.0
      %520 = vmatpush1.msra.mxu0 %v321
      %521 = vmatprep.subr.mxu0 0.0
      %522 = vmatpush1.msra.mxu0 %v322
      %523 = vmatprep.subr.mxu0 0.0
      %524 = vmatpush1.msra.mxu0 %v323
      %525 = vmatprep.subr.mxu0 0.0
      %526 = vmatpush1.msra.mxu0 %v324
      %527 = vmatprep.subr.mxu0 0.0
      %528 = vmatpush1.msra.mxu0 %v325
      %529 = vmatprep.subr.mxu0 0.0
      %530 = vmatpush1.msra.mxu0 %v326
      %531 = vmatprep.subr.mxu0 0.0
      %532 = vmatpush1.msra.mxu0 %v327
      %533 = vmatprep.subr.mxu0 0.0
      %534 = vmatpush1.msra.mxu0 %v328
      %535 = vmatprep.subr.mxu0 0.0
      %536 = vmatpush1.msra.mxu0 %v329
      %537 = vmatprep.subr.mxu0 0.0
      %538 = vmatpush1.msra.mxu0 %v330
      %539 = vmatprep.subr.mxu0 0.0
      %540 = vmatpush1.msra.mxu0 %v331
      %541 = vmatprep.subr.mxu0 0.0
      %542 = vmatpush1.msra.mxu0 %v332
      %543 = vmatprep.subr.mxu0 0.0
      %544 = vmatpush1.msra.mxu0 %v333
      %545 = vmatprep.subr.mxu0 0.0
      %546 = vmatpush1.msra.mxu0 %v334
      %547 = vmatprep.subr.mxu0 0.0
      %548 = vmatpush1.msra.mxu0 %v335
      %549 = vmatprep.subr.mxu0 0.0
      %550 = vmatpush1.msra.mxu0 %v336
      %551 = vmatprep.subr.mxu0 0.0
      %552 = vmatpush1.msra.mxu0 %v337
      %553 = vmatprep.subr.mxu0 0.0
      %554 = vmatpush1.msra.mxu0 %v338
      %555 = vmatprep.subr.mxu0 0.0
      %556 = vmatpush1.msra.mxu0 %v339
      %557 = vmatprep.subr.mxu0 0.0
      %558 = vmatpush1.msra.mxu0 %v340
      %559 = vmatprep.subr.mxu0 0.0
      %560 = vmatpush1.msra.mxu0 %v341
      %561 = vmatprep.subr.mxu0 0.0
      %562 = vmatpush1.msra.mxu0 %v342
      %563 = vmatprep.mubr.f32.mxu0 %v250
      %564 = vmatmul.mubr.f32.gmra.mrb[0].mxu0 %v249
      %v565 = vpop.f32.mrb[0].mxu0
      %v566 = vadd.f32 %v481, %v565
      %v567 = vpop.f32.mrb[0].mxu0
      %568 = vmatprep.mubr.f32.mxu0 %v258
      %569 = vmatmul.mubr.f32.gmra.mrb[0].mxu0 %v257
      %v570 = vpop.f32.mrb[0].mxu0
      %v571 = vadd.f32 %v486, %v570
      %v572 = vpop.f32.mrb[0].mxu0
      %573 = vmatprep.mubr.f32.mxu0 %v266
      %574 = vmatmul.mubr.f32.gmra.mrb[0].mxu0 %v265
      %v575 = vpop.f32.mrb[0].mxu0
      %v576 = vadd.f32 %v491, %v575
      %v577 = vpop.f32.mrb[0].mxu0
      %578 = vmatprep.mubr.f32.mxu0 %v274
      %579 = vmatmul.mubr.f32.gmra.mrb[0].mxu0 %v273
      %v580 = vpop.f32.mrb[0].mxu0
      %v581 = vadd.f32 %v496, %v580
      %v582 = vpop.f32.mrb[0].mxu0
      %583 = vdwg.mxu0
      %584 = vmatprep.subr.mxu0 0.0
      %585 = vmatpush1.msra.mxu0 %v343
      %586 = vmatprep.subr.mxu0 0.0
      %587 = vmatpush1.msra.mxu0 %v344
      %588 = vmatprep.subr.mxu0 0.0
      %589 = vmatpush1.msra.mxu0 %v345
      %590 = vmatprep.subr.mxu0 0.0
      %591 = vmatpush1.msra.mxu0 %v346
      %592 = vmatprep.subr.mxu0 0.0
      %593 = vmatpush1.msra.mxu0 %v347
      %594 = vmatprep.subr.mxu0 0.0
      %595 = vmatpush1.msra.mxu0 %v348
      %596 = vmatprep.subr.mxu0 0.0
      %597 = vmatpush1.msra.mxu0 %v349
      %598 = vmatprep.subr.mxu0 0.0
      %599 = vmatpush1.msra.mxu0 %v350
      %600 = vmatprep.subr.mxu0 0.0
      %601 = vmatpush1.msra.mxu0 %v351
      %602 = vmatprep.subr.mxu0 0.0
      %603 = vmatpush1.msra.mxu0 %v352
      %604 = vmatprep.subr.mxu0 0.0
      %605 = vmatpush1.msra.mxu0 %v353
      %606 = vmatprep.subr.mxu0 0.0
      %607 = vmatpush1.msra.mxu0 %v354
      %608 = vmatprep.subr.mxu0 0.0
      %609 = vmatpush1.msra.mxu0 %v355
      %610 = vmatprep.subr.mxu0 0.0
      %611 = vmatpush1.msra.mxu0 %v356
      %612 = vmatprep.subr.mxu0 0.0
      %613 = vmatpush1.msra.mxu0 %v357
      %614 = vmatprep.subr.mxu0 0.0
      %615 = vmatpush1.msra.mxu0 %v358
      %616 = vmatprep.subr.mxu0 0.0
      %617 = vmatpush1.msra.mxu0 %v359
      %618 = vmatprep.subr.mxu0 0.0
      %619 = vmatpush1.msra.mxu0 %v360
      %620 = vmatprep.subr.mxu0 0.0
      %621 = vmatpush1.msra.mxu0 %v361
      %622 = vmatprep.subr.mxu0 0.0
      %623 = vmatpush1.msra.mxu0 %v362
      %624 = vmatprep.subr.mxu0 0.0
      %625 = vmatpush1.msra.mxu0 %v363
      %626 = vmatprep.subr.mxu0 0.0
      %627 = vmatpush1.msra.mxu0 %v364
      %628 = vmatprep.subr.mxu0 0.0
      %629 = vmatpush1.msra.mxu0 %v365
      %630 = vmatprep.subr.mxu0 0.0
      %631 = vmatpush1.msra.mxu0 %v366
      %632 = vmatprep.subr.mxu0 0.0
      %633 = vmatpush1.msra.mxu0 %v367
      %634 = vmatprep.subr.mxu0 0.0
      %635 = vmatpush1.msra.mxu0 %v368
      %636 = vmatprep.subr.mxu0 0.0
      %637 = vmatpush1.msra.mxu0 %v369
      %638 = vmatprep.subr.mxu0 0.0
      %639 = vmatpush1.msra.mxu0 %v370
      %640 = vmatprep.subr.mxu0 0.0
      %641 = vmatpush1.msra.mxu0 %v371
      %642 = vmatprep.subr.mxu0 0.0
      %643 = vmatpush1.msra.mxu0 %v372
      %644 = vmatprep.subr.mxu0 0.0
      %645 = vmatpush1.msra.mxu0 %v373
      %646 = vmatprep.subr.mxu0 0.0
      %647 = vmatpush1.msra.mxu0 %v374
      %648 = vmatprep.mubr.f32.mxu0 %v252
      %649 = vmatmul.mubr.f32.gmra.mrb[0].mxu0 %v251
      %v650 = vpop.f32.mrb[0].mxu0
      %v651 = vadd.f32 %v566, %v650
      %v652 = vpop.f32.mrb[0].mxu0
      %653 = vmatprep.mubr.f32.mxu0 %v260
      %654 = vmatmul.mubr.f32.gmra.mrb[0].mxu0 %v259
      %v655 = vpop.f32.mrb[0].mxu0
      %v656 = vadd.f32 %v571, %v655
      %v657 = vpop.f32.mrb[0].mxu0
      %658 = vmatprep.mubr.f32.mxu0 %v268
      %659 = vmatmul.mubr.f32.gmra.mrb[0].mxu0 %v267
      %v660 = vpop.f32.mrb[0].mxu0
      %v661 = vadd.f32 %v576, %v660
      %v662 = vpop.f32.mrb[0].mxu0
      %663 = vmatprep.mubr.f32.mxu0 %v276
      %664 = vmatmul.mubr.f32.gmra.mrb[0].mxu0 %v275
      %v665 = vpop.f32.mrb[0].mxu0
      %v666 = vadd.f32 %v581, %v665
      %v667 = vpop.f32.mrb[0].mxu0
      %668 = vdwg.mxu0
      %669 = vmatprep.subr.mxu0 0.0
      %670 = vmatpush1.msra.mxu0 %v375
      %671 = vmatprep.subr.mxu0 0.0
      %672 = vmatpush1.msra.mxu0 %v376
      %673 = vmatprep.subr.mxu0 0.0
      %674 = vmatpush1.msra.mxu0 %v377
      %675 = vmatprep.subr.mxu0 0.0
      %676 = vmatpush1.msra.mxu0 %v378
      %677 = vmatprep.subr.mxu0 0.0
      %678 = vmatpush1.msra.mxu0 %v379
      %679 = vmatprep.subr.mxu0 0.0
      %680 = vmatpush1.msra.mxu0 %v380
      %681 = vmatprep.subr.mxu0 0.0
      %682 = vmatpush1.msra.mxu0 %v381
      %683 = vmatprep.subr.mxu0 0.0
      %684 = vmatpush1.msra.mxu0 %v382
      %685 = vmatprep.subr.mxu0 0.0
      %686 = vmatpush1.msra.mxu0 %v383
      %687 = vmatprep.subr.mxu0 0.0
      %688 = vmatpush1.msra.mxu0 %v384
      %689 = vmatprep.subr.mxu0 0.0
      %690 = vmatpush1.msra.mxu0 %v385
      %691 = vmatprep.subr.mxu0 0.0
      %692 = vmatpush1.msra.mxu0 %v386
      %693 = vmatprep.subr.mxu0 0.0
      %694 = vmatpush1.msra.mxu0 %v387
      %695 = vmatprep.subr.mxu0 0.0
      %696 = vmatpush1.msra.mxu0 %v388
      %697 = vmatprep.subr.mxu0 0.0
      %698 = vmatpush1.msra.mxu0 %v389
      %699 = vmatprep.subr.mxu0 0.0
      %700 = vmatpush1.msra.mxu0 %v390
      %701 = vmatprep.subr.mxu0 0.0
      %702 = vmatpush1.msra.mxu0 %v391
      %703 = vmatprep.subr.mxu0 0.0
      %704 = vmatpush1.msra.mxu0 %v392
      %705 = vmatprep.subr.mxu0 0.0
      %706 = vmatpush1.msra.mxu0 %v393
      %707 = vmatprep.subr.mxu0 0.0
      %708 = vmatpush1.msra.mxu0 %v394
      %709 = vmatprep.subr.mxu0 0.0
      %710 = vmatpush1.msra.mxu0 %v395
      %711 = vmatprep.subr.mxu0 0.0
      %712 = vmatpush1.msra.mxu0 %v396
      %713 = vmatprep.subr.mxu0 0.0
      %714 = vmatpush1.msra.mxu0 %v397
      %715 = vmatprep.subr.mxu0 0.0
      %716 = vmatpush1.msra.mxu0 %v398
      %717 = vmatprep.subr.mxu0 0.0
      %718 = vmatpush1.msra.mxu0 %v399
      %719 = vmatprep.subr.mxu0 0.0
      %720 = vmatpush1.msra.mxu0 %v400
      %721 = vmatprep.subr.mxu0 0.0
      %722 = vmatpush1.msra.mxu0 %v401
      %723 = vmatprep.subr.mxu0 0.0
      %724 = vmatpush1.msra.mxu0 %v402
      %725 = vmatprep.subr.mxu0 0.0
      %726 = vmatpush1.msra.mxu0 %v403
      %727 = vmatprep.subr.mxu0 0.0
      %728 = vmatpush1.msra.mxu0 %v404
      %729 = vmatprep.subr.mxu0 0.0
      %730 = vmatpush1.msra.mxu0 %v405
      %731 = vmatprep.subr.mxu0 0.0
      %732 = vmatpush1.msra.mxu0 %v406
      %733 = vmatprep.mubr.f32.mxu0 %v254
      %734 = vmatmul.mubr.f32.gmra.mrb[0].mxu0 %v253
      %v735 = vpop.f32.mrb[0].mxu0
      %v736 = vadd.f32 %v651, %v735
      %v737 = vpop.f32.mrb[0].mxu0
      %738 = vmatprep.mubr.f32.mxu0 %v262
      %739 = vmatmul.mubr.f32.gmra.mrb[0].mxu0 %v261
      %v740 = vpop.f32.mrb[0].mxu0
      %v741 = vadd.f32 %v656, %v740
      %v742 = vpop.f32.mrb[0].mxu0
      %743 = vmatprep.mubr.f32.mxu0 %v270
      %744 = vmatmul.mubr.f32.gmra.mrb[0].mxu0 %v269
      %v745 = vpop.f32.mrb[0].mxu0
      %v746 = vadd.f32 %v661, %v745
      %v747 = vpop.f32.mrb[0].mxu0
      %748 = vmatprep.mubr.f32.mxu0 %v278
      %749 = vmatmul.mubr.f32.gmra.mrb[0].mxu0 %v277
      %v750 = vpop.f32.mrb[0].mxu0
      %v751 = vadd.f32 %v666, %v750
      %v752 = vpop.f32.mrb[0].mxu0
      %753 = vdwg.mxu0
      %v754 = vmax.f32 %v736, 0.0
      %v755 = vmax.f32 %v741, 0.0
      %v756 = vmax.f32 %v746, 0.0
      %v757 = vmax.f32 %v751, 0.0
      %vm758 = vcmask 523264
      %759 = vst.msk [vmem:[%s245] sm:$0xff] %vm758, %v754
      %760 = vst.msk [vmem:[%s245 + $0x8] sm:$0xff] %vm758, %v755
      %761 = vst.msk [vmem:[%s245 + $0x10] sm:$0xff] %vm758, %v756
      %762 = vst.msk [vmem:[%s245 + $0x18] sm:$0xff] %vm758, %v757
      %s763 = smul.u32 4, %s19
      %p764 = scmp.lt.s32.totalorder %s18, 1
      %s765 = scalar_select %p764, %s18, 1
      %p766 = scmp.lt.s32.totalorder %s763, 3
      %s767 = scalar_select %p766, %s763, 3
      %s768 = smul.addr %s765, 4
      %s769 = sadd.s32 %s767, %s768
      %s770 = smul.addr %s769, 8
      %s771 = scalar_lea.vmem %s3, %s770
      // Predicated region
      $region33: #{multi_view_forward.9} parent=31 // pred_check
        %p772 = pneg %p126
      $region34: #{multi_view_forward.9} parent=31 // pred_check_branch
        %774 = sbr.rel (%p772) target = $region36
      $region35: #{multi_view_forward.9} parent=31 // pred_region
        %s775 = smul.u32 4, %s19
      $region36: #{multi_view_forward.9} parent=31 // pred_fallthru
        _
    $region32: #{multi_view_forward.9} parent=5 // pred_fallthru
      _
    %p776 = scmp.le.s32.totalorder 2, %s9
    // Predicated region
    $region37: #{multi_view_forward.9} parent=5 // pred_check
      %p777 = pneg %p776
    $region38: #{multi_view_forward.9} parent=5 // pred_check_branch
      %779 = sbr.rel (%p777) target = $region40
    $region39: #{multi_view_forward.9} parent=5 // pred_region
      %s780 = ssub.s32 %s9, 2
      // Predicated region
      $region41: #{multi_view_forward.9} parent=39 // pred_check
        %p781 = pneg %p132
      $region42: #{multi_view_forward.9} parent=39 // pred_check_branch
        %783 = sbr.rel (%p781) target = $region44
      $region43: #{multi_view_forward.9} parent=39 // pred_region
        %s784 = smul.u32 4, %s21
        %p785 = scmp.lt.s32.totalorder %s20, 1
        %s786 = scalar_select %p785, %s20, 1
        %p787 = scmp.lt.s32.totalorder %s784, 3
        %s788 = scalar_select %p787, %s784, 3
        %s789 = smul.addr %s786, 4
        %s790 = sadd.s32 %s788, %s789
        %s791 = smul.addr %s790, 8
        %s792 = scalar_lea.vmem %s3, %s791
      $region44: #{multi_view_forward.9} parent=39 // pred_fallthru
        _
    $region40: #{multi_view_forward.9} parent=5 // pred_fallthru
      _
  $region6: #{multi_view_forward.9} parent=0 // loop_footer
    %s13 = sadd.s32 1, %s9
  $region7: #{multi_view_forward.9} parent=0 // loop_footer_branch
    %8 = sbr.rel target = $region3
  $region8: #{multi_view_forward.9} parent=0 // loop_exit
    _

// kernel: multi_view_forward.10
$region0: #{multi_view_forward.10}
  #allocation0 [shape = 'u32[]', space=smem, size = 0x4, offset = 0x4, fixed_abs, tag = 'smem constant byte address 0x4 - core index']
  #allocation1 [shape = 'u32[144,128]{1,0:T(1,128)}', space=vmem, size = 0x12000, scoped, tag = 'internal scratch']
  %s0 = inlined_call_operand.vmem [shape: f32[2,2,1024], index: 0, kind: input, shape index: {}]
  %s1 = inlined_call_operand.vmem [shape: f32[2,1024,20], index: 1, kind: input, shape index: {}]
  %s2 = inlined_call_operand.vmem [shape: f32[2,1,20], index: 2, kind: input, shape index: {}]
  %s3 = inlined_call_operand.vmem [shape: f32[2,2,10], index: 3, kind: input, shape index: {}]
  %s4 = inlined_call_operand.vmem [shape: f32[2,10,1024], index: 4, kind: input, shape index: {}]
  %s5 = inlined_call_operand.vmem [shape: f32[2,1,1024], index: 5, kind: input, shape index: {}]
  %s6 = inlined_call_operand.hbm [shape: f32[2,2,10], index: 6, kind: output, shape index: {0}]
  %s7 = inlined_call_operand.hbm [shape: f32[2,2,10], index: 7, kind: output, shape index: {1}]
  %s8 = inlined_call_operand.hbm [shape: f32[2,2,10], index: 8, kind: output, shape index: {2}]
  %s9 = inlined_call_operand.vmem [shape: f32[2,2,1024], index: 9, kind: output, shape index: {3}]
  %10 = xla_tuple %s6, %s7, %s8, %s9
  %s11 = sld [smem:[#allocation0]]
  $region81: #{multi_view_forward.10} parent=0
    _
  %s13 = ssub.s32 1, %s11
  %s14 = scalar_select 0, %s13, %s11
  $region1: #{multi_view_forward.10} parent=0
    #allocation2 [shape = 'u8[2048]{0}', space=vmem, size = 0x800, scoped, tag = 'output window, operand 0']
    #allocation3 [shape = 's32[2]{0}', space=sflag, size = 0x8, scoped, tag = 'scoped memory for multi_view_forward.10']
    #allocation4 [shape = 'u8[2048]{0}', space=vmem, size = 0x800, scoped, tag = 'output window, operand 1']
    #allocation5 [shape = 's32[2]{0}', space=sflag, size = 0x8, scoped, tag = 'scoped memory for multi_view_forward.10']
    #allocation6 [shape = 'u8[2048]{0}', space=vmem, size = 0x800, scoped, tag = 'output window, operand 2']
    %15 = vsyncpa [#allocation3], 0
    %s16 = scalar_lea.sflag [#allocation3], 1
    %17 = vsyncpa %s16, 0
    %18 = vsyncpa [#allocation5], 0
    %s19 = scalar_lea.sflag [#allocation5], 1
    %20 = vsyncpa %s19, 0
    loop: start=0, step=1, limit=4
    $region2: #{multi_view_forward.10} parent=1 // loop_pre_header
      _
    $region3: #{multi_view_forward.10} parent=1 // loop_header
      %s22 = sphi 0, %s26
      %p23 = scmp.ge.s32.totalorder %s22, 4
      %s32 = sphi 0, %s34
      %s35 = sphi 0, %s32
      %s36 = sphi 0, %s35
      %s52 = sphi 0, %s36
      %s58 = sphi 0, %s60
      %s61 = sphi 0, %s58
      %s62 = sphi 0, %s61
      %s78 = sphi 0, %s62
      %s84 = sphi 0, %s86
      %s87 = sphi 0, %s84
      %s88 = sphi 0, %s87
      %s104 = sphi 0, %s88
      %s110 = sphi 0, %s112
      %s113 = sphi 0, %s110
      %s114 = sphi 0, %s113
      %s130 = sphi 0, %s114
      %s136 = sphi 0, %s138
      %s139 = sphi 0, %s136
      %s140 = sphi 0, %s139
      %s156 = sphi 0, %s140
      %s162 = sphi 0, %s164
      %s165 = sphi 0, %s162
      %s166 = sphi 0, %s165
      %s182 = sphi 0, %s166
      %s188 = sphi 0, %s190
      %s191 = sphi 0, %s188
      %s192 = sphi 0, %s191
      %s208 = sphi 0, %s192
      %s214 = sphi 0, %s216
      %s217 = sphi 0, %s214
      %s218 = sphi 0, %s217
      %s234 = sphi 0, %s218
      %s240 = sphi 0, %s242
      %s243 = sphi 0, %s240
      %s244 = sphi 0, %s243
      %s260 = sphi 0, %s244
      %s266 = sphi 0, %s268
      %s269 = sphi 0, %s266
      %s270 = sphi 0, %s269
      %s286 = sphi 0, %s270
    $region4: #{multi_view_forward.10} parent=1 // loop_header_branch
      %25 = sbr.rel (%p23) target = $region8
    $region5: #{multi_view_forward.10} parent=1 // loop_body
      %s27 = ssub.s32 %s22, 1
      %s28 = ssub.s32 %s22, 2
      %s29 = sadd.s32 %s22, 1
      %s30 = ssub.s32 %s22, %s29
      %p31 = scmp.eq.s32.totalorder %s30, 0
      %s33 = sadd.s32 %s32, 1
      %s34 = scalar_select %p31, %s32, %s33
      %p37 = pneg %p31
      %p38 = scmp.eq.s32.totalorder %s22, 1
      %p39 = por %p37, %p38
      %p40 = scmp.ne.s32.totalorder %s32, %s35
      %p41 = scmp.eq.s32.totalorder %s22, 0
      %p42 = por %p40, %p41
      %p43 = scmp.ne.s32.totalorder %s32, %s35
      %p44 = scmp.eq.s32.totalorder %s27, 1
      %p45 = por %p43, %p44
      %p46 = scmp.ne.s32.totalorder %s35, %s36
      %p47 = scmp.eq.s32.totalorder %s27, 0
      %p48 = por %p46, %p47
      %p49 = scmp.ne.s32.totalorder %s35, %s36
      %p50 = scmp.eq.s32.totalorder %s28, 1
      %p51 = por %p49, %p50
      %p53 = scmp.ne.s32.totalorder %s36, %s52
      %p54 = scmp.eq.s32.totalorder %s28, 0
      %p55 = por %p53, %p54
      %s56 = ssub.s32 %s22, %s29
      %p57 = scmp.eq.s32.totalorder %s56, 0
      %s59 = sadd.s32 %s58, 1
      %s60 = scalar_select %p57, %s58, %s59
      %p63 = pneg %p57
      %p64 = scmp.eq.s32.totalorder %s22, 1
      %p65 = por %p63, %p64
      %p66 = scmp.ne.s32.totalorder %s58, %s61
      %p67 = scmp.eq.s32.totalorder %s22, 0
      %p68 = por %p66, %p67
      %p69 = scmp.ne.s32.totalorder %s58, %s61
      %p70 = scmp.eq.s32.totalorder %s27, 1
      %p71 = por %p69, %p70
      %p72 = scmp.ne.s32.totalorder %s61, %s62
      %p73 = scmp.eq.s32.totalorder %s27, 0
      %p74 = por %p72, %p73
      %p75 = scmp.ne.s32.totalorder %s61, %s62
      %p76 = scmp.eq.s32.totalorder %s28, 1
      %p77 = por %p75, %p76
      %p79 = scmp.ne.s32.totalorder %s62, %s78
      %p80 = scmp.eq.s32.totalorder %s28, 0
      %p81 = por %p79, %p80
      %s82 = ssub.s32 %s22, %s29
      %p83 = scmp.eq.s32.totalorder %s82, 0
      %s85 = sadd.s32 %s84, 1
      %s86 = scalar_select %p83, %s84, %s85
      %p89 = pneg %p83
      %p90 = scmp.eq.s32.totalorder %s22, 1
      %p91 = por %p89, %p90
      %p92 = scmp.ne.s32.totalorder %s84, %s87
      %p93 = scmp.eq.s32.totalorder %s22, 0
      %p94 = por %p92, %p93
      %p95 = scmp.ne.s32.totalorder %s84, %s87
      %p96 = scmp.eq.s32.totalorder %s27, 1
      %p97 = por %p95, %p96
      %p98 = scmp.ne.s32.totalorder %s87, %s88
      %p99 = scmp.eq.s32.totalorder %s27, 0
      %p100 = por %p98, %p99
      %p101 = scmp.ne.s32.totalorder %s87, %s88
      %p102 = scmp.eq.s32.totalorder %s28, 1
      %p103 = por %p101, %p102
      %p105 = scmp.ne.s32.totalorder %s88, %s104
      %p106 = scmp.eq.s32.totalorder %s28, 0
      %p107 = por %p105, %p106
      %s108 = ssub.s32 %s22, %s29
      %p109 = scmp.eq.s32.totalorder %s108, 0
      %s111 = sadd.s32 %s110, 1
      %s112 = scalar_select %p109, %s110, %s111
      %p115 = pneg %p109
      %p116 = scmp.eq.s32.totalorder %s22, 1
      %p117 = por %p115, %p116
      %p118 = scmp.ne.s32.totalorder %s110, %s113
      %p119 = scmp.eq.s32.totalorder %s22, 0
      %p120 = por %p118, %p119
      %p121 = scmp.ne.s32.totalorder %s110, %s113
      %p122 = scmp.eq.s32.totalorder %s27, 1
      %p123 = por %p121, %p122
      %p124 = scmp.ne.s32.totalorder %s113, %s114
      %p125 = scmp.eq.s32.totalorder %s27, 0
      %p126 = por %p124, %p125
      %p127 = scmp.ne.s32.totalorder %s113, %s114
      %p128 = scmp.eq.s32.totalorder %s28, 1
      %p129 = por %p127, %p128
      %p131 = scmp.ne.s32.totalorder %s114, %s130
      %p132 = scmp.eq.s32.totalorder %s28, 0
      %p133 = por %p131, %p132
      %s134 = ssub.s32 %s22, %s29
      %p135 = scmp.eq.s32.totalorder %s134, 0
      %s137 = sadd.s32 %s136, 1
      %s138 = scalar_select %p135, %s136, %s137
      %p141 = pneg %p135
      %p142 = scmp.eq.s32.totalorder %s22, 1
      %p143 = por %p141, %p142
      %p144 = scmp.ne.s32.totalorder %s136, %s139
      %p145 = scmp.eq.s32.totalorder %s22, 0
      %p146 = por %p144, %p145
      %p147 = scmp.ne.s32.totalorder %s136, %s139
      %p148 = scmp.eq.s32.totalorder %s27, 1
      %p149 = por %p147, %p148
      %p150 = scmp.ne.s32.totalorder %s139, %s140
      %p151 = scmp.eq.s32.totalorder %s27, 0
      %p152 = por %p150, %p151
      %p153 = scmp.ne.s32.totalorder %s139, %s140
      %p154 = scmp.eq.s32.totalorder %s28, 1
      %p155 = por %p153, %p154
      %p157 = scmp.ne.s32.totalorder %s140, %s156
      %p158 = scmp.eq.s32.totalorder %s28, 0
      %p159 = por %p157, %p158
      %s160 = ssub.s32 %s22, %s29
      %p161 = scmp.eq.s32.totalorder %s160, 0
      %s163 = sadd.s32 %s162, 1
      %s164 = scalar_select %p161, %s162, %s163
      %p167 = pneg %p161
      %p168 = scmp.eq.s32.totalorder %s22, 1
      %p169 = por %p167, %p168
      %p170 = scmp.ne.s32.totalorder %s162, %s165
      %p171 = scmp.eq.s32.totalorder %s22, 0
      %p172 = por %p170, %p171
      %p173 = scmp.ne.s32.totalorder %s162, %s165
      %p174 = scmp.eq.s32.totalorder %s27, 1
      %p175 = por %p173, %p174
      %p176 = scmp.ne.s32.totalorder %s165, %s166
      %p177 = scmp.eq.s32.totalorder %s27, 0
      %p178 = por %p176, %p177
      %p179 = scmp.ne.s32.totalorder %s165, %s166
      %p180 = scmp.eq.s32.totalorder %s28, 1
      %p181 = por %p179, %p180
      %p183 = scmp.ne.s32.totalorder %s166, %s182
      %p184 = scmp.eq.s32.totalorder %s28, 0
      %p185 = por %p183, %p184
      %s186 = ssub.s32 %s22, %s29
      %p187 = scmp.eq.s32.totalorder %s186, 0
      %s189 = sadd.s32 %s188, 1
      %s190 = scalar_select %p187, %s188, %s189
      %p193 = pneg %p187
      %p194 = scmp.eq.s32.totalorder %s22, 1
      %p195 = por %p193, %p194
      %p196 = scmp.ne.s32.totalorder %s188, %s191
      %p197 = scmp.eq.s32.totalorder %s22, 0
      %p198 = por %p196, %p197
      %p199 = scmp.ne.s32.totalorder %s188, %s191
      %p200 = scmp.eq.s32.totalorder %s27, 1
      %p201 = por %p199, %p200
      %p202 = scmp.ne.s32.totalorder %s191, %s192
      %p203 = scmp.eq.s32.totalorder %s27, 0
      %p204 = por %p202, %p203
      %p205 = scmp.ne.s32.totalorder %s191, %s192
      %p206 = scmp.eq.s32.totalorder %s28, 1
      %p207 = por %p205, %p206
      %p209 = scmp.ne.s32.totalorder %s192, %s208
      %p210 = scmp.eq.s32.totalorder %s28, 0
      %p211 = por %p209, %p210
      %s212 = ssub.s32 %s22, %s29
      %p213 = scmp.eq.s32.totalorder %s212, 0
      %s215 = sadd.s32 %s214, 1
      %s216 = scalar_select %p213, %s214, %s215
      %p219 = pneg %p213
      %p220 = scmp.eq.s32.totalorder %s22, 1
      %p221 = por %p219, %p220
      %p222 = scmp.ne.s32.totalorder %s214, %s217
      %p223 = scmp.eq.s32.totalorder %s22, 0
      %p224 = por %p222, %p223
      %p225 = scmp.ne.s32.totalorder %s214, %s217
      %p226 = scmp.eq.s32.totalorder %s27, 1
      %p227 = por %p225, %p226
      %p228 = scmp.ne.s32.totalorder %s217, %s218
      %p229 = scmp.eq.s32.totalorder %s27, 0
      %p230 = por %p228, %p229
      %p231 = scmp.ne.s32.totalorder %s217, %s218
      %p232 = scmp.eq.s32.totalorder %s28, 1
      %p233 = por %p231, %p232
      %p235 = scmp.ne.s32.totalorder %s218, %s234
      %p236 = scmp.eq.s32.totalorder %s28, 0
      %p237 = por %p235, %p236
      %s238 = ssub.s32 %s22, %s29
      %p239 = scmp.eq.s32.totalorder %s238, 0
      %s241 = sadd.s32 %s240, 1
      %s242 = scalar_select %p239, %s240, %s241
      %p245 = pneg %p239
      %p246 = scmp.eq.s32.totalorder %s22, 1
      %p247 = por %p245, %p246
      %p248 = scmp.ne.s32.totalorder %s240, %s243
      %p249 = scmp.eq.s32.totalorder %s22, 0
      %p250 = por %p248, %p249
      %p251 = scmp.ne.s32.totalorder %s240, %s243
      %p252 = scmp.eq.s32.totalorder %s27, 1
      %p253 = por %p251, %p252
      %p254 = scmp.ne.s32.totalorder %s243, %s244
      %p255 = scmp.eq.s32.totalorder %s27, 0
      %p256 = por %p254, %p255
      %p257 = scmp.ne.s32.totalorder %s243, %s244
      %p258 = scmp.eq.s32.totalorder %s28, 1
      %p259 = por %p257, %p258
      %p261 = scmp.ne.s32.totalorder %s244, %s260
      %p262 = scmp.eq.s32.totalorder %s28, 0
      %p263 = por %p261, %p262
      %s264 = ssub.s32 %s22, %s29
      %p265 = scmp.eq.s32.totalorder %s264, 0
      %s267 = sadd.s32 %s266, 1
      %s268 = scalar_select %p265, %s266, %s267
      %p271 = pneg %p265
      %p272 = scmp.eq.s32.totalorder %s22, 1
      %p273 = por %p271, %p272
      %p274 = scmp.ne.s32.totalorder %s266, %s269
      %p275 = scmp.eq.s32.totalorder %s22, 0
      %p276 = por %p274, %p275
      %p277 = scmp.ne.s32.totalorder %s266, %s269
      %p278 = scmp.eq.s32.totalorder %s27, 1
      %p279 = por %p277, %p278
      %p280 = scmp.ne.s32.totalorder %s269, %s270
      %p281 = scmp.eq.s32.totalorder %s27, 0
      %p282 = por %p280, %p281
      %p283 = scmp.ne.s32.totalorder %s269, %s270
      %p284 = scmp.eq.s32.totalorder %s28, 1
      %p285 = por %p283, %p284
      %p287 = scmp.ne.s32.totalorder %s270, %s286
      %p288 = scmp.eq.s32.totalorder %s28, 0
      %p289 = por %p287, %p288
      %p290 = scmp.le.s32.totalorder 1, %s22
      %p291 = scmp.lt.s32.totalorder %s22, 3
      %p292 = pnand %p290, %p291
      %p293 = pneg %p292
      // Predicated region
      $region9: #{multi_view_forward.10} parent=5 // pred_check
        _
      $region10: #{multi_view_forward.10} parent=5 // pred_check_branch
        %295 = sbr.rel (%p292) target = $region12
      $region11: #{multi_view_forward.10} parent=5 // pred_region
        %s296 = ssub.s32 %s22, 1
      $region12: #{multi_view_forward.10} parent=5 // pred_fallthru
        _
      %p297 = scmp.lt.s32.totalorder %s22, 2
      // Predicated region
      $region13: #{multi_view_forward.10} parent=5 // pred_check
        %p298 = pneg %p297
      $region14: #{multi_view_forward.10} parent=5 // pred_check_branch
        %300 = sbr.rel (%p298) target = $region16
      $region15: #{multi_view_forward.10} parent=5 // pred_region
        // Predicated region
        $region17: #{multi_view_forward.10} parent=15 // pred_check
          %p301 = pneg %p42
        $region18: #{multi_view_forward.10} parent=15 // pred_check_branch
          %303 = sbr.rel (%p301) target = $region20
        $region19: #{multi_view_forward.10} parent=15 // pred_region
          %p304 = scmp.lt.s32.totalorder %s22, 1
          %s305 = scalar_select %p304, %s22, 1
          %s306 = smul.addr %s305, 8
          %s307 = smul.addr %s306, 2
          %s308 = scalar_lea.vmem %s0, %s307
        $region20: #{multi_view_forward.10} parent=15 // pred_fallthru
          _
        // Predicated region
        $region21: #{multi_view_forward.10} parent=15 // pred_check
          %p309 = pneg %p68
        $region22: #{multi_view_forward.10} parent=15 // pred_check_branch
          %311 = sbr.rel (%p309) target = $region24
        $region23: #{multi_view_forward.10} parent=15 // pred_region
          %p312 = scmp.lt.s32.totalorder %s22, 1
          %s313 = scalar_select %p312, %s22, 1
          %s314 = smul.addr %s313, 128
          %s315 = smul.addr %s314, 8
          %s316 = scalar_lea.vmem %s1, %s315
        $region24: #{multi_view_forward.10} parent=15 // pred_fallthru
          _
        // Predicated region
        $region25: #{multi_view_forward.10} parent=15 // pred_check
          %p317 = pneg %p94
        $region26: #{multi_view_forward.10} parent=15 // pred_check_branch
          %319 = sbr.rel (%p317) target = $region28
        $region27: #{multi_view_forward.10} parent=15 // pred_region
          %p320 = scmp.lt.s32.totalorder %s22, 1
          %s321 = scalar_select %p320, %s22, 1
          %s322 = scalar_lea.vmem %s2, %s321
        $region28: #{multi_view_forward.10} parent=15 // pred_fallthru
          _
        // Predicated region
        $region29: #{multi_view_forward.10} parent=15 // pred_check
          %p323 = pneg %p120
        $region30: #{multi_view_forward.10} parent=15 // pred_check_branch
          %325 = sbr.rel (%p323) target = $region32
        $region31: #{multi_view_forward.10} parent=15 // pred_region
          %p326 = scmp.lt.s32.totalorder %s22, 1
          %s327 = scalar_select %p326, %s22, 1
          %s328 = smul.addr %s327, 2
          %s329 = scalar_lea.vmem %s3, %s328
        $region32: #{multi_view_forward.10} parent=15 // pred_fallthru
          _
        // Predicated region
        $region33: #{multi_view_forward.10} parent=15 // pred_check
          %p330 = pneg %p146
        $region34: #{multi_view_forward.10} parent=15 // pred_check_branch
          %332 = sbr.rel (%p330) target = $region36
        $region35: #{multi_view_forward.10} parent=15 // pred_region
          %p333 = scmp.lt.s32.totalorder %s22, 1
          %s334 = scalar_select %p333, %s22, 1
          %s335 = smul.addr %s334, 16
          %s336 = smul.addr %s335, 8
          %s337 = scalar_lea.vmem %s4, %s336
        $region36: #{multi_view_forward.10} parent=15 // pred_fallthru
          _
        // Predicated region
        $region37: #{multi_view_forward.10} parent=15 // pred_check
          %p338 = pneg %p172
        $region38: #{multi_view_forward.10} parent=15 // pred_check_branch
          %340 = sbr.rel (%p338) target = $region40
        $region39: #{multi_view_forward.10} parent=15 // pred_region
          %p341 = scmp.lt.s32.totalorder %s22, 1
          %s342 = scalar_select %p341, %s22, 1
          %s343 = smul.addr %s342, 8
          %s344 = scalar_lea.vmem %s5, %s343
        $region40: #{multi_view_forward.10} parent=15 // pred_fallthru
          _
      $region16: #{multi_view_forward.10} parent=5 // pred_fallthru
        _
      %p345 = scmp.le.s32.totalorder 1, %s22
      %p346 = scmp.lt.s32.totalorder %s22, 3
      %p347 = pnand %p345, %p346
      %p348 = pneg %p347
      // Predicated region
      $region41: #{multi_view_forward.10} parent=5 // pred_check
        _
      $region42: #{multi_view_forward.10} parent=5 // pred_check_branch
        %350 = sbr.rel (%p347) target = $region44
      $region43: #{multi_view_forward.10} parent=5 // pred_region
        %s351 = ssub.s32 %s22, 1
        %p352 = scmp.lt.s32.totalorder %s27, 1
        %s353 = scalar_select %p352, %s27, 1
        %s354 = smul.addr %s353, 8
        %s355 = smul.addr %s354, 2
        %s356 = scalar_lea.vmem %s0, %s355
        %p357 = pneg %p48
        %p358 = pneg %p45
        %p359 = scmp.lt.s32.totalorder %s27, 1
        %s360 = scalar_select %p359, %s27, 1
        %s361 = smul.addr %s360, 128
        %s362 = smul.addr %s361, 8
        %s363 = scalar_lea.vmem %s1, %s362
        %p364 = pneg %p74
        %p365 = pneg %p71
        %p366 = scmp.lt.s32.totalorder %s27, 1
        %s367 = scalar_select %p366, %s27, 1
        %s368 = scalar_lea.vmem %s2, %s367
        %p369 = pneg %p100
        %p370 = pneg %p97
        %p371 = scmp.lt.s32.totalorder %s27, 1
        %s372 = scalar_select %p371, %s27, 1
        %s373 = smul.addr %s372, 2
        %s374 = scalar_lea.vmem %s3, %s373
        %p375 = pneg %p126
        %p376 = pneg %p123
        %p377 = scmp.lt.s32.totalorder %s27, 1
        %s378 = scalar_select %p377, %s27, 1
        %s379 = smul.addr %s378, 16
        %s380 = smul.addr %s379, 8
        %s381 = scalar_lea.vmem %s4, %s380
        %p382 = pneg %p152
        %p383 = pneg %p149
        %p384 = scmp.lt.s32.totalorder %s27, 1
        %s385 = scalar_select %p384, %s27, 1
        %s386 = smul.addr %s385, 8
        %s387 = scalar_lea.vmem %s5, %s386
        %p388 = pneg %p178
        %p389 = pneg %p175
        %p390 = pneg %p204
        %p391 = pneg %p201
        %s392 = sand.u32 %s191, 1
        %s393 = scalar_lea.sflag [#allocation3], %s392
        %s394 = sand.u32 %s191, 1
        %s395 = smul.addr %s394, 2
        %s396 = scalar_lea.vmem [#allocation2], %s395
        %p397 = pneg %p230
        %p398 = pneg %p227
        %s399 = sand.u32 %s27, 1
        %s400 = scalar_lea.sflag [#allocation5], %s399
        %s401 = sand.u32 %s217, 1
        %s402 = smul.addr %s401, 2
        %s403 = scalar_lea.vmem [#allocation4], %s402
        %p404 = pneg %p256
        %p405 = pneg %p253
        %s406 = sand.u32 %s27, 1
        %s407 = scalar_lea.sflag [#allocation5], %s406
        %s408 = sand.u32 %s243, 1
        %s409 = smul.addr %s408, 2
        %s410 = scalar_lea.vmem [#allocation6], %s409
        %p411 = pneg %p282
        %p412 = pneg %p279
        %p413 = scmp.lt.s32.totalorder %s27, 1
        %s414 = scalar_select %p413, %s27, 1
        %s415 = smul.addr %s414, 8
        %s416 = smul.addr %s415, 2
        %s417 = scalar_lea.vmem %s9, %s416
        %p418 = scmp.lt.s32.totalorder %s27, 1
        %s419 = scalar_select %p418, %s27, 1
        %s420 = smul.addr %s419, 8
        %s421 = smul.addr %s420, 2
        %s422 = scalar_lea.vmem %s0, %s421
        %p423 = scmp.lt.s32.totalorder %s27, 1
        %s424 = scalar_select %p423, %s27, 1
        %s425 = smul.addr %s424, 128
        %s426 = smul.addr %s425, 8
        %s427 = scalar_lea.vmem %s1, %s426
        %p428 = scmp.lt.s32.totalorder %s27, 1
        %s429 = scalar_select %p428, %s27, 1
        %s430 = scalar_lea.vmem %s2, %s429
        %p431 = scmp.lt.s32.totalorder %s27, 1
        %s432 = scalar_select %p431, %s27, 1
        %s433 = smul.addr %s432, 2
        %s434 = scalar_lea.vmem %s3, %s433
        %p435 = scmp.lt.s32.totalorder %s27, 1
        %s436 = scalar_select %p435, %s27, 1
        %s437 = smul.addr %s436, 16
        %s438 = smul.addr %s437, 8
        %s439 = scalar_lea.vmem %s4, %s438
        %p440 = scmp.lt.s32.totalorder %s27, 1
        %s441 = scalar_select %p440, %s27, 1
        %s442 = smul.addr %s441, 8
        %s443 = scalar_lea.vmem %s5, %s442
        %p444 = scmp.lt.s32.totalorder %s27, 1
        %s445 = scalar_select %p444, %s27, 1
        %s446 = smul.addr %s445, 8
        %s447 = smul.addr %s446, 2
        %s448 = scalar_lea.vmem %s9, %s447
        %v449 = vld [vmem:[%s422] sm:$0xff]
        %v450 = vld [vmem:[%s422 + $0x8] sm:$0xff]
        %v451 = vld [vmem:[%s427] sm:$0xff]
        %v452 = vld [vmem:[%s427 + $0x8] sm:$0xff]
        %v453 = vld [vmem:[%s427 + $0x10] sm:$0xff]
        %v454 = vld [vmem:[%s427 + $0x18] sm:$0xff]
        %v455 = vld [vmem:[%s427 + $0x20] sm:$0xff]
        %v456 = vld [vmem:[%s427 + $0x28] sm:$0xff]
        %v457 = vld [vmem:[%s427 + $0x30] sm:$0xff]
        %v458 = vld [vmem:[%s427 + $0x38] sm:$0xff]
        %v459 = vld [vmem:[%s427 + $0x40] sm:$0xff]
        %v460 = vld [vmem:[%s427 + $0x48] sm:$0xff]
        %v461 = vld [vmem:[%s427 + $0x50] sm:$0xff]
        %v462 = vld [vmem:[%s427 + $0x58] sm:$0xff]
        %v463 = vld [vmem:[%s427 + $0x60] sm:$0xff]
        %v464 = vld [vmem:[%s427 + $0x68] sm:$0xff]
        %v465 = vld [vmem:[%s427 + $0x70] sm:$0xff]
        %v466 = vld [vmem:[%s427 + $0x78] sm:$0xff]
        %v467 = vld [vmem:[%s427 + $0x80] sm:$0xff]
        %v468 = vld [vmem:[%s427 + $0x88] sm:$0xff]
        %v469 = vld [vmem:[%s427 + $0x90] sm:$0xff]
        %v470 = vld [vmem:[%s427 + $0x98] sm:$0xff]
        %v471 = vld [vmem:[%s427 + $0xa0] sm:$0xff]
        %v472 = vld [vmem:[%s427 + $0xa8] sm:$0xff]
        %v473 = vld [vmem:[%s427 + $0xb0] sm:$0xff]
        %v474 = vld [vmem:[%s427 + $0xb8] sm:$0xff]
        %v475 = vld [vmem:[%s427 + $0xc0] sm:$0xff]
        %v476 = vld [vmem:[%s427 + $0xc8] sm:$0xff]
        %v477 = vld [vmem:[%s427 + $0xd0] sm:$0xff]
        %v478 = vld [vmem:[%s427 + $0xd8] sm:$0xff]
        %v479 = vld [vmem:[%s427 + $0xe0] sm:$0xff]
        %v480 = vld [vmem:[%s427 + $0xe8] sm:$0xff]
        %v481 = vld [vmem:[%s427 + $0xf0] sm:$0xff]
        %v482 = vld [vmem:[%s427 + $0xf8] sm:$0xff]
        %v483 = vld [vmem:[%s427 + $0x100] sm:$0xff]
        %v484 = vld [vmem:[%s427 + $0x108] sm:$0xff]
        %v485 = vld [vmem:[%s427 + $0x110] sm:$0xff]
        %v486 = vld [vmem:[%s427 + $0x118] sm:$0xff]
        %v487 = vld [vmem:[%s427 + $0x120] sm:$0xff]
        %v488 = vld [vmem:[%s427 + $0x128] sm:$0xff]
        %v489 = vld [vmem:[%s427 + $0x130] sm:$0xff]
        %v490 = vld [vmem:[%s427 + $0x138] sm:$0xff]
        %v491 = vld [vmem:[%s427 + $0x140] sm:$0xff]
        %v492 = vld [vmem:[%s427 + $0x148] sm:$0xff]
        %v493 = vld [vmem:[%s427 + $0x150] sm:$0xff]
        %v494 = vld [vmem:[%s427 + $0x158] sm:$0xff]
        %v495 = vld [vmem:[%s427 + $0x160] sm:$0xff]
        %v496 = vld [vmem:[%s427 + $0x168] sm:$0xff]
        %v497 = vld [vmem:[%s427 + $0x170] sm:$0xff]
        %v498 = vld [vmem:[%s427 + $0x178] sm:$0xff]
        %v499 = vld [vmem:[%s427 + $0x180] sm:$0xff]
        %v500 = vld [vmem:[%s427 + $0x188] sm:$0xff]
        %v501 = vld [vmem:[%s427 + $0x190] sm:$0xff]
        %v502 = vld [vmem:[%s427 + $0x198] sm:$0xff]
        %v503 = vld [vmem:[%s427 + $0x1a0] sm:$0xff]
        %v504 = vld [vmem:[%s427 + $0x1a8] sm:$0xff]
        %v505 = vld [vmem:[%s427 + $0x1b0] sm:$0xff]
        %v506 = vld [vmem:[%s427 + $0x1b8] sm:$0xff]
        %v507 = vld [vmem:[%s427 + $0x1c0] sm:$0xff]
        %v508 = vld [vmem:[%s427 + $0x1c8] sm:$0xff]
        %v509 = vld [vmem:[%s427 + $0x1d0] sm:$0xff]
        %v510 = vld [vmem:[%s427 + $0x1d8] sm:$0xff]
        %v511 = vld [vmem:[%s427 + $0x1e0] sm:$0xff]
        %v512 = vld [vmem:[%s427 + $0x1e8] sm:$0xff]
        %v513 = vld [vmem:[%s427 + $0x1f0] sm:$0xff]
        %v514 = vld [vmem:[%s427 + $0x1f8] sm:$0xff]
        %v515 = vld [vmem:[%s427 + $0x200] sm:$0xff]
        %v516 = vld [vmem:[%s427 + $0x208] sm:$0xff]
        %v517 = vld [vmem:[%s427 + $0x210] sm:$0xff]
        %v518 = vld [vmem:[%s427 + $0x218] sm:$0xff]
        %v519 = vld [vmem:[%s427 + $0x220] sm:$0xff]
        %v520 = vld [vmem:[%s427 + $0x228] sm:$0xff]
        %v521 = vld [vmem:[%s427 + $0x230] sm:$0xff]
        %v522 = vld [vmem:[%s427 + $0x238] sm:$0xff]
        %v523 = vld [vmem:[%s427 + $0x240] sm:$0xff]
        %v524 = vld [vmem:[%s427 + $0x248] sm:$0xff]
        %v525 = vld [vmem:[%s427 + $0x250] sm:$0xff]
        %v526 = vld [vmem:[%s427 + $0x258] sm:$0xff]
        %v527 = vld [vmem:[%s427 + $0x260] sm:$0xff]
        %v528 = vld [vmem:[%s427 + $0x268] sm:$0xff]
        %v529 = vld [vmem:[%s427 + $0x270] sm:$0xff]
        %v530 = vld [vmem:[%s427 + $0x278] sm:$0xff]
        %v531 = vld [vmem:[%s427 + $0x280] sm:$0xff]
        %v532 = vld [vmem:[%s427 + $0x288] sm:$0xff]
        %v533 = vld [vmem:[%s427 + $0x290] sm:$0xff]
        %v534 = vld [vmem:[%s427 + $0x298] sm:$0xff]
        %v535 = vld [vmem:[%s427 + $0x2a0] sm:$0xff]
        %v536 = vld [vmem:[%s427 + $0x2a8] sm:$0xff]
        %v537 = vld [vmem:[%s427 + $0x2b0] sm:$0xff]
        %v538 = vld [vmem:[%s427 + $0x2b8] sm:$0xff]
        %v539 = vld [vmem:[%s427 + $0x2c0] sm:$0xff]
        %v540 = vld [vmem:[%s427 + $0x2c8] sm:$0xff]
        %v541 = vld [vmem:[%s427 + $0x2d0] sm:$0xff]
        %v542 = vld [vmem:[%s427 + $0x2d8] sm:$0xff]
        %v543 = vld [vmem:[%s427 + $0x2e0] sm:$0xff]
        %v544 = vld [vmem:[%s427 + $0x2e8] sm:$0xff]
        %v545 = vld [vmem:[%s427 + $0x2f0] sm:$0xff]
        %v546 = vld [vmem:[%s427 + $0x2f8] sm:$0xff]
        %v547 = vld [vmem:[%s427 + $0x300] sm:$0xff]
        %v548 = vld [vmem:[%s427 + $0x308] sm:$0xff]
        %v549 = vld [vmem:[%s427 + $0x310] sm:$0xff]
        %v550 = vld [vmem:[%s427 + $0x318] sm:$0xff]
        %v551 = vld [vmem:[%s427 + $0x320] sm:$0xff]
        %v552 = vld [vmem:[%s427 + $0x328] sm:$0xff]
        %v553 = vld [vmem:[%s427 + $0x330] sm:$0xff]
        %v554 = vld [vmem:[%s427 + $0x338] sm:$0xff]
        %v555 = vld [vmem:[%s427 + $0x340] sm:$0xff]
        %v556 = vld [vmem:[%s427 + $0x348] sm:$0xff]
        %v557 = vld [vmem:[%s427 + $0x350] sm:$0xff]
        %v558 = vld [vmem:[%s427 + $0x358] sm:$0xff]
        %v559 = vld [vmem:[%s427 + $0x360] sm:$0xff]
        %v560 = vld [vmem:[%s427 + $0x368] sm:$0xff]
        %v561 = vld [vmem:[%s427 + $0x370] sm:$0xff]
        %v562 = vld [vmem:[%s427 + $0x378] sm:$0xff]
        %v563 = vld [vmem:[%s427 + $0x380] sm:$0xff]
        %v564 = vld [vmem:[%s427 + $0x388] sm:$0xff]
        %v565 = vld [vmem:[%s427 + $0x390] sm:$0xff]
        %v566 = vld [vmem:[%s427 + $0x398] sm:$0xff]
        %v567 = vld [vmem:[%s427 + $0x3a0] sm:$0xff]
        %v568 = vld [vmem:[%s427 + $0x3a8] sm:$0xff]
        %v569 = vld [vmem:[%s427 + $0x3b0] sm:$0xff]
        %v570 = vld [vmem:[%s427 + $0x3b8] sm:$0xff]
        %v571 = vld [vmem:[%s427 + $0x3c0] sm:$0xff]
        %v572 = vld [vmem:[%s427 + $0x3c8] sm:$0xff]
        %v573 = vld [vmem:[%s427 + $0x3d0] sm:$0xff]
        %v574 = vld [vmem:[%s427 + $0x3d8] sm:$0xff]
        %v575 = vld [vmem:[%s427 + $0x3e0] sm:$0xff]
        %v576 = vld [vmem:[%s427 + $0x3e8] sm:$0xff]
        %v577 = vld [vmem:[%s427 + $0x3f0] sm:$0xff]
        %v578 = vld [vmem:[%s427 + $0x3f8] sm:$0xff]
        %v579 = vld [vmem:[%s430] sm:$0x1]
        %v581 = vlaneseq
        %v582 = vshrl.u32 %v581, 7
        %v583 = vsub.s32 0, %v582
        %v584 = vrot.slane %v579, %v583
        %v588 = vcombine.high %v449, %v449
        %v590 = vunpack.c.l.s4 1983009808
        %v591 = vunpack.c.0.s8 %v590
        %v592 = vlaneseq
        %v593 = vshrl.u32 %v592, 7
        %v594 = vsub.s32 %v591, %v593
        %v595 = vrot.slane %v449, %v594
        %v597 = vunpack.c.l.s4 1983009808
        %v598 = vunpack.c.0.s8 %v597
        %v599 = vlaneseq
        %v600 = vshrl.u32 %v599, 7
        %v601 = vsub.s32 %v598, %v600
        %v602 = vrot.slane %v588, %v601
        %v603 = vcombine.high %v595, %v595
        %v604 = vcombine.high %v602, %v602
        %v605 = vcombine.high %v450, %v450
        %v607 = vunpack.c.l.s4 1983009808
        %v608 = vunpack.c.0.s8 %v607
        %v609 = vlaneseq
        %v610 = vshrl.u32 %v609, 7
        %v611 = vsub.s32 %v608, %v610
        %v612 = vrot.slane %v450, %v611
        %v614 = vunpack.c.l.s4 1983009808
        %v615 = vunpack.c.0.s8 %v614
        %v616 = vlaneseq
        %v617 = vshrl.u32 %v616, 7
        %v618 = vsub.s32 %v615, %v617
        %v619 = vrot.slane %v605, %v618
        %v620 = vcombine.high %v612, %v612
        %v621 = vcombine.high %v619, %v619
        %630 = vmatprep.subr.mxu0 0.0
        %631 = vmatpush1.msra.mxu0 %v451
        %632 = vmatprep.subr.mxu0 0.0
        %633 = vmatpush1.msra.mxu0 %v452
        %634 = vmatprep.subr.mxu0 0.0
        %635 = vmatpush1.msra.mxu0 %v453
        %636 = vmatprep.subr.mxu0 0.0
        %637 = vmatpush1.msra.mxu0 %v454
        %638 = vmatprep.subr.mxu0 0.0
        %639 = vmatpush1.msra.mxu0 %v455
        %640 = vmatprep.subr.mxu0 0.0
        %641 = vmatpush1.msra.mxu0 %v456
        %642 = vmatprep.subr.mxu0 0.0
        %643 = vmatpush1.msra.mxu0 %v457
        %644 = vmatprep.subr.mxu0 0.0
        %645 = vmatpush1.msra.mxu0 %v458
        %646 = vmatprep.subr.mxu0 0.0
        %647 = vmatpush1.msra.mxu0 %v459
        %648 = vmatprep.subr.mxu0 0.0
        %649 = vmatpush1.msra.mxu0 %v460
        %650 = vmatprep.subr.mxu0 0.0
        %651 = vmatpush1.msra.mxu0 %v461
        %652 = vmatprep.subr.mxu0 0.0
        %653 = vmatpush1.msra.mxu0 %v462
        %654 = vmatprep.subr.mxu0 0.0
        %655 = vmatpush1.msra.mxu0 %v463
        %656 = vmatprep.subr.mxu0 0.0
        %657 = vmatpush1.msra.mxu0 %v464
        %658 = vmatprep.subr.mxu0 0.0
        %659 = vmatpush1.msra.mxu0 %v465
        %660 = vmatprep.subr.mxu0 0.0
        %661 = vmatpush1.msra.mxu0 %v466
        %662 = vmatprep.subr.mxu0 0.0
        %663 = vmatpush1.msra.mxu0 %v467
        %664 = vmatprep.subr.mxu0 0.0
        %665 = vmatpush1.msra.mxu0 %v468
        %666 = vmatprep.subr.mxu0 0.0
        %667 = vmatpush1.msra.mxu0 %v469
        %668 = vmatprep.subr.mxu0 0.0
        %669 = vmatpush1.msra.mxu0 %v470
        %670 = vmatprep.subr.mxu0 0.0
        %671 = vmatpush1.msra.mxu0 %v471
        %672 = vmatprep.subr.mxu0 0.0
        %673 = vmatpush1.msra.mxu0 %v472
        %674 = vmatprep.subr.mxu0 0.0
        %675 = vmatpush1.msra.mxu0 %v473
        %676 = vmatprep.subr.mxu0 0.0
        %677 = vmatpush1.msra.mxu0 %v474
        %678 = vmatprep.subr.mxu0 0.0
        %679 = vmatpush1.msra.mxu0 %v475
        %680 = vmatprep.subr.mxu0 0.0
        %681 = vmatpush1.msra.mxu0 %v476
        %682 = vmatprep.subr.mxu0 0.0
        %683 = vmatpush1.msra.mxu0 %v477
        %684 = vmatprep.subr.mxu0 0.0
        %685 = vmatpush1.msra.mxu0 %v478
        %686 = vmatprep.subr.mxu0 0.0
        %687 = vmatpush1.msra.mxu0 %v479
        %688 = vmatprep.subr.mxu0 0.0
        %689 = vmatpush1.msra.mxu0 %v480
        %690 = vmatprep.subr.mxu0 0.0
        %691 = vmatpush1.msra.mxu0 %v481
        %692 = vmatprep.subr.mxu0 0.0
        %693 = vmatpush1.msra.mxu0 %v482
        %694 = vmatprep.mubr.f32.mxu0 %v603
        %695 = vmatmul.mubr.f32.gmra.mrb[0].mxu0 %v595
        %v696 = vpop.f32.mrb[0].mxu0
        %v697 = vadd.f32 %v584, %v696
        %v698 = vpop.f32.mrb[0].mxu0
        %699 = vdwg.mxu0
        %700 = vmatprep.subr.mxu0 0.0
        %701 = vmatpush1.msra.mxu0 %v483
        %702 = vmatprep.subr.mxu0 0.0
        %703 = vmatpush1.msra.mxu0 %v484
        %704 = vmatprep.subr.mxu0 0.0
        %705 = vmatpush1.msra.mxu0 %v485
        %706 = vmatprep.subr.mxu0 0.0
        %707 = vmatpush1.msra.mxu0 %v486
        %708 = vmatprep.subr.mxu0 0.0
        %709 = vmatpush1.msra.mxu0 %v487
        %710 = vmatprep.subr.mxu0 0.0
        %711 = vmatpush1.msra.mxu0 %v488
        %712 = vmatprep.subr.mxu0 0.0
        %713 = vmatpush1.msra.mxu0 %v489
        %714 = vmatprep.subr.mxu0 0.0
        %715 = vmatpush1.msra.mxu0 %v490
        %716 = vmatprep.subr.mxu0 0.0
        %717 = vmatpush1.msra.mxu0 %v491
        %718 = vmatprep.subr.mxu0 0.0
        %719 = vmatpush1.msra.mxu0 %v492
        %720 = vmatprep.subr.mxu0 0.0
        %721 = vmatpush1.msra.mxu0 %v493
        %722 = vmatprep.subr.mxu0 0.0
        %723 = vmatpush1.msra.mxu0 %v494
        %724 = vmatprep.subr.mxu0 0.0
        %725 = vmatpush1.msra.mxu0 %v495
        %726 = vmatprep.subr.mxu0 0.0
        %727 = vmatpush1.msra.mxu0 %v496
        %728 = vmatprep.subr.mxu0 0.0
        %729 = vmatpush1.msra.mxu0 %v497
        %730 = vmatprep.subr.mxu0 0.0
        %731 = vmatpush1.msra.mxu0 %v498
        %732 = vmatprep.subr.mxu0 0.0
        %733 = vmatpush1.msra.mxu0 %v499
        %734 = vmatprep.subr.mxu0 0.0
        %735 = vmatpush1.msra.mxu0 %v500
        %736 = vmatprep.subr.mxu0 0.0
        %737 = vmatpush1.msra.mxu0 %v501
        %738 = vmatprep.subr.mxu0 0.0
        %739 = vmatpush1.msra.mxu0 %v502
        %740 = vmatprep.subr.mxu0 0.0
        %741 = vmatpush1.msra.mxu0 %v503
        %742 = vmatprep.subr.mxu0 0.0
        %743 = vmatpush1.msra.mxu0 %v504
        %744 = vmatprep.subr.mxu0 0.0
        %745 = vmatpush1.msra.mxu0 %v505
        %746 = vmatprep.subr.mxu0 0.0
        %747 = vmatpush1.msra.mxu0 %v506
        %748 = vmatprep.subr.mxu0 0.0
        %749 = vmatpush1.msra.mxu0 %v507
        %750 = vmatprep.subr.mxu0 0.0
        %751 = vmatpush1.msra.mxu0 %v508
        %752 = vmatprep.subr.mxu0 0.0
        %753 = vmatpush1.msra.mxu0 %v509
        %754 = vmatprep.subr.mxu0 0.0
        %755 = vmatpush1.msra.mxu0 %v510
        %756 = vmatprep.subr.mxu0 0.0
        %757 = vmatpush1.msra.mxu0 %v511
        %758 = vmatprep.subr.mxu0 0.0
        %759 = vmatpush1.msra.mxu0 %v512
        %760 = vmatprep.subr.mxu0 0.0
        %761 = vmatpush1.msra.mxu0 %v513
        %762 = vmatprep.subr.mxu0 0.0
        %763 = vmatpush1.msra.mxu0 %v514
        %764 = vmatprep.mubr.f32.mxu0 %v604
        %765 = vmatmul.mubr.f32.gmra.mrb[0].mxu0 %v602
        %v766 = vpop.f32.mrb[0].mxu0
        %v767 = vadd.f32 %v697, %v766
        %v768 = vpop.f32.mrb[0].mxu0
        %769 = vdwg.mxu0
        %770 = vmatprep.subr.mxu0 0.0
        %771 = vmatpush1.msra.mxu0 %v515
        %772 = vmatprep.subr.mxu0 0.0
        %773 = vmatpush1.msra.mxu0 %v516
        %774 = vmatprep.subr.mxu0 0.0
        %775 = vmatpush1.msra.mxu0 %v517
        %776 = vmatprep.subr.mxu0 0.0
        %777 = vmatpush1.msra.mxu0 %v518
        %778 = vmatprep.subr.mxu0 0.0
        %779 = vmatpush1.msra.mxu0 %v519
        %780 = vmatprep.subr.mxu0 0.0
        %781 = vmatpush1.msra.mxu0 %v520
        %782 = vmatprep.subr.mxu0 0.0
        %783 = vmatpush1.msra.mxu0 %v521
        %784 = vmatprep.subr.mxu0 0.0
        %785 = vmatpush1.msra.mxu0 %v522
        %786 = vmatprep.subr.mxu0 0.0
        %787 = vmatpush1.msra.mxu0 %v523
        %788 = vmatprep.subr.mxu0 0.0
        %789 = vmatpush1.msra.mxu0 %v524
        %790 = vmatprep.subr.mxu0 0.0
        %791 = vmatpush1.msra.mxu0 %v525
        %792 = vmatprep.subr.mxu0 0.0
        %793 = vmatpush1.msra.mxu0 %v526
        %794 = vmatprep.subr.mxu0 0.0
        %795 = vmatpush1.msra.mxu0 %v527
        %796 = vmatprep.subr.mxu0 0.0
        %797 = vmatpush1.msra.mxu0 %v528
        %798 = vmatprep.subr.mxu0 0.0
        %799 = vmatpush1.msra.mxu0 %v529
        %800 = vmatprep.subr.mxu0 0.0
        %801 = vmatpush1.msra.mxu0 %v530
        %802 = vmatprep.subr.mxu0 0.0
        %803 = vmatpush1.msra.mxu0 %v531
        %804 = vmatprep.subr.mxu0 0.0
        %805 = vmatpush1.msra.mxu0 %v532
        %806 = vmatprep.subr.mxu0 0.0
        %807 = vmatpush1.msra.mxu0 %v533
        %808 = vmatprep.subr.mxu0 0.0
        %809 = vmatpush1.msra.mxu0 %v534
        %810 = vmatprep.subr.mxu0 0.0
        %811 = vmatpush1.msra.mxu0 %v535
        %812 = vmatprep.subr.mxu0 0.0
        %813 = vmatpush1.msra.mxu0 %v536
        %814 = vmatprep.subr.mxu0 0.0
        %815 = vmatpush1.msra.mxu0 %v537
        %816 = vmatprep.subr.mxu0 0.0
        %817 = vmatpush1.msra.mxu0 %v538
        %818 = vmatprep.subr.mxu0 0.0
        %819 = vmatpush1.msra.mxu0 %v539
        %820 = vmatprep.subr.mxu0 0.0
        %821 = vmatpush1.msra.mxu0 %v540
        %822 = vmatprep.subr.mxu0 0.0
        %823 = vmatpush1.msra.mxu0 %v541
        %824 = vmatprep.subr.mxu0 0.0
        %825 = vmatpush1.msra.mxu0 %v542
        %826 = vmatprep.subr.mxu0 0.0
        %827 = vmatpush1.msra.mxu0 %v543
        %828 = vmatprep.subr.mxu0 0.0
        %829 = vmatpush1.msra.mxu0 %v544
        %830 = vmatprep.subr.mxu0 0.0
        %831 = vmatpush1.msra.mxu0 %v545
        %832 = vmatprep.subr.mxu0 0.0
        %833 = vmatpush1.msra.mxu0 %v546
        %834 = vmatprep.mubr.f32.mxu0 %v620
        %835 = vmatmul.mubr.f32.gmra.mrb[0].mxu0 %v612
        %v836 = vpop.f32.mrb[0].mxu0
        %v837 = vadd.f32 %v767, %v836
        %v838 = vpop.f32.mrb[0].mxu0
        %839 = vdwg.mxu0
        %840 = vmatprep.subr.mxu0 0.0
        %841 = vmatpush1.msra.mxu0 %v547
        %842 = vmatprep.subr.mxu0 0.0
        %843 = vmatpush1.msra.mxu0 %v548
        %844 = vmatprep.subr.mxu0 0.0
        %845 = vmatpush1.msra.mxu0 %v549
        %846 = vmatprep.subr.mxu0 0.0
        %847 = vmatpush1.msra.mxu0 %v550
        %848 = vmatprep.subr.mxu0 0.0
        %849 = vmatpush1.msra.mxu0 %v551
        %850 = vmatprep.subr.mxu0 0.0
        %851 = vmatpush1.msra.mxu0 %v552
        %852 = vmatprep.subr.mxu0 0.0
        %853 = vmatpush1.msra.mxu0 %v553
        %854 = vmatprep.subr.mxu0 0.0
        %855 = vmatpush1.msra.mxu0 %v554
        %856 = vmatprep.subr.mxu0 0.0
        %857 = vmatpush1.msra.mxu0 %v555
        %858 = vmatprep.subr.mxu0 0.0
        %859 = vmatpush1.msra.mxu0 %v556
        %860 = vmatprep.subr.mxu0 0.0
        %861 = vmatpush1.msra.mxu0 %v557
        %862 = vmatprep.subr.mxu0 0.0
        %863 = vmatpush1.msra.mxu0 %v558
        %864 = vmatprep.subr.mxu0 0.0
        %865 = vmatpush1.msra.mxu0 %v559
        %866 = vmatprep.subr.mxu0 0.0
        %867 = vmatpush1.msra.mxu0 %v560
        %868 = vmatprep.subr.mxu0 0.0
        %869 = vmatpush1.msra.mxu0 %v561
        %870 = vmatprep.subr.mxu0 0.0
        %871 = vmatpush1.msra.mxu0 %v562
        %872 = vmatprep.subr.mxu0 0.0
        %873 = vmatpush1.msra.mxu0 %v563
        %874 = vmatprep.subr.mxu0 0.0
        %875 = vmatpush1.msra.mxu0 %v564
        %876 = vmatprep.subr.mxu0 0.0
        %877 = vmatpush1.msra.mxu0 %v565
        %878 = vmatprep.subr.mxu0 0.0
        %879 = vmatpush1.msra.mxu0 %v566
        %880 = vmatprep.subr.mxu0 0.0
        %881 = vmatpush1.msra.mxu0 %v567
        %882 = vmatprep.subr.mxu0 0.0
        %883 = vmatpush1.msra.mxu0 %v568
        %884 = vmatprep.subr.mxu0 0.0
        %885 = vmatpush1.msra.mxu0 %v569
        %886 = vmatprep.subr.mxu0 0.0
        %887 = vmatpush1.msra.mxu0 %v570
        %888 = vmatprep.subr.mxu0 0.0
        %889 = vmatpush1.msra.mxu0 %v571
        %890 = vmatprep.subr.mxu0 0.0
        %891 = vmatpush1.msra.mxu0 %v572
        %892 = vmatprep.subr.mxu0 0.0
        %893 = vmatpush1.msra.mxu0 %v573
        %894 = vmatprep.subr.mxu0 0.0
        %895 = vmatpush1.msra.mxu0 %v574
        %896 = vmatprep.subr.mxu0 0.0
        %897 = vmatpush1.msra.mxu0 %v575
        %898 = vmatprep.subr.mxu0 0.0
        %899 = vmatpush1.msra.mxu0 %v576
        %900 = vmatprep.subr.mxu0 0.0
        %901 = vmatpush1.msra.mxu0 %v577
        %902 = vmatprep.subr.mxu0 0.0
        %903 = vmatpush1.msra.mxu0 %v578
        %904 = vmatprep.mubr.f32.mxu0 %v621
        %905 = vmatmul.mubr.f32.gmra.mrb[0].mxu0 %v619
        %v906 = vpop.f32.mrb[0].mxu0
        %v907 = vadd.f32 %v837, %v906
        %v908 = vpop.f32.mrb[0].mxu0
        %909 = vdwg.mxu0
        %v910 = vmax.f32 %v907, 0.0
        %v911 = vld [vmem:[%s434] sm:$0x3]
        %v912 = vmul.f32 %v910, 0.5
        %v913 = vmul.f32 %v912, 1.442695
        %v914 = vpow.pop %v913
        %916 = vrot.lane.b32.xlu0 %v914, 118
        %v917 = vpop.permute.xlu0 %916
        %v919 = vmul.f32 %v911, %v917
        %v920 = vadd.f32 %v910, %v919
        %v921 = vld [vmem:[%s439] sm:$0xff]
        %v922 = vld [vmem:[%s439 + $0x8] sm:$0xff]
        %v923 = vld [vmem:[%s439 + $0x10] sm:$0xff]
        %v924 = vld [vmem:[%s439 + $0x18] sm:$0xff]
        %v925 = vld [vmem:[%s439 + $0x20] sm:$0xff]
        %v926 = vld [vmem:[%s439 + $0x28] sm:$0xff]
        %v927 = vld [vmem:[%s439 + $0x30] sm:$0xff]
        %v928 = vld [vmem:[%s439 + $0x38] sm:$0xff]
        %v929 = vld [vmem:[%s439 + $0x40] sm:$0x3]
        %v930 = vld [vmem:[%s439 + $0x48] sm:$0x3]
        %v931 = vld [vmem:[%s439 + $0x50] sm:$0x3]
        %v932 = vld [vmem:[%s439 + $0x58] sm:$0x3]
        %v933 = vld [vmem:[%s439 + $0x60] sm:$0x3]
        %v934 = vld [vmem:[%s439 + $0x68] sm:$0x3]
        %v935 = vld [vmem:[%s439 + $0x70] sm:$0x3]
        %v936 = vld [vmem:[%s439 + $0x78] sm:$0x3]
        %v937 = vld [vmem:[%s443] sm:$0xff]
        %v939 = vlaneseq
        %v940 = vshrl.u32 %v939, 7
        %v941 = vsub.s32 0, %v940
        %v942 = vrot.slane %v937, %v941
        %v943 = vlaneseq
        %v944 = vshrl.u32 %v943, 7
        %v945 = vsub.s32 1, %v944
        %v946 = vrot.slane %v937, %v945
        %v947 = vlaneseq
        %v948 = vshrl.u32 %v947, 7
        %v949 = vsub.s32 2, %v948
        %v950 = vrot.slane %v937, %v949
        %v951 = vlaneseq
        %v952 = vshrl.u32 %v951, 7
        %v953 = vsub.s32 3, %v952
        %v954 = vrot.slane %v937, %v953
        %v955 = vlaneseq
        %v956 = vshrl.u32 %v955, 7
        %v957 = vsub.s32 4, %v956
        %v958 = vrot.slane %v937, %v957
        %v959 = vlaneseq
        %v960 = vshrl.u32 %v959, 7
        %v961 = vsub.s32 5, %v960
        %v962 = vrot.slane %v937, %v961
        %v963 = vlaneseq
        %v964 = vshrl.u32 %v963, 7
        %v965 = vsub.s32 6, %v964
        %v966 = vrot.slane %v937, %v965
        %v967 = vlaneseq
        %v968 = vshrl.u32 %v967, 7
        %v969 = vsub.s32 7, %v968
        %v970 = vrot.slane %v937, %v969
        %vm979 = vcmask 80896
        %v981 = vsel %vm979, %v920, 0
        %vm983 = vcmask 1041408
        %v985 = vsel %vm983, %v929, 0
        %v988 = vsel %vm983, %v930, 0
        %v991 = vsel %vm983, %v931, 0
        %v994 = vsel %vm983, %v932, 0
        %v997 = vsel %vm983, %v933, 0
        %v1000 = vsel %vm983, %v934, 0
        %v1003 = vsel %vm983, %v935, 0
        %v1006 = vsel %vm983, %v936, 0
        %1008 = vmatprep.subr.mxu0 %v922
        %1009 = vmatpush1.msra.mxu0 %v921
        %1010 = vmatprep.subr.mxu0 %v988
        %1011 = vmatpush1.msra.mxu0 %v985
        %1012 = vmatprep.subr.mxu0 0.0
        %1013 = vmatpush1.msra.mxu0 0.0
        %1014 = vmatprep.subr.mxu0 0.0
        %1015 = vmatpush1.msra.mxu0 0.0
        %1016 = vmatprep.subr.mxu0 0.0
        %1017 = vmatpush1.msra.mxu0 0.0
        %1018 = vmatprep.subr.mxu0 0.0
        %1019 = vmatpush1.msra.mxu0 0.0
        %1020 = vmatprep.subr.mxu0 0.0
        %1021 = vmatpush1.msra.mxu0 0.0
        %1022 = vmatprep.subr.mxu0 0.0
        %1023 = vmatpush1.msra.mxu0 0.0
        %1024 = vmatprep.subr.mxu0 0.0
        %1025 = vmatpush1.msra.mxu0 0.0
        %1026 = vmatprep.subr.mxu0 0.0
        %1027 = vmatpush1.msra.mxu0 0.0
        %1028 = vmatprep.subr.mxu0 0.0
        %1029 = vmatpush1.msra.mxu0 0.0
        %1030 = vmatprep.subr.mxu0 0.0
        %1031 = vmatpush1.msra.mxu0 0.0
        %1032 = vmatprep.subr.mxu0 0.0
        %1033 = vmatpush1.msra.mxu0 0.0
        %1034 = vmatprep.subr.mxu0 0.0
        %1035 = vmatpush1.msra.mxu0 0.0
        %1036 = vmatprep.subr.mxu0 0.0
        %1037 = vmatpush1.msra.mxu0 0.0
        %1038 = vmatprep.subr.mxu0 0.0
        %1039 = vmatpush1.msra.mxu0 0.0
        %1040 = vmatprep.subr.mxu0 0.0
        %1041 = vmatpush1.msra.mxu0 0.0
        %1042 = vmatprep.subr.mxu0 0.0
        %1043 = vmatpush1.msra.mxu0 0.0
        %1044 = vmatprep.subr.mxu0 0.0
        %1045 = vmatpush1.msra.mxu0 0.0
        %1046 = vmatprep.subr.mxu0 0.0
        %1047 = vmatpush1.msra.mxu0 0.0
        %1048 = vmatprep.subr.mxu0 0.0
        %1049 = vmatpush1.msra.mxu0 0.0
        %1050 = vmatprep.subr.mxu0 0.0
        %1051 = vmatpush1.msra.mxu0 0.0
        %1052 = vmatprep.subr.mxu0 0.0
        %1053 = vmatpush1.msra.mxu0 0.0
        %1054 = vmatprep.subr.mxu0 0.0
        %1055 = vmatpush1.msra.mxu0 0.0
        %1056 = vmatprep.subr.mxu0 0.0
        %1057 = vmatpush1.msra.mxu0 0.0
        %1058 = vmatprep.subr.mxu0 0.0
        %1059 = vmatpush1.msra.mxu0 0.0
        %1060 = vmatprep.subr.mxu0 0.0
        %1061 = vmatpush1.msra.mxu0 0.0
        %1062 = vmatprep.subr.mxu0 0.0
        %1063 = vmatpush1.msra.mxu0 0.0
        %1064 = vmatprep.subr.mxu0 0.0
        %1065 = vmatpush1.msra.mxu0 0.0
        %1066 = vmatprep.subr.mxu0 0.0
        %1067 = vmatpush1.msra.mxu0 0.0
        %1068 = vmatprep.subr.mxu0 0.0
        %1069 = vmatpush1.msra.mxu0 0.0
        %1070 = vmatprep.subr.mxu0 0.0
        %1071 = vmatpush1.msra.mxu0 0.0
        %1072 = vmatprep.mubr.f32.mxu0 0.0
        %1073 = vmatmul.mubr.f32.gmra.mrb[0].mxu0 %v981
        %v1074 = vpop.f32.mrb[0].mxu0
        %v1075 = vadd.f32 %v942, %v1074
        %v1076 = vpop.f32.mrb[0].mxu0
        %v1077 = vadd.f32 %v946, %v1076
        %1078 = vdwg.mxu0
        %1079 = vmatprep.subr.mxu0 %v924
        %1080 = vmatpush1.msra.mxu0 %v923
        %1081 = vmatprep.subr.mxu0 %v994
        %1082 = vmatpush1.msra.mxu0 %v991
        %1083 = vmatprep.subr.mxu0 0.0
        %1084 = vmatpush1.msra.mxu0 0.0
        %1085 = vmatprep.subr.mxu0 0.0
        %1086 = vmatpush1.msra.mxu0 0.0
        %1087 = vmatprep.subr.mxu0 0.0
        %1088 = vmatpush1.msra.mxu0 0.0
        %1089 = vmatprep.subr.mxu0 0.0
        %1090 = vmatpush1.msra.mxu0 0.0
        %1091 = vmatprep.subr.mxu0 0.0
        %1092 = vmatpush1.msra.mxu0 0.0
        %1093 = vmatprep.subr.mxu0 0.0
        %1094 = vmatpush1.msra.mxu0 0.0
        %1095 = vmatprep.subr.mxu0 0.0
        %1096 = vmatpush1.msra.mxu0 0.0
        %1097 = vmatprep.subr.mxu0 0.0
        %1098 = vmatpush1.msra.mxu0 0.0
        %1099 = vmatprep.subr.mxu0 0.0
        %1100 = vmatpush1.msra.mxu0 0.0
        %1101 = vmatprep.subr.mxu0 0.0
        %1102 = vmatpush1.msra.mxu0 0.0
        %1103 = vmatprep.subr.mxu0 0.0
        %1104 = vmatpush1.msra.mxu0 0.0
        %1105 = vmatprep.subr.mxu0 0.0
        %1106 = vmatpush1.msra.mxu0 0.0
        %1107 = vmatprep.subr.mxu0 0.0
        %1108 = vmatpush1.msra.mxu0 0.0
        %1109 = vmatprep.subr.mxu0 0.0
        %1110 = vmatpush1.msra.mxu0 0.0
        %1111 = vmatprep.subr.mxu0 0.0
        %1112 = vmatpush1.msra.mxu0 0.0
        %1113 = vmatprep.subr.mxu0 0.0
        %1114 = vmatpush1.msra.mxu0 0.0
        %1115 = vmatprep.subr.mxu0 0.0
        %1116 = vmatpush1.msra.mxu0 0.0
        %1117 = vmatprep.subr.mxu0 0.0
        %1118 = vmatpush1.msra.mxu0 0.0
        %1119 = vmatprep.subr.mxu0 0.0
        %1120 = vmatpush1.msra.mxu0 0.0
        %1121 = vmatprep.subr.mxu0 0.0
        %1122 = vmatpush1.msra.mxu0 0.0
        %1123 = vmatprep.subr.mxu0 0.0
        %1124 = vmatpush1.msra.mxu0 0.0
        %1125 = vmatprep.subr.mxu0 0.0
        %1126 = vmatpush1.msra.mxu0 0.0
        %1127 = vmatprep.subr.mxu0 0.0
        %1128 = vmatpush1.msra.mxu0 0.0
        %1129 = vmatprep.subr.mxu0 0.0
        %1130 = vmatpush1.msra.mxu0 0.0
        %1131 = vmatprep.subr.mxu0 0.0
        %1132 = vmatpush1.msra.mxu0 0.0
        %1133 = vmatprep.subr.mxu0 0.0
        %1134 = vmatpush1.msra.mxu0 0.0
        %1135 = vmatprep.subr.mxu0 0.0
        %1136 = vmatpush1.msra.mxu0 0.0
        %1137 = vmatprep.subr.mxu0 0.0
        %1138 = vmatpush1.msra.mxu0 0.0
        %1139 = vmatprep.subr.mxu0 0.0
        %1140 = vmatpush1.msra.mxu0 0.0
        %1141 = vmatprep.subr.mxu0 0.0
        %1142 = vmatpush1.msra.mxu0 0.0
        %1143 = vmatprep.mubr.f32.mxu0 0.0
        %1144 = vmatmul.mubr.f32.gmra.mrb[0].mxu0 %v981
        %v1145 = vpop.f32.mrb[0].mxu0
        %v1146 = vadd.f32 %v950, %v1145
        %v1147 = vpop.f32.mrb[0].mxu0
        %v1148 = vadd.f32 %v954, %v1147
        %1149 = vdwg.mxu0
        %1150 = vmatprep.subr.mxu0 %v926
        %1151 = vmatpush1.msra.mxu0 %v925
        %1152 = vmatprep.subr.mxu0 %v1000
        %1153 = vmatpush1.msra.mxu0 %v997
        %1154 = vmatprep.subr.mxu0 0.0
        %1155 = vmatpush1.msra.mxu0 0.0
        %1156 = vmatprep.subr.mxu0 0.0
        %1157 = vmatpush1.msra.mxu0 0.0
        %1158 = vmatprep.subr.mxu0 0.0
        %1159 = vmatpush1.msra.mxu0 0.0
        %1160 = vmatprep.subr.mxu0 0.0
        %1161 = vmatpush1.msra.mxu0 0.0
        %1162 = vmatprep.subr.mxu0 0.0
        %1163 = vmatpush1.msra.mxu0 0.0
        %1164 = vmatprep.subr.mxu0 0.0
        %1165 = vmatpush1.msra.mxu0 0.0
        %1166 = vmatprep.subr.mxu0 0.0
        %1167 = vmatpush1.msra.mxu0 0.0
        %1168 = vmatprep.subr.mxu0 0.0
        %1169 = vmatpush1.msra.mxu0 0.0
        %1170 = vmatprep.subr.mxu0 0.0
        %1171 = vmatpush1.msra.mxu0 0.0
        %1172 = vmatprep.subr.mxu0 0.0
        %1173 = vmatpush1.msra.mxu0 0.0
        %1174 = vmatprep.subr.mxu0 0.0
        %1175 = vmatpush1.msra.mxu0 0.0
        %1176 = vmatprep.subr.mxu0 0.0
        %1177 = vmatpush1.msra.mxu0 0.0
        %1178 = vmatprep.subr.mxu0 0.0
        %1179 = vmatpush1.msra.mxu0 0.0
        %1180 = vmatprep.subr.mxu0 0.0
        %1181 = vmatpush1.msra.mxu0 0.0
        %1182 = vmatprep.subr.mxu0 0.0
        %1183 = vmatpush1.msra.mxu0 0.0
        %1184 = vmatprep.subr.mxu0 0.0
        %1185 = vmatpush1.msra.mxu0 0.0
        %1186 = vmatprep.subr.mxu0 0.0
        %1187 = vmatpush1.msra.mxu0 0.0
        %1188 = vmatprep.subr.mxu0 0.0
        %1189 = vmatpush1.msra.mxu0 0.0
        %1190 = vmatprep.subr.mxu0 0.0
        %1191 = vmatpush1.msra.mxu0 0.0
        %1192 = vmatprep.subr.mxu0 0.0
        %1193 = vmatpush1.msra.mxu0 0.0
        %1194 = vmatprep.subr.mxu0 0.0
        %1195 = vmatpush1.msra.mxu0 0.0
        %1196 = vmatprep.subr.mxu0 0.0
        %1197 = vmatpush1.msra.mxu0 0.0
        %1198 = vmatprep.subr.mxu0 0.0
        %1199 = vmatpush1.msra.mxu0 0.0
        %1200 = vmatprep.subr.mxu0 0.0
        %1201 = vmatpush1.msra.mxu0 0.0
        %1202 = vmatprep.subr.mxu0 0.0
        %1203 = vmatpush1.msra.mxu0 0.0
        %1204 = vmatprep.subr.mxu0 0.0
        %1205 = vmatpush1.msra.mxu0 0.0
        %1206 = vmatprep.subr.mxu0 0.0
        %1207 = vmatpush1.msra.mxu0 0.0
        %1208 = vmatprep.subr.mxu0 0.0
        %1209 = vmatpush1.msra.mxu0 0.0
        %1210 = vmatprep.subr.mxu0 0.0
        %1211 = vmatpush1.msra.mxu0 0.0
        %1212 = vmatprep.subr.mxu0 0.0
        %1213 = vmatpush1.msra.mxu0 0.0
        %1214 = vmatprep.mubr.f32.mxu0 0.0
        %1215 = vmatmul.mubr.f32.gmra.mrb[0].mxu0 %v981
        %v1216 = vpop.f32.mrb[0].mxu0
        %v1217 = vadd.f32 %v958, %v1216
        %v1218 = vpop.f32.mrb[0].mxu0
        %v1219 = vadd.f32 %v962, %v1218
        %1220 = vdwg.mxu0
        %1221 = vmatprep.subr.mxu0 %v928
        %1222 = vmatpush1.msra.mxu0 %v927
        %1223 = vmatprep.subr.mxu0 %v1006
        %1224 = vmatpush1.msra.mxu0 %v1003
        %1225 = vmatprep.subr.mxu0 0.0
        %1226 = vmatpush1.msra.mxu0 0.0
        %1227 = vmatprep.subr.mxu0 0.0
        %1228 = vmatpush1.msra.mxu0 0.0
        %1229 = vmatprep.subr.mxu0 0.0
        %1230 = vmatpush1.msra.mxu0 0.0
        %1231 = vmatprep.subr.mxu0 0.0
        %1232 = vmatpush1.msra.mxu0 0.0
        %1233 = vmatprep.subr.mxu0 0.0
        %1234 = vmatpush1.msra.mxu0 0.0
        %1235 = vmatprep.subr.mxu0 0.0
        %1236 = vmatpush1.msra.mxu0 0.0
        %1237 = vmatprep.subr.mxu0 0.0
        %1238 = vmatpush1.msra.mxu0 0.0
        %1239 = vmatprep.subr.mxu0 0.0
        %1240 = vmatpush1.msra.mxu0 0.0
        %1241 = vmatprep.subr.mxu0 0.0
        %1242 = vmatpush1.msra.mxu0 0.0
        %1243 = vmatprep.subr.mxu0 0.0
        %1244 = vmatpush1.msra.mxu0 0.0
        %1245 = vmatprep.subr.mxu0 0.0
        %1246 = vmatpush1.msra.mxu0 0.0
        %1247 = vmatprep.subr.mxu0 0.0
        %1248 = vmatpush1.msra.mxu0 0.0
        %1249 = vmatprep.subr.mxu0 0.0
        %1250 = vmatpush1.msra.mxu0 0.0
        %1251 = vmatprep.subr.mxu0 0.0
        %1252 = vmatpush1.msra.mxu0 0.0
        %1253 = vmatprep.subr.mxu0 0.0
        %1254 = vmatpush1.msra.mxu0 0.0
        %1255 = vmatprep.subr.mxu0 0.0
        %1256 = vmatpush1.msra.mxu0 0.0
        %1257 = vmatprep.subr.mxu0 0.0
        %1258 = vmatpush1.msra.mxu0 0.0
        %1259 = vmatprep.subr.mxu0 0.0
        %1260 = vmatpush1.msra.mxu0 0.0
        %1261 = vmatprep.subr.mxu0 0.0
        %1262 = vmatpush1.msra.mxu0 0.0
        %1263 = vmatprep.subr.mxu0 0.0
        %1264 = vmatpush1.msra.mxu0 0.0
        %1265 = vmatprep.subr.mxu0 0.0
        %1266 = vmatpush1.msra.mxu0 0.0
        %1267 = vmatprep.subr.mxu0 0.0
        %1268 = vmatpush1.msra.mxu0 0.0
        %1269 = vmatprep.subr.mxu0 0.0
        %1270 = vmatpush1.msra.mxu0 0.0
        %1271 = vmatprep.subr.mxu0 0.0
        %1272 = vmatpush1.msra.mxu0 0.0
        %1273 = vmatprep.subr.mxu0 0.0
        %1274 = vmatpush1.msra.mxu0 0.0
        %1275 = vmatprep.subr.mxu0 0.0
        %1276 = vmatpush1.msra.mxu0 0.0
        %1277 = vmatprep.subr.mxu0 0.0
        %1278 = vmatpush1.msra.mxu0 0.0
        %1279 = vmatprep.subr.mxu0 0.0
        %1280 = vmatpush1.msra.mxu0 0.0
        %1281 = vmatprep.subr.mxu0 0.0
        %1282 = vmatpush1.msra.mxu0 0.0
        %1283 = vmatprep.subr.mxu0 0.0
        %1284 = vmatpush1.msra.mxu0 0.0
        %1285 = vmatprep.mubr.f32.mxu0 0.0
        %1286 = vmatmul.mubr.f32.gmra.mrb[0].mxu0 %v981
        %v1287 = vpop.f32.mrb[0].mxu0
        %v1288 = vadd.f32 %v966, %v1287
        %v1289 = vpop.f32.mrb[0].mxu0
        %v1290 = vadd.f32 %v970, %v1289
        %1291 = vdwg.mxu0
        %v1292 = vmax.f32 %v1075, 0.0
        %v1293 = vmax.f32 %v1077, 0.0
        %v1294 = vmax.f32 %v1146, 0.0
        %v1295 = vmax.f32 %v1148, 0.0
        %v1296 = vmax.f32 %v1217, 0.0
        %v1297 = vmax.f32 %v1219, 0.0
        %v1298 = vmax.f32 %v1288, 0.0
        %v1299 = vmax.f32 %v1290, 0.0
        %vm1300 = vcmask 74752
        %1301 = vst.msk [vmem:[%s396] sm:$0x3] %vm1300, %v910
        %1303 = vrot.lane.b32.xlu0 %v910, 118
        %v1304 = vpop.permute.xlu0 %1303
        %1306 = vst.msk [vmem:[%s403] sm:$0x3] %vm1300, %v1304
        %1307 = vst.msk [vmem:[%s410] sm:$0x3] %vm1300, %v920
        %v1316 = vcombine.low %v1292, %v1293
        %v1317 = vcombine.low %v1294, %v1295
        %v1319 = vunpack.c.l.s4 1983009808
        %v1320 = vunpack.c.0.s8 %v1319
        %v1321 = vlaneseq
        %v1322 = vshrl.u32 %v1321, 7
        %v1323 = vsub.s32 %v1320, %v1322
        %v1324 = vrot.slane %v1316, %v1323
        %v1326 = vunpack.c.l.s4 1983009808
        %v1327 = vunpack.c.0.s8 %v1326
        %v1328 = vlaneseq
        %v1329 = vshrl.u32 %v1328, 7
        %v1330 = vsub.s32 %v1327, %v1329
        %v1331 = vrot.slane %v1317, %v1330
        %v1332 = vcombine.low %v1324, %v1331
        %v1333 = vcombine.low %v1296, %v1297
        %v1334 = vcombine.low %v1298, %v1299
        %v1336 = vunpack.c.l.s4 1983009808
        %v1337 = vunpack.c.0.s8 %v1336
        %v1338 = vlaneseq
        %v1339 = vshrl.u32 %v1338, 7
        %v1340 = vsub.s32 %v1337, %v1339
        %v1341 = vrot.slane %v1333, %v1340
        %v1343 = vunpack.c.l.s4 1983009808
        %v1344 = vunpack.c.0.s8 %v1343
        %v1345 = vlaneseq
        %v1346 = vshrl.u32 %v1345, 7
        %v1347 = vsub.s32 %v1344, %v1346
        %v1348 = vrot.slane %v1334, %v1347
        %v1349 = vcombine.low %v1341, %v1348
        %1352 = vst [vmem:[%s448] sm:$0xff] %v1332
        %1353 = vst [vmem:[%s448 + $0x8] sm:$0xff] %v1349
        %s1354 = sand.u32 %s191, 1
        %s1355 = scalar_lea.sflag [#allocation3], %s1354
        %s1356 = sand.u32 %s191, 1
        %s1357 = smul.addr %s1356, 2
        %s1358 = scalar_lea.vmem [#allocation2], %s1357
        %s1359 = sand.u32 %s27, 1
        %s1360 = scalar_lea.sflag [#allocation5], %s1359
        %s1361 = sand.u32 %s217, 1
        %s1362 = smul.addr %s1361, 2
        %s1363 = scalar_lea.vmem [#allocation4], %s1362
        %s1364 = sand.u32 %s27, 1
        %s1365 = scalar_lea.sflag [#allocation5], %s1364
        %s1366 = sand.u32 %s243, 1
        %s1367 = smul.addr %s1366, 2
        %s1368 = scalar_lea.vmem [#allocation6], %s1367
        %p1369 = scmp.lt.s32.totalorder %s27, 1
        %s1370 = scalar_select %p1369, %s27, 1
        %s1371 = smul.addr %s1370, 8
        %s1372 = smul.addr %s1371, 2
        %s1373 = scalar_lea.vmem %s9, %s1372
        // Predicated region
        $region45: #{multi_view_forward.10} parent=43 // pred_check
          %p1374 = pneg %p201
        $region46: #{multi_view_forward.10} parent=43 // pred_check_branch
          %1376 = sbr.rel (%p1374) target = $region48
        $region47: #{multi_view_forward.10} parent=43 // pred_region
          %s1378 = ssub.s32 32, 32
          %1379 = vsyncadd %s1355, %s1378
          %s1380 = smul.addr %s27, 32
          %s1381 = scalar_lea.hbm %s6, %s1380
          %s1383 = sshll.u32 %s1358, 4
          %s1384 = int_to_ptr.vmem [resolvable:$true] %s1383
          %1386 = dma.vmem_to_hbm [thread:$0]  %s1384, 32, %s1381, %s1355
        $region48: #{multi_view_forward.10} parent=43 // pred_fallthru
          _
        // Predicated region
        $region49: #{multi_view_forward.10} parent=43 // pred_check
          %p1387 = pneg %p227
        $region50: #{multi_view_forward.10} parent=43 // pred_check_branch
          %1389 = sbr.rel (%p1387) target = $region52
        $region51: #{multi_view_forward.10} parent=43 // pred_region
          %s1391 = ssub.s32 32, 32
          %1392 = vsyncadd %s1360, %s1391
          %s1393 = smul.addr %s27, 32
          %s1394 = scalar_lea.hbm %s7, %s1393
          %s1396 = sshll.u32 %s1363, 4
          %s1397 = int_to_ptr.vmem [resolvable:$true] %s1396
          %1399 = dma.vmem_to_hbm [thread:$0]  %s1397, 32, %s1394, %s1360
        $region52: #{multi_view_forward.10} parent=43 // pred_fallthru
          _
        // Predicated region
        $region53: #{multi_view_forward.10} parent=43 // pred_check
          %p1400 = pneg %p253
        $region54: #{multi_view_forward.10} parent=43 // pred_check_branch
          %1402 = sbr.rel (%p1400) target = $region56
        $region55: #{multi_view_forward.10} parent=43 // pred_region
          %s1404 = ssub.s32 32, 32
          %1405 = vsyncadd %s1365, %s1404
          %s1406 = smul.addr %s27, 32
          %s1407 = scalar_lea.hbm %s8, %s1406
          %s1409 = sshll.u32 %s1368, 4
          %s1410 = int_to_ptr.vmem [resolvable:$true] %s1409
          %1412 = dma.vmem_to_hbm [thread:$0]  %s1410, 32, %s1407, %s1365
        $region56: #{multi_view_forward.10} parent=43 // pred_fallthru
          _
        // Predicated region
        $region57: #{multi_view_forward.10} parent=43 // pred_check
          %p1413 = pneg %p279
        $region58: #{multi_view_forward.10} parent=43 // pred_check_branch
          %1415 = sbr.rel (%p1413) target = $region60
        $region59: #{multi_view_forward.10} parent=43 // pred_region
          _
        $region60: #{multi_view_forward.10} parent=43 // pred_fallthru
          _
      $region44: #{multi_view_forward.10} parent=5 // pred_fallthru
        _
      %p1416 = scmp.le.s32.totalorder 2, %s22
      // Predicated region
      $region61: #{multi_view_forward.10} parent=5 // pred_check
        %p1417 = pneg %p1416
      $region62: #{multi_view_forward.10} parent=5 // pred_check_branch
        %1419 = sbr.rel (%p1417) target = $region64
      $region63: #{multi_view_forward.10} parent=5 // pred_region
        %s1420 = ssub.s32 %s22, 2
        // Predicated region
        $region65: #{multi_view_forward.10} parent=63 // pred_check
          %p1421 = pneg %p207
        $region66: #{multi_view_forward.10} parent=63 // pred_check_branch
          %1423 = sbr.rel (%p1421) target = $region68
        $region67: #{multi_view_forward.10} parent=63 // pred_region
          %s1424 = sand.u32 %s192, 1
          %s1425 = scalar_lea.sflag [#allocation3], %s1424
          %s1426 = sand.u32 %s192, 1
          %s1427 = smul.addr %s1426, 2
          %s1428 = scalar_lea.vmem [#allocation2], %s1427
          %1429 = dma.done %s1425, 32
        $region68: #{multi_view_forward.10} parent=63 // pred_fallthru
          _
        // Predicated region
        $region69: #{multi_view_forward.10} parent=63 // pred_check
          %p1430 = pneg %p233
        $region70: #{multi_view_forward.10} parent=63 // pred_check_branch
          %1432 = sbr.rel (%p1430) target = $region72
        $region71: #{multi_view_forward.10} parent=63 // pred_region
          %s1433 = sand.u32 %s28, 1
          %s1434 = scalar_lea.sflag [#allocation5], %s1433
          %s1435 = sand.u32 %s218, 1
          %s1436 = smul.addr %s1435, 2
          %s1437 = scalar_lea.vmem [#allocation4], %s1436
          %1438 = dma.done %s1434, 32
        $region72: #{multi_view_forward.10} parent=63 // pred_fallthru
          _
        // Predicated region
        $region73: #{multi_view_forward.10} parent=63 // pred_check
          %p1439 = pneg %p259
        $region74: #{multi_view_forward.10} parent=63 // pred_check_branch
          %1441 = sbr.rel (%p1439) target = $region76
        $region75: #{multi_view_forward.10} parent=63 // pred_region
          %s1442 = sand.u32 %s28, 1
          %s1443 = scalar_lea.sflag [#allocation5], %s1442
          %s1444 = sand.u32 %s244, 1
          %s1445 = smul.addr %s1444, 2
          %s1446 = scalar_lea.vmem [#allocation6], %s1445
          %1447 = dma.done %s1443, 32
        $region76: #{multi_view_forward.10} parent=63 // pred_fallthru
          _
        // Predicated region
        $region77: #{multi_view_forward.10} parent=63 // pred_check
          %p1448 = pneg %p285
        $region78: #{multi_view_forward.10} parent=63 // pred_check_branch
          %1450 = sbr.rel (%p1448) target = $region80
        $region79: #{multi_view_forward.10} parent=63 // pred_region
          %p1451 = scmp.lt.s32.totalorder %s28, 1
          %s1452 = scalar_select %p1451, %s28, 1
          %s1453 = smul.addr %s1452, 8
          %s1454 = smul.addr %s1453, 2
          %s1455 = scalar_lea.vmem %s9, %s1454
        $region80: #{multi_view_forward.10} parent=63 // pred_fallthru
          _
      $region64: #{multi_view_forward.10} parent=5 // pred_fallthru
        _
    $region6: #{multi_view_forward.10} parent=1 // loop_footer
      %s26 = sadd.s32 1, %s22
    $region7: #{multi_view_forward.10} parent=1 // loop_footer_branch
      %21 = sbr.rel target = $region3
    $region8: #{multi_view_forward.10} parent=1 // loop_exit
      _
    %1456 = vsyncpa [#allocation3], 1
    %s1457 = scalar_lea.sflag [#allocation3], 1
    %1458 = vsyncpa %s1457, 1
    %1459 = vsyncpa [#allocation5], 1
    %s1460 = scalar_lea.sflag [#allocation5], 1
    %1461 = vsyncpa %s1460, 1

// kernel: multi_view_forward.11
$region0: #{multi_view_forward.11}
  #allocation0 [shape = 'u32[]', space=smem, size = 0x4, offset = 0x4, fixed_abs, tag = 'smem constant byte address 0x4 - core index']
  #allocation1 [shape = 'u32[144,128]{1,0:T(1,128)}', space=vmem, size = 0x12000, scoped, tag = 'internal scratch']
  %s0 = inlined_call_operand.vmem [shape: f32[2,32,576], index: 0, kind: input, shape index: {}]
  %s1 = inlined_call_operand.vmem [shape: f32[2,576,128], index: 1, kind: input, shape index: {}]
  %s2 = inlined_call_operand.vmem [shape: f32[2,1,128], index: 2, kind: input, shape index: {}]
  %s3 = inlined_call_operand.vmem [shape: f32[2,32,128], index: 3, kind: output, shape index: {}]
  %s4 = sld [smem:[#allocation0]]
  $region45: #{multi_view_forward.11} parent=0
    _
  %s6 = ssub.s32 1, %s4
  %s7 = scalar_select 0, %s6, %s4
  loop: start=0, step=1, limit=4
  $region2: #{multi_view_forward.11} parent=0 // loop_pre_header
    _
  $region3: #{multi_view_forward.11} parent=0 // loop_header
    %s9 = sphi 0, %s13
    %p10 = scmp.ge.s32.totalorder %s9, 4
    %s16 = sphi 0, %s28
    %s17 = sphi 0, %s24
    %s18 = sphi 0, %s16
    %s19 = sphi 0, %s17
    %s20 = sphi 0, %s18
    %s21 = sphi 0, %s19
    %s33 = sphi 0, %s35
    %s36 = sphi 0, %s33
    %s37 = sphi 0, %s36
    %s53 = sphi 0, %s37
    %s59 = sphi 0, %s61
    %s62 = sphi 0, %s59
    %s63 = sphi 0, %s62
    %s79 = sphi 0, %s63
    %s85 = sphi 0, %s87
    %s88 = sphi 0, %s85
    %s89 = sphi 0, %s88
    %s105 = sphi 0, %s89
    %s113 = sphi 0, %s115
    %s116 = sphi 0, %s113
    %s117 = sphi 0, %s116
    %s133 = sphi 0, %s117
  $region4: #{multi_view_forward.11} parent=0 // loop_header_branch
    %12 = sbr.rel (%p10) target = $region8
  $region5: #{multi_view_forward.11} parent=0 // loop_body
    %s14 = ssub.s32 %s9, 1
    %s15 = ssub.s32 %s9, 2
    %s22 = sadd.s32 1, %s17
    %p23 = scmp.ge.s32.totalorder %s22, 1
    %s24 = scalar_select %p23, 0, %s22
    %s25 = sadd.s32 1, %s16
    %s26 = scalar_select %p23, %s25, %s16
    %p27 = scmp.ge.s32.totalorder %s26, 2
    %s28 = scalar_select %p27, 0, %s26
    %s29 = ssub.s32 %s16, %s28
    %s30 = ssub.s32 %s17, %s24
    %s31 = sor.u32 %s29, %s30
    %p32 = scmp.eq.s32.totalorder %s31, 0
    %s34 = sadd.s32 %s33, 1
    %s35 = scalar_select %p32, %s33, %s34
    %p38 = pneg %p32
    %p39 = scmp.eq.s32.totalorder %s9, 1
    %p40 = por %p38, %p39
    %p41 = scmp.ne.s32.totalorder %s33, %s36
    %p42 = scmp.eq.s32.totalorder %s9, 0
    %p43 = por %p41, %p42
    %p44 = scmp.ne.s32.totalorder %s33, %s36
    %p45 = scmp.eq.s32.totalorder %s14, 1
    %p46 = por %p44, %p45
    %p47 = scmp.ne.s32.totalorder %s36, %s37
    %p48 = scmp.eq.s32.totalorder %s14, 0
    %p49 = por %p47, %p48
    %p50 = scmp.ne.s32.totalorder %s36, %s37
    %p51 = scmp.eq.s32.totalorder %s15, 1
    %p52 = por %p50, %p51
    %p54 = scmp.ne.s32.totalorder %s37, %s53
    %p55 = scmp.eq.s32.totalorder %s15, 0
    %p56 = por %p54, %p55
    %s57 = ssub.s32 %s16, %s28
    %p58 = scmp.eq.s32.totalorder %s57, 0
    %s60 = sadd.s32 %s59, 1
    %s61 = scalar_select %p58, %s59, %s60
    %p64 = pneg %p58
    %p65 = scmp.eq.s32.totalorder %s9, 1
    %p66 = por %p64, %p65
    %p67 = scmp.ne.s32.totalorder %s59, %s62
    %p68 = scmp.eq.s32.totalorder %s9, 0
    %p69 = por %p67, %p68
    %p70 = scmp.ne.s32.totalorder %s59, %s62
    %p71 = scmp.eq.s32.totalorder %s14, 1
    %p72 = por %p70, %p71
    %p73 = scmp.ne.s32.totalorder %s62, %s63
    %p74 = scmp.eq.s32.totalorder %s14, 0
    %p75 = por %p73, %p74
    %p76 = scmp.ne.s32.totalorder %s62, %s63
    %p77 = scmp.eq.s32.totalorder %s15, 1
    %p78 = por %p76, %p77
    %p80 = scmp.ne.s32.totalorder %s63, %s79
    %p81 = scmp.eq.s32.totalorder %s15, 0
    %p82 = por %p80, %p81
    %s83 = ssub.s32 %s16, %s28
    %p84 = scmp.eq.s32.totalorder %s83, 0
    %s86 = sadd.s32 %s85, 1
    %s87 = scalar_select %p84, %s85, %s86
    %p90 = pneg %p84
    %p91 = scmp.eq.s32.totalorder %s9, 1
    %p92 = por %p90, %p91
    %p93 = scmp.ne.s32.totalorder %s85, %s88
    %p94 = scmp.eq.s32.totalorder %s9, 0
    %p95 = por %p93, %p94
    %p96 = scmp.ne.s32.totalorder %s85, %s88
    %p97 = scmp.eq.s32.totalorder %s14, 1
    %p98 = por %p96, %p97
    %p99 = scmp.ne.s32.totalorder %s88, %s89
    %p100 = scmp.eq.s32.totalorder %s14, 0
    %p101 = por %p99, %p100
    %p102 = scmp.ne.s32.totalorder %s88, %s89
    %p103 = scmp.eq.s32.totalorder %s15, 1
    %p104 = por %p102, %p103
    %p106 = scmp.ne.s32.totalorder %s89, %s105
    %p107 = scmp.eq.s32.totalorder %s15, 0
    %p108 = por %p106, %p107
    %s109 = ssub.s32 %s16, %s28
    %s110 = ssub.s32 %s17, %s24
    %s111 = sor.u32 %s109, %s110
    %p112 = scmp.eq.s32.totalorder %s111, 0
    %s114 = sadd.s32 %s113, 1
    %s115 = scalar_select %p112, %s113, %s114
    %p118 = pneg %p112
    %p119 = scmp.eq.s32.totalorder %s9, 1
    %p120 = por %p118, %p119
    %p121 = scmp.ne.s32.totalorder %s113, %s116
    %p122 = scmp.eq.s32.totalorder %s9, 0
    %p123 = por %p121, %p122
    %p124 = scmp.ne.s32.totalorder %s113, %s116
    %p125 = scmp.eq.s32.totalorder %s14, 1
    %p126 = por %p124, %p125
    %p127 = scmp.ne.s32.totalorder %s116, %s117
    %p128 = scmp.eq.s32.totalorder %s14, 0
    %p129 = por %p127, %p128
    %p130 = scmp.ne.s32.totalorder %s116, %s117
    %p131 = scmp.eq.s32.totalorder %s15, 1
    %p132 = por %p130, %p131
    %p134 = scmp.ne.s32.totalorder %s117, %s133
    %p135 = scmp.eq.s32.totalorder %s15, 0
    %p136 = por %p134, %p135
    %p137 = scmp.le.s32.totalorder 1, %s9
    %p138 = scmp.lt.s32.totalorder %s9, 3
    %p139 = pnand %p137, %p138
    %p140 = pneg %p139
    // Predicated region
    $region9: #{multi_view_forward.11} parent=5 // pred_check
      _
    $region10: #{multi_view_forward.11} parent=5 // pred_check_branch
      %142 = sbr.rel (%p139) target = $region12
    $region11: #{multi_view_forward.11} parent=5 // pred_region
      %s143 = ssub.s32 %s9, 1
    $region12: #{multi_view_forward.11} parent=5 // pred_fallthru
      _
    %p144 = scmp.lt.s32.totalorder %s9, 2
    // Predicated region
    $region13: #{multi_view_forward.11} parent=5 // pred_check
      %p145 = pneg %p144
    $region14: #{multi_view_forward.11} parent=5 // pred_check_branch
      %147 = sbr.rel (%p145) target = $region16
    $region15: #{multi_view_forward.11} parent=5 // pred_region
      // Predicated region
      $region17: #{multi_view_forward.11} parent=15 // pred_check
        %p148 = pneg %p43
      $region18: #{multi_view_forward.11} parent=15 // pred_check_branch
        %150 = sbr.rel (%p148) target = $region20
      $region19: #{multi_view_forward.11} parent=15 // pred_region
        %s151 = smul.u32 4, %s17
        %p152 = scmp.lt.s32.totalorder %s16, 1
        %s153 = scalar_select %p152, %s16, 1
        %p154 = scmp.lt.s32.totalorder %s151, 3
        %s155 = scalar_select %p154, %s151, 3
        %s156 = smul.addr %s155, 5
        %s157 = smul.addr %s153, 20
        %s158 = sadd.s32 %s156, %s157
        %s159 = smul.addr %s158, 8
        %s160 = scalar_lea.vmem %s0, %s159
        %s161 = smul.u32 4, %s17
      $region20: #{multi_view_forward.11} parent=15 // pred_fallthru
        _
      // Predicated region
      $region21: #{multi_view_forward.11} parent=15 // pred_check
        %p162 = pneg %p69
      $region22: #{multi_view_forward.11} parent=15 // pred_check_branch
        %164 = sbr.rel (%p162) target = $region24
      $region23: #{multi_view_forward.11} parent=15 // pred_region
        %p165 = scmp.lt.s32.totalorder %s16, 1
        %s166 = scalar_select %p165, %s16, 1
        %s167 = smul.addr %s166, 72
        %s168 = smul.addr %s167, 8
        %s169 = scalar_lea.vmem %s1, %s168
      $region24: #{multi_view_forward.11} parent=15 // pred_fallthru
        _
      // Predicated region
      $region25: #{multi_view_forward.11} parent=15 // pred_check
        %p170 = pneg %p95
      $region26: #{multi_view_forward.11} parent=15 // pred_check_branch
        %172 = sbr.rel (%p170) target = $region28
      $region27: #{multi_view_forward.11} parent=15 // pred_region
        %p173 = scmp.lt.s32.totalorder %s16, 1
        %s174 = scalar_select %p173, %s16, 1
        %s175 = scalar_lea.vmem %s2, %s174
      $region28: #{multi_view_forward.11} parent=15 // pred_fallthru
        _
    $region16: #{multi_view_forward.11} parent=5 // pred_fallthru
      _
    %p176 = scmp.le.s32.totalorder 1, %s9
    %p177 = scmp.lt.s32.totalorder %s9, 3
    %p178 = pnand %p176, %p177
    %p179 = pneg %p178
    // Predicated region
    $region29: #{multi_view_forward.11} parent=5 // pred_check
      _
    $region30: #{multi_view_forward.11} parent=5 // pred_check_branch
      %181 = sbr.rel (%p178) target = $region32
    $region31: #{multi_view_forward.11} parent=5 // pred_region
      %s182 = ssub.s32 %s9, 1
      %s183 = smul.u32 4, %s19
      %p184 = scmp.lt.s32.totalorder %s18, 1
      %s185 = scalar_select %p184, %s18, 1
      %p186 = scmp.lt.s32.totalorder %s183, 3
      %s187 = scalar_select %p186, %s183, 3
      %s188 = smul.addr %s187, 5
      %s189 = smul.addr %s185, 20
      %s190 = sadd.s32 %s188, %s189
      %s191 = smul.addr %s190, 8
      %s192 = scalar_lea.vmem %s0, %s191
      %p193 = pneg %p49
      %p194 = pneg %p46
      %p195 = scmp.lt.s32.totalorder %s18, 1
      %s196 = scalar_select %p195, %s18, 1
      %s197 = smul.addr %s196, 72
      %s198 = smul.addr %s197, 8
      %s199 = scalar_lea.vmem %s1, %s198
      %p200 = pneg %p75
      %p201 = pneg %p72
      %p202 = scmp.lt.s32.totalorder %s18, 1
      %s203 = scalar_select %p202, %s18, 1
      %s204 = scalar_lea.vmem %s2, %s203
      %p205 = pneg %p101
      %p206 = pneg %p98
      %p207 = pneg %p129
      %p208 = pneg %p126
      %s209 = smul.u32 4, %s19
      %p210 = scmp.lt.s32.totalorder %s18, 1
      %s211 = scalar_select %p210, %s18, 1
      %p212 = scmp.lt.s32.totalorder %s209, 3
      %s213 = scalar_select %p212, %s209, 3
      %s214 = smul.addr %s211, 4
      %s215 = sadd.s32 %s213, %s214
      %s216 = smul.addr %s215, 8
      %s217 = scalar_lea.vmem %s3, %s216
      %s218 = smul.u32 4, %s19
      %p219 = scmp.lt.s32.totalorder %s18, 1
      %s220 = scalar_select %p219, %s18, 1
      %p221 = scmp.lt.s32.totalorder %s218, 3
      %s222 = scalar_select %p221, %s218, 3
      %s223 = smul.addr %s222, 5
      %s224 = smul.addr %s220, 20
      %s225 = sadd.s32 %s223, %s224
      %s226 = smul.addr %s225, 8
      %s227 = scalar_lea.vmem %s0, %s226
      %s228 = smul.u32 4, %s19
      %p229 = scmp.lt.s32.totalorder %s18, 1
      %s230 = scalar_select %p229, %s18, 1
      %s231 = smul.addr %s230, 72
      %s232 = smul.addr %s231, 8
      %s233 = scalar_lea.vmem %s1, %s232
      %p234 = scmp.lt.s32.totalorder %s18, 1
      %s235 = scalar_select %p234, %s18, 1
      %s236 = scalar_lea.vmem %s2, %s235
      %s237 = smul.u32 4, %s19
      %p238 = scmp.lt.s32.totalorder %s18, 1
      %s239 = scalar_select %p238, %s18, 1
      %p240 = scmp.lt.s32.totalorder %s237, 3
      %s241 = scalar_select %p240, %s237, 3
      %s242 = smul.addr %s239, 4
      %s243 = sadd.s32 %s241, %s242
      %s244 = smul.addr %s243, 8
      %s245 = scalar_lea.vmem %s3, %s244
      %s246 = smul.u32 4, %s19
      %v247 = vld [vmem:[%s227] sm:$0xff]
      %v248 = vld [vmem:[%s227 + $0x8] sm:$0xff]
      %v249 = vld [vmem:[%s227 + $0x10] sm:$0xff]
      %v250 = vld [vmem:[%s227 + $0x18] sm:$0xff]
      %v251 = vld [vmem:[%s227 + $0x20] sm:$0xff]
      %v252 = vld [vmem:[%s227 + $0x28] sm:$0xff]
      %v253 = vld [vmem:[%s227 + $0x30] sm:$0xff]
      %v254 = vld [vmem:[%s227 + $0x38] sm:$0xff]
      %v255 = vld [vmem:[%s227 + $0x40] sm:$0xff]
      %v256 = vld [vmem:[%s227 + $0x48] sm:$0xff]
      %v257 = vld [vmem:[%s227 + $0x50] sm:$0xff]
      %v258 = vld [vmem:[%s227 + $0x58] sm:$0xff]
      %v259 = vld [vmem:[%s227 + $0x60] sm:$0xff]
      %v260 = vld [vmem:[%s227 + $0x68] sm:$0xff]
      %v261 = vld [vmem:[%s227 + $0x70] sm:$0xff]
      %v262 = vld [vmem:[%s227 + $0x78] sm:$0xff]
      %v263 = vld [vmem:[%s227 + $0x80] sm:$0xff]
      %v264 = vld [vmem:[%s227 + $0x88] sm:$0xff]
      %v265 = vld [vmem:[%s227 + $0x90] sm:$0xff]
      %v266 = vld [vmem:[%s227 + $0x98] sm:$0xff]
      %v267 = vld [vmem:[%s233] sm:$0xff]
      %v268 = vld [vmem:[%s233 + $0x8] sm:$0xff]
      %v269 = vld [vmem:[%s233 + $0x10] sm:$0xff]
      %v270 = vld [vmem:[%s233 + $0x18] sm:$0xff]
      %v271 = vld [vmem:[%s233 + $0x20] sm:$0xff]
      %v272 = vld [vmem:[%s233 + $0x28] sm:$0xff]
      %v273 = vld [vmem:[%s233 + $0x30] sm:$0xff]
      %v274 = vld [vmem:[%s233 + $0x38] sm:$0xff]
      %v275 = vld [vmem:[%s233 + $0x40] sm:$0xff]
      %v276 = vld [vmem:[%s233 + $0x48] sm:$0xff]
      %v277 = vld [vmem:[%s233 + $0x50] sm:$0xff]
      %v278 = vld [vmem:[%s233 + $0x58] sm:$0xff]
      %v279 = vld [vmem:[%s233 + $0x60] sm:$0xff]
      %v280 = vld [vmem:[%s233 + $0x68] sm:$0xff]
      %v281 = vld [vmem:[%s233 + $0x70] sm:$0xff]
      %v282 = vld [vmem:[%s233 + $0x78] sm:$0xff]
      %v283 = vld [vmem:[%s233 + $0x80] sm:$0xff]
      %v284 = vld [vmem:[%s233 + $0x88] sm:$0xff]
      %v285 = vld [vmem:[%s233 + $0x90] sm:$0xff]
      %v286 = vld [vmem:[%s233 + $0x98] sm:$0xff]
      %v287 = vld [vmem:[%s233 + $0xa0] sm:$0xff]
      %v288 = vld [vmem:[%s233 + $0xa8] sm:$0xff]
      %v289 = vld [vmem:[%s233 + $0xb0] sm:$0xff]
      %v290 = vld [vmem:[%s233 + $0xb8] sm:$0xff]
      %v291 = vld [vmem:[%s233 + $0xc0] sm:$0xff]
      %v292 = vld [vmem:[%s233 + $0xc8] sm:$0xff]
      %v293 = vld [vmem:[%s233 + $0xd0] sm:$0xff]
      %v294 = vld [vmem:[%s233 + $0xd8] sm:$0xff]
      %v295 = vld [vmem:[%s233 + $0xe0] sm:$0xff]
      %v296 = vld [vmem:[%s233 + $0xe8] sm:$0xff]
      %v297 = vld [vmem:[%s233 + $0xf0] sm:$0xff]
      %v298 = vld [vmem:[%s233 + $0xf8] sm:$0xff]
      %v299 = vld [vmem:[%s233 + $0x100] sm:$0xff]
      %v300 = vld [vmem:[%s233 + $0x108] sm:$0xff]
      %v301 = vld [vmem:[%s233 + $0x110] sm:$0xff]
      %v302 = vld [vmem:[%s233 + $0x118] sm:$0xff]
      %v303 = vld [vmem:[%s233 + $0x120] sm:$0xff]
      %v304 = vld [vmem:[%s233 + $0x128] sm:$0xff]
      %v305 = vld [vmem:[%s233 + $0x130] sm:$0xff]
      %v306 = vld [vmem:[%s233 + $0x138] sm:$0xff]
      %v307 = vld [vmem:[%s233 + $0x140] sm:$0xff]
      %v308 = vld [vmem:[%s233 + $0x148] sm:$0xff]
      %v309 = vld [vmem:[%s233 + $0x150] sm:$0xff]
      %v310 = vld [vmem:[%s233 + $0x158] sm:$0xff]
      %v311 = vld [vmem:[%s233 + $0x160] sm:$0xff]
      %v312 = vld [vmem:[%s233 + $0x168] sm:$0xff]
      %v313 = vld [vmem:[%s233 + $0x170] sm:$0xff]
      %v314 = vld [vmem:[%s233 + $0x178] sm:$0xff]
      %v315 = vld [vmem:[%s233 + $0x180] sm:$0xff]
      %v316 = vld [vmem:[%s233 + $0x188] sm:$0xff]
      %v317 = vld [vmem:[%s233 + $0x190] sm:$0xff]
      %v318 = vld [vmem:[%s233 + $0x198] sm:$0xff]
      %v319 = vld [vmem:[%s233 + $0x1a0] sm:$0xff]
      %v320 = vld [vmem:[%s233 + $0x1a8] sm:$0xff]
      %v321 = vld [vmem:[%s233 + $0x1b0] sm:$0xff]
      %v322 = vld [vmem:[%s233 + $0x1b8] sm:$0xff]
      %v323 = vld [vmem:[%s233 + $0x1c0] sm:$0xff]
      %v324 = vld [vmem:[%s233 + $0x1c8] sm:$0xff]
      %v325 = vld [vmem:[%s233 + $0x1d0] sm:$0xff]
      %v326 = vld [vmem:[%s233 + $0x1d8] sm:$0xff]
      %v327 = vld [vmem:[%s233 + $0x1e0] sm:$0xff]
      %v328 = vld [vmem:[%s233 + $0x1e8] sm:$0xff]
      %v329 = vld [vmem:[%s233 + $0x1f0] sm:$0xff]
      %v330 = vld [vmem:[%s233 + $0x1f8] sm:$0xff]
      %v331 = vld [vmem:[%s233 + $0x200] sm:$0xff]
      %v332 = vld [vmem:[%s233 + $0x208] sm:$0xff]
      %v333 = vld [vmem:[%s233 + $0x210] sm:$0xff]
      %v334 = vld [vmem:[%s233 + $0x218] sm:$0xff]
      %v335 = vld [vmem:[%s233 + $0x220] sm:$0xff]
      %v336 = vld [vmem:[%s233 + $0x228] sm:$0xff]
      %v337 = vld [vmem:[%s233 + $0x230] sm:$0xff]
      %v338 = vld [vmem:[%s233 + $0x238] sm:$0xff]
      %v339 = vld [vmem:[%s236] sm:$0x1]
      %v341 = vlaneseq
      %v342 = vshrl.u32 %v341, 7
      %v343 = vsub.s32 0, %v342
      %v344 = vrot.slane %v339, %v343
      %vm346 = vcmask 523264
      %v348 = vsel %vm346, %v251, 0
      %v351 = vsel %vm346, %v256, 0
      %v354 = vsel %vm346, %v261, 0
      %v357 = vsel %vm346, %v266, 0
      %359 = vmatprep.subr.mxu0 0.0
      %360 = vmatpush1.msra.mxu0 %v267
      %361 = vmatprep.subr.mxu0 0.0
      %362 = vmatpush1.msra.mxu0 %v268
      %363 = vmatprep.subr.mxu0 0.0
      %364 = vmatpush1.msra.mxu0 %v269
      %365 = vmatprep.subr.mxu0 0.0
      %366 = vmatpush1.msra.mxu0 %v270
      %367 = vmatprep.subr.mxu0 0.0
      %368 = vmatpush1.msra.mxu0 %v271
      %369 = vmatprep.subr.mxu0 0.0
      %370 = vmatpush1.msra.mxu0 %v272
      %371 = vmatprep.subr.mxu0 0.0
      %372 = vmatpush1.msra.mxu0 %v273
      %373 = vmatprep.subr.mxu0 0.0
      %374 = vmatpush1.msra.mxu0 %v274
      %375 = vmatprep.subr.mxu0 0.0
      %376 = vmatpush1.msra.mxu0 %v275
      %377 = vmatprep.subr.mxu0 0.0
      %378 = vmatpush1.msra.mxu0 %v276
      %379 = vmatprep.subr.mxu0 0.0
      %380 = vmatpush1.msra.mxu0 %v277
      %381 = vmatprep.subr.mxu0 0.0
      %382 = vmatpush1.msra.mxu0 %v278
      %383 = vmatprep.subr.mxu0 0.0
      %384 = vmatpush1.msra.mxu0 %v279
      %385 = vmatprep.subr.mxu0 0.0
      %386 = vmatpush1.msra.mxu0 %v280
      %387 = vmatprep.subr.mxu0 0.0
      %388 = vmatpush1.msra.mxu0 %v281
      %389 = vmatprep.subr.mxu0 0.0
      %390 = vmatpush1.msra.mxu0 %v282
      %391 = vmatprep.subr.mxu0 0.0
      %392 = vmatpush1.msra.mxu0 %v283
      %393 = vmatprep.subr.mxu0 0.0
      %394 = vmatpush1.msra.mxu0 %v284
      %395 = vmatprep.subr.mxu0 0.0
      %396 = vmatpush1.msra.mxu0 %v285
      %397 = vmatprep.subr.mxu0 0.0
      %398 = vmatpush1.msra.mxu0 %v286
      %399 = vmatprep.subr.mxu0 0.0
      %400 = vmatpush1.msra.mxu0 %v287
      %401 = vmatprep.subr.mxu0 0.0
      %402 = vmatpush1.msra.mxu0 %v288
      %403 = vmatprep.subr.mxu0 0.0
      %404 = vmatpush1.msra.mxu0 %v289
      %405 = vmatprep.subr.mxu0 0.0
      %406 = vmatpush1.msra.mxu0 %v290
      %407 = vmatprep.subr.mxu0 0.0
      %408 = vmatpush1.msra.mxu0 %v291
      %409 = vmatprep.subr.mxu0 0.0
      %410 = vmatpush1.msra.mxu0 %v292
      %411 = vmatprep.subr.mxu0 0.0
      %412 = vmatpush1.msra.mxu0 %v293
      %413 = vmatprep.subr.mxu0 0.0
      %414 = vmatpush1.msra.mxu0 %v294
      %415 = vmatprep.subr.mxu0 0.0
      %416 = vmatpush1.msra.mxu0 %v295
      %417 = vmatprep.subr.mxu0 0.0
      %418 = vmatpush1.msra.mxu0 %v296
      %419 = vmatprep.subr.mxu0 0.0
      %420 = vmatpush1.msra.mxu0 %v297
      %421 = vmatprep.subr.mxu0 0.0
      %422 = vmatpush1.msra.mxu0 %v298
      %423 = vmatprep.mubr.f32.mxu0 %v248
      %424 = vmatmul.mubr.f32.gmra.mrb[0].mxu0 %v247
      %v425 = vpop.f32.mrb[0].mxu0
      %v426 = vadd.f32 %v344, %v425
      %v427 = vpop.f32.mrb[0].mxu0
      %428 = vmatprep.mubr.f32.mxu0 %v253
      %429 = vmatmul.mubr.f32.gmra.mrb[0].mxu0 %v252
      %v430 = vpop.f32.mrb[0].mxu0
      %v431 = vadd.f32 %v344, %v430
      %v432 = vpop.f32.mrb[0].mxu0
      %433 = vmatprep.mubr.f32.mxu0 %v258
      %434 = vmatmul.mubr.f32.gmra.mrb[0].mxu0 %v257
      %v435 = vpop.f32.mrb[0].mxu0
      %v436 = vadd.f32 %v344, %v435
      %v437 = vpop.f32.mrb[0].mxu0
      %438 = vmatprep.mubr.f32.mxu0 %v263
      %439 = vmatmul.mubr.f32.gmra.mrb[0].mxu0 %v262
      %v440 = vpop.f32.mrb[0].mxu0
      %v441 = vadd.f32 %v344, %v440
      %v442 = vpop.f32.mrb[0].mxu0
      %443 = vdwg.mxu0
      %444 = vmatprep.subr.mxu0 0.0
      %445 = vmatpush1.msra.mxu0 %v299
      %446 = vmatprep.subr.mxu0 0.0
      %447 = vmatpush1.msra.mxu0 %v300
      %448 = vmatprep.subr.mxu0 0.0
      %449 = vmatpush1.msra.mxu0 %v301
      %450 = vmatprep.subr.mxu0 0.0
      %451 = vmatpush1.msra.mxu0 %v302
      %452 = vmatprep.subr.mxu0 0.0
      %453 = vmatpush1.msra.mxu0 %v303
      %454 = vmatprep.subr.mxu0 0.0
      %455 = vmatpush1.msra.mxu0 %v304
      %456 = vmatprep.subr.mxu0 0.0
      %457 = vmatpush1.msra.mxu0 %v305
      %458 = vmatprep.subr.mxu0 0.0
      %459 = vmatpush1.msra.mxu0 %v306
      %460 = vmatprep.subr.mxu0 0.0
      %461 = vmatpush1.msra.mxu0 %v307
      %462 = vmatprep.subr.mxu0 0.0
      %463 = vmatpush1.msra.mxu0 %v308
      %464 = vmatprep.subr.mxu0 0.0
      %465 = vmatpush1.msra.mxu0 %v309
      %466 = vmatprep.subr.mxu0 0.0
      %467 = vmatpush1.msra.mxu0 %v310
      %468 = vmatprep.subr.mxu0 0.0
      %469 = vmatpush1.msra.mxu0 %v311
      %470 = vmatprep.subr.mxu0 0.0
      %471 = vmatpush1.msra.mxu0 %v312
      %472 = vmatprep.subr.mxu0 0.0
      %473 = vmatpush1.msra.mxu0 %v313
      %474 = vmatprep.subr.mxu0 0.0
      %475 = vmatpush1.msra.mxu0 %v314
      %476 = vmatprep.subr.mxu0 0.0
      %477 = vmatpush1.msra.mxu0 %v315
      %478 = vmatprep.subr.mxu0 0.0
      %479 = vmatpush1.msra.mxu0 %v316
      %480 = vmatprep.subr.mxu0 0.0
      %481 = vmatpush1.msra.mxu0 %v317
      %482 = vmatprep.subr.mxu0 0.0
      %483 = vmatpush1.msra.mxu0 %v318
      %484 = vmatprep.subr.mxu0 0.0
      %485 = vmatpush1.msra.mxu0 %v319
      %486 = vmatprep.subr.mxu0 0.0
      %487 = vmatpush1.msra.mxu0 %v320
      %488 = vmatprep.subr.mxu0 0.0
      %489 = vmatpush1.msra.mxu0 %v321
      %490 = vmatprep.subr.mxu0 0.0
      %491 = vmatpush1.msra.mxu0 %v322
      %492 = vmatprep.subr.mxu0 0.0
      %493 = vmatpush1.msra.mxu0 %v323
      %494 = vmatprep.subr.mxu0 0.0
      %495 = vmatpush1.msra.mxu0 %v324
      %496 = vmatprep.subr.mxu0 0.0
      %497 = vmatpush1.msra.mxu0 %v325
      %498 = vmatprep.subr.mxu0 0.0
      %499 = vmatpush1.msra.mxu0 %v326
      %500 = vmatprep.subr.mxu0 0.0
      %501 = vmatpush1.msra.mxu0 %v327
      %502 = vmatprep.subr.mxu0 0.0
      %503 = vmatpush1.msra.mxu0 %v328
      %504 = vmatprep.subr.mxu0 0.0
      %505 = vmatpush1.msra.mxu0 %v329
      %506 = vmatprep.subr.mxu0 0.0
      %507 = vmatpush1.msra.mxu0 %v330
      %508 = vmatprep.mubr.f32.mxu0 %v250
      %509 = vmatmul.mubr.f32.gmra.mrb[0].mxu0 %v249
      %v510 = vpop.f32.mrb[0].mxu0
      %v511 = vadd.f32 %v426, %v510
      %v512 = vpop.f32.mrb[0].mxu0
      %513 = vmatprep.mubr.f32.mxu0 %v255
      %514 = vmatmul.mubr.f32.gmra.mrb[0].mxu0 %v254
      %v515 = vpop.f32.mrb[0].mxu0
      %v516 = vadd.f32 %v431, %v515
      %v517 = vpop.f32.mrb[0].mxu0
      %518 = vmatprep.mubr.f32.mxu0 %v260
      %519 = vmatmul.mubr.f32.gmra.mrb[0].mxu0 %v259
      %v520 = vpop.f32.mrb[0].mxu0
      %v521 = vadd.f32 %v436, %v520
      %v522 = vpop.f32.mrb[0].mxu0
      %523 = vmatprep.mubr.f32.mxu0 %v265
      %524 = vmatmul.mubr.f32.gmra.mrb[0].mxu0 %v264
      %v525 = vpop.f32.mrb[0].mxu0
      %v526 = vadd.f32 %v441, %v525
      %v527 = vpop.f32.mrb[0].mxu0
      %528 = vdwg.mxu0
      %529 = vmatprep.subr.mxu0 0.0
      %530 = vmatpush1.msra.mxu0 %v331
      %531 = vmatprep.subr.mxu0 0.0
      %532 = vmatpush1.msra.mxu0 %v332
      %533 = vmatprep.subr.mxu0 0.0
      %534 = vmatpush1.msra.mxu0 %v333
      %535 = vmatprep.subr.mxu0 0.0
      %536 = vmatpush1.msra.mxu0 %v334
      %537 = vmatprep.subr.mxu0 0.0
      %538 = vmatpush1.msra.mxu0 %v335
      %539 = vmatprep.subr.mxu0 0.0
      %540 = vmatpush1.msra.mxu0 %v336
      %541 = vmatprep.subr.mxu0 0.0
      %542 = vmatpush1.msra.mxu0 %v337
      %543 = vmatprep.subr.mxu0 0.0
      %544 = vmatpush1.msra.mxu0 %v338
      %545 = vmatprep.subr.mxu0 0.0
      %546 = vmatpush1.msra.mxu0 0.0
      %547 = vmatprep.subr.mxu0 0.0
      %548 = vmatpush1.msra.mxu0 0.0
      %549 = vmatprep.subr.mxu0 0.0
      %550 = vmatpush1.msra.mxu0 0.0
      %551 = vmatprep.subr.mxu0 0.0
      %552 = vmatpush1.msra.mxu0 0.0
      %553 = vmatprep.subr.mxu0 0.0
      %554 = vmatpush1.msra.mxu0 0.0
      %555 = vmatprep.subr.mxu0 0.0
      %556 = vmatpush1.msra.mxu0 0.0
      %557 = vmatprep.subr.mxu0 0.0
      %558 = vmatpush1.msra.mxu0 0.0
      %559 = vmatprep.subr.mxu0 0.0
      %560 = vmatpush1.msra.mxu0 0.0
      %561 = vmatprep.subr.mxu0 0.0
      %562 = vmatpush1.msra.mxu0 0.0
      %563 = vmatprep.subr.mxu0 0.0
      %564 = vmatpush1.msra.mxu0 0.0
      %565 = vmatprep.subr.mxu0 0.0
      %566 = vmatpush1.msra.mxu0 0.0
      %567 = vmatprep.subr.mxu0 0.0
      %568 = vmatpush1.msra.mxu0 0.0
      %569 = vmatprep.subr.mxu0 0.0
      %570 = vmatpush1.msra.mxu0 0.0
      %571 = vmatprep.subr.mxu0 0.0
      %572 = vmatpush1.msra.mxu0 0.0
      %573 = vmatprep.subr.mxu0 0.0
      %574 = vmatpush1.msra.mxu0 0.0
      %575 = vmatprep.subr.mxu0 0.0
      %576 = vmatpush1.msra.mxu0 0.0
      %577 = vmatprep.subr.mxu0 0.0
      %578 = vmatpush1.msra.mxu0 0.0
      %579 = vmatprep.subr.mxu0 0.0
      %580 = vmatpush1.msra.mxu0 0.0
      %581 = vmatprep.subr.mxu0 0.0
      %582 = vmatpush1.msra.mxu0 0.0
      %583 = vmatprep.subr.mxu0 0.0
      %584 = vmatpush1.msra.mxu0 0.0
      %585 = vmatprep.subr.mxu0 0.0
      %586 = vmatpush1.msra.mxu0 0.0
      %587 = vmatprep.subr.mxu0 0.0
      %588 = vmatpush1.msra.mxu0 0.0
      %589 = vmatprep.subr.mxu0 0.0
      %590 = vmatpush1.msra.mxu0 0.0
      %591 = vmatprep.subr.mxu0 0.0
      %592 = vmatpush1.msra.mxu0 0.0
      %593 = vmatprep.mubr.f32.mxu0 0.0
      %594 = vmatmul.mubr.f32.gmra.mrb[0].mxu0 %v348
      %v595 = vpop.f32.mrb[0].mxu0
      %v596 = vadd.f32 %v511, %v595
      %v597 = vpop.f32.mrb[0].mxu0
      %598 = vmatprep.mubr.f32.mxu0 0.0
      %599 = vmatmul.mubr.f32.gmra.mrb[0].mxu0 %v351
      %v600 = vpop.f32.mrb[0].mxu0
      %v601 = vadd.f32 %v516, %v600
      %v602 = vpop.f32.mrb[0].mxu0
      %603 = vmatprep.mubr.f32.mxu0 0.0
      %604 = vmatmul.mubr.f32.gmra.mrb[0].mxu0 %v354
      %v605 = vpop.f32.mrb[0].mxu0
      %v606 = vadd.f32 %v521, %v605
      %v607 = vpop.f32.mrb[0].mxu0
      %608 = vmatprep.mubr.f32.mxu0 0.0
      %609 = vmatmul.mubr.f32.gmra.mrb[0].mxu0 %v357
      %v610 = vpop.f32.mrb[0].mxu0
      %v611 = vadd.f32 %v526, %v610
      %v612 = vpop.f32.mrb[0].mxu0
      %613 = vdwg.mxu0
      %v614 = vmax.f32 %v596, 0.0
      %v615 = vmax.f32 %v601, 0.0
      %v616 = vmax.f32 %v606, 0.0
      %v617 = vmax.f32 %v611, 0.0
      %618 = vst [vmem:[%s245] sm:$0xff] %v614
      %619 = vst [vmem:[%s245 + $0x8] sm:$0xff] %v615
      %620 = vst [vmem:[%s245 + $0x10] sm:$0xff] %v616
      %621 = vst [vmem:[%s245 + $0x18] sm:$0xff] %v617
      %s622 = smul.u32 4, %s19
      %p623 = scmp.lt.s32.totalorder %s18, 1
      %s624 = scalar_select %p623, %s18, 1
      %p625 = scmp.lt.s32.totalorder %s622, 3
      %s626 = scalar_select %p625, %s622, 3
      %s627 = smul.addr %s624, 4
      %s628 = sadd.s32 %s626, %s627
      %s629 = smul.addr %s628, 8
      %s630 = scalar_lea.vmem %s3, %s629
      // Predicated region
      $region33: #{multi_view_forward.11} parent=31 // pred_check
        %p631 = pneg %p126
      $region34: #{multi_view_forward.11} parent=31 // pred_check_branch
        %633 = sbr.rel (%p631) target = $region36
      $region35: #{multi_view_forward.11} parent=31 // pred_region
        %s634 = smul.u32 4, %s19
      $region36: #{multi_view_forward.11} parent=31 // pred_fallthru
        _
    $region32: #{multi_view_forward.11} parent=5 // pred_fallthru
      _
    %p635 = scmp.le.s32.totalorder 2, %s9
    // Predicated region
    $region37: #{multi_view_forward.11} parent=5 // pred_check
      %p636 = pneg %p635
    $region38: #{multi_view_forward.11} parent=5 // pred_check_branch
      %638 = sbr.rel (%p636) target = $region40
    $region39: #{multi_view_forward.11} parent=5 // pred_region
      %s639 = ssub.s32 %s9, 2
      // Predicated region
      $region41: #{multi_view_forward.11} parent=39 // pred_check
        %p640 = pneg %p132
      $region42: #{multi_view_forward.11} parent=39 // pred_check_branch
        %642 = sbr.rel (%p640) target = $region44
      $region43: #{multi_view_forward.11} parent=39 // pred_region
        %s643 = smul.u32 4, %s21
        %p644 = scmp.lt.s32.totalorder %s20, 1
        %s645 = scalar_select %p644, %s20, 1
        %p646 = scmp.lt.s32.totalorder %s643, 3
        %s647 = scalar_select %p646, %s643, 3
        %s648 = smul.addr %s645, 4
        %s649 = sadd.s32 %s647, %s648
        %s650 = smul.addr %s649, 8
        %s651 = scalar_lea.vmem %s3, %s650
      $region44: #{multi_view_forward.11} parent=39 // pred_fallthru
        _
    $region40: #{multi_view_forward.11} parent=5 // pred_fallthru
      _
  $region6: #{multi_view_forward.11} parent=0 // loop_footer
    %s13 = sadd.s32 1, %s9
  $region7: #{multi_view_forward.11} parent=0 // loop_footer_branch
    %8 = sbr.rel target = $region3
  $region8: #{multi_view_forward.11} parent=0 // loop_exit
    _

// kernel: multi_view_forward.12
$region0: #{multi_view_forward.12}
  #allocation0 [shape = 'u32[]', space=smem, size = 0x4, offset = 0x4, fixed_abs, tag = 'smem constant byte address 0x4 - core index']
  #allocation1 [shape = 'u32[144,128]{1,0:T(1,128)}', space=vmem, size = 0x12000, scoped, tag = 'internal scratch']
  %s0 = inlined_call_operand.vmem [shape: f32[2,128,288], index: 0, kind: input, shape index: {}]
  %s1 = inlined_call_operand.vmem [shape: f32[2,288,128], index: 1, kind: input, shape index: {}]
  %s2 = inlined_call_operand.vmem [shape: f32[2,1,128], index: 2, kind: input, shape index: {}]
  %s3 = inlined_call_operand.vmem [shape: f32[2,128,128], index: 3, kind: output, shape index: {}]
  %s4 = sld [smem:[#allocation0]]
  $region45: #{multi_view_forward.12} parent=0
    _
  %s6 = ssub.s32 1, %s4
  %s7 = scalar_select 0, %s6, %s4
  loop: start=0, step=1, limit=4
  $region2: #{multi_view_forward.12} parent=0 // loop_pre_header
    _
  $region3: #{multi_view_forward.12} parent=0 // loop_header
    %s9 = sphi 0, %s13
    %p10 = scmp.ge.s32.totalorder %s9, 4
    %s16 = sphi 0, %s28
    %s17 = sphi 0, %s24
    %s18 = sphi 0, %s16
    %s19 = sphi 0, %s17
    %s20 = sphi 0, %s18
    %s21 = sphi 0, %s19
    %s33 = sphi 0, %s35
    %s36 = sphi 0, %s33
    %s37 = sphi 0, %s36
    %s53 = sphi 0, %s37
    %s59 = sphi 0, %s61
    %s62 = sphi 0, %s59
    %s63 = sphi 0, %s62
    %s79 = sphi 0, %s63
    %s85 = sphi 0, %s87
    %s88 = sphi 0, %s85
    %s89 = sphi 0, %s88
    %s105 = sphi 0, %s89
    %s113 = sphi 0, %s115
    %s116 = sphi 0, %s113
    %s117 = sphi 0, %s116
    %s133 = sphi 0, %s117
  $region4: #{multi_view_forward.12} parent=0 // loop_header_branch
    %12 = sbr.rel (%p10) target = $region8
  $region5: #{multi_view_forward.12} parent=0 // loop_body
    %s14 = ssub.s32 %s9, 1
    %s15 = ssub.s32 %s9, 2
    %s22 = sadd.s32 1, %s17
    %p23 = scmp.ge.s32.totalorder %s22, 1
    %s24 = scalar_select %p23, 0, %s22
    %s25 = sadd.s32 1, %s16
    %s26 = scalar_select %p23, %s25, %s16
    %p27 = scmp.ge.s32.totalorder %s26, 2
    %s28 = scalar_select %p27, 0, %s26
    %s29 = ssub.s32 %s16, %s28
    %s30 = ssub.s32 %s17, %s24
    %s31 = sor.u32 %s29, %s30
    %p32 = scmp.eq.s32.totalorder %s31, 0
    %s34 = sadd.s32 %s33, 1
    %s35 = scalar_select %p32, %s33, %s34
    %p38 = pneg %p32
    %p39 = scmp.eq.s32.totalorder %s9, 1
    %p40 = por %p38, %p39
    %p41 = scmp.ne.s32.totalorder %s33, %s36
    %p42 = scmp.eq.s32.totalorder %s9, 0
    %p43 = por %p41, %p42
    %p44 = scmp.ne.s32.totalorder %s33, %s36
    %p45 = scmp.eq.s32.totalorder %s14, 1
    %p46 = por %p44, %p45
    %p47 = scmp.ne.s32.totalorder %s36, %s37
    %p48 = scmp.eq.s32.totalorder %s14, 0
    %p49 = por %p47, %p48
    %p50 = scmp.ne.s32.totalorder %s36, %s37
    %p51 = scmp.eq.s32.totalorder %s15, 1
    %p52 = por %p50, %p51
    %p54 = scmp.ne.s32.totalorder %s37, %s53
    %p55 = scmp.eq.s32.totalorder %s15, 0
    %p56 = por %p54, %p55
    %s57 = ssub.s32 %s16, %s28
    %p58 = scmp.eq.s32.totalorder %s57, 0
    %s60 = sadd.s32 %s59, 1
    %s61 = scalar_select %p58, %s59, %s60
    %p64 = pneg %p58
    %p65 = scmp.eq.s32.totalorder %s9, 1
    %p66 = por %p64, %p65
    %p67 = scmp.ne.s32.totalorder %s59, %s62
    %p68 = scmp.eq.s32.totalorder %s9, 0
    %p69 = por %p67, %p68
    %p70 = scmp.ne.s32.totalorder %s59, %s62
    %p71 = scmp.eq.s32.totalorder %s14, 1
    %p72 = por %p70, %p71
    %p73 = scmp.ne.s32.totalorder %s62, %s63
    %p74 = scmp.eq.s32.totalorder %s14, 0
    %p75 = por %p73, %p74
    %p76 = scmp.ne.s32.totalorder %s62, %s63
    %p77 = scmp.eq.s32.totalorder %s15, 1
    %p78 = por %p76, %p77
    %p80 = scmp.ne.s32.totalorder %s63, %s79
    %p81 = scmp.eq.s32.totalorder %s15, 0
    %p82 = por %p80, %p81
    %s83 = ssub.s32 %s16, %s28
    %p84 = scmp.eq.s32.totalorder %s83, 0
    %s86 = sadd.s32 %s85, 1
    %s87 = scalar_select %p84, %s85, %s86
    %p90 = pneg %p84
    %p91 = scmp.eq.s32.totalorder %s9, 1
    %p92 = por %p90, %p91
    %p93 = scmp.ne.s32.totalorder %s85, %s88
    %p94 = scmp.eq.s32.totalorder %s9, 0
    %p95 = por %p93, %p94
    %p96 = scmp.ne.s32.totalorder %s85, %s88
    %p97 = scmp.eq.s32.totalorder %s14, 1
    %p98 = por %p96, %p97
    %p99 = scmp.ne.s32.totalorder %s88, %s89
    %p100 = scmp.eq.s32.totalorder %s14, 0
    %p101 = por %p99, %p100
    %p102 = scmp.ne.s32.totalorder %s88, %s89
    %p103 = scmp.eq.s32.totalorder %s15, 1
    %p104 = por %p102, %p103
    %p106 = scmp.ne.s32.totalorder %s89, %s105
    %p107 = scmp.eq.s32.totalorder %s15, 0
    %p108 = por %p106, %p107
    %s109 = ssub.s32 %s16, %s28
    %s110 = ssub.s32 %s17, %s24
    %s111 = sor.u32 %s109, %s110
    %p112 = scmp.eq.s32.totalorder %s111, 0
    %s114 = sadd.s32 %s113, 1
    %s115 = scalar_select %p112, %s113, %s114
    %p118 = pneg %p112
    %p119 = scmp.eq.s32.totalorder %s9, 1
    %p120 = por %p118, %p119
    %p121 = scmp.ne.s32.totalorder %s113, %s116
    %p122 = scmp.eq.s32.totalorder %s9, 0
    %p123 = por %p121, %p122
    %p124 = scmp.ne.s32.totalorder %s113, %s116
    %p125 = scmp.eq.s32.totalorder %s14, 1
    %p126 = por %p124, %p125
    %p127 = scmp.ne.s32.totalorder %s116, %s117
    %p128 = scmp.eq.s32.totalorder %s14, 0
    %p129 = por %p127, %p128
    %p130 = scmp.ne.s32.totalorder %s116, %s117
    %p131 = scmp.eq.s32.totalorder %s15, 1
    %p132 = por %p130, %p131
    %p134 = scmp.ne.s32.totalorder %s117, %s133
    %p135 = scmp.eq.s32.totalorder %s15, 0
    %p136 = por %p134, %p135
    %p137 = scmp.le.s32.totalorder 1, %s9
    %p138 = scmp.lt.s32.totalorder %s9, 3
    %p139 = pnand %p137, %p138
    %p140 = pneg %p139
    // Predicated region
    $region9: #{multi_view_forward.12} parent=5 // pred_check
      _
    $region10: #{multi_view_forward.12} parent=5 // pred_check_branch
      %142 = sbr.rel (%p139) target = $region12
    $region11: #{multi_view_forward.12} parent=5 // pred_region
      %s143 = ssub.s32 %s9, 1
    $region12: #{multi_view_forward.12} parent=5 // pred_fallthru
      _
    %p144 = scmp.lt.s32.totalorder %s9, 2
    // Predicated region
    $region13: #{multi_view_forward.12} parent=5 // pred_check
      %p145 = pneg %p144
    $region14: #{multi_view_forward.12} parent=5 // pred_check_branch
      %147 = sbr.rel (%p145) target = $region16
    $region15: #{multi_view_forward.12} parent=5 // pred_region
      // Predicated region
      $region17: #{multi_view_forward.12} parent=15 // pred_check
        %p148 = pneg %p43
      $region18: #{multi_view_forward.12} parent=15 // pred_check_branch
        %150 = sbr.rel (%p148) target = $region20
      $region19: #{multi_view_forward.12} parent=15 // pred_region
        %s151 = smul.u32 16, %s17
        %p152 = scmp.lt.s32.totalorder %s16, 1
        %s153 = scalar_select %p152, %s16, 1
        %p154 = scmp.lt.s32.totalorder %s151, 15
        %s155 = scalar_select %p154, %s151, 15
        %s156 = smul.addr %s155, 3
        %s157 = smul.addr %s153, 48
        %s158 = sadd.s32 %s156, %s157
        %s159 = smul.addr %s158, 8
        %s160 = scalar_lea.vmem %s0, %s159
        %s161 = smul.u32 16, %s17
      $region20: #{multi_view_forward.12} parent=15 // pred_fallthru
        _
      // Predicated region
      $region21: #{multi_view_forward.12} parent=15 // pred_check
        %p162 = pneg %p69
      $region22: #{multi_view_forward.12} parent=15 // pred_check_branch
        %164 = sbr.rel (%p162) target = $region24
      $region23: #{multi_view_forward.12} parent=15 // pred_region
        %p165 = scmp.lt.s32.totalorder %s16, 1
        %s166 = scalar_select %p165, %s16, 1
        %s167 = smul.addr %s166, 36
        %s168 = smul.addr %s167, 8
        %s169 = scalar_lea.vmem %s1, %s168
      $region24: #{multi_view_forward.12} parent=15 // pred_fallthru
        _
      // Predicated region
      $region25: #{multi_view_forward.12} parent=15 // pred_check
        %p170 = pneg %p95
      $region26: #{multi_view_forward.12} parent=15 // pred_check_branch
        %172 = sbr.rel (%p170) target = $region28
      $region27: #{multi_view_forward.12} parent=15 // pred_region
        %p173 = scmp.lt.s32.totalorder %s16, 1
        %s174 = scalar_select %p173, %s16, 1
        %s175 = scalar_lea.vmem %s2, %s174
      $region28: #{multi_view_forward.12} parent=15 // pred_fallthru
        _
    $region16: #{multi_view_forward.12} parent=5 // pred_fallthru
      _
    %p176 = scmp.le.s32.totalorder 1, %s9
    %p177 = scmp.lt.s32.totalorder %s9, 3
    %p178 = pnand %p176, %p177
    %p179 = pneg %p178
    // Predicated region
    $region29: #{multi_view_forward.12} parent=5 // pred_check
      _
    $region30: #{multi_view_forward.12} parent=5 // pred_check_branch
      %181 = sbr.rel (%p178) target = $region32
    $region31: #{multi_view_forward.12} parent=5 // pred_region
      %s182 = ssub.s32 %s9, 1
      %s183 = smul.u32 16, %s19
      %p184 = scmp.lt.s32.totalorder %s18, 1
      %s185 = scalar_select %p184, %s18, 1
      %p186 = scmp.lt.s32.totalorder %s183, 15
      %s187 = scalar_select %p186, %s183, 15
      %s188 = smul.addr %s187, 3
      %s189 = smul.addr %s185, 48
      %s190 = sadd.s32 %s188, %s189
      %s191 = smul.addr %s190, 8
      %s192 = scalar_lea.vmem %s0, %s191
      %p193 = pneg %p49
      %p194 = pneg %p46
      %p195 = scmp.lt.s32.totalorder %s18, 1
      %s196 = scalar_select %p195, %s18, 1
      %s197 = smul.addr %s196, 36
      %s198 = smul.addr %s197, 8
      %s199 = scalar_lea.vmem %s1, %s198
      %p200 = pneg %p75
      %p201 = pneg %p72
      %p202 = scmp.lt.s32.totalorder %s18, 1
      %s203 = scalar_select %p202, %s18, 1
      %s204 = scalar_lea.vmem %s2, %s203
      %p205 = pneg %p101
      %p206 = pneg %p98
      %p207 = pneg %p129
      %p208 = pneg %p126
      %s209 = smul.u32 16, %s19
      %p210 = scmp.lt.s32.totalorder %s18, 1
      %s211 = scalar_select %p210, %s18, 1
      %p212 = scmp.lt.s32.totalorder %s209, 15
      %s213 = scalar_select %p212, %s209, 15
      %s214 = smul.addr %s211, 16
      %s215 = sadd.s32 %s213, %s214
      %s216 = smul.addr %s215, 8
      %s217 = scalar_lea.vmem %s3, %s216
      %s218 = smul.u32 16, %s19
      %p219 = scmp.lt.s32.totalorder %s18, 1
      %s220 = scalar_select %p219, %s18, 1
      %p221 = scmp.lt.s32.totalorder %s218, 15
      %s222 = scalar_select %p221, %s218, 15
      %s223 = smul.addr %s222, 3
      %s224 = smul.addr %s220, 48
      %s225 = sadd.s32 %s223, %s224
      %s226 = smul.addr %s225, 8
      %s227 = scalar_lea.vmem %s0, %s226
      %s228 = smul.u32 16, %s19
      %p229 = scmp.lt.s32.totalorder %s18, 1
      %s230 = scalar_select %p229, %s18, 1
      %s231 = smul.addr %s230, 36
      %s232 = smul.addr %s231, 8
      %s233 = scalar_lea.vmem %s1, %s232
      %p234 = scmp.lt.s32.totalorder %s18, 1
      %s235 = scalar_select %p234, %s18, 1
      %s236 = scalar_lea.vmem %s2, %s235
      %s237 = smul.u32 16, %s19
      %p238 = scmp.lt.s32.totalorder %s18, 1
      %s239 = scalar_select %p238, %s18, 1
      %p240 = scmp.lt.s32.totalorder %s237, 15
      %s241 = scalar_select %p240, %s237, 15
      %s242 = smul.addr %s239, 16
      %s243 = sadd.s32 %s241, %s242
      %s244 = smul.addr %s243, 8
      %s245 = scalar_lea.vmem %s3, %s244
      %s246 = smul.u32 16, %s19
      %v247 = vld [vmem:[%s227] sm:$0xff]
      %v248 = vld [vmem:[%s227 + $0x8] sm:$0xff]
      %v249 = vld [vmem:[%s227 + $0x10] sm:$0xff]
      %v250 = vld [vmem:[%s227 + $0x18] sm:$0xff]
      %v251 = vld [vmem:[%s227 + $0x20] sm:$0xff]
      %v252 = vld [vmem:[%s227 + $0x28] sm:$0xff]
      %v253 = vld [vmem:[%s227 + $0x30] sm:$0xff]
      %v254 = vld [vmem:[%s227 + $0x38] sm:$0xff]
      %v255 = vld [vmem:[%s227 + $0x40] sm:$0xff]
      %v256 = vld [vmem:[%s227 + $0x48] sm:$0xff]
      %v257 = vld [vmem:[%s227 + $0x50] sm:$0xff]
      %v258 = vld [vmem:[%s227 + $0x58] sm:$0xff]
      %v259 = vld [vmem:[%s227 + $0x60] sm:$0xff]
      %v260 = vld [vmem:[%s227 + $0x68] sm:$0xff]
      %v261 = vld [vmem:[%s227 + $0x70] sm:$0xff]
      %v262 = vld [vmem:[%s227 + $0x78] sm:$0xff]
      %v263 = vld [vmem:[%s227 + $0x80] sm:$0xff]
      %v264 = vld [vmem:[%s227 + $0x88] sm:$0xff]
      %v265 = vld [vmem:[%s227 + $0x90] sm:$0xff]
      %v266 = vld [vmem:[%s227 + $0x98] sm:$0xff]
      %v267 = vld [vmem:[%s227 + $0xa0] sm:$0xff]
      %v268 = vld [vmem:[%s227 + $0xa8] sm:$0xff]
      %v269 = vld [vmem:[%s227 + $0xb0] sm:$0xff]
      %v270 = vld [vmem:[%s227 + $0xb8] sm:$0xff]
      %v271 = vld [vmem:[%s227 + $0xc0] sm:$0xff]
      %v272 = vld [vmem:[%s227 + $0xc8] sm:$0xff]
      %v273 = vld [vmem:[%s227 + $0xd0] sm:$0xff]
      %v274 = vld [vmem:[%s227 + $0xd8] sm:$0xff]
      %v275 = vld [vmem:[%s227 + $0xe0] sm:$0xff]
      %v276 = vld [vmem:[%s227 + $0xe8] sm:$0xff]
      %v277 = vld [vmem:[%s227 + $0xf0] sm:$0xff]
      %v278 = vld [vmem:[%s227 + $0xf8] sm:$0xff]
      %v279 = vld [vmem:[%s227 + $0x100] sm:$0xff]
      %v280 = vld [vmem:[%s227 + $0x108] sm:$0xff]
      %v281 = vld [vmem:[%s227 + $0x110] sm:$0xff]
      %v282 = vld [vmem:[%s227 + $0x118] sm:$0xff]
      %v283 = vld [vmem:[%s227 + $0x120] sm:$0xff]
      %v284 = vld [vmem:[%s227 + $0x128] sm:$0xff]
      %v285 = vld [vmem:[%s227 + $0x130] sm:$0xff]
      %v286 = vld [vmem:[%s227 + $0x138] sm:$0xff]
      %v287 = vld [vmem:[%s227 + $0x140] sm:$0xff]
      %v288 = vld [vmem:[%s227 + $0x148] sm:$0xff]
      %v289 = vld [vmem:[%s227 + $0x150] sm:$0xff]
      %v290 = vld [vmem:[%s227 + $0x158] sm:$0xff]
      %v291 = vld [vmem:[%s227 + $0x160] sm:$0xff]
      %v292 = vld [vmem:[%s227 + $0x168] sm:$0xff]
      %v293 = vld [vmem:[%s227 + $0x170] sm:$0xff]
      %v294 = vld [vmem:[%s227 + $0x178] sm:$0xff]
      %v295 = vld [vmem:[%s233] sm:$0xff]
      %v296 = vld [vmem:[%s233 + $0x8] sm:$0xff]
      %v297 = vld [vmem:[%s233 + $0x10] sm:$0xff]
      %v298 = vld [vmem:[%s233 + $0x18] sm:$0xff]
      %v299 = vld [vmem:[%s233 + $0x20] sm:$0xff]
      %v300 = vld [vmem:[%s233 + $0x28] sm:$0xff]
      %v301 = vld [vmem:[%s233 + $0x30] sm:$0xff]
      %v302 = vld [vmem:[%s233 + $0x38] sm:$0xff]
      %v303 = vld [vmem:[%s233 + $0x40] sm:$0xff]
      %v304 = vld [vmem:[%s233 + $0x48] sm:$0xff]
      %v305 = vld [vmem:[%s233 + $0x50] sm:$0xff]
      %v306 = vld [vmem:[%s233 + $0x58] sm:$0xff]
      %v307 = vld [vmem:[%s233 + $0x60] sm:$0xff]
      %v308 = vld [vmem:[%s233 + $0x68] sm:$0xff]
      %v309 = vld [vmem:[%s233 + $0x70] sm:$0xff]
      %v310 = vld [vmem:[%s233 + $0x78] sm:$0xff]
      %v311 = vld [vmem:[%s233 + $0x80] sm:$0xff]
      %v312 = vld [vmem:[%s233 + $0x88] sm:$0xff]
      %v313 = vld [vmem:[%s233 + $0x90] sm:$0xff]
      %v314 = vld [vmem:[%s233 + $0x98] sm:$0xff]
      %v315 = vld [vmem:[%s233 + $0xa0] sm:$0xff]
      %v316 = vld [vmem:[%s233 + $0xa8] sm:$0xff]
      %v317 = vld [vmem:[%s233 + $0xb0] sm:$0xff]
      %v318 = vld [vmem:[%s233 + $0xb8] sm:$0xff]
      %v319 = vld [vmem:[%s233 + $0xc0] sm:$0xff]
      %v320 = vld [vmem:[%s233 + $0xc8] sm:$0xff]
      %v321 = vld [vmem:[%s233 + $0xd0] sm:$0xff]
      %v322 = vld [vmem:[%s233 + $0xd8] sm:$0xff]
      %v323 = vld [vmem:[%s233 + $0xe0] sm:$0xff]
      %v324 = vld [vmem:[%s233 + $0xe8] sm:$0xff]
      %v325 = vld [vmem:[%s233 + $0xf0] sm:$0xff]
      %v326 = vld [vmem:[%s233 + $0xf8] sm:$0xff]
      %v327 = vld [vmem:[%s233 + $0x100] sm:$0xff]
      %v328 = vld [vmem:[%s233 + $0x108] sm:$0xff]
      %v329 = vld [vmem:[%s233 + $0x110] sm:$0xff]
      %v330 = vld [vmem:[%s233 + $0x118] sm:$0xff]
      %v331 = vld [vmem:[%s236] sm:$0x1]
      %v333 = vlaneseq
      %v334 = vshrl.u32 %v333, 7
      %v335 = vsub.s32 0, %v334
      %v336 = vrot.slane %v331, %v335
      %vm338 = vcmask 261120
      %v340 = vsel %vm338, %v249, 0
      %v343 = vsel %vm338, %v252, 0
      %v346 = vsel %vm338, %v255, 0
      %v349 = vsel %vm338, %v258, 0
      %v352 = vsel %vm338, %v261, 0
      %v355 = vsel %vm338, %v264, 0
      %v358 = vsel %vm338, %v267, 0
      %v361 = vsel %vm338, %v270, 0
      %v364 = vsel %vm338, %v273, 0
      %v367 = vsel %vm338, %v276, 0
      %v370 = vsel %vm338, %v279, 0
      %v373 = vsel %vm338, %v282, 0
      %v376 = vsel %vm338, %v285, 0
      %v379 = vsel %vm338, %v288, 0
      %v382 = vsel %vm338, %v291, 0
      %v385 = vsel %vm338, %v294, 0
      %387 = vmatprep.subr.mxu0 0.0
      %388 = vmatpush1.msra.mxu0 %v295
      %389 = vmatprep.subr.mxu0 0.0
      %390 = vmatpush1.msra.mxu0 %v296
      %391 = vmatprep.subr.mxu0 0.0
      %392 = vmatpush1.msra.mxu0 %v297
      %393 = vmatprep.subr.mxu0 0.0
      %394 = vmatpush1.msra.mxu0 %v298
      %395 = vmatprep.subr.mxu0 0.0
      %396 = vmatpush1.msra.mxu0 %v299
      %397 = vmatprep.subr.mxu0 0.0
      %398 = vmatpush1.msra.mxu0 %v300
      %399 = vmatprep.subr.mxu0 0.0
      %400 = vmatpush1.msra.mxu0 %v301
      %401 = vmatprep.subr.mxu0 0.0
      %402 = vmatpush1.msra.mxu0 %v302
      %403 = vmatprep.subr.mxu0 0.0
      %404 = vmatpush1.msra.mxu0 %v303
      %405 = vmatprep.subr.mxu0 0.0
      %406 = vmatpush1.msra.mxu0 %v304
      %407 = vmatprep.subr.mxu0 0.0
      %408 = vmatpush1.msra.mxu0 %v305
      %409 = vmatprep.subr.mxu0 0.0
      %410 = vmatpush1.msra.mxu0 %v306
      %411 = vmatprep.subr.mxu0 0.0
      %412 = vmatpush1.msra.mxu0 %v307
      %413 = vmatprep.subr.mxu0 0.0
      %414 = vmatpush1.msra.mxu0 %v308
      %415 = vmatprep.subr.mxu0 0.0
      %416 = vmatpush1.msra.mxu0 %v309
      %417 = vmatprep.subr.mxu0 0.0
      %418 = vmatpush1.msra.mxu0 %v310
      %419 = vmatprep.subr.mxu0 0.0
      %420 = vmatpush1.msra.mxu0 %v311
      %421 = vmatprep.subr.mxu0 0.0
      %422 = vmatpush1.msra.mxu0 %v312
      %423 = vmatprep.subr.mxu0 0.0
      %424 = vmatpush1.msra.mxu0 %v313
      %425 = vmatprep.subr.mxu0 0.0
      %426 = vmatpush1.msra.mxu0 %v314
      %427 = vmatprep.subr.mxu0 0.0
      %428 = vmatpush1.msra.mxu0 %v315
      %429 = vmatprep.subr.mxu0 0.0
      %430 = vmatpush1.msra.mxu0 %v316
      %431 = vmatprep.subr.mxu0 0.0
      %432 = vmatpush1.msra.mxu0 %v317
      %433 = vmatprep.subr.mxu0 0.0
      %434 = vmatpush1.msra.mxu0 %v318
      %435 = vmatprep.subr.mxu0 0.0
      %436 = vmatpush1.msra.mxu0 %v319
      %437 = vmatprep.subr.mxu0 0.0
      %438 = vmatpush1.msra.mxu0 %v320
      %439 = vmatprep.subr.mxu0 0.0
      %440 = vmatpush1.msra.mxu0 %v321
      %441 = vmatprep.subr.mxu0 0.0
      %442 = vmatpush1.msra.mxu0 %v322
      %443 = vmatprep.subr.mxu0 0.0
      %444 = vmatpush1.msra.mxu0 %v323
      %445 = vmatprep.subr.mxu0 0.0
      %446 = vmatpush1.msra.mxu0 %v324
      %447 = vmatprep.subr.mxu0 0.0
      %448 = vmatpush1.msra.mxu0 %v325
      %449 = vmatprep.subr.mxu0 0.0
      %450 = vmatpush1.msra.mxu0 %v326
      %451 = vmatprep.mubr.f32.mxu0 %v248
      %452 = vmatmul.mubr.f32.gmra.mrb[0].mxu0 %v247
      %v453 = vpop.f32.mrb[0].mxu0
      %v454 = vadd.f32 %v336, %v453
      %v455 = vpop.f32.mrb[0].mxu0
      %456 = vmatprep.mubr.f32.mxu0 %v251
      %457 = vmatmul.mubr.f32.gmra.mrb[0].mxu0 %v250
      %v458 = vpop.f32.mrb[0].mxu0
      %v459 = vadd.f32 %v336, %v458
      %v460 = vpop.f32.mrb[0].mxu0
      %461 = vmatprep.mubr.f32.mxu0 %v254
      %462 = vmatmul.mubr.f32.gmra.mrb[0].mxu0 %v253
      %v463 = vpop.f32.mrb[0].mxu0
      %v464 = vadd.f32 %v336, %v463
      %v465 = vpop.f32.mrb[0].mxu0
      %466 = vmatprep.mubr.f32.mxu0 %v257
      %467 = vmatmul.mubr.f32.gmra.mrb[0].mxu0 %v256
      %v468 = vpop.f32.mrb[0].mxu0
      %v469 = vadd.f32 %v336, %v468
      %v470 = vpop.f32.mrb[0].mxu0
      %471 = vmatprep.mubr.f32.mxu0 %v260
      %472 = vmatmul.mubr.f32.gmra.mrb[0].mxu0 %v259
      %v473 = vpop.f32.mrb[0].mxu0
      %v474 = vadd.f32 %v336, %v473
      %v475 = vpop.f32.mrb[0].mxu0
      %476 = vmatprep.mubr.f32.mxu0 %v263
      %477 = vmatmul.mubr.f32.gmra.mrb[0].mxu0 %v262
      %v478 = vpop.f32.mrb[0].mxu0
      %v479 = vadd.f32 %v336, %v478
      %v480 = vpop.f32.mrb[0].mxu0
      %481 = vmatprep.mubr.f32.mxu0 %v266
      %482 = vmatmul.mubr.f32.gmra.mrb[0].mxu0 %v265
      %v483 = vpop.f32.mrb[0].mxu0
      %v484 = vadd.f32 %v336, %v483
      %v485 = vpop.f32.mrb[0].mxu0
      %486 = vmatprep.mubr.f32.mxu0 %v269
      %487 = vmatmul.mubr.f32.gmra.mrb[0].mxu0 %v268
      %v488 = vpop.f32.mrb[0].mxu0
      %v489 = vadd.f32 %v336, %v488
      %v490 = vpop.f32.mrb[0].mxu0
      %491 = vmatprep.mubr.f32.mxu0 %v272
      %492 = vmatmul.mubr.f32.gmra.mrb[0].mxu0 %v271
      %v493 = vpop.f32.mrb[0].mxu0
      %v494 = vadd.f32 %v336, %v493
      %v495 = vpop.f32.mrb[0].mxu0
      %496 = vmatprep.mubr.f32.mxu0 %v275
      %497 = vmatmul.mubr.f32.gmra.mrb[0].mxu0 %v274
      %v498 = vpop.f32.mrb[0].mxu0
      %v499 = vadd.f32 %v336, %v498
      %v500 = vpop.f32.mrb[0].mxu0
      %501 = vmatprep.mubr.f32.mxu0 %v278
      %502 = vmatmul.mubr.f32.gmra.mrb[0].mxu0 %v277
      %v503 = vpop.f32.mrb[0].mxu0
      %v504 = vadd.f32 %v336, %v503
      %v505 = vpop.f32.mrb[0].mxu0
      %506 = vmatprep.mubr.f32.mxu0 %v281
      %507 = vmatmul.mubr.f32.gmra.mrb[0].mxu0 %v280
      %v508 = vpop.f32.mrb[0].mxu0
      %v509 = vadd.f32 %v336, %v508
      %v510 = vpop.f32.mrb[0].mxu0
      %511 = vmatprep.mubr.f32.mxu0 %v284
      %512 = vmatmul.mubr.f32.gmra.mrb[0].mxu0 %v283
      %v513 = vpop.f32.mrb[0].mxu0
      %v514 = vadd.f32 %v336, %v513
      %v515 = vpop.f32.mrb[0].mxu0
      %516 = vmatprep.mubr.f32.mxu0 %v287
      %517 = vmatmul.mubr.f32.gmra.mrb[0].mxu0 %v286
      %v518 = vpop.f32.mrb[0].mxu0
      %v519 = vadd.f32 %v336, %v518
      %v520 = vpop.f32.mrb[0].mxu0
      %521 = vmatprep.mubr.f32.mxu0 %v290
      %522 = vmatmul.mubr.f32.gmra.mrb[0].mxu0 %v289
      %v523 = vpop.f32.mrb[0].mxu0
      %v524 = vadd.f32 %v336, %v523
      %v525 = vpop.f32.mrb[0].mxu0
      %526 = vmatprep.mubr.f32.mxu0 %v293
      %527 = vmatmul.mubr.f32.gmra.mrb[0].mxu0 %v292
      %v528 = vpop.f32.mrb[0].mxu0
      %v529 = vadd.f32 %v336, %v528
      %v530 = vpop.f32.mrb[0].mxu0
      %531 = vdwg.mxu0
      %532 = vmatprep.subr.mxu0 0.0
      %533 = vmatpush1.msra.mxu0 %v327
      %534 = vmatprep.subr.mxu0 0.0
      %535 = vmatpush1.msra.mxu0 %v328
      %536 = vmatprep.subr.mxu0 0.0
      %537 = vmatpush1.msra.mxu0 %v329
      %538 = vmatprep.subr.mxu0 0.0
      %539 = vmatpush1.msra.mxu0 %v330
      %540 = vmatprep.subr.mxu0 0.0
      %541 = vmatpush1.msra.mxu0 0.0
      %542 = vmatprep.subr.mxu0 0.0
      %543 = vmatpush1.msra.mxu0 0.0
      %544 = vmatprep.subr.mxu0 0.0
      %545 = vmatpush1.msra.mxu0 0.0
      %546 = vmatprep.subr.mxu0 0.0
      %547 = vmatpush1.msra.mxu0 0.0
      %548 = vmatprep.subr.mxu0 0.0
      %549 = vmatpush1.msra.mxu0 0.0
      %550 = vmatprep.subr.mxu0 0.0
      %551 = vmatpush1.msra.mxu0 0.0
      %552 = vmatprep.subr.mxu0 0.0
      %553 = vmatpush1.msra.mxu0 0.0
      %554 = vmatprep.subr.mxu0 0.0
      %555 = vmatpush1.msra.mxu0 0.0
      %556 = vmatprep.subr.mxu0 0.0
      %557 = vmatpush1.msra.mxu0 0.0
      %558 = vmatprep.subr.mxu0 0.0
      %559 = vmatpush1.msra.mxu0 0.0
      %560 = vmatprep.subr.mxu0 0.0
      %561 = vmatpush1.msra.mxu0 0.0
      %562 = vmatprep.subr.mxu0 0.0
      %563 = vmatpush1.msra.mxu0 0.0
      %564 = vmatprep.subr.mxu0 0.0
      %565 = vmatpush1.msra.mxu0 0.0
      %566 = vmatprep.subr.mxu0 0.0
      %567 = vmatpush1.msra.mxu0 0.0
      %568 = vmatprep.subr.mxu0 0.0
      %569 = vmatpush1.msra.mxu0 0.0
      %570 = vmatprep.subr.mxu0 0.0
      %571 = vmatpush1.msra.mxu0 0.0
      %572 = vmatprep.subr.mxu0 0.0
      %573 = vmatpush1.msra.mxu0 0.0
      %574 = vmatprep.subr.mxu0 0.0
      %575 = vmatpush1.msra.mxu0 0.0
      %576 = vmatprep.subr.mxu0 0.0
      %577 = vmatpush1.msra.mxu0 0.0
      %578 = vmatprep.subr.mxu0 0.0
      %579 = vmatpush1.msra.mxu0 0.0
      %580 = vmatprep.subr.mxu0 0.0
      %581 = vmatpush1.msra.mxu0 0.0
      %582 = vmatprep.subr.mxu0 0.0
      %583 = vmatpush1.msra.mxu0 0.0
      %584 = vmatprep.subr.mxu0 0.0
      %585 = vmatpush1.msra.mxu0 0.0
      %586 = vmatprep.subr.mxu0 0.0
      %587 = vmatpush1.msra.mxu0 0.0
      %588 = vmatprep.subr.mxu0 0.0
      %589 = vmatpush1.msra.mxu0 0.0
      %590 = vmatprep.subr.mxu0 0.0
      %591 = vmatpush1.msra.mxu0 0.0
      %592 = vmatprep.subr.mxu0 0.0
      %593 = vmatpush1.msra.mxu0 0.0
      %594 = vmatprep.subr.mxu0 0.0
      %595 = vmatpush1.msra.mxu0 0.0
      %596 = vmatprep.mubr.f32.mxu0 0.0
      %597 = vmatmul.mubr.f32.gmra.mrb[0].mxu0 %v340
      %v598 = vpop.f32.mrb[0].mxu0
      %v599 = vadd.f32 %v454, %v598
      %v600 = vpop.f32.mrb[0].mxu0
      %601 = vmatprep.mubr.f32.mxu0 0.0
      %602 = vmatmul.mubr.f32.gmra.mrb[0].mxu0 %v343
      %v603 = vpop.f32.mrb[0].mxu0
      %v604 = vadd.f32 %v459, %v603
      %v605 = vpop.f32.mrb[0].mxu0
      %606 = vmatprep.mubr.f32.mxu0 0.0
      %607 = vmatmul.mubr.f32.gmra.mrb[0].mxu0 %v346
      %v608 = vpop.f32.mrb[0].mxu0
      %v609 = vadd.f32 %v464, %v608
      %v610 = vpop.f32.mrb[0].mxu0
      %611 = vmatprep.mubr.f32.mxu0 0.0
      %612 = vmatmul.mubr.f32.gmra.mrb[0].mxu0 %v349
      %v613 = vpop.f32.mrb[0].mxu0
      %v614 = vadd.f32 %v469, %v613
      %v615 = vpop.f32.mrb[0].mxu0
      %616 = vmatprep.mubr.f32.mxu0 0.0
      %617 = vmatmul.mubr.f32.gmra.mrb[0].mxu0 %v352
      %v618 = vpop.f32.mrb[0].mxu0
      %v619 = vadd.f32 %v474, %v618
      %v620 = vpop.f32.mrb[0].mxu0
      %621 = vmatprep.mubr.f32.mxu0 0.0
      %622 = vmatmul.mubr.f32.gmra.mrb[0].mxu0 %v355
      %v623 = vpop.f32.mrb[0].mxu0
      %v624 = vadd.f32 %v479, %v623
      %v625 = vpop.f32.mrb[0].mxu0
      %626 = vmatprep.mubr.f32.mxu0 0.0
      %627 = vmatmul.mubr.f32.gmra.mrb[0].mxu0 %v358
      %v628 = vpop.f32.mrb[0].mxu0
      %v629 = vadd.f32 %v484, %v628
      %v630 = vpop.f32.mrb[0].mxu0
      %631 = vmatprep.mubr.f32.mxu0 0.0
      %632 = vmatmul.mubr.f32.gmra.mrb[0].mxu0 %v361
      %v633 = vpop.f32.mrb[0].mxu0
      %v634 = vadd.f32 %v489, %v633
      %v635 = vpop.f32.mrb[0].mxu0
      %636 = vmatprep.mubr.f32.mxu0 0.0
      %637 = vmatmul.mubr.f32.gmra.mrb[0].mxu0 %v364
      %v638 = vpop.f32.mrb[0].mxu0
      %v639 = vadd.f32 %v494, %v638
      %v640 = vpop.f32.mrb[0].mxu0
      %641 = vmatprep.mubr.f32.mxu0 0.0
      %642 = vmatmul.mubr.f32.gmra.mrb[0].mxu0 %v367
      %v643 = vpop.f32.mrb[0].mxu0
      %v644 = vadd.f32 %v499, %v643
      %v645 = vpop.f32.mrb[0].mxu0
      %646 = vmatprep.mubr.f32.mxu0 0.0
      %647 = vmatmul.mubr.f32.gmra.mrb[0].mxu0 %v370
      %v648 = vpop.f32.mrb[0].mxu0
      %v649 = vadd.f32 %v504, %v648
      %v650 = vpop.f32.mrb[0].mxu0
      %651 = vmatprep.mubr.f32.mxu0 0.0
      %652 = vmatmul.mubr.f32.gmra.mrb[0].mxu0 %v373
      %v653 = vpop.f32.mrb[0].mxu0
      %v654 = vadd.f32 %v509, %v653
      %v655 = vpop.f32.mrb[0].mxu0
      %656 = vmatprep.mubr.f32.mxu0 0.0
      %657 = vmatmul.mubr.f32.gmra.mrb[0].mxu0 %v376
      %v658 = vpop.f32.mrb[0].mxu0
      %v659 = vadd.f32 %v514, %v658
      %v660 = vpop.f32.mrb[0].mxu0
      %661 = vmatprep.mubr.f32.mxu0 0.0
      %662 = vmatmul.mubr.f32.gmra.mrb[0].mxu0 %v379
      %v663 = vpop.f32.mrb[0].mxu0
      %v664 = vadd.f32 %v519, %v663
      %v665 = vpop.f32.mrb[0].mxu0
      %666 = vmatprep.mubr.f32.mxu0 0.0
      %667 = vmatmul.mubr.f32.gmra.mrb[0].mxu0 %v382
      %v668 = vpop.f32.mrb[0].mxu0
      %v669 = vadd.f32 %v524, %v668
      %v670 = vpop.f32.mrb[0].mxu0
      %671 = vmatprep.mubr.f32.mxu0 0.0
      %672 = vmatmul.mubr.f32.gmra.mrb[0].mxu0 %v385
      %v673 = vpop.f32.mrb[0].mxu0
      %v674 = vadd.f32 %v529, %v673
      %v675 = vpop.f32.mrb[0].mxu0
      %676 = vdwg.mxu0
      %v677 = vmax.f32 %v599, 0.0
      %v678 = vmax.f32 %v604, 0.0
      %v679 = vmax.f32 %v609, 0.0
      %v680 = vmax.f32 %v614, 0.0
      %v681 = vmax.f32 %v619, 0.0
      %v682 = vmax.f32 %v624, 0.0
      %v683 = vmax.f32 %v629, 0.0
      %v684 = vmax.f32 %v634, 0.0
      %v685 = vmax.f32 %v639, 0.0
      %v686 = vmax.f32 %v644, 0.0
      %v687 = vmax.f32 %v649, 0.0
      %v688 = vmax.f32 %v654, 0.0
      %v689 = vmax.f32 %v659, 0.0
      %v690 = vmax.f32 %v664, 0.0
      %v691 = vmax.f32 %v669, 0.0
      %v692 = vmax.f32 %v674, 0.0
      %693 = vst [vmem:[%s245] sm:$0xff] %v677
      %694 = vst [vmem:[%s245 + $0x8] sm:$0xff] %v678
      %695 = vst [vmem:[%s245 + $0x10] sm:$0xff] %v679
      %696 = vst [vmem:[%s245 + $0x18] sm:$0xff] %v680
      %697 = vst [vmem:[%s245 + $0x20] sm:$0xff] %v681
      %698 = vst [vmem:[%s245 + $0x28] sm:$0xff] %v682
      %699 = vst [vmem:[%s245 + $0x30] sm:$0xff] %v683
      %700 = vst [vmem:[%s245 + $0x38] sm:$0xff] %v684
      %701 = vst [vmem:[%s245 + $0x40] sm:$0xff] %v685
      %702 = vst [vmem:[%s245 + $0x48] sm:$0xff] %v686
      %703 = vst [vmem:[%s245 + $0x50] sm:$0xff] %v687
      %704 = vst [vmem:[%s245 + $0x58] sm:$0xff] %v688
      %705 = vst [vmem:[%s245 + $0x60] sm:$0xff] %v689
      %706 = vst [vmem:[%s245 + $0x68] sm:$0xff] %v690
      %707 = vst [vmem:[%s245 + $0x70] sm:$0xff] %v691
      %708 = vst [vmem:[%s245 + $0x78] sm:$0xff] %v692
      %s709 = smul.u32 16, %s19
      %p710 = scmp.lt.s32.totalorder %s18, 1
      %s711 = scalar_select %p710, %s18, 1
      %p712 = scmp.lt.s32.totalorder %s709, 15
      %s713 = scalar_select %p712, %s709, 15
      %s714 = smul.addr %s711, 16
      %s715 = sadd.s32 %s713, %s714
      %s716 = smul.addr %s715, 8
      %s717 = scalar_lea.vmem %s3, %s716
      // Predicated region
      $region33: #{multi_view_forward.12} parent=31 // pred_check
        %p718 = pneg %p126
      $region34: #{multi_view_forward.12} parent=31 // pred_check_branch
        %720 = sbr.rel (%p718) target = $region36
      $region35: #{multi_view_forward.12} parent=31 // pred_region
        %s721 = smul.u32 16, %s19
      $region36: #{multi_view_forward.12} parent=31 // pred_fallthru
        _
    $region32: #{multi_view_forward.12} parent=5 // pred_fallthru
      _
    %p722 = scmp.le.s32.totalorder 2, %s9
    // Predicated region
    $region37: #{multi_view_forward.12} parent=5 // pred_check
      %p723 = pneg %p722
    $region38: #{multi_view_forward.12} parent=5 // pred_check_branch
      %725 = sbr.rel (%p723) target = $region40
    $region39: #{multi_view_forward.12} parent=5 // pred_region
      %s726 = ssub.s32 %s9, 2
      // Predicated region
      $region41: #{multi_view_forward.12} parent=39 // pred_check
        %p727 = pneg %p132
      $region42: #{multi_view_forward.12} parent=39 // pred_check_branch
        %729 = sbr.rel (%p727) target = $region44
      $region43: #{multi_view_forward.12} parent=39 // pred_region
        %s730 = smul.u32 16, %s21
        %p731 = scmp.lt.s32.totalorder %s20, 1
        %s732 = scalar_select %p731, %s20, 1
        %p733 = scmp.lt.s32.totalorder %s730, 15
        %s734 = scalar_select %p733, %s730, 15
        %s735 = smul.addr %s732, 16
        %s736 = sadd.s32 %s734, %s735
        %s737 = smul.addr %s736, 8
        %s738 = scalar_lea.vmem %s3, %s737
      $region44: #{multi_view_forward.12} parent=39 // pred_fallthru
        _
    $region40: #{multi_view_forward.12} parent=5 // pred_fallthru
      _
  $region6: #{multi_view_forward.12} parent=0 // loop_footer
    %s13 = sadd.s32 1, %s9
  $region7: #{multi_view_forward.12} parent=0 // loop_footer_branch
    %8 = sbr.rel target = $region3
  $region8: #{multi_view_forward.12} parent=0 // loop_exit
    _

// kernel: multi_view_forward.13
$region0: #{multi_view_forward.13}
  #allocation0 [shape = 'u32[]', space=smem, size = 0x4, offset = 0x4, fixed_abs, tag = 'smem constant byte address 0x4 - core index']
  #allocation1 [shape = 'u32[144,128]{1,0:T(1,128)}', space=vmem, size = 0x12000, scoped, tag = 'internal scratch']
  %s0 = inlined_call_operand.vmem [shape: f32[2,512,288], index: 0, kind: input, shape index: {}]
  %s1 = inlined_call_operand.vmem [shape: f32[2,288,12], index: 1, kind: input, shape index: {}]
  %s2 = inlined_call_operand.vmem [shape: f32[2,1,12], index: 2, kind: input, shape index: {}]
  %s3 = inlined_call_operand.vmem [shape: f32[2,512,12], index: 3, kind: output, shape index: {}]
  %s4 = sld [smem:[#allocation0]]
  $region45: #{multi_view_forward.13} parent=0
    _
  %s6 = ssub.s32 1, %s4
  %s7 = scalar_select 0, %s6, %s4
  loop: start=0, step=1, limit=4
  $region2: #{multi_view_forward.13} parent=0 // loop_pre_header
    _
  $region3: #{multi_view_forward.13} parent=0 // loop_header
    %s9 = sphi 0, %s13
    %p10 = scmp.ge.s32.totalorder %s9, 4
    %s16 = sphi 0, %s28
    %s17 = sphi 0, %s24
    %s18 = sphi 0, %s16
    %s19 = sphi 0, %s17
    %s20 = sphi 0, %s18
    %s21 = sphi 0, %s19
    %s33 = sphi 0, %s35
    %s36 = sphi 0, %s33
    %s37 = sphi 0, %s36
    %s53 = sphi 0, %s37
    %s59 = sphi 0, %s61
    %s62 = sphi 0, %s59
    %s63 = sphi 0, %s62
    %s79 = sphi 0, %s63
    %s85 = sphi 0, %s87
    %s88 = sphi 0, %s85
    %s89 = sphi 0, %s88
    %s105 = sphi 0, %s89
    %s113 = sphi 0, %s115
    %s116 = sphi 0, %s113
    %s117 = sphi 0, %s116
    %s133 = sphi 0, %s117
  $region4: #{multi_view_forward.13} parent=0 // loop_header_branch
    %12 = sbr.rel (%p10) target = $region8
  $region5: #{multi_view_forward.13} parent=0 // loop_body
    %s14 = ssub.s32 %s9, 1
    %s15 = ssub.s32 %s9, 2
    %s22 = sadd.s32 1, %s17
    %p23 = scmp.ge.s32.totalorder %s22, 1
    %s24 = scalar_select %p23, 0, %s22
    %s25 = sadd.s32 1, %s16
    %s26 = scalar_select %p23, %s25, %s16
    %p27 = scmp.ge.s32.totalorder %s26, 2
    %s28 = scalar_select %p27, 0, %s26
    %s29 = ssub.s32 %s16, %s28
    %s30 = ssub.s32 %s17, %s24
    %s31 = sor.u32 %s29, %s30
    %p32 = scmp.eq.s32.totalorder %s31, 0
    %s34 = sadd.s32 %s33, 1
    %s35 = scalar_select %p32, %s33, %s34
    %p38 = pneg %p32
    %p39 = scmp.eq.s32.totalorder %s9, 1
    %p40 = por %p38, %p39
    %p41 = scmp.ne.s32.totalorder %s33, %s36
    %p42 = scmp.eq.s32.totalorder %s9, 0
    %p43 = por %p41, %p42
    %p44 = scmp.ne.s32.totalorder %s33, %s36
    %p45 = scmp.eq.s32.totalorder %s14, 1
    %p46 = por %p44, %p45
    %p47 = scmp.ne.s32.totalorder %s36, %s37
    %p48 = scmp.eq.s32.totalorder %s14, 0
    %p49 = por %p47, %p48
    %p50 = scmp.ne.s32.totalorder %s36, %s37
    %p51 = scmp.eq.s32.totalorder %s15, 1
    %p52 = por %p50, %p51
    %p54 = scmp.ne.s32.totalorder %s37, %s53
    %p55 = scmp.eq.s32.totalorder %s15, 0
    %p56 = por %p54, %p55
    %s57 = ssub.s32 %s16, %s28
    %p58 = scmp.eq.s32.totalorder %s57, 0
    %s60 = sadd.s32 %s59, 1
    %s61 = scalar_select %p58, %s59, %s60
    %p64 = pneg %p58
    %p65 = scmp.eq.s32.totalorder %s9, 1
    %p66 = por %p64, %p65
    %p67 = scmp.ne.s32.totalorder %s59, %s62
    %p68 = scmp.eq.s32.totalorder %s9, 0
    %p69 = por %p67, %p68
    %p70 = scmp.ne.s32.totalorder %s59, %s62
    %p71 = scmp.eq.s32.totalorder %s14, 1
    %p72 = por %p70, %p71
    %p73 = scmp.ne.s32.totalorder %s62, %s63
    %p74 = scmp.eq.s32.totalorder %s14, 0
    %p75 = por %p73, %p74
    %p76 = scmp.ne.s32.totalorder %s62, %s63
    %p77 = scmp.eq.s32.totalorder %s15, 1
    %p78 = por %p76, %p77
    %p80 = scmp.ne.s32.totalorder %s63, %s79
    %p81 = scmp.eq.s32.totalorder %s15, 0
    %p82 = por %p80, %p81
    %s83 = ssub.s32 %s16, %s28
    %p84 = scmp.eq.s32.totalorder %s83, 0
    %s86 = sadd.s32 %s85, 1
    %s87 = scalar_select %p84, %s85, %s86
    %p90 = pneg %p84
    %p91 = scmp.eq.s32.totalorder %s9, 1
    %p92 = por %p90, %p91
    %p93 = scmp.ne.s32.totalorder %s85, %s88
    %p94 = scmp.eq.s32.totalorder %s9, 0
    %p95 = por %p93, %p94
    %p96 = scmp.ne.s32.totalorder %s85, %s88
    %p97 = scmp.eq.s32.totalorder %s14, 1
    %p98 = por %p96, %p97
    %p99 = scmp.ne.s32.totalorder %s88, %s89
    %p100 = scmp.eq.s32.totalorder %s14, 0
    %p101 = por %p99, %p100
    %p102 = scmp.ne.s32.totalorder %s88, %s89
    %p103 = scmp.eq.s32.totalorder %s15, 1
    %p104 = por %p102, %p103
    %p106 = scmp.ne.s32.totalorder %s89, %s105
    %p107 = scmp.eq.s32.totalorder %s15, 0
    %p108 = por %p106, %p107
    %s109 = ssub.s32 %s16, %s28
    %s110 = ssub.s32 %s17, %s24
    %s111 = sor.u32 %s109, %s110
    %p112 = scmp.eq.s32.totalorder %s111, 0
    %s114 = sadd.s32 %s113, 1
    %s115 = scalar_select %p112, %s113, %s114
    %p118 = pneg %p112
    %p119 = scmp.eq.s32.totalorder %s9, 1
    %p120 = por %p118, %p119
    %p121 = scmp.ne.s32.totalorder %s113, %s116
    %p122 = scmp.eq.s32.totalorder %s9, 0
    %p123 = por %p121, %p122
    %p124 = scmp.ne.s32.totalorder %s113, %s116
    %p125 = scmp.eq.s32.totalorder %s14, 1
    %p126 = por %p124, %p125
    %p127 = scmp.ne.s32.totalorder %s116, %s117
    %p128 = scmp.eq.s32.totalorder %s14, 0
    %p129 = por %p127, %p128
    %p130 = scmp.ne.s32.totalorder %s116, %s117
    %p131 = scmp.eq.s32.totalorder %s15, 1
    %p132 = por %p130, %p131
    %p134 = scmp.ne.s32.totalorder %s117, %s133
    %p135 = scmp.eq.s32.totalorder %s15, 0
    %p136 = por %p134, %p135
    %p137 = scmp.le.s32.totalorder 1, %s9
    %p138 = scmp.lt.s32.totalorder %s9, 3
    %p139 = pnand %p137, %p138
    %p140 = pneg %p139
    // Predicated region
    $region9: #{multi_view_forward.13} parent=5 // pred_check
      _
    $region10: #{multi_view_forward.13} parent=5 // pred_check_branch
      %142 = sbr.rel (%p139) target = $region12
    $region11: #{multi_view_forward.13} parent=5 // pred_region
      %s143 = ssub.s32 %s9, 1
    $region12: #{multi_view_forward.13} parent=5 // pred_fallthru
      _
    %p144 = scmp.lt.s32.totalorder %s9, 2
    // Predicated region
    $region13: #{multi_view_forward.13} parent=5 // pred_check
      %p145 = pneg %p144
    $region14: #{multi_view_forward.13} parent=5 // pred_check_branch
      %147 = sbr.rel (%p145) target = $region16
    $region15: #{multi_view_forward.13} parent=5 // pred_region
      // Predicated region
      $region17: #{multi_view_forward.13} parent=15 // pred_check
        %p148 = pneg %p43
      $region18: #{multi_view_forward.13} parent=15 // pred_check_branch
        %150 = sbr.rel (%p148) target = $region20
      $region19: #{multi_view_forward.13} parent=15 // pred_region
        %s151 = smul.u32 64, %s17
        %p152 = scmp.lt.s32.totalorder %s16, 1
        %s153 = scalar_select %p152, %s16, 1
        %p154 = scmp.lt.s32.totalorder %s151, 63
        %s155 = scalar_select %p154, %s151, 63
        %s156 = smul.addr %s155, 3
        %s157 = smul.addr %s153, 192
        %s158 = sadd.s32 %s156, %s157
        %s159 = smul.addr %s158, 8
        %s160 = scalar_lea.vmem %s0, %s159
        %s161 = smul.u32 64, %s17
      $region20: #{multi_view_forward.13} parent=15 // pred_fallthru
        _
      // Predicated region
      $region21: #{multi_view_forward.13} parent=15 // pred_check
        %p162 = pneg %p69
      $region22: #{multi_view_forward.13} parent=15 // pred_check_branch
        %164 = sbr.rel (%p162) target = $region24
      $region23: #{multi_view_forward.13} parent=15 // pred_region
        %p165 = scmp.lt.s32.totalorder %s16, 1
        %s166 = scalar_select %p165, %s16, 1
        %s167 = smul.addr %s166, 36
        %s168 = smul.addr %s167, 8
        %s169 = scalar_lea.vmem %s1, %s168
      $region24: #{multi_view_forward.13} parent=15 // pred_fallthru
        _
      // Predicated region
      $region25: #{multi_view_forward.13} parent=15 // pred_check
        %p170 = pneg %p95
      $region26: #{multi_view_forward.13} parent=15 // pred_check_branch
        %172 = sbr.rel (%p170) target = $region28
      $region27: #{multi_view_forward.13} parent=15 // pred_region
        %p173 = scmp.lt.s32.totalorder %s16, 1
        %s174 = scalar_select %p173, %s16, 1
        %s175 = scalar_lea.vmem %s2, %s174
      $region28: #{multi_view_forward.13} parent=15 // pred_fallthru
        _
    $region16: #{multi_view_forward.13} parent=5 // pred_fallthru
      _
    %p176 = scmp.le.s32.totalorder 1, %s9
    %p177 = scmp.lt.s32.totalorder %s9, 3
    %p178 = pnand %p176, %p177
    %p179 = pneg %p178
    // Predicated region
    $region29: #{multi_view_forward.13} parent=5 // pred_check
      _
    $region30: #{multi_view_forward.13} parent=5 // pred_check_branch
      %181 = sbr.rel (%p178) target = $region32
    $region31: #{multi_view_forward.13} parent=5 // pred_region
      %s182 = ssub.s32 %s9, 1
      %s183 = smul.u32 64, %s19
      %p184 = scmp.lt.s32.totalorder %s18, 1
      %s185 = scalar_select %p184, %s18, 1
      %p186 = scmp.lt.s32.totalorder %s183, 63
      %s187 = scalar_select %p186, %s183, 63
      %s188 = smul.addr %s187, 3
      %s189 = smul.addr %s185, 192
      %s190 = sadd.s32 %s188, %s189
      %s191 = smul.addr %s190, 8
      %s192 = scalar_lea.vmem %s0, %s191
      %p193 = pneg %p49
      %p194 = pneg %p46
      %p195 = scmp.lt.s32.totalorder %s18, 1
      %s196 = scalar_select %p195, %s18, 1
      %s197 = smul.addr %s196, 36
      %s198 = smul.addr %s197, 8
      %s199 = scalar_lea.vmem %s1, %s198
      %p200 = pneg %p75
      %p201 = pneg %p72
      %p202 = scmp.lt.s32.totalorder %s18, 1
      %s203 = scalar_select %p202, %s18, 1
      %s204 = scalar_lea.vmem %s2, %s203
      %p205 = pneg %p101
      %p206 = pneg %p98
      %p207 = pneg %p129
      %p208 = pneg %p126
      %s209 = smul.u32 64, %s19
      %p210 = scmp.lt.s32.totalorder %s18, 1
      %s211 = scalar_select %p210, %s18, 1
      %p212 = scmp.lt.s32.totalorder %s209, 63
      %s213 = scalar_select %p212, %s209, 63
      %s214 = smul.addr %s211, 64
      %s215 = sadd.s32 %s213, %s214
      %s216 = smul.addr %s215, 8
      %s217 = scalar_lea.vmem %s3, %s216
      %s218 = smul.u32 64, %s19
      %p219 = scmp.lt.s32.totalorder %s18, 1
      %s220 = scalar_select %p219, %s18, 1
      %p221 = scmp.lt.s32.totalorder %s218, 63
      %s222 = scalar_select %p221, %s218, 63
      %s223 = smul.addr %s222, 3
      %s224 = smul.addr %s220, 192
      %s225 = sadd.s32 %s223, %s224
      %s226 = smul.addr %s225, 8
      %s227 = scalar_lea.vmem %s0, %s226
      %s228 = smul.u32 64, %s19
      %p229 = scmp.lt.s32.totalorder %s18, 1
      %s230 = scalar_select %p229, %s18, 1
      %s231 = smul.addr %s230, 36
      %s232 = smul.addr %s231, 8
      %s233 = scalar_lea.vmem %s1, %s232
      %p234 = scmp.lt.s32.totalorder %s18, 1
      %s235 = scalar_select %p234, %s18, 1
      %s236 = scalar_lea.vmem %s2, %s235
      %s237 = smul.u32 64, %s19
      %p238 = scmp.lt.s32.totalorder %s18, 1
      %s239 = scalar_select %p238, %s18, 1
      %p240 = scmp.lt.s32.totalorder %s237, 63
      %s241 = scalar_select %p240, %s237, 63
      %s242 = smul.addr %s239, 64
      %s243 = sadd.s32 %s241, %s242
      %s244 = smul.addr %s243, 8
      %s245 = scalar_lea.vmem %s3, %s244
      %s246 = smul.u32 64, %s19
      %v247 = vld [vmem:[%s227] sm:$0xff]
      %v248 = vld [vmem:[%s227 + $0x8] sm:$0xff]
      %v249 = vld [vmem:[%s227 + $0x10] sm:$0xff]
      %v250 = vld [vmem:[%s227 + $0x18] sm:$0xff]
      %v251 = vld [vmem:[%s227 + $0x20] sm:$0xff]
      %v252 = vld [vmem:[%s227 + $0x28] sm:$0xff]
      %v253 = vld [vmem:[%s227 + $0x30] sm:$0xff]
      %v254 = vld [vmem:[%s227 + $0x38] sm:$0xff]
      %v255 = vld [vmem:[%s227 + $0x40] sm:$0xff]
      %v256 = vld [vmem:[%s227 + $0x48] sm:$0xff]
      %v257 = vld [vmem:[%s227 + $0x50] sm:$0xff]
      %v258 = vld [vmem:[%s227 + $0x58] sm:$0xff]
      %v259 = vld [vmem:[%s227 + $0x60] sm:$0xff]
      %v260 = vld [vmem:[%s227 + $0x68] sm:$0xff]
      %v261 = vld [vmem:[%s227 + $0x70] sm:$0xff]
      %v262 = vld [vmem:[%s227 + $0x78] sm:$0xff]
      %v263 = vld [vmem:[%s227 + $0x80] sm:$0xff]
      %v264 = vld [vmem:[%s227 + $0x88] sm:$0xff]
      %v265 = vld [vmem:[%s227 + $0x90] sm:$0xff]
      %v266 = vld [vmem:[%s227 + $0x98] sm:$0xff]
      %v267 = vld [vmem:[%s227 + $0xa0] sm:$0xff]
      %v268 = vld [vmem:[%s227 + $0xa8] sm:$0xff]
      %v269 = vld [vmem:[%s227 + $0xb0] sm:$0xff]
      %v270 = vld [vmem:[%s227 + $0xb8] sm:$0xff]
      %v271 = vld [vmem:[%s227 + $0xc0] sm:$0xff]
      %v272 = vld [vmem:[%s227 + $0xc8] sm:$0xff]
      %v273 = vld [vmem:[%s227 + $0xd0] sm:$0xff]
      %v274 = vld [vmem:[%s227 + $0xd8] sm:$0xff]
      %v275 = vld [vmem:[%s227 + $0xe0] sm:$0xff]
      %v276 = vld [vmem:[%s227 + $0xe8] sm:$0xff]
      %v277 = vld [vmem:[%s227 + $0xf0] sm:$0xff]
      %v278 = vld [vmem:[%s227 + $0xf8] sm:$0xff]
      %v279 = vld [vmem:[%s227 + $0x100] sm:$0xff]
      %v280 = vld [vmem:[%s227 + $0x108] sm:$0xff]
      %v281 = vld [vmem:[%s227 + $0x110] sm:$0xff]
      %v282 = vld [vmem:[%s227 + $0x118] sm:$0xff]
      %v283 = vld [vmem:[%s227 + $0x120] sm:$0xff]
      %v284 = vld [vmem:[%s227 + $0x128] sm:$0xff]
      %v285 = vld [vmem:[%s227 + $0x130] sm:$0xff]
      %v286 = vld [vmem:[%s227 + $0x138] sm:$0xff]
      %v287 = vld [vmem:[%s227 + $0x140] sm:$0xff]
      %v288 = vld [vmem:[%s227 + $0x148] sm:$0xff]
      %v289 = vld [vmem:[%s227 + $0x150] sm:$0xff]
      %v290 = vld [vmem:[%s227 + $0x158] sm:$0xff]
      %v291 = vld [vmem:[%s227 + $0x160] sm:$0xff]
      %v292 = vld [vmem:[%s227 + $0x168] sm:$0xff]
      %v293 = vld [vmem:[%s227 + $0x170] sm:$0xff]
      %v294 = vld [vmem:[%s227 + $0x178] sm:$0xff]
      %v295 = vld [vmem:[%s227 + $0x180] sm:$0xff]
      %v296 = vld [vmem:[%s227 + $0x188] sm:$0xff]
      %v297 = vld [vmem:[%s227 + $0x190] sm:$0xff]
      %v298 = vld [vmem:[%s227 + $0x198] sm:$0xff]
      %v299 = vld [vmem:[%s227 + $0x1a0] sm:$0xff]
      %v300 = vld [vmem:[%s227 + $0x1a8] sm:$0xff]
      %v301 = vld [vmem:[%s227 + $0x1b0] sm:$0xff]
      %v302 = vld [vmem:[%s227 + $0x1b8] sm:$0xff]
      %v303 = vld [vmem:[%s227 + $0x1c0] sm:$0xff]
      %v304 = vld [vmem:[%s227 + $0x1c8] sm:$0xff]
      %v305 = vld [vmem:[%s227 + $0x1d0] sm:$0xff]
      %v306 = vld [vmem:[%s227 + $0x1d8] sm:$0xff]
      %v307 = vld [vmem:[%s227 + $0x1e0] sm:$0xff]
      %v308 = vld [vmem:[%s227 + $0x1e8] sm:$0xff]
      %v309 = vld [vmem:[%s227 + $0x1f0] sm:$0xff]
      %v310 = vld [vmem:[%s227 + $0x1f8] sm:$0xff]
      %v311 = vld [vmem:[%s227 + $0x200] sm:$0xff]
      %v312 = vld [vmem:[%s227 + $0x208] sm:$0xff]
      %v313 = vld [vmem:[%s227 + $0x210] sm:$0xff]
      %v314 = vld [vmem:[%s227 + $0x218] sm:$0xff]
      %v315 = vld [vmem:[%s227 + $0x220] sm:$0xff]
      %v316 = vld [vmem:[%s227 + $0x228] sm:$0xff]
      %v317 = vld [vmem:[%s227 + $0x230] sm:$0xff]
      %v318 = vld [vmem:[%s227 + $0x238] sm:$0xff]
      %v319 = vld [vmem:[%s227 + $0x240] sm:$0xff]
      %v320 = vld [vmem:[%s227 + $0x248] sm:$0xff]
      %v321 = vld [vmem:[%s227 + $0x250] sm:$0xff]
      %v322 = vld [vmem:[%s227 + $0x258] sm:$0xff]
      %v323 = vld [vmem:[%s227 + $0x260] sm:$0xff]
      %v324 = vld [vmem:[%s227 + $0x268] sm:$0xff]
      %v325 = vld [vmem:[%s227 + $0x270] sm:$0xff]
      %v326 = vld [vmem:[%s227 + $0x278] sm:$0xff]
      %v327 = vld [vmem:[%s227 + $0x280] sm:$0xff]
      %v328 = vld [vmem:[%s227 + $0x288] sm:$0xff]
      %v329 = vld [vmem:[%s227 + $0x290] sm:$0xff]
      %v330 = vld [vmem:[%s227 + $0x298] sm:$0xff]
      %v331 = vld [vmem:[%s227 + $0x2a0] sm:$0xff]
      %v332 = vld [vmem:[%s227 + $0x2a8] sm:$0xff]
      %v333 = vld [vmem:[%s227 + $0x2b0] sm:$0xff]
      %v334 = vld [vmem:[%s227 + $0x2b8] sm:$0xff]
      %v335 = vld [vmem:[%s227 + $0x2c0] sm:$0xff]
      %v336 = vld [vmem:[%s227 + $0x2c8] sm:$0xff]
      %v337 = vld [vmem:[%s227 + $0x2d0] sm:$0xff]
      %v338 = vld [vmem:[%s227 + $0x2d8] sm:$0xff]
      %v339 = vld [vmem:[%s227 + $0x2e0] sm:$0xff]
      %v340 = vld [vmem:[%s227 + $0x2e8] sm:$0xff]
      %v341 = vld [vmem:[%s227 + $0x2f0] sm:$0xff]
      %v342 = vld [vmem:[%s227 + $0x2f8] sm:$0xff]
      %v343 = vld [vmem:[%s227 + $0x300] sm:$0xff]
      %v344 = vld [vmem:[%s227 + $0x308] sm:$0xff]
      %v345 = vld [vmem:[%s227 + $0x310] sm:$0xff]
      %v346 = vld [vmem:[%s227 + $0x318] sm:$0xff]
      %v347 = vld [vmem:[%s227 + $0x320] sm:$0xff]
      %v348 = vld [vmem:[%s227 + $0x328] sm:$0xff]
      %v349 = vld [vmem:[%s227 + $0x330] sm:$0xff]
      %v350 = vld [vmem:[%s227 + $0x338] sm:$0xff]
      %v351 = vld [vmem:[%s227 + $0x340] sm:$0xff]
      %v352 = vld [vmem:[%s227 + $0x348] sm:$0xff]
      %v353 = vld [vmem:[%s227 + $0x350] sm:$0xff]
      %v354 = vld [vmem:[%s227 + $0x358] sm:$0xff]
      %v355 = vld [vmem:[%s227 + $0x360] sm:$0xff]
      %v356 = vld [vmem:[%s227 + $0x368] sm:$0xff]
      %v357 = vld [vmem:[%s227 + $0x370] sm:$0xff]
      %v358 = vld [vmem:[%s227 + $0x378] sm:$0xff]
      %v359 = vld [vmem:[%s227 + $0x380] sm:$0xff]
      %v360 = vld [vmem:[%s227 + $0x388] sm:$0xff]
      %v361 = vld [vmem:[%s227 + $0x390] sm:$0xff]
      %v362 = vld [vmem:[%s227 + $0x398] sm:$0xff]
      %v363 = vld [vmem:[%s227 + $0x3a0] sm:$0xff]
      %v364 = vld [vmem:[%s227 + $0x3a8] sm:$0xff]
      %v365 = vld [vmem:[%s227 + $0x3b0] sm:$0xff]
      %v366 = vld [vmem:[%s227 + $0x3b8] sm:$0xff]
      %v367 = vld [vmem:[%s227 + $0x3c0] sm:$0xff]
      %v368 = vld [vmem:[%s227 + $0x3c8] sm:$0xff]
      %v369 = vld [vmem:[%s227 + $0x3d0] sm:$0xff]
      %v370 = vld [vmem:[%s227 + $0x3d8] sm:$0xff]
      %v371 = vld [vmem:[%s227 + $0x3e0] sm:$0xff]
      %v372 = vld [vmem:[%s227 + $0x3e8] sm:$0xff]
      %v373 = vld [vmem:[%s227 + $0x3f0] sm:$0xff]
      %v374 = vld [vmem:[%s227 + $0x3f8] sm:$0xff]
      %v375 = vld [vmem:[%s227 + $0x400] sm:$0xff]
      %v376 = vld [vmem:[%s227 + $0x408] sm:$0xff]
      %v377 = vld [vmem:[%s227 + $0x410] sm:$0xff]
      %v378 = vld [vmem:[%s227 + $0x418] sm:$0xff]
      %v379 = vld [vmem:[%s227 + $0x420] sm:$0xff]
      %v380 = vld [vmem:[%s227 + $0x428] sm:$0xff]
      %v381 = vld [vmem:[%s227 + $0x430] sm:$0xff]
      %v382 = vld [vmem:[%s227 + $0x438] sm:$0xff]
      %v383 = vld [vmem:[%s227 + $0x440] sm:$0xff]
      %v384 = vld [vmem:[%s227 + $0x448] sm:$0xff]
      %v385 = vld [vmem:[%s227 + $0x450] sm:$0xff]
      %v386 = vld [vmem:[%s227 + $0x458] sm:$0xff]
      %v387 = vld [vmem:[%s227 + $0x460] sm:$0xff]
      %v388 = vld [vmem:[%s227 + $0x468] sm:$0xff]
      %v389 = vld [vmem:[%s227 + $0x470] sm:$0xff]
      %v390 = vld [vmem:[%s227 + $0x478] sm:$0xff]
      %v391 = vld [vmem:[%s227 + $0x480] sm:$0xff]
      %v392 = vld [vmem:[%s227 + $0x488] sm:$0xff]
      %v393 = vld [vmem:[%s227 + $0x490] sm:$0xff]
      %v394 = vld [vmem:[%s227 + $0x498] sm:$0xff]
      %v395 = vld [vmem:[%s227 + $0x4a0] sm:$0xff]
      %v396 = vld [vmem:[%s227 + $0x4a8] sm:$0xff]
      %v397 = vld [vmem:[%s227 + $0x4b0] sm:$0xff]
      %v398 = vld [vmem:[%s227 + $0x4b8] sm:$0xff]
      %v399 = vld [vmem:[%s227 + $0x4c0] sm:$0xff]
      %v400 = vld [vmem:[%s227 + $0x4c8] sm:$0xff]
      %v401 = vld [vmem:[%s227 + $0x4d0] sm:$0xff]
      %v402 = vld [vmem:[%s227 + $0x4d8] sm:$0xff]
      %v403 = vld [vmem:[%s227 + $0x4e0] sm:$0xff]
      %v404 = vld [vmem:[%s227 + $0x4e8] sm:$0xff]
      %v405 = vld [vmem:[%s227 + $0x4f0] sm:$0xff]
      %v406 = vld [vmem:[%s227 + $0x4f8] sm:$0xff]
      %v407 = vld [vmem:[%s227 + $0x500] sm:$0xff]
      %v408 = vld [vmem:[%s227 + $0x508] sm:$0xff]
      %v409 = vld [vmem:[%s227 + $0x510] sm:$0xff]
      %v410 = vld [vmem:[%s227 + $0x518] sm:$0xff]
      %v411 = vld [vmem:[%s227 + $0x520] sm:$0xff]
      %v412 = vld [vmem:[%s227 + $0x528] sm:$0xff]
      %v413 = vld [vmem:[%s227 + $0x530] sm:$0xff]
      %v414 = vld [vmem:[%s227 + $0x538] sm:$0xff]
      %v415 = vld [vmem:[%s227 + $0x540] sm:$0xff]
      %v416 = vld [vmem:[%s227 + $0x548] sm:$0xff]
      %v417 = vld [vmem:[%s227 + $0x550] sm:$0xff]
      %v418 = vld [vmem:[%s227 + $0x558] sm:$0xff]
      %v419 = vld [vmem:[%s227 + $0x560] sm:$0xff]
      %v420 = vld [vmem:[%s227 + $0x568] sm:$0xff]
      %v421 = vld [vmem:[%s227 + $0x570] sm:$0xff]
      %v422 = vld [vmem:[%s227 + $0x578] sm:$0xff]
      %v423 = vld [vmem:[%s227 + $0x580] sm:$0xff]
      %v424 = vld [vmem:[%s227 + $0x588] sm:$0xff]
      %v425 = vld [vmem:[%s227 + $0x590] sm:$0xff]
      %v426 = vld [vmem:[%s227 + $0x598] sm:$0xff]
      %v427 = vld [vmem:[%s227 + $0x5a0] sm:$0xff]
      %v428 = vld [vmem:[%s227 + $0x5a8] sm:$0xff]
      %v429 = vld [vmem:[%s227 + $0x5b0] sm:$0xff]
      %v430 = vld [vmem:[%s227 + $0x5b8] sm:$0xff]
      %v431 = vld [vmem:[%s227 + $0x5c0] sm:$0xff]
      %v432 = vld [vmem:[%s227 + $0x5c8] sm:$0xff]
      %v433 = vld [vmem:[%s227 + $0x5d0] sm:$0xff]
      %v434 = vld [vmem:[%s227 + $0x5d8] sm:$0xff]
      %v435 = vld [vmem:[%s227 + $0x5e0] sm:$0xff]
      %v436 = vld [vmem:[%s227 + $0x5e8] sm:$0xff]
      %v437 = vld [vmem:[%s227 + $0x5f0] sm:$0xff]
      %v438 = vld [vmem:[%s227 + $0x5f8] sm:$0xff]
      %v439 = vld [vmem:[%s233] sm:$0xff]
      %v440 = vld [vmem:[%s233 + $0x8] sm:$0xff]
      %v441 = vld [vmem:[%s233 + $0x10] sm:$0xff]
      %v442 = vld [vmem:[%s233 + $0x18] sm:$0xff]
      %v443 = vld [vmem:[%s233 + $0x20] sm:$0xff]
      %v444 = vld [vmem:[%s233 + $0x28] sm:$0xff]
      %v445 = vld [vmem:[%s233 + $0x30] sm:$0xff]
      %v446 = vld [vmem:[%s233 + $0x38] sm:$0xff]
      %v447 = vld [vmem:[%s233 + $0x40] sm:$0xff]
      %v448 = vld [vmem:[%s233 + $0x48] sm:$0xff]
      %v449 = vld [vmem:[%s233 + $0x50] sm:$0xff]
      %v450 = vld [vmem:[%s233 + $0x58] sm:$0xff]
      %v451 = vld [vmem:[%s233 + $0x60] sm:$0xff]
      %v452 = vld [vmem:[%s233 + $0x68] sm:$0xff]
      %v453 = vld [vmem:[%s233 + $0x70] sm:$0xff]
      %v454 = vld [vmem:[%s233 + $0x78] sm:$0xff]
      %v455 = vld [vmem:[%s233 + $0x80] sm:$0xff]
      %v456 = vld [vmem:[%s233 + $0x88] sm:$0xff]
      %v457 = vld [vmem:[%s233 + $0x90] sm:$0xff]
      %v458 = vld [vmem:[%s233 + $0x98] sm:$0xff]
      %v459 = vld [vmem:[%s233 + $0xa0] sm:$0xff]
      %v460 = vld [vmem:[%s233 + $0xa8] sm:$0xff]
      %v461 = vld [vmem:[%s233 + $0xb0] sm:$0xff]
      %v462 = vld [vmem:[%s233 + $0xb8] sm:$0xff]
      %v463 = vld [vmem:[%s233 + $0xc0] sm:$0xff]
      %v464 = vld [vmem:[%s233 + $0xc8] sm:$0xff]
      %v465 = vld [vmem:[%s233 + $0xd0] sm:$0xff]
      %v466 = vld [vmem:[%s233 + $0xd8] sm:$0xff]
      %v467 = vld [vmem:[%s233 + $0xe0] sm:$0xff]
      %v468 = vld [vmem:[%s233 + $0xe8] sm:$0xff]
      %v469 = vld [vmem:[%s233 + $0xf0] sm:$0xff]
      %v470 = vld [vmem:[%s233 + $0xf8] sm:$0xff]
      %v471 = vld [vmem:[%s233 + $0x100] sm:$0xff]
      %v472 = vld [vmem:[%s233 + $0x108] sm:$0xff]
      %v473 = vld [vmem:[%s233 + $0x110] sm:$0xff]
      %v474 = vld [vmem:[%s233 + $0x118] sm:$0xff]
      %v475 = vld [vmem:[%s236] sm:$0x1]
      %v477 = vlaneseq
      %v478 = vshrl.u32 %v477, 7
      %v479 = vsub.s32 0, %v478
      %v480 = vrot.slane %v475, %v479
      %vm482 = vcmask 261120
      %v484 = vsel %vm482, %v249, 0
      %v487 = vsel %vm482, %v252, 0
      %v490 = vsel %vm482, %v255, 0
      %v493 = vsel %vm482, %v258, 0
      %v496 = vsel %vm482, %v261, 0
      %v499 = vsel %vm482, %v264, 0
      %v502 = vsel %vm482, %v267, 0
      %v505 = vsel %vm482, %v270, 0
      %v508 = vsel %vm482, %v273, 0
      %v511 = vsel %vm482, %v276, 0
      %v514 = vsel %vm482, %v279, 0
      %v517 = vsel %vm482, %v282, 0
      %v520 = vsel %vm482, %v285, 0
      %v523 = vsel %vm482, %v288, 0
      %v526 = vsel %vm482, %v291, 0
      %v529 = vsel %vm482, %v294, 0
      %v532 = vsel %vm482, %v297, 0
      %v535 = vsel %vm482, %v300, 0
      %v538 = vsel %vm482, %v303, 0
      %v541 = vsel %vm482, %v306, 0
      %v544 = vsel %vm482, %v309, 0
      %v547 = vsel %vm482, %v312, 0
      %v550 = vsel %vm482, %v315, 0
      %v553 = vsel %vm482, %v318, 0
      %v556 = vsel %vm482, %v321, 0
      %v559 = vsel %vm482, %v324, 0
      %v562 = vsel %vm482, %v327, 0
      %v565 = vsel %vm482, %v330, 0
      %v568 = vsel %vm482, %v333, 0
      %v571 = vsel %vm482, %v336, 0
      %v574 = vsel %vm482, %v339, 0
      %v577 = vsel %vm482, %v342, 0
      %v580 = vsel %vm482, %v345, 0
      %v583 = vsel %vm482, %v348, 0
      %v586 = vsel %vm482, %v351, 0
      %v589 = vsel %vm482, %v354, 0
      %v592 = vsel %vm482, %v357, 0
      %v595 = vsel %vm482, %v360, 0
      %v598 = vsel %vm482, %v363, 0
      %v601 = vsel %vm482, %v366, 0
      %v604 = vsel %vm482, %v369, 0
      %v607 = vsel %vm482, %v372, 0
      %v610 = vsel %vm482, %v375, 0
      %v613 = vsel %vm482, %v378, 0
      %v616 = vsel %vm482, %v381, 0
      %v619 = vsel %vm482, %v384, 0
      %v622 = vsel %vm482, %v387, 0
      %v625 = vsel %vm482, %v390, 0
      %v628 = vsel %vm482, %v393, 0
      %v631 = vsel %vm482, %v396, 0
      %v634 = vsel %vm482, %v399, 0
      %v637 = vsel %vm482, %v402, 0
      %v640 = vsel %vm482, %v405, 0
      %v643 = vsel %vm482, %v408, 0
      %v646 = vsel %vm482, %v411, 0
      %v649 = vsel %vm482, %v414, 0
      %v652 = vsel %vm482, %v417, 0
      %v655 = vsel %vm482, %v420, 0
      %v658 = vsel %vm482, %v423, 0
      %v661 = vsel %vm482, %v426, 0
      %v664 = vsel %vm482, %v429, 0
      %v667 = vsel %vm482, %v432, 0
      %v670 = vsel %vm482, %v435, 0
      %v673 = vsel %vm482, %v438, 0
      %675 = vmatprep.subr.mxu0 0.0
      %676 = vmatpush1.msra.mxu0 %v439
      %677 = vmatprep.subr.mxu0 0.0
      %678 = vmatpush1.msra.mxu0 %v440
      %679 = vmatprep.subr.mxu0 0.0
      %680 = vmatpush1.msra.mxu0 %v441
      %681 = vmatprep.subr.mxu0 0.0
      %682 = vmatpush1.msra.mxu0 %v442
      %683 = vmatprep.subr.mxu0 0.0
      %684 = vmatpush1.msra.mxu0 %v443
      %685 = vmatprep.subr.mxu0 0.0
      %686 = vmatpush1.msra.mxu0 %v444
      %687 = vmatprep.subr.mxu0 0.0
      %688 = vmatpush1.msra.mxu0 %v445
      %689 = vmatprep.subr.mxu0 0.0
      %690 = vmatpush1.msra.mxu0 %v446
      %691 = vmatprep.subr.mxu0 0.0
      %692 = vmatpush1.msra.mxu0 %v447
      %693 = vmatprep.subr.mxu0 0.0
      %694 = vmatpush1.msra.mxu0 %v448
      %695 = vmatprep.subr.mxu0 0.0
      %696 = vmatpush1.msra.mxu0 %v449
      %697 = vmatprep.subr.mxu0 0.0
      %698 = vmatpush1.msra.mxu0 %v450
      %699 = vmatprep.subr.mxu0 0.0
      %700 = vmatpush1.msra.mxu0 %v451
      %701 = vmatprep.subr.mxu0 0.0
      %702 = vmatpush1.msra.mxu0 %v452
      %703 = vmatprep.subr.mxu0 0.0
      %704 = vmatpush1.msra.mxu0 %v453
      %705 = vmatprep.subr.mxu0 0.0
      %706 = vmatpush1.msra.mxu0 %v454
      %707 = vmatprep.subr.mxu0 0.0
      %708 = vmatpush1.msra.mxu0 %v455
      %709 = vmatprep.subr.mxu0 0.0
      %710 = vmatpush1.msra.mxu0 %v456
      %711 = vmatprep.subr.mxu0 0.0
      %712 = vmatpush1.msra.mxu0 %v457
      %713 = vmatprep.subr.mxu0 0.0
      %714 = vmatpush1.msra.mxu0 %v458
      %715 = vmatprep.subr.mxu0 0.0
      %716 = vmatpush1.msra.mxu0 %v459
      %717 = vmatprep.subr.mxu0 0.0
      %718 = vmatpush1.msra.mxu0 %v460
      %719 = vmatprep.subr.mxu0 0.0
      %720 = vmatpush1.msra.mxu0 %v461
      %721 = vmatprep.subr.mxu0 0.0
      %722 = vmatpush1.msra.mxu0 %v462
      %723 = vmatprep.subr.mxu0 0.0
      %724 = vmatpush1.msra.mxu0 %v463
      %725 = vmatprep.subr.mxu0 0.0
      %726 = vmatpush1.msra.mxu0 %v464
      %727 = vmatprep.subr.mxu0 0.0
      %728 = vmatpush1.msra.mxu0 %v465
      %729 = vmatprep.subr.mxu0 0.0
      %730 = vmatpush1.msra.mxu0 %v466
      %731 = vmatprep.subr.mxu0 0.0
      %732 = vmatpush1.msra.mxu0 %v467
      %733 = vmatprep.subr.mxu0 0.0
      %734 = vmatpush1.msra.mxu0 %v468
      %735 = vmatprep.subr.mxu0 0.0
      %736 = vmatpush1.msra.mxu0 %v469
      %737 = vmatprep.subr.mxu0 0.0
      %738 = vmatpush1.msra.mxu0 %v470
      %739 = vmatprep.mubr.f32.mxu0 %v248
      %740 = vmatmul.mubr.f32.gmra.mrb[0].mxu0 %v247
      %v741 = vpop.f32.mrb[0].mxu0
      %v742 = vadd.f32 %v480, %v741
      %v743 = vpop.f32.mrb[0].mxu0
      %744 = vmatprep.mubr.f32.mxu0 %v251
      %745 = vmatmul.mubr.f32.gmra.mrb[0].mxu0 %v250
      %v746 = vpop.f32.mrb[0].mxu0
      %v747 = vadd.f32 %v480, %v746
      %v748 = vpop.f32.mrb[0].mxu0
      %749 = vmatprep.mubr.f32.mxu0 %v254
      %750 = vmatmul.mubr.f32.gmra.mrb[0].mxu0 %v253
      %v751 = vpop.f32.mrb[0].mxu0
      %v752 = vadd.f32 %v480, %v751
      %v753 = vpop.f32.mrb[0].mxu0
      %754 = vmatprep.mubr.f32.mxu0 %v257
      %755 = vmatmul.mubr.f32.gmra.mrb[0].mxu0 %v256
      %v756 = vpop.f32.mrb[0].mxu0
      %v757 = vadd.f32 %v480, %v756
      %v758 = vpop.f32.mrb[0].mxu0
      %759 = vmatprep.mubr.f32.mxu0 %v260
      %760 = vmatmul.mubr.f32.gmra.mrb[0].mxu0 %v259
      %v761 = vpop.f32.mrb[0].mxu0
      %v762 = vadd.f32 %v480, %v761
      %v763 = vpop.f32.mrb[0].mxu0
      %764 = vmatprep.mubr.f32.mxu0 %v263
      %765 = vmatmul.mubr.f32.gmra.mrb[0].mxu0 %v262
      %v766 = vpop.f32.mrb[0].mxu0
      %v767 = vadd.f32 %v480, %v766
      %v768 = vpop.f32.mrb[0].mxu0
      %769 = vmatprep.mubr.f32.mxu0 %v266
      %770 = vmatmul.mubr.f32.gmra.mrb[0].mxu0 %v265
      %v771 = vpop.f32.mrb[0].mxu0
      %v772 = vadd.f32 %v480, %v771
      %v773 = vpop.f32.mrb[0].mxu0
      %774 = vmatprep.mubr.f32.mxu0 %v269
      %775 = vmatmul.mubr.f32.gmra.mrb[0].mxu0 %v268
      %v776 = vpop.f32.mrb[0].mxu0
      %v777 = vadd.f32 %v480, %v776
      %v778 = vpop.f32.mrb[0].mxu0
      %779 = vmatprep.mubr.f32.mxu0 %v272
      %780 = vmatmul.mubr.f32.gmra.mrb[0].mxu0 %v271
      %v781 = vpop.f32.mrb[0].mxu0
      %v782 = vadd.f32 %v480, %v781
      %v783 = vpop.f32.mrb[0].mxu0
      %784 = vmatprep.mubr.f32.mxu0 %v275
      %785 = vmatmul.mubr.f32.gmra.mrb[0].mxu0 %v274
      %v786 = vpop.f32.mrb[0].mxu0
      %v787 = vadd.f32 %v480, %v786
      %v788 = vpop.f32.mrb[0].mxu0
      %789 = vmatprep.mubr.f32.mxu0 %v278
      %790 = vmatmul.mubr.f32.gmra.mrb[0].mxu0 %v277
      %v791 = vpop.f32.mrb[0].mxu0
      %v792 = vadd.f32 %v480, %v791
      %v793 = vpop.f32.mrb[0].mxu0
      %794 = vmatprep.mubr.f32.mxu0 %v281
      %795 = vmatmul.mubr.f32.gmra.mrb[0].mxu0 %v280
      %v796 = vpop.f32.mrb[0].mxu0
      %v797 = vadd.f32 %v480, %v796
      %v798 = vpop.f32.mrb[0].mxu0
      %799 = vmatprep.mubr.f32.mxu0 %v284
      %800 = vmatmul.mubr.f32.gmra.mrb[0].mxu0 %v283
      %v801 = vpop.f32.mrb[0].mxu0
      %v802 = vadd.f32 %v480, %v801
      %v803 = vpop.f32.mrb[0].mxu0
      %804 = vmatprep.mubr.f32.mxu0 %v287
      %805 = vmatmul.mubr.f32.gmra.mrb[0].mxu0 %v286
      %v806 = vpop.f32.mrb[0].mxu0
      %v807 = vadd.f32 %v480, %v806
      %v808 = vpop.f32.mrb[0].mxu0
      %809 = vmatprep.mubr.f32.mxu0 %v290
      %810 = vmatmul.mubr.f32.gmra.mrb[0].mxu0 %v289
      %v811 = vpop.f32.mrb[0].mxu0
      %v812 = vadd.f32 %v480, %v811
      %v813 = vpop.f32.mrb[0].mxu0
      %814 = vmatprep.mubr.f32.mxu0 %v293
      %815 = vmatmul.mubr.f32.gmra.mrb[0].mxu0 %v292
      %v816 = vpop.f32.mrb[0].mxu0
      %v817 = vadd.f32 %v480, %v816
      %v818 = vpop.f32.mrb[0].mxu0
      %819 = vmatprep.mubr.f32.mxu0 %v296
      %820 = vmatmul.mubr.f32.gmra.mrb[0].mxu0 %v295
      %v821 = vpop.f32.mrb[0].mxu0
      %v822 = vadd.f32 %v480, %v821
      %v823 = vpop.f32.mrb[0].mxu0
      %824 = vmatprep.mubr.f32.mxu0 %v299
      %825 = vmatmul.mubr.f32.gmra.mrb[0].mxu0 %v298
      %v826 = vpop.f32.mrb[0].mxu0
      %v827 = vadd.f32 %v480, %v826
      %v828 = vpop.f32.mrb[0].mxu0
      %829 = vmatprep.mubr.f32.mxu0 %v302
      %830 = vmatmul.mubr.f32.gmra.mrb[0].mxu0 %v301
      %v831 = vpop.f32.mrb[0].mxu0
      %v832 = vadd.f32 %v480, %v831
      %v833 = vpop.f32.mrb[0].mxu0
      %834 = vmatprep.mubr.f32.mxu0 %v305
      %835 = vmatmul.mubr.f32.gmra.mrb[0].mxu0 %v304
      %v836 = vpop.f32.mrb[0].mxu0
      %v837 = vadd.f32 %v480, %v836
      %v838 = vpop.f32.mrb[0].mxu0
      %839 = vmatprep.mubr.f32.mxu0 %v308
      %840 = vmatmul.mubr.f32.gmra.mrb[0].mxu0 %v307
      %v841 = vpop.f32.mrb[0].mxu0
      %v842 = vadd.f32 %v480, %v841
      %v843 = vpop.f32.mrb[0].mxu0
      %844 = vmatprep.mubr.f32.mxu0 %v311
      %845 = vmatmul.mubr.f32.gmra.mrb[0].mxu0 %v310
      %v846 = vpop.f32.mrb[0].mxu0
      %v847 = vadd.f32 %v480, %v846
      %v848 = vpop.f32.mrb[0].mxu0
      %849 = vmatprep.mubr.f32.mxu0 %v314
      %850 = vmatmul.mubr.f32.gmra.mrb[0].mxu0 %v313
      %v851 = vpop.f32.mrb[0].mxu0
      %v852 = vadd.f32 %v480, %v851
      %v853 = vpop.f32.mrb[0].mxu0
      %854 = vmatprep.mubr.f32.mxu0 %v317
      %855 = vmatmul.mubr.f32.gmra.mrb[0].mxu0 %v316
      %v856 = vpop.f32.mrb[0].mxu0
      %v857 = vadd.f32 %v480, %v856
      %v858 = vpop.f32.mrb[0].mxu0
      %859 = vmatprep.mubr.f32.mxu0 %v320
      %860 = vmatmul.mubr.f32.gmra.mrb[0].mxu0 %v319
      %v861 = vpop.f32.mrb[0].mxu0
      %v862 = vadd.f32 %v480, %v861
      %v863 = vpop.f32.mrb[0].mxu0
      %864 = vmatprep.mubr.f32.mxu0 %v323
      %865 = vmatmul.mubr.f32.gmra.mrb[0].mxu0 %v322
      %v866 = vpop.f32.mrb[0].mxu0
      %v867 = vadd.f32 %v480, %v866
      %v868 = vpop.f32.mrb[0].mxu0
      %869 = vmatprep.mubr.f32.mxu0 %v326
      %870 = vmatmul.mubr.f32.gmra.mrb[0].mxu0 %v325
      %v871 = vpop.f32.mrb[0].mxu0
      %v872 = vadd.f32 %v480, %v871
      %v873 = vpop.f32.mrb[0].mxu0
      %874 = vmatprep.mubr.f32.mxu0 %v329
      %875 = vmatmul.mubr.f32.gmra.mrb[0].mxu0 %v328
      %v876 = vpop.f32.mrb[0].mxu0
      %v877 = vadd.f32 %v480, %v876
      %v878 = vpop.f32.mrb[0].mxu0
      %879 = vmatprep.mubr.f32.mxu0 %v332
      %880 = vmatmul.mubr.f32.gmra.mrb[0].mxu0 %v331
      %v881 = vpop.f32.mrb[0].mxu0
      %v882 = vadd.f32 %v480, %v881
      %v883 = vpop.f32.mrb[0].mxu0
      %884 = vmatprep.mubr.f32.mxu0 %v335
      %885 = vmatmul.mubr.f32.gmra.mrb[0].mxu0 %v334
      %v886 = vpop.f32.mrb[0].mxu0
      %v887 = vadd.f32 %v480, %v886
      %v888 = vpop.f32.mrb[0].mxu0
      %889 = vmatprep.mubr.f32.mxu0 %v338
      %890 = vmatmul.mubr.f32.gmra.mrb[0].mxu0 %v337
      %v891 = vpop.f32.mrb[0].mxu0
      %v892 = vadd.f32 %v480, %v891
      %v893 = vpop.f32.mrb[0].mxu0
      %894 = vmatprep.mubr.f32.mxu0 %v341
      %895 = vmatmul.mubr.f32.gmra.mrb[0].mxu0 %v340
      %v896 = vpop.f32.mrb[0].mxu0
      %v897 = vadd.f32 %v480, %v896
      %v898 = vpop.f32.mrb[0].mxu0
      %899 = vmatprep.mubr.f32.mxu0 %v344
      %900 = vmatmul.mubr.f32.gmra.mrb[0].mxu0 %v343
      %v901 = vpop.f32.mrb[0].mxu0
      %v902 = vadd.f32 %v480, %v901
      %v903 = vpop.f32.mrb[0].mxu0
      %904 = vmatprep.mubr.f32.mxu0 %v347
      %905 = vmatmul.mubr.f32.gmra.mrb[0].mxu0 %v346
      %v906 = vpop.f32.mrb[0].mxu0
      %v907 = vadd.f32 %v480, %v906
      %v908 = vpop.f32.mrb[0].mxu0
      %909 = vmatprep.mubr.f32.mxu0 %v350
      %910 = vmatmul.mubr.f32.gmra.mrb[0].mxu0 %v349
      %v911 = vpop.f32.mrb[0].mxu0
      %v912 = vadd.f32 %v480, %v911
      %v913 = vpop.f32.mrb[0].mxu0
      %914 = vmatprep.mubr.f32.mxu0 %v353
      %915 = vmatmul.mubr.f32.gmra.mrb[0].mxu0 %v352
      %v916 = vpop.f32.mrb[0].mxu0
      %v917 = vadd.f32 %v480, %v916
      %v918 = vpop.f32.mrb[0].mxu0
      %919 = vmatprep.mubr.f32.mxu0 %v356
      %920 = vmatmul.mubr.f32.gmra.mrb[0].mxu0 %v355
      %v921 = vpop.f32.mrb[0].mxu0
      %v922 = vadd.f32 %v480, %v921
      %v923 = vpop.f32.mrb[0].mxu0
      %924 = vmatprep.mubr.f32.mxu0 %v359
      %925 = vmatmul.mubr.f32.gmra.mrb[0].mxu0 %v358
      %v926 = vpop.f32.mrb[0].mxu0
      %v927 = vadd.f32 %v480, %v926
      %v928 = vpop.f32.mrb[0].mxu0
      %929 = vmatprep.mubr.f32.mxu0 %v362
      %930 = vmatmul.mubr.f32.gmra.mrb[0].mxu0 %v361
      %v931 = vpop.f32.mrb[0].mxu0
      %v932 = vadd.f32 %v480, %v931
      %v933 = vpop.f32.mrb[0].mxu0
      %934 = vmatprep.mubr.f32.mxu0 %v365
      %935 = vmatmul.mubr.f32.gmra.mrb[0].mxu0 %v364
      %v936 = vpop.f32.mrb[0].mxu0
      %v937 = vadd.f32 %v480, %v936
      %v938 = vpop.f32.mrb[0].mxu0
      %939 = vmatprep.mubr.f32.mxu0 %v368
      %940 = vmatmul.mubr.f32.gmra.mrb[0].mxu0 %v367
      %v941 = vpop.f32.mrb[0].mxu0
      %v942 = vadd.f32 %v480, %v941
      %v943 = vpop.f32.mrb[0].mxu0
      %944 = vmatprep.mubr.f32.mxu0 %v371
      %945 = vmatmul.mubr.f32.gmra.mrb[0].mxu0 %v370
      %v946 = vpop.f32.mrb[0].mxu0
      %v947 = vadd.f32 %v480, %v946
      %v948 = vpop.f32.mrb[0].mxu0
      %949 = vmatprep.mubr.f32.mxu0 %v374
      %950 = vmatmul.mubr.f32.gmra.mrb[0].mxu0 %v373
      %v951 = vpop.f32.mrb[0].mxu0
      %v952 = vadd.f32 %v480, %v951
      %v953 = vpop.f32.mrb[0].mxu0
      %954 = vmatprep.mubr.f32.mxu0 %v377
      %955 = vmatmul.mubr.f32.gmra.mrb[0].mxu0 %v376
      %v956 = vpop.f32.mrb[0].mxu0
      %v957 = vadd.f32 %v480, %v956
      %v958 = vpop.f32.mrb[0].mxu0
      %959 = vmatprep.mubr.f32.mxu0 %v380
      %960 = vmatmul.mubr.f32.gmra.mrb[0].mxu0 %v379
      %v961 = vpop.f32.mrb[0].mxu0
      %v962 = vadd.f32 %v480, %v961
      %v963 = vpop.f32.mrb[0].mxu0
      %964 = vmatprep.mubr.f32.mxu0 %v383
      %965 = vmatmul.mubr.f32.gmra.mrb[0].mxu0 %v382
      %v966 = vpop.f32.mrb[0].mxu0
      %v967 = vadd.f32 %v480, %v966
      %v968 = vpop.f32.mrb[0].mxu0
      %969 = vmatprep.mubr.f32.mxu0 %v386
      %970 = vmatmul.mubr.f32.gmra.mrb[0].mxu0 %v385
      %v971 = vpop.f32.mrb[0].mxu0
      %v972 = vadd.f32 %v480, %v971
      %v973 = vpop.f32.mrb[0].mxu0
      %974 = vmatprep.mubr.f32.mxu0 %v389
      %975 = vmatmul.mubr.f32.gmra.mrb[0].mxu0 %v388
      %v976 = vpop.f32.mrb[0].mxu0
      %v977 = vadd.f32 %v480, %v976
      %v978 = vpop.f32.mrb[0].mxu0
      %979 = vmatprep.mubr.f32.mxu0 %v392
      %980 = vmatmul.mubr.f32.gmra.mrb[0].mxu0 %v391
      %v981 = vpop.f32.mrb[0].mxu0
      %v982 = vadd.f32 %v480, %v981
      %v983 = vpop.f32.mrb[0].mxu0
      %984 = vmatprep.mubr.f32.mxu0 %v395
      %985 = vmatmul.mubr.f32.gmra.mrb[0].mxu0 %v394
      %v986 = vpop.f32.mrb[0].mxu0
      %v987 = vadd.f32 %v480, %v986
      %v988 = vpop.f32.mrb[0].mxu0
      %989 = vmatprep.mubr.f32.mxu0 %v398
      %990 = vmatmul.mubr.f32.gmra.mrb[0].mxu0 %v397
      %v991 = vpop.f32.mrb[0].mxu0
      %v992 = vadd.f32 %v480, %v991
      %v993 = vpop.f32.mrb[0].mxu0
      %994 = vmatprep.mubr.f32.mxu0 %v401
      %995 = vmatmul.mubr.f32.gmra.mrb[0].mxu0 %v400
      %v996 = vpop.f32.mrb[0].mxu0
      %v997 = vadd.f32 %v480, %v996
      %v998 = vpop.f32.mrb[0].mxu0
      %999 = vmatprep.mubr.f32.mxu0 %v404
      %1000 = vmatmul.mubr.f32.gmra.mrb[0].mxu0 %v403
      %v1001 = vpop.f32.mrb[0].mxu0
      %v1002 = vadd.f32 %v480, %v1001
      %v1003 = vpop.f32.mrb[0].mxu0
      %1004 = vmatprep.mubr.f32.mxu0 %v407
      %1005 = vmatmul.mubr.f32.gmra.mrb[0].mxu0 %v406
      %v1006 = vpop.f32.mrb[0].mxu0
      %v1007 = vadd.f32 %v480, %v1006
      %v1008 = vpop.f32.mrb[0].mxu0
      %1009 = vmatprep.mubr.f32.mxu0 %v410
      %1010 = vmatmul.mubr.f32.gmra.mrb[0].mxu0 %v409
      %v1011 = vpop.f32.mrb[0].mxu0
      %v1012 = vadd.f32 %v480, %v1011
      %v1013 = vpop.f32.mrb[0].mxu0
      %1014 = vmatprep.mubr.f32.mxu0 %v413
      %1015 = vmatmul.mubr.f32.gmra.mrb[0].mxu0 %v412
      %v1016 = vpop.f32.mrb[0].mxu0
      %v1017 = vadd.f32 %v480, %v1016
      %v1018 = vpop.f32.mrb[0].mxu0
      %1019 = vmatprep.mubr.f32.mxu0 %v416
      %1020 = vmatmul.mubr.f32.gmra.mrb[0].mxu0 %v415
      %v1021 = vpop.f32.mrb[0].mxu0
      %v1022 = vadd.f32 %v480, %v1021
      %v1023 = vpop.f32.mrb[0].mxu0
      %1024 = vmatprep.mubr.f32.mxu0 %v419
      %1025 = vmatmul.mubr.f32.gmra.mrb[0].mxu0 %v418
      %v1026 = vpop.f32.mrb[0].mxu0
      %v1027 = vadd.f32 %v480, %v1026
      %v1028 = vpop.f32.mrb[0].mxu0
      %1029 = vmatprep.mubr.f32.mxu0 %v422
      %1030 = vmatmul.mubr.f32.gmra.mrb[0].mxu0 %v421
      %v1031 = vpop.f32.mrb[0].mxu0
      %v1032 = vadd.f32 %v480, %v1031
      %v1033 = vpop.f32.mrb[0].mxu0
      %1034 = vmatprep.mubr.f32.mxu0 %v425
      %1035 = vmatmul.mubr.f32.gmra.mrb[0].mxu0 %v424
      %v1036 = vpop.f32.mrb[0].mxu0
      %v1037 = vadd.f32 %v480, %v1036
      %v1038 = vpop.f32.mrb[0].mxu0
      %1039 = vmatprep.mubr.f32.mxu0 %v428
      %1040 = vmatmul.mubr.f32.gmra.mrb[0].mxu0 %v427
      %v1041 = vpop.f32.mrb[0].mxu0
      %v1042 = vadd.f32 %v480, %v1041
      %v1043 = vpop.f32.mrb[0].mxu0
      %1044 = vmatprep.mubr.f32.mxu0 %v431
      %1045 = vmatmul.mubr.f32.gmra.mrb[0].mxu0 %v430
      %v1046 = vpop.f32.mrb[0].mxu0
      %v1047 = vadd.f32 %v480, %v1046
      %v1048 = vpop.f32.mrb[0].mxu0
      %1049 = vmatprep.mubr.f32.mxu0 %v434
      %1050 = vmatmul.mubr.f32.gmra.mrb[0].mxu0 %v433
      %v1051 = vpop.f32.mrb[0].mxu0
      %v1052 = vadd.f32 %v480, %v1051
      %v1053 = vpop.f32.mrb[0].mxu0
      %1054 = vmatprep.mubr.f32.mxu0 %v437
      %1055 = vmatmul.mubr.f32.gmra.mrb[0].mxu0 %v436
      %v1056 = vpop.f32.mrb[0].mxu0
      %v1057 = vadd.f32 %v480, %v1056
      %v1058 = vpop.f32.mrb[0].mxu0
      %1059 = vdwg.mxu0
      %1060 = vmatprep.subr.mxu0 0.0
      %1061 = vmatpush1.msra.mxu0 %v471
      %1062 = vmatprep.subr.mxu0 0.0
      %1063 = vmatpush1.msra.mxu0 %v472
      %1064 = vmatprep.subr.mxu0 0.0
      %1065 = vmatpush1.msra.mxu0 %v473
      %1066 = vmatprep.subr.mxu0 0.0
      %1067 = vmatpush1.msra.mxu0 %v474
      %1068 = vmatprep.subr.mxu0 0.0
      %1069 = vmatpush1.msra.mxu0 0.0
      %1070 = vmatprep.subr.mxu0 0.0
      %1071 = vmatpush1.msra.mxu0 0.0
      %1072 = vmatprep.subr.mxu0 0.0
      %1073 = vmatpush1.msra.mxu0 0.0
      %1074 = vmatprep.subr.mxu0 0.0
      %1075 = vmatpush1.msra.mxu0 0.0
      %1076 = vmatprep.subr.mxu0 0.0
      %1077 = vmatpush1.msra.mxu0 0.0
      %1078 = vmatprep.subr.mxu0 0.0
      %1079 = vmatpush1.msra.mxu0 0.0
      %1080 = vmatprep.subr.mxu0 0.0
      %1081 = vmatpush1.msra.mxu0 0.0
      %1082 = vmatprep.subr.mxu0 0.0
      %1083 = vmatpush1.msra.mxu0 0.0
      %1084 = vmatprep.subr.mxu0 0.0
      %1085 = vmatpush1.msra.mxu0 0.0
      %1086 = vmatprep.subr.mxu0 0.0
      %1087 = vmatpush1.msra.mxu0 0.0
      %1088 = vmatprep.subr.mxu0 0.0
      %1089 = vmatpush1.msra.mxu0 0.0
      %1090 = vmatprep.subr.mxu0 0.0
      %1091 = vmatpush1.msra.mxu0 0.0
      %1092 = vmatprep.subr.mxu0 0.0
      %1093 = vmatpush1.msra.mxu0 0.0
      %1094 = vmatprep.subr.mxu0 0.0
      %1095 = vmatpush1.msra.mxu0 0.0
      %1096 = vmatprep.subr.mxu0 0.0
      %1097 = vmatpush1.msra.mxu0 0.0
      %1098 = vmatprep.subr.mxu0 0.0
      %1099 = vmatpush1.msra.mxu0 0.0
      %1100 = vmatprep.subr.mxu0 0.0
      %1101 = vmatpush1.msra.mxu0 0.0
      %1102 = vmatprep.subr.mxu0 0.0
      %1103 = vmatpush1.msra.mxu0 0.0
      %1104 = vmatprep.subr.mxu0 0.0
      %1105 = vmatpush1.msra.mxu0 0.0
      %1106 = vmatprep.subr.mxu0 0.0
      %1107 = vmatpush1.msra.mxu0 0.0
      %1108 = vmatprep.subr.mxu0 0.0
      %1109 = vmatpush1.msra.mxu0 0.0
      %1110 = vmatprep.subr.mxu0 0.0
      %1111 = vmatpush1.msra.mxu0 0.0
      %1112 = vmatprep.subr.mxu0 0.0
      %1113 = vmatpush1.msra.mxu0 0.0
      %1114 = vmatprep.subr.mxu0 0.0
      %1115 = vmatpush1.msra.mxu0 0.0
      %1116 = vmatprep.subr.mxu0 0.0
      %1117 = vmatpush1.msra.mxu0 0.0
      %1118 = vmatprep.subr.mxu0 0.0
      %1119 = vmatpush1.msra.mxu0 0.0
      %1120 = vmatprep.subr.mxu0 0.0
      %1121 = vmatpush1.msra.mxu0 0.0
      %1122 = vmatprep.subr.mxu0 0.0
      %1123 = vmatpush1.msra.mxu0 0.0
      %1124 = vmatprep.mubr.f32.mxu0 0.0
      %1125 = vmatmul.mubr.f32.gmra.mrb[0].mxu0 %v484
      %v1126 = vpop.f32.mrb[0].mxu0
      %v1127 = vadd.f32 %v742, %v1126
      %v1128 = vpop.f32.mrb[0].mxu0
      %1129 = vmatprep.mubr.f32.mxu0 0.0
      %1130 = vmatmul.mubr.f32.gmra.mrb[0].mxu0 %v487
      %v1131 = vpop.f32.mrb[0].mxu0
      %v1132 = vadd.f32 %v747, %v1131
      %v1133 = vpop.f32.mrb[0].mxu0
      %1134 = vmatprep.mubr.f32.mxu0 0.0
      %1135 = vmatmul.mubr.f32.gmra.mrb[0].mxu0 %v490
      %v1136 = vpop.f32.mrb[0].mxu0
      %v1137 = vadd.f32 %v752, %v1136
      %v1138 = vpop.f32.mrb[0].mxu0
      %1139 = vmatprep.mubr.f32.mxu0 0.0
      %1140 = vmatmul.mubr.f32.gmra.mrb[0].mxu0 %v493
      %v1141 = vpop.f32.mrb[0].mxu0
      %v1142 = vadd.f32 %v757, %v1141
      %v1143 = vpop.f32.mrb[0].mxu0
      %1144 = vmatprep.mubr.f32.mxu0 0.0
      %1145 = vmatmul.mubr.f32.gmra.mrb[0].mxu0 %v496
      %v1146 = vpop.f32.mrb[0].mxu0
      %v1147 = vadd.f32 %v762, %v1146
      %v1148 = vpop.f32.mrb[0].mxu0
      %1149 = vmatprep.mubr.f32.mxu0 0.0
      %1150 = vmatmul.mubr.f32.gmra.mrb[0].mxu0 %v499
      %v1151 = vpop.f32.mrb[0].mxu0
      %v1152 = vadd.f32 %v767, %v1151
      %v1153 = vpop.f32.mrb[0].mxu0
      %1154 = vmatprep.mubr.f32.mxu0 0.0
      %1155 = vmatmul.mubr.f32.gmra.mrb[0].mxu0 %v502
      %v1156 = vpop.f32.mrb[0].mxu0
      %v1157 = vadd.f32 %v772, %v1156
      %v1158 = vpop.f32.mrb[0].mxu0
      %1159 = vmatprep.mubr.f32.mxu0 0.0
      %1160 = vmatmul.mubr.f32.gmra.mrb[0].mxu0 %v505
      %v1161 = vpop.f32.mrb[0].mxu0
      %v1162 = vadd.f32 %v777, %v1161
      %v1163 = vpop.f32.mrb[0].mxu0
      %1164 = vmatprep.mubr.f32.mxu0 0.0
      %1165 = vmatmul.mubr.f32.gmra.mrb[0].mxu0 %v508
      %v1166 = vpop.f32.mrb[0].mxu0
      %v1167 = vadd.f32 %v782, %v1166
      %v1168 = vpop.f32.mrb[0].mxu0
      %1169 = vmatprep.mubr.f32.mxu0 0.0
      %1170 = vmatmul.mubr.f32.gmra.mrb[0].mxu0 %v511
      %v1171 = vpop.f32.mrb[0].mxu0
      %v1172 = vadd.f32 %v787, %v1171
      %v1173 = vpop.f32.mrb[0].mxu0
      %1174 = vmatprep.mubr.f32.mxu0 0.0
      %1175 = vmatmul.mubr.f32.gmra.mrb[0].mxu0 %v514
      %v1176 = vpop.f32.mrb[0].mxu0
      %v1177 = vadd.f32 %v792, %v1176
      %v1178 = vpop.f32.mrb[0].mxu0
      %1179 = vmatprep.mubr.f32.mxu0 0.0
      %1180 = vmatmul.mubr.f32.gmra.mrb[0].mxu0 %v517
      %v1181 = vpop.f32.mrb[0].mxu0
      %v1182 = vadd.f32 %v797, %v1181
      %v1183 = vpop.f32.mrb[0].mxu0
      %1184 = vmatprep.mubr.f32.mxu0 0.0
      %1185 = vmatmul.mubr.f32.gmra.mrb[0].mxu0 %v520
      %v1186 = vpop.f32.mrb[0].mxu0
      %v1187 = vadd.f32 %v802, %v1186
      %v1188 = vpop.f32.mrb[0].mxu0
      %1189 = vmatprep.mubr.f32.mxu0 0.0
      %1190 = vmatmul.mubr.f32.gmra.mrb[0].mxu0 %v523
      %v1191 = vpop.f32.mrb[0].mxu0
      %v1192 = vadd.f32 %v807, %v1191
      %v1193 = vpop.f32.mrb[0].mxu0
      %1194 = vmatprep.mubr.f32.mxu0 0.0
      %1195 = vmatmul.mubr.f32.gmra.mrb[0].mxu0 %v526
      %v1196 = vpop.f32.mrb[0].mxu0
      %v1197 = vadd.f32 %v812, %v1196
      %v1198 = vpop.f32.mrb[0].mxu0
      %1199 = vmatprep.mubr.f32.mxu0 0.0
      %1200 = vmatmul.mubr.f32.gmra.mrb[0].mxu0 %v529
      %v1201 = vpop.f32.mrb[0].mxu0
      %v1202 = vadd.f32 %v817, %v1201
      %v1203 = vpop.f32.mrb[0].mxu0
      %1204 = vmatprep.mubr.f32.mxu0 0.0
      %1205 = vmatmul.mubr.f32.gmra.mrb[0].mxu0 %v532
      %v1206 = vpop.f32.mrb[0].mxu0
      %v1207 = vadd.f32 %v822, %v1206
      %v1208 = vpop.f32.mrb[0].mxu0
      %1209 = vmatprep.mubr.f32.mxu0 0.0
      %1210 = vmatmul.mubr.f32.gmra.mrb[0].mxu0 %v535
      %v1211 = vpop.f32.mrb[0].mxu0
      %v1212 = vadd.f32 %v827, %v1211
      %v1213 = vpop.f32.mrb[0].mxu0
      %1214 = vmatprep.mubr.f32.mxu0 0.0
      %1215 = vmatmul.mubr.f32.gmra.mrb[0].mxu0 %v538
      %v1216 = vpop.f32.mrb[0].mxu0
      %v1217 = vadd.f32 %v832, %v1216
      %v1218 = vpop.f32.mrb[0].mxu0
      %1219 = vmatprep.mubr.f32.mxu0 0.0
      %1220 = vmatmul.mubr.f32.gmra.mrb[0].mxu0 %v541
      %v1221 = vpop.f32.mrb[0].mxu0
      %v1222 = vadd.f32 %v837, %v1221
      %v1223 = vpop.f32.mrb[0].mxu0
      %1224 = vmatprep.mubr.f32.mxu0 0.0
      %1225 = vmatmul.mubr.f32.gmra.mrb[0].mxu0 %v544
      %v1226 = vpop.f32.mrb[0].mxu0
      %v1227 = vadd.f32 %v842, %v1226
      %v1228 = vpop.f32.mrb[0].mxu0
      %1229 = vmatprep.mubr.f32.mxu0 0.0
      %1230 = vmatmul.mubr.f32.gmra.mrb[0].mxu0 %v547
      %v1231 = vpop.f32.mrb[0].mxu0
      %v1232 = vadd.f32 %v847, %v1231
      %v1233 = vpop.f32.mrb[0].mxu0
      %1234 = vmatprep.mubr.f32.mxu0 0.0
      %1235 = vmatmul.mubr.f32.gmra.mrb[0].mxu0 %v550
      %v1236 = vpop.f32.mrb[0].mxu0
      %v1237 = vadd.f32 %v852, %v1236
      %v1238 = vpop.f32.mrb[0].mxu0
      %1239 = vmatprep.mubr.f32.mxu0 0.0
      %1240 = vmatmul.mubr.f32.gmra.mrb[0].mxu0 %v553
      %v1241 = vpop.f32.mrb[0].mxu0
      %v1242 = vadd.f32 %v857, %v1241
      %v1243 = vpop.f32.mrb[0].mxu0
      %1244 = vmatprep.mubr.f32.mxu0 0.0
      %1245 = vmatmul.mubr.f32.gmra.mrb[0].mxu0 %v556
      %v1246 = vpop.f32.mrb[0].mxu0
      %v1247 = vadd.f32 %v862, %v1246
      %v1248 = vpop.f32.mrb[0].mxu0
      %1249 = vmatprep.mubr.f32.mxu0 0.0
      %1250 = vmatmul.mubr.f32.gmra.mrb[0].mxu0 %v559
      %v1251 = vpop.f32.mrb[0].mxu0
      %v1252 = vadd.f32 %v867, %v1251
      %v1253 = vpop.f32.mrb[0].mxu0
      %1254 = vmatprep.mubr.f32.mxu0 0.0
      %1255 = vmatmul.mubr.f32.gmra.mrb[0].mxu0 %v562
      %v1256 = vpop.f32.mrb[0].mxu0
      %v1257 = vadd.f32 %v872, %v1256
      %v1258 = vpop.f32.mrb[0].mxu0
      %1259 = vmatprep.mubr.f32.mxu0 0.0
      %1260 = vmatmul.mubr.f32.gmra.mrb[0].mxu0 %v565
      %v1261 = vpop.f32.mrb[0].mxu0
      %v1262 = vadd.f32 %v877, %v1261
      %v1263 = vpop.f32.mrb[0].mxu0
      %1264 = vmatprep.mubr.f32.mxu0 0.0
      %1265 = vmatmul.mubr.f32.gmra.mrb[0].mxu0 %v568
      %v1266 = vpop.f32.mrb[0].mxu0
      %v1267 = vadd.f32 %v882, %v1266
      %v1268 = vpop.f32.mrb[0].mxu0
      %1269 = vmatprep.mubr.f32.mxu0 0.0
      %1270 = vmatmul.mubr.f32.gmra.mrb[0].mxu0 %v571
      %v1271 = vpop.f32.mrb[0].mxu0
      %v1272 = vadd.f32 %v887, %v1271
      %v1273 = vpop.f32.mrb[0].mxu0
      %1274 = vmatprep.mubr.f32.mxu0 0.0
      %1275 = vmatmul.mubr.f32.gmra.mrb[0].mxu0 %v574
      %v1276 = vpop.f32.mrb[0].mxu0
      %v1277 = vadd.f32 %v892, %v1276
      %v1278 = vpop.f32.mrb[0].mxu0
      %1279 = vmatprep.mubr.f32.mxu0 0.0
      %1280 = vmatmul.mubr.f32.gmra.mrb[0].mxu0 %v577
      %v1281 = vpop.f32.mrb[0].mxu0
      %v1282 = vadd.f32 %v897, %v1281
      %v1283 = vpop.f32.mrb[0].mxu0
      %1284 = vmatprep.mubr.f32.mxu0 0.0
      %1285 = vmatmul.mubr.f32.gmra.mrb[0].mxu0 %v580
      %v1286 = vpop.f32.mrb[0].mxu0
      %v1287 = vadd.f32 %v902, %v1286
      %v1288 = vpop.f32.mrb[0].mxu0
      %1289 = vmatprep.mubr.f32.mxu0 0.0
      %1290 = vmatmul.mubr.f32.gmra.mrb[0].mxu0 %v583
      %v1291 = vpop.f32.mrb[0].mxu0
      %v1292 = vadd.f32 %v907, %v1291
      %v1293 = vpop.f32.mrb[0].mxu0
      %1294 = vmatprep.mubr.f32.mxu0 0.0
      %1295 = vmatmul.mubr.f32.gmra.mrb[0].mxu0 %v586
      %v1296 = vpop.f32.mrb[0].mxu0
      %v1297 = vadd.f32 %v912, %v1296
      %v1298 = vpop.f32.mrb[0].mxu0
      %1299 = vmatprep.mubr.f32.mxu0 0.0
      %1300 = vmatmul.mubr.f32.gmra.mrb[0].mxu0 %v589
      %v1301 = vpop.f32.mrb[0].mxu0
      %v1302 = vadd.f32 %v917, %v1301
      %v1303 = vpop.f32.mrb[0].mxu0
      %1304 = vmatprep.mubr.f32.mxu0 0.0
      %1305 = vmatmul.mubr.f32.gmra.mrb[0].mxu0 %v592
      %v1306 = vpop.f32.mrb[0].mxu0
      %v1307 = vadd.f32 %v922, %v1306
      %v1308 = vpop.f32.mrb[0].mxu0
      %1309 = vmatprep.mubr.f32.mxu0 0.0
      %1310 = vmatmul.mubr.f32.gmra.mrb[0].mxu0 %v595
      %v1311 = vpop.f32.mrb[0].mxu0
      %v1312 = vadd.f32 %v927, %v1311
      %v1313 = vpop.f32.mrb[0].mxu0
      %1314 = vmatprep.mubr.f32.mxu0 0.0
      %1315 = vmatmul.mubr.f32.gmra.mrb[0].mxu0 %v598
      %v1316 = vpop.f32.mrb[0].mxu0
      %v1317 = vadd.f32 %v932, %v1316
      %v1318 = vpop.f32.mrb[0].mxu0
      %1319 = vmatprep.mubr.f32.mxu0 0.0
      %1320 = vmatmul.mubr.f32.gmra.mrb[0].mxu0 %v601
      %v1321 = vpop.f32.mrb[0].mxu0
      %v1322 = vadd.f32 %v937, %v1321
      %v1323 = vpop.f32.mrb[0].mxu0
      %1324 = vmatprep.mubr.f32.mxu0 0.0
      %1325 = vmatmul.mubr.f32.gmra.mrb[0].mxu0 %v604
      %v1326 = vpop.f32.mrb[0].mxu0
      %v1327 = vadd.f32 %v942, %v1326
      %v1328 = vpop.f32.mrb[0].mxu0
      %1329 = vmatprep.mubr.f32.mxu0 0.0
      %1330 = vmatmul.mubr.f32.gmra.mrb[0].mxu0 %v607
      %v1331 = vpop.f32.mrb[0].mxu0
      %v1332 = vadd.f32 %v947, %v1331
      %v1333 = vpop.f32.mrb[0].mxu0
      %1334 = vmatprep.mubr.f32.mxu0 0.0
      %1335 = vmatmul.mubr.f32.gmra.mrb[0].mxu0 %v610
      %v1336 = vpop.f32.mrb[0].mxu0
      %v1337 = vadd.f32 %v952, %v1336
      %v1338 = vpop.f32.mrb[0].mxu0
      %1339 = vmatprep.mubr.f32.mxu0 0.0
      %1340 = vmatmul.mubr.f32.gmra.mrb[0].mxu0 %v613
      %v1341 = vpop.f32.mrb[0].mxu0
      %v1342 = vadd.f32 %v957, %v1341
      %v1343 = vpop.f32.mrb[0].mxu0
      %1344 = vmatprep.mubr.f32.mxu0 0.0
      %1345 = vmatmul.mubr.f32.gmra.mrb[0].mxu0 %v616
      %v1346 = vpop.f32.mrb[0].mxu0
      %v1347 = vadd.f32 %v962, %v1346
      %v1348 = vpop.f32.mrb[0].mxu0
      %1349 = vmatprep.mubr.f32.mxu0 0.0
      %1350 = vmatmul.mubr.f32.gmra.mrb[0].mxu0 %v619
      %v1351 = vpop.f32.mrb[0].mxu0
      %v1352 = vadd.f32 %v967, %v1351
      %v1353 = vpop.f32.mrb[0].mxu0
      %1354 = vmatprep.mubr.f32.mxu0 0.0
      %1355 = vmatmul.mubr.f32.gmra.mrb[0].mxu0 %v622
      %v1356 = vpop.f32.mrb[0].mxu0
      %v1357 = vadd.f32 %v972, %v1356
      %v1358 = vpop.f32.mrb[0].mxu0
      %1359 = vmatprep.mubr.f32.mxu0 0.0
      %1360 = vmatmul.mubr.f32.gmra.mrb[0].mxu0 %v625
      %v1361 = vpop.f32.mrb[0].mxu0
      %v1362 = vadd.f32 %v977, %v1361
      %v1363 = vpop.f32.mrb[0].mxu0
      %1364 = vmatprep.mubr.f32.mxu0 0.0
      %1365 = vmatmul.mubr.f32.gmra.mrb[0].mxu0 %v628
      %v1366 = vpop.f32.mrb[0].mxu0
      %v1367 = vadd.f32 %v982, %v1366
      %v1368 = vpop.f32.mrb[0].mxu0
      %1369 = vmatprep.mubr.f32.mxu0 0.0
      %1370 = vmatmul.mubr.f32.gmra.mrb[0].mxu0 %v631
      %v1371 = vpop.f32.mrb[0].mxu0
      %v1372 = vadd.f32 %v987, %v1371
      %v1373 = vpop.f32.mrb[0].mxu0
      %1374 = vmatprep.mubr.f32.mxu0 0.0
      %1375 = vmatmul.mubr.f32.gmra.mrb[0].mxu0 %v634
      %v1376 = vpop.f32.mrb[0].mxu0
      %v1377 = vadd.f32 %v992, %v1376
      %v1378 = vpop.f32.mrb[0].mxu0
      %1379 = vmatprep.mubr.f32.mxu0 0.0
      %1380 = vmatmul.mubr.f32.gmra.mrb[0].mxu0 %v637
      %v1381 = vpop.f32.mrb[0].mxu0
      %v1382 = vadd.f32 %v997, %v1381
      %v1383 = vpop.f32.mrb[0].mxu0
      %1384 = vmatprep.mubr.f32.mxu0 0.0
      %1385 = vmatmul.mubr.f32.gmra.mrb[0].mxu0 %v640
      %v1386 = vpop.f32.mrb[0].mxu0
      %v1387 = vadd.f32 %v1002, %v1386
      %v1388 = vpop.f32.mrb[0].mxu0
      %1389 = vmatprep.mubr.f32.mxu0 0.0
      %1390 = vmatmul.mubr.f32.gmra.mrb[0].mxu0 %v643
      %v1391 = vpop.f32.mrb[0].mxu0
      %v1392 = vadd.f32 %v1007, %v1391
      %v1393 = vpop.f32.mrb[0].mxu0
      %1394 = vmatprep.mubr.f32.mxu0 0.0
      %1395 = vmatmul.mubr.f32.gmra.mrb[0].mxu0 %v646
      %v1396 = vpop.f32.mrb[0].mxu0
      %v1397 = vadd.f32 %v1012, %v1396
      %v1398 = vpop.f32.mrb[0].mxu0
      %1399 = vmatprep.mubr.f32.mxu0 0.0
      %1400 = vmatmul.mubr.f32.gmra.mrb[0].mxu0 %v649
      %v1401 = vpop.f32.mrb[0].mxu0
      %v1402 = vadd.f32 %v1017, %v1401
      %v1403 = vpop.f32.mrb[0].mxu0
      %1404 = vmatprep.mubr.f32.mxu0 0.0
      %1405 = vmatmul.mubr.f32.gmra.mrb[0].mxu0 %v652
      %v1406 = vpop.f32.mrb[0].mxu0
      %v1407 = vadd.f32 %v1022, %v1406
      %v1408 = vpop.f32.mrb[0].mxu0
      %1409 = vmatprep.mubr.f32.mxu0 0.0
      %1410 = vmatmul.mubr.f32.gmra.mrb[0].mxu0 %v655
      %v1411 = vpop.f32.mrb[0].mxu0
      %v1412 = vadd.f32 %v1027, %v1411
      %v1413 = vpop.f32.mrb[0].mxu0
      %1414 = vmatprep.mubr.f32.mxu0 0.0
      %1415 = vmatmul.mubr.f32.gmra.mrb[0].mxu0 %v658
      %v1416 = vpop.f32.mrb[0].mxu0
      %v1417 = vadd.f32 %v1032, %v1416
      %v1418 = vpop.f32.mrb[0].mxu0
      %1419 = vmatprep.mubr.f32.mxu0 0.0
      %1420 = vmatmul.mubr.f32.gmra.mrb[0].mxu0 %v661
      %v1421 = vpop.f32.mrb[0].mxu0
      %v1422 = vadd.f32 %v1037, %v1421
      %v1423 = vpop.f32.mrb[0].mxu0
      %1424 = vmatprep.mubr.f32.mxu0 0.0
      %1425 = vmatmul.mubr.f32.gmra.mrb[0].mxu0 %v664
      %v1426 = vpop.f32.mrb[0].mxu0
      %v1427 = vadd.f32 %v1042, %v1426
      %v1428 = vpop.f32.mrb[0].mxu0
      %1429 = vmatprep.mubr.f32.mxu0 0.0
      %1430 = vmatmul.mubr.f32.gmra.mrb[0].mxu0 %v667
      %v1431 = vpop.f32.mrb[0].mxu0
      %v1432 = vadd.f32 %v1047, %v1431
      %v1433 = vpop.f32.mrb[0].mxu0
      %1434 = vmatprep.mubr.f32.mxu0 0.0
      %1435 = vmatmul.mubr.f32.gmra.mrb[0].mxu0 %v670
      %v1436 = vpop.f32.mrb[0].mxu0
      %v1437 = vadd.f32 %v1052, %v1436
      %v1438 = vpop.f32.mrb[0].mxu0
      %1439 = vmatprep.mubr.f32.mxu0 0.0
      %1440 = vmatmul.mubr.f32.gmra.mrb[0].mxu0 %v673
      %v1441 = vpop.f32.mrb[0].mxu0
      %v1442 = vadd.f32 %v1057, %v1441
      %v1443 = vpop.f32.mrb[0].mxu0
      %1444 = vdwg.mxu0
      %v1445 = vxor.u32 %v1127, 2147483648
      %v1446 = vxor.u32 %v1132, 2147483648
      %v1447 = vxor.u32 %v1137, 2147483648
      %v1448 = vxor.u32 %v1142, 2147483648
      %v1449 = vxor.u32 %v1147, 2147483648
      %v1450 = vxor.u32 %v1152, 2147483648
      %v1451 = vxor.u32 %v1157, 2147483648
      %v1452 = vxor.u32 %v1162, 2147483648
      %v1453 = vxor.u32 %v1167, 2147483648
      %v1454 = vxor.u32 %v1172, 2147483648
      %v1455 = vxor.u32 %v1177, 2147483648
      %v1456 = vxor.u32 %v1182, 2147483648
      %v1457 = vxor.u32 %v1187, 2147483648
      %v1458 = vxor.u32 %v1192, 2147483648
      %v1459 = vxor.u32 %v1197, 2147483648
      %v1460 = vxor.u32 %v1202, 2147483648
      %v1461 = vxor.u32 %v1207, 2147483648
      %v1462 = vxor.u32 %v1212, 2147483648
      %v1463 = vxor.u32 %v1217, 2147483648
      %v1464 = vxor.u32 %v1222, 2147483648
      %v1465 = vxor.u32 %v1227, 2147483648
      %v1466 = vxor.u32 %v1232, 2147483648
      %v1467 = vxor.u32 %v1237, 2147483648
      %v1468 = vxor.u32 %v1242, 2147483648
      %v1469 = vxor.u32 %v1247, 2147483648
      %v1470 = vxor.u32 %v1252, 2147483648
      %v1471 = vxor.u32 %v1257, 2147483648
      %v1472 = vxor.u32 %v1262, 2147483648
      %v1473 = vxor.u32 %v1267, 2147483648
      %v1474 = vxor.u32 %v1272, 2147483648
      %v1475 = vxor.u32 %v1277, 2147483648
      %v1476 = vxor.u32 %v1282, 2147483648
      %v1477 = vxor.u32 %v1287, 2147483648
      %v1478 = vxor.u32 %v1292, 2147483648
      %v1479 = vxor.u32 %v1297, 2147483648
      %v1480 = vxor.u32 %v1302, 2147483648
      %v1481 = vxor.u32 %v1307, 2147483648
      %v1482 = vxor.u32 %v1312, 2147483648
      %v1483 = vxor.u32 %v1317, 2147483648
      %v1484 = vxor.u32 %v1322, 2147483648
      %v1485 = vxor.u32 %v1327, 2147483648
      %v1486 = vxor.u32 %v1332, 2147483648
      %v1487 = vxor.u32 %v1337, 2147483648
      %v1488 = vxor.u32 %v1342, 2147483648
      %v1489 = vxor.u32 %v1347, 2147483648
      %v1490 = vxor.u32 %v1352, 2147483648
      %v1491 = vxor.u32 %v1357, 2147483648
      %v1492 = vxor.u32 %v1362, 2147483648
      %v1493 = vxor.u32 %v1367, 2147483648
      %v1494 = vxor.u32 %v1372, 2147483648
      %v1495 = vxor.u32 %v1377, 2147483648
      %v1496 = vxor.u32 %v1382, 2147483648
      %v1497 = vxor.u32 %v1387, 2147483648
      %v1498 = vxor.u32 %v1392, 2147483648
      %v1499 = vxor.u32 %v1397, 2147483648
      %v1500 = vxor.u32 %v1402, 2147483648
      %v1501 = vxor.u32 %v1407, 2147483648
      %v1502 = vxor.u32 %v1412, 2147483648
      %v1503 = vxor.u32 %v1417, 2147483648
      %v1504 = vxor.u32 %v1422, 2147483648
      %v1505 = vxor.u32 %v1427, 2147483648
      %v1506 = vxor.u32 %v1432, 2147483648
      %v1507 = vxor.u32 %v1437, 2147483648
      %v1508 = vxor.u32 %v1442, 2147483648
      %v1509 = vmul.f32 %v1445, 1.442695
      %v1510 = vpow.pop %v1509
      %v1511 = vmul.f32 %v1446, 1.442695
      %v1512 = vpow.pop %v1511
      %v1513 = vmul.f32 %v1447, 1.442695
      %v1514 = vpow.pop %v1513
      %v1515 = vmul.f32 %v1448, 1.442695
      %v1516 = vpow.pop %v1515
      %v1517 = vmul.f32 %v1449, 1.442695
      %v1518 = vpow.pop %v1517
      %v1519 = vmul.f32 %v1450, 1.442695
      %v1520 = vpow.pop %v1519
      %v1521 = vmul.f32 %v1451, 1.442695
      %v1522 = vpow.pop %v1521
      %v1523 = vmul.f32 %v1452, 1.442695
      %v1524 = vpow.pop %v1523
      %v1525 = vmul.f32 %v1453, 1.442695
      %v1526 = vpow.pop %v1525
      %v1527 = vmul.f32 %v1454, 1.442695
      %v1528 = vpow.pop %v1527
      %v1529 = vmul.f32 %v1455, 1.442695
      %v1530 = vpow.pop %v1529
      %v1531 = vmul.f32 %v1456, 1.442695
      %v1532 = vpow.pop %v1531
      %v1533 = vmul.f32 %v1457, 1.442695
      %v1534 = vpow.pop %v1533
      %v1535 = vmul.f32 %v1458, 1.442695
      %v1536 = vpow.pop %v1535
      %v1537 = vmul.f32 %v1459, 1.442695
      %v1538 = vpow.pop %v1537
      %v1539 = vmul.f32 %v1460, 1.442695
      %v1540 = vpow.pop %v1539
      %v1541 = vmul.f32 %v1461, 1.442695
      %v1542 = vpow.pop %v1541
      %v1543 = vmul.f32 %v1462, 1.442695
      %v1544 = vpow.pop %v1543
      %v1545 = vmul.f32 %v1463, 1.442695
      %v1546 = vpow.pop %v1545
      %v1547 = vmul.f32 %v1464, 1.442695
      %v1548 = vpow.pop %v1547
      %v1549 = vmul.f32 %v1465, 1.442695
      %v1550 = vpow.pop %v1549
      %v1551 = vmul.f32 %v1466, 1.442695
      %v1552 = vpow.pop %v1551
      %v1553 = vmul.f32 %v1467, 1.442695
      %v1554 = vpow.pop %v1553
      %v1555 = vmul.f32 %v1468, 1.442695
      %v1556 = vpow.pop %v1555
      %v1557 = vmul.f32 %v1469, 1.442695
      %v1558 = vpow.pop %v1557
      %v1559 = vmul.f32 %v1470, 1.442695
      %v1560 = vpow.pop %v1559
      %v1561 = vmul.f32 %v1471, 1.442695
      %v1562 = vpow.pop %v1561
      %v1563 = vmul.f32 %v1472, 1.442695
      %v1564 = vpow.pop %v1563
      %v1565 = vmul.f32 %v1473, 1.442695
      %v1566 = vpow.pop %v1565
      %v1567 = vmul.f32 %v1474, 1.442695
      %v1568 = vpow.pop %v1567
      %v1569 = vmul.f32 %v1475, 1.442695
      %v1570 = vpow.pop %v1569
      %v1571 = vmul.f32 %v1476, 1.442695
      %v1572 = vpow.pop %v1571
      %v1573 = vmul.f32 %v1477, 1.442695
      %v1574 = vpow.pop %v1573
      %v1575 = vmul.f32 %v1478, 1.442695
      %v1576 = vpow.pop %v1575
      %v1577 = vmul.f32 %v1479, 1.442695
      %v1578 = vpow.pop %v1577
      %v1579 = vmul.f32 %v1480, 1.442695
      %v1580 = vpow.pop %v1579
      %v1581 = vmul.f32 %v1481, 1.442695
      %v1582 = vpow.pop %v1581
      %v1583 = vmul.f32 %v1482, 1.442695
      %v1584 = vpow.pop %v1583
      %v1585 = vmul.f32 %v1483, 1.442695
      %v1586 = vpow.pop %v1585
      %v1587 = vmul.f32 %v1484, 1.442695
      %v1588 = vpow.pop %v1587
      %v1589 = vmul.f32 %v1485, 1.442695
      %v1590 = vpow.pop %v1589
      %v1591 = vmul.f32 %v1486, 1.442695
      %v1592 = vpow.pop %v1591
      %v1593 = vmul.f32 %v1487, 1.442695
      %v1594 = vpow.pop %v1593
      %v1595 = vmul.f32 %v1488, 1.442695
      %v1596 = vpow.pop %v1595
      %v1597 = vmul.f32 %v1489, 1.442695
      %v1598 = vpow.pop %v1597
      %v1599 = vmul.f32 %v1490, 1.442695
      %v1600 = vpow.pop %v1599
      %v1601 = vmul.f32 %v1491, 1.442695
      %v1602 = vpow.pop %v1601
      %v1603 = vmul.f32 %v1492, 1.442695
      %v1604 = vpow.pop %v1603
      %v1605 = vmul.f32 %v1493, 1.442695
      %v1606 = vpow.pop %v1605
      %v1607 = vmul.f32 %v1494, 1.442695
      %v1608 = vpow.pop %v1607
      %v1609 = vmul.f32 %v1495, 1.442695
      %v1610 = vpow.pop %v1609
      %v1611 = vmul.f32 %v1496, 1.442695
      %v1612 = vpow.pop %v1611
      %v1613 = vmul.f32 %v1497, 1.442695
      %v1614 = vpow.pop %v1613
      %v1615 = vmul.f32 %v1498, 1.442695
      %v1616 = vpow.pop %v1615
      %v1617 = vmul.f32 %v1499, 1.442695
      %v1618 = vpow.pop %v1617
      %v1619 = vmul.f32 %v1500, 1.442695
      %v1620 = vpow.pop %v1619
      %v1621 = vmul.f32 %v1501, 1.442695
      %v1622 = vpow.pop %v1621
      %v1623 = vmul.f32 %v1502, 1.442695
      %v1624 = vpow.pop %v1623
      %v1625 = vmul.f32 %v1503, 1.442695
      %v1626 = vpow.pop %v1625
      %v1627 = vmul.f32 %v1504, 1.442695
      %v1628 = vpow.pop %v1627
      %v1629 = vmul.f32 %v1505, 1.442695
      %v1630 = vpow.pop %v1629
      %v1631 = vmul.f32 %v1506, 1.442695
      %v1632 = vpow.pop %v1631
      %v1633 = vmul.f32 %v1507, 1.442695
      %v1634 = vpow.pop %v1633
      %v1635 = vmul.f32 %v1508, 1.442695
      %v1636 = vpow.pop %v1635
      %v1637 = vadd.f32 %v1510, 1.0
      %v1638 = vadd.f32 %v1512, 1.0
      %v1639 = vadd.f32 %v1514, 1.0
      %v1640 = vadd.f32 %v1516, 1.0
      %v1641 = vadd.f32 %v1518, 1.0
      %v1642 = vadd.f32 %v1520, 1.0
      %v1643 = vadd.f32 %v1522, 1.0
      %v1644 = vadd.f32 %v1524, 1.0
      %v1645 = vadd.f32 %v1526, 1.0
      %v1646 = vadd.f32 %v1528, 1.0
      %v1647 = vadd.f32 %v1530, 1.0
      %v1648 = vadd.f32 %v1532, 1.0
      %v1649 = vadd.f32 %v1534, 1.0
      %v1650 = vadd.f32 %v1536, 1.0
      %v1651 = vadd.f32 %v1538, 1.0
      %v1652 = vadd.f32 %v1540, 1.0
      %v1653 = vadd.f32 %v1542, 1.0
      %v1654 = vadd.f32 %v1544, 1.0
      %v1655 = vadd.f32 %v1546, 1.0
      %v1656 = vadd.f32 %v1548, 1.0
      %v1657 = vadd.f32 %v1550, 1.0
      %v1658 = vadd.f32 %v1552, 1.0
      %v1659 = vadd.f32 %v1554, 1.0
      %v1660 = vadd.f32 %v1556, 1.0
      %v1661 = vadd.f32 %v1558, 1.0
      %v1662 = vadd.f32 %v1560, 1.0
      %v1663 = vadd.f32 %v1562, 1.0
      %v1664 = vadd.f32 %v1564, 1.0
      %v1665 = vadd.f32 %v1566, 1.0
      %v1666 = vadd.f32 %v1568, 1.0
      %v1667 = vadd.f32 %v1570, 1.0
      %v1668 = vadd.f32 %v1572, 1.0
      %v1669 = vadd.f32 %v1574, 1.0
      %v1670 = vadd.f32 %v1576, 1.0
      %v1671 = vadd.f32 %v1578, 1.0
      %v1672 = vadd.f32 %v1580, 1.0
      %v1673 = vadd.f32 %v1582, 1.0
      %v1674 = vadd.f32 %v1584, 1.0
      %v1675 = vadd.f32 %v1586, 1.0
      %v1676 = vadd.f32 %v1588, 1.0
      %v1677 = vadd.f32 %v1590, 1.0
      %v1678 = vadd.f32 %v1592, 1.0
      %v1679 = vadd.f32 %v1594, 1.0
      %v1680 = vadd.f32 %v1596, 1.0
      %v1681 = vadd.f32 %v1598, 1.0
      %v1682 = vadd.f32 %v1600, 1.0
      %v1683 = vadd.f32 %v1602, 1.0
      %v1684 = vadd.f32 %v1604, 1.0
      %v1685 = vadd.f32 %v1606, 1.0
      %v1686 = vadd.f32 %v1608, 1.0
      %v1687 = vadd.f32 %v1610, 1.0
      %v1688 = vadd.f32 %v1612, 1.0
      %v1689 = vadd.f32 %v1614, 1.0
      %v1690 = vadd.f32 %v1616, 1.0
      %v1691 = vadd.f32 %v1618, 1.0
      %v1692 = vadd.f32 %v1620, 1.0
      %v1693 = vadd.f32 %v1622, 1.0
      %v1694 = vadd.f32 %v1624, 1.0
      %v1695 = vadd.f32 %v1626, 1.0
      %v1696 = vadd.f32 %v1628, 1.0
      %v1697 = vadd.f32 %v1630, 1.0
      %v1698 = vadd.f32 %v1632, 1.0
      %v1699 = vadd.f32 %v1634, 1.0
      %v1700 = vadd.f32 %v1636, 1.0
      %v1701 = vrcp.pop %v1637
      %v1702 = vmul.f32 1.0, %v1701
      %v1703 = vrcp.pop %v1638
      %v1704 = vmul.f32 1.0, %v1703
      %v1705 = vrcp.pop %v1639
      %v1706 = vmul.f32 1.0, %v1705
      %v1707 = vrcp.pop %v1640
      %v1708 = vmul.f32 1.0, %v1707
      %v1709 = vrcp.pop %v1641
      %v1710 = vmul.f32 1.0, %v1709
      %v1711 = vrcp.pop %v1642
      %v1712 = vmul.f32 1.0, %v1711
      %v1713 = vrcp.pop %v1643
      %v1714 = vmul.f32 1.0, %v1713
      %v1715 = vrcp.pop %v1644
      %v1716 = vmul.f32 1.0, %v1715
      %v1717 = vrcp.pop %v1645
      %v1718 = vmul.f32 1.0, %v1717
      %v1719 = vrcp.pop %v1646
      %v1720 = vmul.f32 1.0, %v1719
      %v1721 = vrcp.pop %v1647
      %v1722 = vmul.f32 1.0, %v1721
      %v1723 = vrcp.pop %v1648
      %v1724 = vmul.f32 1.0, %v1723
      %v1725 = vrcp.pop %v1649
      %v1726 = vmul.f32 1.0, %v1725
      %v1727 = vrcp.pop %v1650
      %v1728 = vmul.f32 1.0, %v1727
      %v1729 = vrcp.pop %v1651
      %v1730 = vmul.f32 1.0, %v1729
      %v1731 = vrcp.pop %v1652
      %v1732 = vmul.f32 1.0, %v1731
      %v1733 = vrcp.pop %v1653
      %v1734 = vmul.f32 1.0, %v1733
      %v1735 = vrcp.pop %v1654
      %v1736 = vmul.f32 1.0, %v1735
      %v1737 = vrcp.pop %v1655
      %v1738 = vmul.f32 1.0, %v1737
      %v1739 = vrcp.pop %v1656
      %v1740 = vmul.f32 1.0, %v1739
      %v1741 = vrcp.pop %v1657
      %v1742 = vmul.f32 1.0, %v1741
      %v1743 = vrcp.pop %v1658
      %v1744 = vmul.f32 1.0, %v1743
      %v1745 = vrcp.pop %v1659
      %v1746 = vmul.f32 1.0, %v1745
      %v1747 = vrcp.pop %v1660
      %v1748 = vmul.f32 1.0, %v1747
      %v1749 = vrcp.pop %v1661
      %v1750 = vmul.f32 1.0, %v1749
      %v1751 = vrcp.pop %v1662
      %v1752 = vmul.f32 1.0, %v1751
      %v1753 = vrcp.pop %v1663
      %v1754 = vmul.f32 1.0, %v1753
      %v1755 = vrcp.pop %v1664
      %v1756 = vmul.f32 1.0, %v1755
      %v1757 = vrcp.pop %v1665
      %v1758 = vmul.f32 1.0, %v1757
      %v1759 = vrcp.pop %v1666
      %v1760 = vmul.f32 1.0, %v1759
      %v1761 = vrcp.pop %v1667
      %v1762 = vmul.f32 1.0, %v1761
      %v1763 = vrcp.pop %v1668
      %v1764 = vmul.f32 1.0, %v1763
      %v1765 = vrcp.pop %v1669
      %v1766 = vmul.f32 1.0, %v1765
      %v1767 = vrcp.pop %v1670
      %v1768 = vmul.f32 1.0, %v1767
      %v1769 = vrcp.pop %v1671
      %v1770 = vmul.f32 1.0, %v1769
      %v1771 = vrcp.pop %v1672
      %v1772 = vmul.f32 1.0, %v1771
      %v1773 = vrcp.pop %v1673
      %v1774 = vmul.f32 1.0, %v1773
      %v1775 = vrcp.pop %v1674
      %v1776 = vmul.f32 1.0, %v1775
      %v1777 = vrcp.pop %v1675
      %v1778 = vmul.f32 1.0, %v1777
      %v1779 = vrcp.pop %v1676
      %v1780 = vmul.f32 1.0, %v1779
      %v1781 = vrcp.pop %v1677
      %v1782 = vmul.f32 1.0, %v1781
      %v1783 = vrcp.pop %v1678
      %v1784 = vmul.f32 1.0, %v1783
      %v1785 = vrcp.pop %v1679
      %v1786 = vmul.f32 1.0, %v1785
      %v1787 = vrcp.pop %v1680
      %v1788 = vmul.f32 1.0, %v1787
      %v1789 = vrcp.pop %v1681
      %v1790 = vmul.f32 1.0, %v1789
      %v1791 = vrcp.pop %v1682
      %v1792 = vmul.f32 1.0, %v1791
      %v1793 = vrcp.pop %v1683
      %v1794 = vmul.f32 1.0, %v1793
      %v1795 = vrcp.pop %v1684
      %v1796 = vmul.f32 1.0, %v1795
      %v1797 = vrcp.pop %v1685
      %v1798 = vmul.f32 1.0, %v1797
      %v1799 = vrcp.pop %v1686
      %v1800 = vmul.f32 1.0, %v1799
      %v1801 = vrcp.pop %v1687
      %v1802 = vmul.f32 1.0, %v1801
      %v1803 = vrcp.pop %v1688
      %v1804 = vmul.f32 1.0, %v1803
      %v1805 = vrcp.pop %v1689
      %v1806 = vmul.f32 1.0, %v1805
      %v1807 = vrcp.pop %v1690
      %v1808 = vmul.f32 1.0, %v1807
      %v1809 = vrcp.pop %v1691
      %v1810 = vmul.f32 1.0, %v1809
      %v1811 = vrcp.pop %v1692
      %v1812 = vmul.f32 1.0, %v1811
      %v1813 = vrcp.pop %v1693
      %v1814 = vmul.f32 1.0, %v1813
      %v1815 = vrcp.pop %v1694
      %v1816 = vmul.f32 1.0, %v1815
      %v1817 = vrcp.pop %v1695
      %v1818 = vmul.f32 1.0, %v1817
      %v1819 = vrcp.pop %v1696
      %v1820 = vmul.f32 1.0, %v1819
      %v1821 = vrcp.pop %v1697
      %v1822 = vmul.f32 1.0, %v1821
      %v1823 = vrcp.pop %v1698
      %v1824 = vmul.f32 1.0, %v1823
      %v1825 = vrcp.pop %v1699
      %v1826 = vmul.f32 1.0, %v1825
      %v1827 = vrcp.pop %v1700
      %v1828 = vmul.f32 1.0, %v1827
      %vm1829 = vcmask 97280
      %1830 = vst.msk [vmem:[%s245] sm:$0xff] %vm1829, %v1702
      %1831 = vst.msk [vmem:[%s245 + $0x8] sm:$0xff] %vm1829, %v1704
      %1832 = vst.msk [vmem:[%s245 + $0x10] sm:$0xff] %vm1829, %v1706
      %1833 = vst.msk [vmem:[%s245 + $0x18] sm:$0xff] %vm1829, %v1708
      %1834 = vst.msk [vmem:[%s245 + $0x20] sm:$0xff] %vm1829, %v1710
      %1835 = vst.msk [vmem:[%s245 + $0x28] sm:$0xff] %vm1829, %v1712
      %1836 = vst.msk [vmem:[%s245 + $0x30] sm:$0xff] %vm1829, %v1714
      %1837 = vst.msk [vmem:[%s245 + $0x38] sm:$0xff] %vm1829, %v1716
      %1838 = vst.msk [vmem:[%s245 + $0x40] sm:$0xff] %vm1829, %v1718
      %1839 = vst.msk [vmem:[%s245 + $0x48] sm:$0xff] %vm1829, %v1720
      %1840 = vst.msk [vmem:[%s245 + $0x50] sm:$0xff] %vm1829, %v1722
      %1841 = vst.msk [vmem:[%s245 + $0x58] sm:$0xff] %vm1829, %v1724
      %1842 = vst.msk [vmem:[%s245 + $0x60] sm:$0xff] %vm1829, %v1726
      %1843 = vst.msk [vmem:[%s245 + $0x68] sm:$0xff] %vm1829, %v1728
      %1844 = vst.msk [vmem:[%s245 + $0x70] sm:$0xff] %vm1829, %v1730
      %1845 = vst.msk [vmem:[%s245 + $0x78] sm:$0xff] %vm1829, %v1732
      %1846 = vst.msk [vmem:[%s245 + $0x80] sm:$0xff] %vm1829, %v1734
      %1847 = vst.msk [vmem:[%s245 + $0x88] sm:$0xff] %vm1829, %v1736
      %1848 = vst.msk [vmem:[%s245 + $0x90] sm:$0xff] %vm1829, %v1738
      %1849 = vst.msk [vmem:[%s245 + $0x98] sm:$0xff] %vm1829, %v1740
      %1850 = vst.msk [vmem:[%s245 + $0xa0] sm:$0xff] %vm1829, %v1742
      %1851 = vst.msk [vmem:[%s245 + $0xa8] sm:$0xff] %vm1829, %v1744
      %1852 = vst.msk [vmem:[%s245 + $0xb0] sm:$0xff] %vm1829, %v1746
      %1853 = vst.msk [vmem:[%s245 + $0xb8] sm:$0xff] %vm1829, %v1748
      %1854 = vst.msk [vmem:[%s245 + $0xc0] sm:$0xff] %vm1829, %v1750
      %1855 = vst.msk [vmem:[%s245 + $0xc8] sm:$0xff] %vm1829, %v1752
      %1856 = vst.msk [vmem:[%s245 + $0xd0] sm:$0xff] %vm1829, %v1754
      %1857 = vst.msk [vmem:[%s245 + $0xd8] sm:$0xff] %vm1829, %v1756
      %1858 = vst.msk [vmem:[%s245 + $0xe0] sm:$0xff] %vm1829, %v1758
      %1859 = vst.msk [vmem:[%s245 + $0xe8] sm:$0xff] %vm1829, %v1760
      %1860 = vst.msk [vmem:[%s245 + $0xf0] sm:$0xff] %vm1829, %v1762
      %1861 = vst.msk [vmem:[%s245 + $0xf8] sm:$0xff] %vm1829, %v1764
      %1862 = vst.msk [vmem:[%s245 + $0x100] sm:$0xff] %vm1829, %v1766
      %1863 = vst.msk [vmem:[%s245 + $0x108] sm:$0xff] %vm1829, %v1768
      %1864 = vst.msk [vmem:[%s245 + $0x110] sm:$0xff] %vm1829, %v1770
      %1865 = vst.msk [vmem:[%s245 + $0x118] sm:$0xff] %vm1829, %v1772
      %1866 = vst.msk [vmem:[%s245 + $0x120] sm:$0xff] %vm1829, %v1774
      %1867 = vst.msk [vmem:[%s245 + $0x128] sm:$0xff] %vm1829, %v1776
      %1868 = vst.msk [vmem:[%s245 + $0x130] sm:$0xff] %vm1829, %v1778
      %1869 = vst.msk [vmem:[%s245 + $0x138] sm:$0xff] %vm1829, %v1780
      %1870 = vst.msk [vmem:[%s245 + $0x140] sm:$0xff] %vm1829, %v1782
      %1871 = vst.msk [vmem:[%s245 + $0x148] sm:$0xff] %vm1829, %v1784
      %1872 = vst.msk [vmem:[%s245 + $0x150] sm:$0xff] %vm1829, %v1786
      %1873 = vst.msk [vmem:[%s245 + $0x158] sm:$0xff] %vm1829, %v1788
      %1874 = vst.msk [vmem:[%s245 + $0x160] sm:$0xff] %vm1829, %v1790
      %1875 = vst.msk [vmem:[%s245 + $0x168] sm:$0xff] %vm1829, %v1792
      %1876 = vst.msk [vmem:[%s245 + $0x170] sm:$0xff] %vm1829, %v1794
      %1877 = vst.msk [vmem:[%s245 + $0x178] sm:$0xff] %vm1829, %v1796
      %1878 = vst.msk [vmem:[%s245 + $0x180] sm:$0xff] %vm1829, %v1798
      %1879 = vst.msk [vmem:[%s245 + $0x188] sm:$0xff] %vm1829, %v1800
      %1880 = vst.msk [vmem:[%s245 + $0x190] sm:$0xff] %vm1829, %v1802
      %1881 = vst.msk [vmem:[%s245 + $0x198] sm:$0xff] %vm1829, %v1804
      %1882 = vst.msk [vmem:[%s245 + $0x1a0] sm:$0xff] %vm1829, %v1806
      %1883 = vst.msk [vmem:[%s245 + $0x1a8] sm:$0xff] %vm1829, %v1808
      %1884 = vst.msk [vmem:[%s245 + $0x1b0] sm:$0xff] %vm1829, %v1810
      %1885 = vst.msk [vmem:[%s245 + $0x1b8] sm:$0xff] %vm1829, %v1812
      %1886 = vst.msk [vmem:[%s245 + $0x1c0] sm:$0xff] %vm1829, %v1814
      %1887 = vst.msk [vmem:[%s245 + $0x1c8] sm:$0xff] %vm1829, %v1816
      %1888 = vst.msk [vmem:[%s245 + $0x1d0] sm:$0xff] %vm1829, %v1818
      %1889 = vst.msk [vmem:[%s245 + $0x1d8] sm:$0xff] %vm1829, %v1820
      %1890 = vst.msk [vmem:[%s245 + $0x1e0] sm:$0xff] %vm1829, %v1822
      %1891 = vst.msk [vmem:[%s245 + $0x1e8] sm:$0xff] %vm1829, %v1824
      %1892 = vst.msk [vmem:[%s245 + $0x1f0] sm:$0xff] %vm1829, %v1826
      %1893 = vst.msk [vmem:[%s245 + $0x1f8] sm:$0xff] %vm1829, %v1828
      %s1894 = smul.u32 64, %s19
      %p1895 = scmp.lt.s32.totalorder %s18, 1
      %s1896 = scalar_select %p1895, %s18, 1
      %p1897 = scmp.lt.s32.totalorder %s1894, 63
      %s1898 = scalar_select %p1897, %s1894, 63
      %s1899 = smul.addr %s1896, 64
      %s1900 = sadd.s32 %s1898, %s1899
      %s1901 = smul.addr %s1900, 8
      %s1902 = scalar_lea.vmem %s3, %s1901
      // Predicated region
      $region33: #{multi_view_forward.13} parent=31 // pred_check
        %p1903 = pneg %p126
      $region34: #{multi_view_forward.13} parent=31 // pred_check_branch
        %1905 = sbr.rel (%p1903) target = $region36
      $region35: #{multi_view_forward.13} parent=31 // pred_region
        %s1906 = smul.u32 64, %s19
      $region36: #{multi_view_forward.13} parent=31 // pred_fallthru
        _
    $region32: #{multi_view_forward.13} parent=5 // pred_fallthru
      _
    %p1907 = scmp.le.s32.totalorder 2, %s9
    // Predicated region
    $region37: #{multi_view_forward.13} parent=5 // pred_check
      %p1908 = pneg %p1907
    $region38: #{multi_view_forward.13} parent=5 // pred_check_branch
      %1910 = sbr.rel (%p1908) target = $region40
    $region39: #{multi_view_forward.13} parent=5 // pred_region
      %s1911 = ssub.s32 %s9, 2
      // Predicated region
      $region41: #{multi_view_forward.13} parent=39 // pred_check
        %p1912 = pneg %p132
      $region42: #{multi_view_forward.13} parent=39 // pred_check_branch
        %1914 = sbr.rel (%p1912) target = $region44
      $region43: #{multi_view_forward.13} parent=39 // pred_region
        %s1915 = smul.u32 64, %s21
        %p1916 = scmp.lt.s32.totalorder %s20, 1
        %s1917 = scalar_select %p1916, %s20, 1
        %p1918 = scmp.lt.s32.totalorder %s1915, 63
        %s1919 = scalar_select %p1918, %s1915, 63
        %s1920 = smul.addr %s1917, 64
        %s1921 = sadd.s32 %s1919, %s1920
        %s1922 = smul.addr %s1921, 8
        %s1923 = scalar_lea.vmem %s3, %s1922
      $region44: #{multi_view_forward.13} parent=39 // pred_fallthru
        _
    $region40: #{multi_view_forward.13} parent=5 // pred_fallthru
      _
  $region6: #{multi_view_forward.13} parent=0 // loop_footer
    %s13 = sadd.s32 1, %s9
  $region7: #{multi_view_forward.13} parent=0 // loop_footer_branch
    %8 = sbr.rel target = $region3
  $region8: #{multi_view_forward.13} parent=0 // loop_exit
    _

</llo_original>
